<compile_context>
chip_gen: v5e
topology: v5e:2x2
jax: 0.10.0
libtpu: 0.0.40
codegen_flags: <defaults>
</compile_context>

<pallas_src>
import jax
import jax.numpy as jnp
from jax import lax
from jax.experimental import pallas as pl
from jax.experimental.pallas import tpu as pltpu

PITCH_BINS = 360
BN_EPS = 0.0010000000474974513
FRAME = 1024  # Crepe operates on 1024-sample audio frames


# ---------------------------------------------------------------------------
# In-kernel building blocks
# ---------------------------------------------------------------------------
def _conv1(x_ref, w1_ref, aff1_ref, xpad2_ref):
    """conv1 (K=512, stride 4) + bias + ReLU + BN + (2,1) maxpool.

    The pooled result (128 rows x 128 channels) is written into the already
    zeroed padded layer-2 buffer at row offset 31.

    Output position h = 32*a + r (a in [0,8), r in [0,32)):
        out[32a+r, :] = sum_t xp[128*(a+t) + 4r : +128] @ W1[128t:128t+128, :]
    -> one (8,512) x (512,128) matmul per residue r, with the (8,512) operand
    built from static slices of the VMEM-resident padded frame (16,128).
    """
    x1 = x_ref[0]                      # (16, 128) f32 == flat padded frame (2048)
    w1 = w1_ref[...]                   # (512, 128) bf16
    b1 = aff1_ref[0:1, :]              # (1, 128) f32
    sc1 = aff1_ref[1:2, :]
    sh1 = aff1_ref[2:3, :]

    def residue(r):
        s = 4 * r
        if s == 0:
            shv = x1[0:12, :]
        else:
            # shv[i, l] == xp_flat[128*i + s + l]   (flat shift by s)
            shv = jnp.concatenate([x1[0:12, s:], x1[1:13, :s]], axis=1)
        # lhs[a, 128*t + l] == xp_flat[128*(a+t) + s + l]
        lhs = jnp.concatenate(
            [shv[0:8, :], shv[1:9, :], shv[2:10, :], shv[3:11, :]], axis=1)
        acc = jnp.dot(lhs.astype(jnp.bfloat16), w1,
                      preferred_element_type=jnp.float32)        # (8, 128) f32
        return jnp.maximum(acc + b1, 0.0) * sc1 + sh1            # ReLU then BN

    # max_pool2d((2,1)): output pairs (h, h+1) = residues (2m, 2m+1), same a.
    for m in range(16):
        pooled = jnp.maximum(residue(2 * m), residue(2 * m + 1))  # (8, 128)
        for a in range(8):
            # pooled row index = 16*a + m ; layer-2 pad offset = 31
            xpad2_ref[pl.ds(31 + 16 * a + m, 1), :] = pooled[a:a + 1, :]


def _conv_block(xpad_ref, w_ref, aff_ref, h_out, c_in, c_out, k_taps=64):
    """Stride-1 conv as per-tap matmul accumulation, + bias + ReLU + BN."""
    def tap(k, acc):
        lhs = xpad_ref[pl.ds(k, h_out), :].astype(jnp.bfloat16)       # (H, C_in)
        rhs = w_ref[pl.ds(pl.multiple_of(k * c_in, c_in), c_in), :]   # (C_in, C_out)
        return acc + jnp.dot(lhs, rhs, preferred_element_type=jnp.float32)

    acc = lax.fori_loop(0, k_taps, tap,
                        jnp.zeros((h_out, c_out), jnp.float32))
    bias = aff_ref[0:1, :]
    scale = aff_ref[1:2, :]
    shift = aff_ref[2:3, :]
    return jnp.maximum(acc + bias, 0.0) * scale + shift               # (H, C_out)


def _pool_into(y, convtmp_ref, nxt_ref, h_out, c_out, dst_off=31):
    """(2,1) max-pool of y (h_out, c_out) into nxt_ref rows [31, 31+h_out/2)."""
    convtmp_ref[0:h_out, 0:c_out] = y

    @pl.loop(0, h_out // 2)
    def _(h):
        r0 = convtmp_ref[pl.ds(2 * h, 1), 0:c_out]
        r1 = convtmp_ref[pl.ds(2 * h + 1, 1), 0:c_out]
        nxt_ref[pl.ds(dst_off + h, 1), :] = jnp.maximum(r0, r1)


# ---------------------------------------------------------------------------
# Fused whole-network kernel (one grid step == one audio frame)
# ---------------------------------------------------------------------------
def _crepe_kernel(x_ref,
                  w1_ref, aff1_ref, w2_ref, aff2_ref, w3_ref, aff3_ref,
                  w4_ref, aff4_ref, w5_ref, aff5_ref, w6_ref, aff6_ref,
                  wc_ref, bc_ref,
                  o_ref,
                  xpad2, xpad3, xpad4, xpad5, xpad6, convtmp):
    # Zero the padded activation buffers (pad rows must be exact zeros).
    for ref in (xpad2, xpad3, xpad4, xpad5, xpad6):
        ref[...] = jnp.zeros_like(ref)

    # conv1 (+ pool) -> xpad2 rows [31, 159)
    _conv1(x_ref, w1_ref, aff1_ref, xpad2)

    # conv2 .. conv5 (+ pool into the next zero-padded buffer)
    y2 = _conv_block(xpad2, w2_ref, aff2_ref, 128, 128, 16)
    _pool_into(y2, convtmp, xpad3, 128, 16)
    y3 = _conv_block(xpad3, w3_ref, aff3_ref, 64, 16, 16)
    _pool_into(y3, convtmp, xpad4, 64, 16)
    y4 = _conv_block(xpad4, w4_ref, aff4_ref, 32, 16, 16)
    _pool_into(y4, convtmp, xpad5, 32, 16)
    y5 = _conv_block(xpad5, w5_ref, aff5_ref, 16, 16, 32)
    _pool_into(y5, convtmp, xpad6, 16, 32)

    # conv6 (+ pool kept as values) and classifier
    y6 = _conv_block(xpad6, w6_ref, aff6_ref, 8, 32, 64)              # (8, 64)
    feats = []
    for a in range(4):
        feats.append(jnp.maximum(y6[2 * a:2 * a + 1, :],
                                 y6[2 * a + 1:2 * a + 2, :]))         # (1, 64)
    # torch: permute(0,2,1,3).reshape(-1, 256)  ==  flatten (H, C)
    feat = jnp.concatenate(feats, axis=1).astype(jnp.bfloat16)        # (1, 256)
    logits = jnp.dot(feat, wc_ref[...],
                     preferred_element_type=jnp.float32) + bc_ref[...]
    # numerically-stable sigmoid
    z = jnp.exp(-jnp.abs(logits))
    probs = jnp.where(logits >= 0.0, 1.0 / (1.0 + z), z / (1.0 + z))
    o_ref[...] = probs.reshape(1, 1, PITCH_BINS)


# ---------------------------------------------------------------------------
# Wrapper: single pallas_call for the whole forward pass
# ---------------------------------------------------------------------------
def crepe_forward(x, params):
    """x: (B, 1024) audio frames -> (B, PITCH_BINS) sigmoid probabilities."""
    B, T = x.shape
    assert T == FRAME, "fused kernel is sized for 1024-sample Crepe frames"

    # conv1 padding (254 each side) on the raw 4 KB frame, rounded up to 2048
    # samples (the extra trailing zeros are never read by the kernel).
    xp = jnp.pad(x.astype(jnp.float32), ((0, 0), (254, 2048 - 254 - T)))
    xp = xp.reshape(B, 16, 128)

    convs = [params[f"conv{i}"] for i in range(1, 7)]
    wc, bc = params["classifier"]

    def const_spec(arr):
        return pl.BlockSpec(arr.shape, lambda b: (0,) * arr.ndim)

    in_specs = [pl.BlockSpec((1, 16, 128), lambda b: (b, 0, 0))]
    operands = [xp]
    for w, aff in convs:
        in_specs += [const_spec(w), const_spec(aff)]
        operands += [w, aff]
    in_specs += [const_spec(wc), const_spec(bc)]
    operands += [wc, bc]

    out = pl.pallas_call(
        _crepe_kernel,
        out_shape=jax.ShapeDtypeStruct((B, 1, PITCH_BINS), jnp.float32),
        grid=(B,),
        in_specs=in_specs,
        out_specs=pl.BlockSpec((1, 1, PITCH_BINS), lambda b: (b, 0, 0)),
        scratch_shapes=[
            pltpu.VMEM((192, 128), jnp.float32),   # conv2 padded input
            pltpu.VMEM((128, 16), jnp.float32),    # conv3 padded input
            pltpu.VMEM((96, 16), jnp.float32),     # conv4 padded input
            pltpu.VMEM((80, 16), jnp.float32),     # conv5 padded input
            pltpu.VMEM((72, 32), jnp.float32),     # conv6 padded input
            pltpu.VMEM((128, 64), jnp.float32),    # conv-output temp (pooling)
        ],
        compiler_params=pltpu.CompilerParams(
            dimension_semantics=("parallel",),
            vmem_limit_bytes=32 * 1024 * 1024,
        ),
    )(*operands)
    return out.reshape(B, PITCH_BINS)


# ---------------------------------------------------------------------------
# Parameter construction ("tiny" Crepe), deterministic
# ---------------------------------------------------------------------------
def make_params(key, model="tiny"):
    # TODO(synk): "full" Crepe needs larger weight/scratch tiling; this fused
    # kernel is sized for the "tiny" configuration.
    if model != "tiny":
        raise ValueError("fused Pallas kernel supports the 'tiny' Crepe only")
    in_channels = [1, 128, 16, 16, 16, 32]
    out_channels = [128, 16, 16, 16, 32, 64]
    in_features = 256
    kernel_sizes = [512] + 5 * [64]

    params = {}
    for i in range(6):
        cin, cout, K = in_channels[i], out_channels[i], kernel_sizes[i]
        key, kw, kb, k1, k2, k3, k4 = jax.random.split(key, 7)
        fan_in = cin * K
        bound = 1.0 / jnp.sqrt(fan_in)
        w_conv = jax.random.uniform(kw, (cout, cin, K), jnp.float32, -bound, bound)
        bias = jax.random.uniform(kb, (cout,), jnp.float32, -bound, bound)
        # BatchNorm2d (eval-mode): fold running stats + affine into scale/shift.
        gamma = 1.0 + 0.1 * jax.random.normal(k1, (cout,), jnp.float32)
        beta = 0.1 * jax.random.normal(k2, (cout,), jnp.float32)
        r_mean = 0.1 * jax.random.normal(k3, (cout,), jnp.float32)
        r_var = 1.0 + 0.1 * jnp.abs(jax.random.normal(k4, (cout,), jnp.float32))
        scale = gamma / jnp.sqrt(r_var + BN_EPS)
        shift = beta - r_mean * scale
        # Matmul weight matrix matching (k, c_in)-ordered patches.
        w_mat = jnp.transpose(w_conv, (2, 1, 0)).reshape(K * cin, cout)
        aff = jnp.stack([bias, scale, shift], axis=0)        # (3, C_out)
        params[f"conv{i + 1}"] = (w_mat.astype(jnp.bfloat16),
                                  aff.astype(jnp.float32))

    key, kw, kb = jax.random.split(key, 3)
    bound = 1.0 / jnp.sqrt(in_features)
    wcls = jax.random.uniform(kw, (PITCH_BINS, in_features), jnp.float32,
                              -bound, bound)
    bcls = jax.random.uniform(kb, (PITCH_BINS,), jnp.float32, -bound, bound)
    params["classifier"] = (jnp.transpose(wcls).astype(jnp.bfloat16),
                            bcls.reshape(1, PITCH_BINS).astype(jnp.float32))
    return params


if __name__ == "__main__":
    key = jax.random.PRNGKey(0)
    k_params, k_x = jax.random.split(key)
    params = make_params(k_params, model="tiny")
    x = jax.random.normal(k_x, (2, FRAME), dtype=jnp.float32)
    fwd = jax.jit(crepe_forward)
    out = jax.block_until_ready(fwd(x, params))
    assert out.shape == (2, PITCH_BINS), out.shape
    assert bool(jnp.all(jnp.isfinite(out)))
    assert bool(jnp.all((out >= 0.0) & (out <= 1.0)))
    print("KERNEL_OK")
</pallas_src>

<mosaic_0001>
module attributes {stable_mosaic.version = 11 : i64} {
  func.func @_crepe_kernel(%arg0: i32, %arg1: memref<1x16x128xf32, #tpu.memory_space<vmem>>, %arg2: memref<512x128xbf16, #tpu.memory_space<vmem>>, %arg3: memref<3x128xf32, #tpu.memory_space<vmem>>, %arg4: memref<8192x16xbf16, #tpu.memory_space<vmem>>, %arg5: memref<3x16xf32, #tpu.memory_space<vmem>>, %arg6: memref<1024x16xbf16, #tpu.memory_space<vmem>>, %arg7: memref<3x16xf32, #tpu.memory_space<vmem>>, %arg8: memref<1024x16xbf16, #tpu.memory_space<vmem>>, %arg9: memref<3x16xf32, #tpu.memory_space<vmem>>, %arg10: memref<1024x32xbf16, #tpu.memory_space<vmem>>, %arg11: memref<3x32xf32, #tpu.memory_space<vmem>>, %arg12: memref<2048x64xbf16, #tpu.memory_space<vmem>>, %arg13: memref<3x64xf32, #tpu.memory_space<vmem>>, %arg14: memref<256x360xbf16, #tpu.memory_space<vmem>>, %arg15: memref<1x360xf32, #tpu.memory_space<vmem>>, %arg16: memref<1x1x360xf32, #tpu.memory_space<vmem>>, %arg17: memref<192x128xf32, #tpu.memory_space<vmem>>, %arg18: memref<128x16xf32, #tpu.memory_space<vmem>>, %arg19: memref<96x16xf32, #tpu.memory_space<vmem>>, %arg20: memref<80x16xf32, #tpu.memory_space<vmem>>, %arg21: memref<72x32xf32, #tpu.memory_space<vmem>>, %arg22: memref<128x64xf32, #tpu.memory_space<vmem>>) attributes {dimension_semantics = [#tpu.dimension_semantics<parallel>], iteration_bounds = array<i64: 2>, scalar_prefetch = 0 : i64, scratch_operands = 6 : i64, tpu.core_type = #tpu.core_type<tc>, window_params = [{transform_indices = @transform_0, window_bounds = array<i64: 1, 16, 128>}, {pipeline_mode = #tpu.pipeline_mode<synchronous>, transform_indices = @transform_1, window_bounds = array<i64: 512, 128>}, {pipeline_mode = #tpu.pipeline_mode<synchronous>, transform_indices = @transform_2, window_bounds = array<i64: 3, 128>}, {pipeline_mode = #tpu.pipeline_mode<synchronous>, transform_indices = @transform_3, window_bounds = array<i64: 8192, 16>}, {pipeline_mode = #tpu.pipeline_mode<synchronous>, transform_indices = @transform_4, window_bounds = array<i64: 3, 16>}, {pipeline_mode = #tpu.pipeline_mode<synchronous>, transform_indices = @transform_5, window_bounds = array<i64: 1024, 16>}, {pipeline_mode = #tpu.pipeline_mode<synchronous>, transform_indices = @transform_6, window_bounds = array<i64: 3, 16>}, {pipeline_mode = #tpu.pipeline_mode<synchronous>, transform_indices = @transform_7, window_bounds = array<i64: 1024, 16>}, {pipeline_mode = #tpu.pipeline_mode<synchronous>, transform_indices = @transform_8, window_bounds = array<i64: 3, 16>}, {pipeline_mode = #tpu.pipeline_mode<synchronous>, transform_indices = @transform_9, window_bounds = array<i64: 1024, 32>}, {pipeline_mode = #tpu.pipeline_mode<synchronous>, transform_indices = @transform_10, window_bounds = array<i64: 3, 32>}, {pipeline_mode = #tpu.pipeline_mode<synchronous>, transform_indices = @transform_11, window_bounds = array<i64: 2048, 64>}, {pipeline_mode = #tpu.pipeline_mode<synchronous>, transform_indices = @transform_12, window_bounds = array<i64: 3, 64>}, {pipeline_mode = #tpu.pipeline_mode<synchronous>, transform_indices = @transform_13, window_bounds = array<i64: 256, 360>}, {pipeline_mode = #tpu.pipeline_mode<synchronous>, transform_indices = @transform_14, window_bounds = array<i64: 1, 360>}, {transform_indices = @transform_15, window_bounds = array<i64: 1, 1, 360>}]} {
    %cst = arith.constant 0.000000e+00 : f32
    %0 = vector.broadcast %cst : f32 to vector<192x128xf32>
    %c0 = arith.constant 0 : index
    %c0_0 = arith.constant 0 : index
    %1 = vector.load %arg17[%c0, %c0_0] : memref<192x128xf32, #tpu.memory_space<vmem>>, vector<192x128xf32>
    tpu.vector_store %arg17[%c0, %c0_0], %0 {strides = array<i32>} : memref<192x128xf32, #tpu.memory_space<vmem>>, vector<192x128xf32>,
    %cst_1 = arith.constant 0.000000e+00 : f32
    %2 = vector.broadcast %cst_1 : f32 to vector<128x16xf32>
    %c0_2 = arith.constant 0 : index
    %c0_3 = arith.constant 0 : index
    %3 = vector.load %arg18[%c0_2, %c0_3] : memref<128x16xf32, #tpu.memory_space<vmem>>, vector<128x16xf32>
    tpu.vector_store %arg18[%c0_2, %c0_3], %2 {strides = array<i32>} : memref<128x16xf32, #tpu.memory_space<vmem>>, vector<128x16xf32>,
    %cst_4 = arith.constant 0.000000e+00 : f32
    %4 = vector.broadcast %cst_4 : f32 to vector<96x16xf32>
    %c0_5 = arith.constant 0 : index
    %c0_6 = arith.constant 0 : index
    %5 = vector.load %arg19[%c0_5, %c0_6] : memref<96x16xf32, #tpu.memory_space<vmem>>, vector<96x16xf32>
    tpu.vector_store %arg19[%c0_5, %c0_6], %4 {strides = array<i32>} : memref<96x16xf32, #tpu.memory_space<vmem>>, vector<96x16xf32>,
    %cst_7 = arith.constant 0.000000e+00 : f32
    %6 = vector.broadcast %cst_7 : f32 to vector<80x16xf32>
    %c0_8 = arith.constant 0 : index
    %c0_9 = arith.constant 0 : index
    %7 = vector.load %arg20[%c0_8, %c0_9] : memref<80x16xf32, #tpu.memory_space<vmem>>, vector<80x16xf32>
    tpu.vector_store %arg20[%c0_8, %c0_9], %6 {strides = array<i32>} : memref<80x16xf32, #tpu.memory_space<vmem>>, vector<80x16xf32>,
    %cst_10 = arith.constant 0.000000e+00 : f32
    %8 = vector.broadcast %cst_10 : f32 to vector<72x32xf32>
    %c0_11 = arith.constant 0 : index
    %c0_12 = arith.constant 0 : index
    %9 = vector.load %arg21[%c0_11, %c0_12] : memref<72x32xf32, #tpu.memory_space<vmem>>, vector<72x32xf32>
    tpu.vector_store %arg21[%c0_11, %c0_12], %8 {strides = array<i32>} : memref<72x32xf32, #tpu.memory_space<vmem>>, vector<72x32xf32>,
    %c0_13 = arith.constant 0 : index
    %c0_14 = arith.constant 0 : index
    %c0_15 = arith.constant 0 : index
    %10 = vector.load %arg1[%c0_13, %c0_14, %c0_15] : memref<1x16x128xf32, #tpu.memory_space<vmem>>, vector<1x16x128xf32>
    %11 = vector.shape_cast %10 : vector<1x16x128xf32> to vector<16x128xf32>
    %c0_16 = arith.constant 0 : index
    %c0_17 = arith.constant 0 : index
    %12 = vector.load %arg2[%c0_16, %c0_17] : memref<512x128xbf16, #tpu.memory_space<vmem>>, vector<512x128xbf16>
    %c0_18 = arith.constant 0 : index
    %c0_19 = arith.constant 0 : index
    %13 = vector.load %arg3[%c0_18, %c0_19] : memref<3x128xf32, #tpu.memory_space<vmem>>, vector<1x128xf32>
    %c1 = arith.constant 1 : index
    %c0_20 = arith.constant 0 : index
    %14 = vector.load %arg3[%c1, %c0_20] : memref<3x128xf32, #tpu.memory_space<vmem>>, vector<1x128xf32>
    %c2 = arith.constant 2 : index
    %c0_21 = arith.constant 0 : index
    %15 = vector.load %arg3[%c2, %c0_21] : memref<3x128xf32, #tpu.memory_space<vmem>>, vector<1x128xf32>
    %16 = vector.extract_strided_slice %11 {offsets = [0, 0], sizes = [12, 128], strides = [1, 1]} : vector<16x128xf32> to vector<12x128xf32>
    %17 = vector.extract_strided_slice %16 {offsets = [0, 0], sizes = [8, 128], strides = [1, 1]} : vector<12x128xf32> to vector<8x128xf32>
    %18 = vector.extract_strided_slice %16 {offsets = [1, 0], sizes = [8, 128], strides = [1, 1]} : vector<12x128xf32> to vector<8x128xf32>
    %19 = vector.extract_strided_slice %16 {offsets = [2, 0], sizes = [8, 128], strides = [1, 1]} : vector<12x128xf32> to vector<8x128xf32>
    %20 = vector.extract_strided_slice %16 {offsets = [3, 0], sizes = [8, 128], strides = [1, 1]} : vector<12x128xf32> to vector<8x128xf32>
    %21 = tpu.concatenate %17, %18, %19, %20 in 1 : vector<8x128xf32>, vector<8x128xf32>, vector<8x128xf32>, vector<8x128xf32> -> vector<8x512xf32>
    %22 = arith.truncf %21 : vector<8x512xf32> to vector<8x512xbf16>
    %cst_22 = arith.constant dense<0.000000e+00> : vector<8x128xf32>
    %23 = tpu.matmul %22, %12, %cst_22 {dimension_numbers = #tpu.dot_dimension_numbers<[1], [0], [0], [1], [0, 0, 1, 1], [], []>} : vector<8x512xbf16>, vector<512x128xbf16>, vector<8x128xf32> -> vector<8x128xf32>
    %24 = vector.broadcast %13 : vector<1x128xf32> to vector<8x128xf32>
    %25 = arith.addf %23, %24 : vector<8x128xf32>
    %cst_23 = arith.constant 0.000000e+00 : f32
    %26 = vector.broadcast %cst_23 : f32 to vector<8x128xf32>
    %27 = arith.maximumf %25, %26 : vector<8x128xf32>
    %28 = vector.broadcast %14 : vector<1x128xf32> to vector<8x128xf32>
    %29 = arith.mulf %27, %28 : vector<8x128xf32>
    %30 = vector.broadcast %15 : vector<1x128xf32> to vector<8x128xf32>
    %31 = arith.addf %29, %30 : vector<8x128xf32>
    %32 = vector.extract_strided_slice %11 {offsets = [0, 4], sizes = [12, 124], strides = [1, 1]} : vector<16x128xf32> to vector<12x124xf32>
    %33 = vector.extract_strided_slice %11 {offsets = [1, 0], sizes = [12, 4], strides = [1, 1]} : vector<16x128xf32> to vector<12x4xf32>
    %34 = tpu.concatenate %32, %33 in 1 : vector<12x124xf32>, vector<12x4xf32> -> vector<12x128xf32>
    %35 = vector.extract_strided_slice %34 {offsets = [0, 0], sizes = [8, 128], strides = [1, 1]} : vector<12x128xf32> to vector<8x128xf32>
    %36 = vector.extract_strided_slice %34 {offsets = [1, 0], sizes = [8, 128], strides = [1, 1]} : vector<12x128xf32> to vector<8x128xf32>
    %37 = vector.extract_strided_slice %34 {offsets = [2, 0], sizes = [8, 128], strides = [1, 1]} : vector<12x128xf32> to vector<8x128xf32>
    %38 = vector.extract_strided_slice %34 {offsets = [3, 0], sizes = [8, 128], strides = [1, 1]} : vector<12x128xf32> to vector<8x128xf32>
    %39 = tpu.concatenate %35, %36, %37, %38 in 1 : vector<8x128xf32>, vector<8x128xf32>, vector<8x128xf32>, vector<8x128xf32> -> vector<8x512xf32>
    %40 = arith.truncf %39 : vector<8x512xf32> to vector<8x512xbf16>
    %cst_24 = arith.constant dense<0.000000e+00> : vector<8x128xf32>
    %41 = tpu.matmul %40, %12, %cst_24 {dimension_numbers = #tpu.dot_dimension_numbers<[1], [0], [0], [1], [0, 0, 1, 1], [], []>} : vector<8x512xbf16>, vector<512x128xbf16>, vector<8x128xf32> -> vector<8x128xf32>
    %42 = vector.broadcast %13 : vector<1x128xf32> to vector<8x128xf32>
    %43 = arith.addf %41, %42 : vector<8x128xf32>
    %cst_25 = arith.constant 0.000000e+00 : f32
    %44 = vector.broadcast %cst_25 : f32 to vector<8x128xf32>
    %45 = arith.maximumf %43, %44 : vector<8x128xf32>
    %46 = vector.broadcast %14 : vector<1x128xf32> to vector<8x128xf32>
    %47 = arith.mulf %45, %46 : vector<8x128xf32>
    %48 = vector.broadcast %15 : vector<1x128xf32> to vector<8x128xf32>
    %49 = arith.addf %47, %48 : vector<8x128xf32>
    %50 = arith.maximumf %31, %49 : vector<8x128xf32>
    %51 = vector.extract_strided_slice %50 {offsets = [0, 0], sizes = [1, 128], strides = [1, 1]} : vector<8x128xf32> to vector<1x128xf32>
    %c31 = arith.constant 31 : index
    %c0_26 = arith.constant 0 : index
    %52 = vector.load %arg17[%c31, %c0_26] : memref<192x128xf32, #tpu.memory_space<vmem>>, vector<1x128xf32>
    tpu.vector_store %arg17[%c31, %c0_26], %51 {strides = array<i32>} : memref<192x128xf32, #tpu.memory_space<vmem>>, vector<1x128xf32>,
    %53 = vector.extract_strided_slice %50 {offsets = [1, 0], sizes = [1, 128], strides = [1, 1]} : vector<8x128xf32> to vector<1x128xf32>
    %c47 = arith.constant 47 : index
    %c0_27 = arith.constant 0 : index
    %54 = vector.load %arg17[%c47, %c0_27] : memref<192x128xf32, #tpu.memory_space<vmem>>, vector<1x128xf32>
    tpu.vector_store %arg17[%c47, %c0_27], %53 {strides = array<i32>} : memref<192x128xf32, #tpu.memory_space<vmem>>, vector<1x128xf32>,
    %55 = vector.extract_strided_slice %50 {offsets = [2, 0], sizes = [1, 128], strides = [1, 1]} : vector<8x128xf32> to vector<1x128xf32>
    %c63 = arith.constant 63 : index
    %c0_28 = arith.constant 0 : index
    %56 = vector.load %arg17[%c63, %c0_28] : memref<192x128xf32, #tpu.memory_space<vmem>>, vector<1x128xf32>
    tpu.vector_store %arg17[%c63, %c0_28], %55 {strides = array<i32>} : memref<192x128xf32, #tpu.memory_space<vmem>>, vector<1x128xf32>,
    %57 = vector.extract_strided_slice %50 {offsets = [3, 0], sizes = [1, 128], strides = [1, 1]} : vector<8x128xf32> to vector<1x128xf32>
    %c79 = arith.constant 79 : index
    %c0_29 = arith.constant 0 : index
    %58 = vector.load %arg17[%c79, %c0_29] : memref<192x128xf32, #tpu.memory_space<vmem>>, vector<1x128xf32>
    tpu.vector_store %arg17[%c79, %c0_29], %57 {strides = array<i32>} : memref<192x128xf32, #tpu.memory_space<vmem>>, vector<1x128xf32>,
    %59 = vector.extract_strided_slice %50 {offsets = [4, 0], sizes = [1, 128], strides = [1, 1]} : vector<8x128xf32> to vector<1x128xf32>
    %c95 = arith.constant 95 : index
    %c0_30 = arith.constant 0 : index
    %60 = vector.load %arg17[%c95, %c0_30] : memref<192x128xf32, #tpu.memory_space<vmem>>, vector<1x128xf32>
    tpu.vector_store %arg17[%c95, %c0_30], %59 {strides = array<i32>} : memref<192x128xf32, #tpu.memory_space<vmem>>, vector<1x128xf32>,
    %61 = vector.extract_strided_slice %50 {offsets = [5, 0], sizes = [1, 128], strides = [1, 1]} : vector<8x128xf32> to vector<1x128xf32>
    %c111 = arith.constant 111 : index
    %c0_31 = arith.constant 0 : index
    %62 = vector.load %arg17[%c111, %c0_31] : memref<192x128xf32, #tpu.memory_space<vmem>>, vector<1x128xf32>
    tpu.vector_store %arg17[%c111, %c0_31], %61 {strides = array<i32>} : memref<192x128xf32, #tpu.memory_space<vmem>>, vector<1x128xf32>,
    %63 = vector.extract_strided_slice %50 {offsets = [6, 0], sizes = [1, 128], strides = [1, 1]} : vector<8x128xf32> to vector<1x128xf32>
    %c127 = arith.constant 127 : index
    %c0_32 = arith.constant 0 : index
    %64 = vector.load %arg17[%c127, %c0_32] : memref<192x128xf32, #tpu.memory_space<vmem>>, vector<1x128xf32>
    tpu.vector_store %arg17[%c127, %c0_32], %63 {strides = array<i32>} : memref<192x128xf32, #tpu.memory_space<vmem>>, vector<1x128xf32>,
    %65 = vector.extract_strided_slice %50 {offsets = [7, 0], sizes = [1, 128], strides = [1, 1]} : vector<8x128xf32> to vector<1x128xf32>
    %c143 = arith.constant 143 : index
    %c0_33 = arith.constant 0 : index
    %66 = vector.load %arg17[%c143, %c0_33] : memref<192x128xf32, #tpu.memory_space<vmem>>, vector<1x128xf32>
    tpu.vector_store %arg17[%c143, %c0_33], %65 {strides = array<i32>} : memref<192x128xf32, #tpu.memory_space<vmem>>, vector<1x128xf32>,
    %67 = vector.extract_strided_slice %11 {offsets = [0, 8], sizes = [12, 120], strides = [1, 1]} : vector<16x128xf32> to vector<12x120xf32>
    %68 = vector.extract_strided_slice %11 {offsets = [1, 0], sizes = [12, 8], strides = [1, 1]} : vector<16x128xf32> to vector<12x8xf32>
    %69 = tpu.concatenate %67, %68 in 1 : vector<12x120xf32>, vector<12x8xf32> -> vector<12x128xf32>
    %70 = vector.extract_strided_slice %69 {offsets = [0, 0], sizes = [8, 128], strides = [1, 1]} : vector<12x128xf32> to vector<8x128xf32>
    %71 = vector.extract_strided_slice %69 {offsets = [1, 0], sizes = [8, 128], strides = [1, 1]} : vector<12x128xf32> to vector<8x128xf32>
    %72 = vector.extract_strided_slice %69 {offsets = [2, 0], sizes = [8, 128], strides = [1, 1]} : vector<12x128xf32> to vector<8x128xf32>
    %73 = vector.extract_strided_slice %69 {offsets = [3, 0], sizes = [8, 128], strides = [1, 1]} : vector<12x128xf32> to vector<8x128xf32>
    %74 = tpu.concatenate %70, %71, %72, %73 in 1 : vector<8x128xf32>, vector<8x128xf32>, vector<8x128xf32>, vector<8x128xf32> -> vector<8x512xf32>
    %75 = arith.truncf %74 : vector<8x512xf32> to vector<8x512xbf16>
    %cst_34 = arith.constant dense<0.000000e+00> : vector<8x128xf32>
    %76 = tpu.matmul %75, %12, %cst_34 {dimension_numbers = #tpu.dot_dimension_numbers<[1], [0], [0], [1], [0, 0, 1, 1], [], []>} : vector<8x512xbf16>, vector<512x128xbf16>, vector<8x128xf32> -> vector<8x128xf32>
    %77 = vector.broadcast %13 : vector<1x128xf32> to vector<8x128xf32>
    %78 = arith.addf %76, %77 : vector<8x128xf32>
    %cst_35 = arith.constant 0.000000e+00 : f32
    %79 = vector.broadcast %cst_35 : f32 to vector<8x128xf32>
    %80 = arith.maximumf %78, %79 : vector<8x128xf32>
    %81 = vector.broadcast %14 : vector<1x128xf32> to vector<8x128xf32>
    %82 = arith.mulf %80, %81 : vector<8x128xf32>
    %83 = vector.broadcast %15 : vector<1x128xf32> to vector<8x128xf32>
    %84 = arith.addf %82, %83 : vector<8x128xf32>
    %85 = vector.extract_strided_slice %11 {offsets = [0, 12], sizes = [12, 116], strides = [1, 1]} : vector<16x128xf32> to vector<12x116xf32>
    %86 = vector.extract_strided_slice %11 {offsets = [1, 0], sizes = [12, 12], strides = [1, 1]} : vector<16x128xf32> to vector<12x12xf32>
    %87 = tpu.concatenate %85, %86 in 1 : vector<12x116xf32>, vector<12x12xf32> -> vector<12x128xf32>
    %88 = vector.extract_strided_slice %87 {offsets = [0, 0], sizes = [8, 128], strides = [1, 1]} : vector<12x128xf32> to vector<8x128xf32>
    %89 = vector.extract_strided_slice %87 {offsets = [1, 0], sizes = [8, 128], strides = [1, 1]} : vector<12x128xf32> to vector<8x128xf32>
    %90 = vector.extract_strided_slice %87 {offsets = [2, 0], sizes = [8, 128], strides = [1, 1]} : vector<12x128xf32> to vector<8x128xf32>
    %91 = vector.extract_strided_slice %87 {offsets = [3, 0], sizes = [8, 128], strides = [1, 1]} : vector<12x128xf32> to vector<8x128xf32>
    %92 = tpu.concatenate %88, %89, %90, %91 in 1 : vector<8x128xf32>, vector<8x128xf32>, vector<8x128xf32>, vector<8x128xf32> -> vector<8x512xf32>
    %93 = arith.truncf %92 : vector<8x512xf32> to vector<8x512xbf16>
    %cst_36 = arith.constant dense<0.000000e+00> : vector<8x128xf32>
    %94 = tpu.matmul %93, %12, %cst_36 {dimension_numbers = #tpu.dot_dimension_numbers<[1], [0], [0], [1], [0, 0, 1, 1], [], []>} : vector<8x512xbf16>, vector<512x128xbf16>, vector<8x128xf32> -> vector<8x128xf32>
    %95 = vector.broadcast %13 : vector<1x128xf32> to vector<8x128xf32>
    %96 = arith.addf %94, %95 : vector<8x128xf32>
    %cst_37 = arith.constant 0.000000e+00 : f32
    %97 = vector.broadcast %cst_37 : f32 to vector<8x128xf32>
    %98 = arith.maximumf %96, %97 : vector<8x128xf32>
    %99 = vector.broadcast %14 : vector<1x128xf32> to vector<8x128xf32>
    %100 = arith.mulf %98, %99 : vector<8x128xf32>
    %101 = vector.broadcast %15 : vector<1x128xf32> to vector<8x128xf32>
    %102 = arith.addf %100, %101 : vector<8x128xf32>
    %103 = arith.maximumf %84, %102 : vector<8x128xf32>
    %104 = vector.extract_strided_slice %103 {offsets = [0, 0], sizes = [1, 128], strides = [1, 1]} : vector<8x128xf32> to vector<1x128xf32>
    %c32 = arith.constant 32 : index
    %c0_38 = arith.constant 0 : index
    %105 = vector.load %arg17[%c32, %c0_38] : memref<192x128xf32, #tpu.memory_space<vmem>>, vector<1x128xf32>
    tpu.vector_store %arg17[%c32, %c0_38], %104 {strides = array<i32>} : memref<192x128xf32, #tpu.memory_space<vmem>>, vector<1x128xf32>,
    %106 = vector.extract_strided_slice %103 {offsets = [1, 0], sizes = [1, 128], strides = [1, 1]} : vector<8x128xf32> to vector<1x128xf32>
    %c48 = arith.constant 48 : index
    %c0_39 = arith.constant 0 : index
    %107 = vector.load %arg17[%c48, %c0_39] : memref<192x128xf32, #tpu.memory_space<vmem>>, vector<1x128xf32>
    tpu.vector_store %arg17[%c48, %c0_39], %106 {strides = array<i32>} : memref<192x128xf32, #tpu.memory_space<vmem>>, vector<1x128xf32>,
    %108 = vector.extract_strided_slice %103 {offsets = [2, 0], sizes = [1, 128], strides = [1, 1]} : vector<8x128xf32> to vector<1x128xf32>
    %c64 = arith.constant 64 : index
    %c0_40 = arith.constant 0 : index
    %109 = vector.load %arg17[%c64, %c0_40] : memref<192x128xf32, #tpu.memory_space<vmem>>, vector<1x128xf32>
    tpu.vector_store %arg17[%c64, %c0_40], %108 {strides = array<i32>} : memref<192x128xf32, #tpu.memory_space<vmem>>, vector<1x128xf32>,
    %110 = vector.extract_strided_slice %103 {offsets = [3, 0], sizes = [1, 128], strides = [1, 1]} : vector<8x128xf32> to vector<1x128xf32>
    %c80 = arith.constant 80 : index
    %c0_41 = arith.constant 0 : index
    %111 = vector.load %arg17[%c80, %c0_41] : memref<192x128xf32, #tpu.memory_space<vmem>>, vector<1x128xf32>
    tpu.vector_store %arg17[%c80, %c0_41], %110 {strides = array<i32>} : memref<192x128xf32, #tpu.memory_space<vmem>>, vector<1x128xf32>,
    %112 = vector.extract_strided_slice %103 {offsets = [4, 0], sizes = [1, 128], strides = [1, 1]} : vector<8x128xf32> to vector<1x128xf32>
    %c96 = arith.constant 96 : index
    %c0_42 = arith.constant 0 : index
    %113 = vector.load %arg17[%c96, %c0_42] : memref<192x128xf32, #tpu.memory_space<vmem>>, vector<1x128xf32>
    tpu.vector_store %arg17[%c96, %c0_42], %112 {strides = array<i32>} : memref<192x128xf32, #tpu.memory_space<vmem>>, vector<1x128xf32>,
    %114 = vector.extract_strided_slice %103 {offsets = [5, 0], sizes = [1, 128], strides = [1, 1]} : vector<8x128xf32> to vector<1x128xf32>
    %c112 = arith.constant 112 : index
    %c0_43 = arith.constant 0 : index
    %115 = vector.load %arg17[%c112, %c0_43] : memref<192x128xf32, #tpu.memory_space<vmem>>, vector<1x128xf32>
    tpu.vector_store %arg17[%c112, %c0_43], %114 {strides = array<i32>} : memref<192x128xf32, #tpu.memory_space<vmem>>, vector<1x128xf32>,
    %116 = vector.extract_strided_slice %103 {offsets = [6, 0], sizes = [1, 128], strides = [1, 1]} : vector<8x128xf32> to vector<1x128xf32>
    %c128 = arith.constant 128 : index
    %c0_44 = arith.constant 0 : index
    %117 = vector.load %arg17[%c128, %c0_44] : memref<192x128xf32, #tpu.memory_space<vmem>>, vector<1x128xf32>
    tpu.vector_store %arg17[%c128, %c0_44], %116 {strides = array<i32>} : memref<192x128xf32, #tpu.memory_space<vmem>>, vector<1x128xf32>,
    %118 = vector.extract_strided_slice %103 {offsets = [7, 0], sizes = [1, 128], strides = [1, 1]} : vector<8x128xf32> to vector<1x128xf32>
    %c144 = arith.constant 144 : index
    %c0_45 = arith.constant 0 : index
    %119 = vector.load %arg17[%c144, %c0_45] : memref<192x128xf32, #tpu.memory_space<vmem>>, vector<1x128xf32>
    tpu.vector_store %arg17[%c144, %c0_45], %118 {strides = array<i32>} : memref<192x128xf32, #tpu.memory_space<vmem>>, vector<1x128xf32>,
    %120 = vector.extract_strided_slice %11 {offsets = [0, 16], sizes = [12, 112], strides = [1, 1]} : vector<16x128xf32> to vector<12x112xf32>
    %121 = vector.extract_strided_slice %11 {offsets = [1, 0], sizes = [12, 16], strides = [1, 1]} : vector<16x128xf32> to vector<12x16xf32>
    %122 = tpu.concatenate %120, %121 in 1 : vector<12x112xf32>, vector<12x16xf32> -> vector<12x128xf32>
    %123 = vector.extract_strided_slice %122 {offsets = [0, 0], sizes = [8, 128], strides = [1, 1]} : vector<12x128xf32> to vector<8x128xf32>
    %124 = vector.extract_strided_slice %122 {offsets = [1, 0], sizes = [8, 128], strides = [1, 1]} : vector<12x128xf32> to vector<8x128xf32>
    %125 = vector.extract_strided_slice %122 {offsets = [2, 0], sizes = [8, 128], strides = [1, 1]} : vector<12x128xf32> to vector<8x128xf32>
    %126 = vector.extract_strided_slice %122 {offsets = [3, 0], sizes = [8, 128], strides = [1, 1]} : vector<12x128xf32> to vector<8x128xf32>
    %127 = tpu.concatenate %123, %124, %125, %126 in 1 : vector<8x128xf32>, vector<8x128xf32>, vector<8x128xf32>, vector<8x128xf32> -> vector<8x512xf32>
    %128 = arith.truncf %127 : vector<8x512xf32> to vector<8x512xbf16>
    %cst_46 = arith.constant dense<0.000000e+00> : vector<8x128xf32>
    %129 = tpu.matmul %128, %12, %cst_46 {dimension_numbers = #tpu.dot_dimension_numbers<[1], [0], [0], [1], [0, 0, 1, 1], [], []>} : vector<8x512xbf16>, vector<512x128xbf16>, vector<8x128xf32> -> vector<8x128xf32>
    %130 = vector.broadcast %13 : vector<1x128xf32> to vector<8x128xf32>
    %131 = arith.addf %129, %130 : vector<8x128xf32>
    %cst_47 = arith.constant 0.000000e+00 : f32
    %132 = vector.broadcast %cst_47 : f32 to vector<8x128xf32>
    %133 = arith.maximumf %131, %132 : vector<8x128xf32>
    %134 = vector.broadcast %14 : vector<1x128xf32> to vector<8x128xf32>
    %135 = arith.mulf %133, %134 : vector<8x128xf32>
    %136 = vector.broadcast %15 : vector<1x128xf32> to vector<8x128xf32>
    %137 = arith.addf %135, %136 : vector<8x128xf32>
    %138 = vector.extract_strided_slice %11 {offsets = [0, 20], sizes = [12, 108], strides = [1, 1]} : vector<16x128xf32> to vector<12x108xf32>
    %139 = vector.extract_strided_slice %11 {offsets = [1, 0], sizes = [12, 20], strides = [1, 1]} : vector<16x128xf32> to vector<12x20xf32>
    %140 = tpu.concatenate %138, %139 in 1 : vector<12x108xf32>, vector<12x20xf32> -> vector<12x128xf32>
    %141 = vector.extract_strided_slice %140 {offsets = [0, 0], sizes = [8, 128], strides = [1, 1]} : vector<12x128xf32> to vector<8x128xf32>
    %142 = vector.extract_strided_slice %140 {offsets = [1, 0], sizes = [8, 128], strides = [1, 1]} : vector<12x128xf32> to vector<8x128xf32>
    %143 = vector.extract_strided_slice %140 {offsets = [2, 0], sizes = [8, 128], strides = [1, 1]} : vector<12x128xf32> to vector<8x128xf32>
    %144 = vector.extract_strided_slice %140 {offsets = [3, 0], sizes = [8, 128], strides = [1, 1]} : vector<12x128xf32> to vector<8x128xf32>
    %145 = tpu.concatenate %141, %142, %143, %144 in 1 : vector<8x128xf32>, vector<8x128xf32>, vector<8x128xf32>, vector<8x128xf32> -> vector<8x512xf32>
    %146 = arith.truncf %145 : vector<8x512xf32> to vector<8x512xbf16>
    %cst_48 = arith.constant dense<0.000000e+00> : vector<8x128xf32>
    %147 = tpu.matmul %146, %12, %cst_48 {dimension_numbers = #tpu.dot_dimension_numbers<[1], [0], [0], [1], [0, 0, 1, 1], [], []>} : vector<8x512xbf16>, vector<512x128xbf16>, vector<8x128xf32> -> vector<8x128xf32>
    %148 = vector.broadcast %13 : vector<1x128xf32> to vector<8x128xf32>
    %149 = arith.addf %147, %148 : vector<8x128xf32>
    %cst_49 = arith.constant 0.000000e+00 : f32
    %150 = vector.broadcast %cst_49 : f32 to vector<8x128xf32>
    %151 = arith.maximumf %149, %150 : vector<8x128xf32>
    %152 = vector.broadcast %14 : vector<1x128xf32> to vector<8x128xf32>
    %153 = arith.mulf %151, %152 : vector<8x128xf32>
    %154 = vector.broadcast %15 : vector<1x128xf32> to vector<8x128xf32>
    %155 = arith.addf %153, %154 : vector<8x128xf32>
    %156 = arith.maximumf %137, %155 : vector<8x128xf32>
    %157 = vector.extract_strided_slice %156 {offsets = [0, 0], sizes = [1, 128], strides = [1, 1]} : vector<8x128xf32> to vector<1x128xf32>
    %c33 = arith.constant 33 : index
    %c0_50 = arith.constant 0 : index
    %158 = vector.load %arg17[%c33, %c0_50] : memref<192x128xf32, #tpu.memory_space<vmem>>, vector<1x128xf32>
    tpu.vector_store %arg17[%c33, %c0_50], %157 {strides = array<i32>} : memref<192x128xf32, #tpu.memory_space<vmem>>, vector<1x128xf32>,
    %159 = vector.extract_strided_slice %156 {offsets = [1, 0], sizes = [1, 128], strides = [1, 1]} : vector<8x128xf32> to vector<1x128xf32>
    %c49 = arith.constant 49 : index
    %c0_51 = arith.constant 0 : index
    %160 = vector.load %arg17[%c49, %c0_51] : memref<192x128xf32, #tpu.memory_space<vmem>>, vector<1x128xf32>
    tpu.vector_store %arg17[%c49, %c0_51], %159 {strides = array<i32>} : memref<192x128xf32, #tpu.memory_space<vmem>>, vector<1x128xf32>,
    %161 = vector.extract_strided_slice %156 {offsets = [2, 0], sizes = [1, 128], strides = [1, 1]} : vector<8x128xf32> to vector<1x128xf32>
    %c65 = arith.constant 65 : index
    %c0_52 = arith.constant 0 : index
    %162 = vector.load %arg17[%c65, %c0_52] : memref<192x128xf32, #tpu.memory_space<vmem>>, vector<1x128xf32>
    tpu.vector_store %arg17[%c65, %c0_52], %161 {strides = array<i32>} : memref<192x128xf32, #tpu.memory_space<vmem>>, vector<1x128xf32>,
    %163 = vector.extract_strided_slice %156 {offsets = [3, 0], sizes = [1, 128], strides = [1, 1]} : vector<8x128xf32> to vector<1x128xf32>
    %c81 = arith.constant 81 : index
    %c0_53 = arith.constant 0 : index
    %164 = vector.load %arg17[%c81, %c0_53] : memref<192x128xf32, #tpu.memory_space<vmem>>, vector<1x128xf32>
    tpu.vector_store %arg17[%c81, %c0_53], %163 {strides = array<i32>} : memref<192x128xf32, #tpu.memory_space<vmem>>, vector<1x128xf32>,
    %165 = vector.extract_strided_slice %156 {offsets = [4, 0], sizes = [1, 128], strides = [1, 1]} : vector<8x128xf32> to vector<1x128xf32>
    %c97 = arith.constant 97 : index
    %c0_54 = arith.constant 0 : index
    %166 = vector.load %arg17[%c97, %c0_54] : memref<192x128xf32, #tpu.memory_space<vmem>>, vector<1x128xf32>
    tpu.vector_store %arg17[%c97, %c0_54], %165 {strides = array<i32>} : memref<192x128xf32, #tpu.memory_space<vmem>>, vector<1x128xf32>,
    %167 = vector.extract_strided_slice %156 {offsets = [5, 0], sizes = [1, 128], strides = [1, 1]} : vector<8x128xf32> to vector<1x128xf32>
    %c113 = arith.constant 113 : index
    %c0_55 = arith.constant 0 : index
    %168 = vector.load %arg17[%c113, %c0_55] : memref<192x128xf32, #tpu.memory_space<vmem>>, vector<1x128xf32>
    tpu.vector_store %arg17[%c113, %c0_55], %167 {strides = array<i32>} : memref<192x128xf32, #tpu.memory_space<vmem>>, vector<1x128xf32>,
    %169 = vector.extract_strided_slice %156 {offsets = [6, 0], sizes = [1, 128], strides = [1, 1]} : vector<8x128xf32> to vector<1x128xf32>
    %c129 = arith.constant 129 : index
    %c0_56 = arith.constant 0 : index
    %170 = vector.load %arg17[%c129, %c0_56] : memref<192x128xf32, #tpu.memory_space<vmem>>, vector<1x128xf32>
    tpu.vector_store %arg17[%c129, %c0_56], %169 {strides = array<i32>} : memref<192x128xf32, #tpu.memory_space<vmem>>, vector<1x128xf32>,
    %171 = vector.extract_strided_slice %156 {offsets = [7, 0], sizes = [1, 128], strides = [1, 1]} : vector<8x128xf32> to vector<1x128xf32>
    %c145 = arith.constant 145 : index
    %c0_57 = arith.constant 0 : index
    %172 = vector.load %arg17[%c145, %c0_57] : memref<192x128xf32, #tpu.memory_space<vmem>>, vector<1x128xf32>
    tpu.vector_store %arg17[%c145, %c0_57], %171 {strides = array<i32>} : memref<192x128xf32, #tpu.memory_space<vmem>>, vector<1x128xf32>,
    %173 = vector.extract_strided_slice %11 {offsets = [0, 24], sizes = [12, 104], strides = [1, 1]} : vector<16x128xf32> to vector<12x104xf32>
    %174 = vector.extract_strided_slice %11 {offsets = [1, 0], sizes = [12, 24], strides = [1, 1]} : vector<16x128xf32> to vector<12x24xf32>
    %175 = tpu.concatenate %173, %174 in 1 : vector<12x104xf32>, vector<12x24xf32> -> vector<12x128xf32>
    %176 = vector.extract_strided_slice %175 {offsets = [0, 0], sizes = [8, 128], strides = [1, 1]} : vector<12x128xf32> to vector<8x128xf32>
    %177 = vector.extract_strided_slice %175 {offsets = [1, 0], sizes = [8, 128], strides = [1, 1]} : vector<12x128xf32> to vector<8x128xf32>
    %178 = vector.extract_strided_slice %175 {offsets = [2, 0], sizes = [8, 128], strides = [1, 1]} : vector<12x128xf32> to vector<8x128xf32>
    %179 = vector.extract_strided_slice %175 {offsets = [3, 0], sizes = [8, 128], strides = [1, 1]} : vector<12x128xf32> to vector<8x128xf32>
    %180 = tpu.concatenate %176, %177, %178, %179 in 1 : vector<8x128xf32>, vector<8x128xf32>, vector<8x128xf32>, vector<8x128xf32> -> vector<8x512xf32>
    %181 = arith.truncf %180 : vector<8x512xf32> to vector<8x512xbf16>
    %cst_58 = arith.constant dense<0.000000e+00> : vector<8x128xf32>
    %182 = tpu.matmul %181, %12, %cst_58 {dimension_numbers = #tpu.dot_dimension_numbers<[1], [0], [0], [1], [0, 0, 1, 1], [], []>} : vector<8x512xbf16>, vector<512x128xbf16>, vector<8x128xf32> -> vector<8x128xf32>
    %183 = vector.broadcast %13 : vector<1x128xf32> to vector<8x128xf32>
    %184 = arith.addf %182, %183 : vector<8x128xf32>
    %cst_59 = arith.constant 0.000000e+00 : f32
    %185 = vector.broadcast %cst_59 : f32 to vector<8x128xf32>
    %186 = arith.maximumf %184, %185 : vector<8x128xf32>
    %187 = vector.broadcast %14 : vector<1x128xf32> to vector<8x128xf32>
    %188 = arith.mulf %186, %187 : vector<8x128xf32>
    %189 = vector.broadcast %15 : vector<1x128xf32> to vector<8x128xf32>
    %190 = arith.addf %188, %189 : vector<8x128xf32>
    %191 = vector.extract_strided_slice %11 {offsets = [0, 28], sizes = [12, 100], strides = [1, 1]} : vector<16x128xf32> to vector<12x100xf32>
    %192 = vector.extract_strided_slice %11 {offsets = [1, 0], sizes = [12, 28], strides = [1, 1]} : vector<16x128xf32> to vector<12x28xf32>
    %193 = tpu.concatenate %191, %192 in 1 : vector<12x100xf32>, vector<12x28xf32> -> vector<12x128xf32>
    %194 = vector.extract_strided_slice %193 {offsets = [0, 0], sizes = [8, 128], strides = [1, 1]} : vector<12x128xf32> to vector<8x128xf32>
    %195 = vector.extract_strided_slice %193 {offsets = [1, 0], sizes = [8, 128], strides = [1, 1]} : vector<12x128xf32> to vector<8x128xf32>
    %196 = vector.extract_strided_slice %193 {offsets = [2, 0], sizes = [8, 128], strides = [1, 1]} : vector<12x128xf32> to vector<8x128xf32>
    %197 = vector.extract_strided_slice %193 {offsets = [3, 0], sizes = [8, 128], strides = [1, 1]} : vector<12x128xf32> to vector<8x128xf32>
    %198 = tpu.concatenate %194, %195, %196, %197 in 1 : vector<8x128xf32>, vector<8x128xf32>, vector<8x128xf32>, vector<8x128xf32> -> vector<8x512xf32>
    %199 = arith.truncf %198 : vector<8x512xf32> to vector<8x512xbf16>
    %cst_60 = arith.constant dense<0.000000e+00> : vector<8x128xf32>
    %200 = tpu.matmul %199, %12, %cst_60 {dimension_numbers = #tpu.dot_dimension_numbers<[1], [0], [0], [1], [0, 0, 1, 1], [], []>} : vector<8x512xbf16>, vector<512x128xbf16>, vector<8x128xf32> -> vector<8x128xf32>
    %201 = vector.broadcast %13 : vector<1x128xf32> to vector<8x128xf32>
    %202 = arith.addf %200, %201 : vector<8x128xf32>
    %cst_61 = arith.constant 0.000000e+00 : f32
    %203 = vector.broadcast %cst_61 : f32 to vector<8x128xf32>
    %204 = arith.maximumf %202, %203 : vector<8x128xf32>
    %205 = vector.broadcast %14 : vector<1x128xf32> to vector<8x128xf32>
    %206 = arith.mulf %204, %205 : vector<8x128xf32>
    %207 = vector.broadcast %15 : vector<1x128xf32> to vector<8x128xf32>
    %208 = arith.addf %206, %207 : vector<8x128xf32>
    %209 = arith.maximumf %190, %208 : vector<8x128xf32>
    %210 = vector.extract_strided_slice %209 {offsets = [0, 0], sizes = [1, 128], strides = [1, 1]} : vector<8x128xf32> to vector<1x128xf32>
    %c34 = arith.constant 34 : index
    %c0_62 = arith.constant 0 : index
    %211 = vector.load %arg17[%c34, %c0_62] : memref<192x128xf32, #tpu.memory_space<vmem>>, vector<1x128xf32>
    tpu.vector_store %arg17[%c34, %c0_62], %210 {strides = array<i32>} : memref<192x128xf32, #tpu.memory_space<vmem>>, vector<1x128xf32>,
    %212 = vector.extract_strided_slice %209 {offsets = [1, 0], sizes = [1, 128], strides = [1, 1]} : vector<8x128xf32> to vector<1x128xf32>
    %c50 = arith.constant 50 : index
    %c0_63 = arith.constant 0 : index
    %213 = vector.load %arg17[%c50, %c0_63] : memref<192x128xf32, #tpu.memory_space<vmem>>, vector<1x128xf32>
    tpu.vector_store %arg17[%c50, %c0_63], %212 {strides = array<i32>} : memref<192x128xf32, #tpu.memory_space<vmem>>, vector<1x128xf32>,
    %214 = vector.extract_strided_slice %209 {offsets = [2, 0], sizes = [1, 128], strides = [1, 1]} : vector<8x128xf32> to vector<1x128xf32>
    %c66 = arith.constant 66 : index
    %c0_64 = arith.constant 0 : index
    %215 = vector.load %arg17[%c66, %c0_64] : memref<192x128xf32, #tpu.memory_space<vmem>>, vector<1x128xf32>
    tpu.vector_store %arg17[%c66, %c0_64], %214 {strides = array<i32>} : memref<192x128xf32, #tpu.memory_space<vmem>>, vector<1x128xf32>,
    %216 = vector.extract_strided_slice %209 {offsets = [3, 0], sizes = [1, 128], strides = [1, 1]} : vector<8x128xf32> to vector<1x128xf32>
    %c82 = arith.constant 82 : index
    %c0_65 = arith.constant 0 : index
    %217 = vector.load %arg17[%c82, %c0_65] : memref<192x128xf32, #tpu.memory_space<vmem>>, vector<1x128xf32>
    tpu.vector_store %arg17[%c82, %c0_65], %216 {strides = array<i32>} : memref<192x128xf32, #tpu.memory_space<vmem>>, vector<1x128xf32>,
    %218 = vector.extract_strided_slice %209 {offsets = [4, 0], sizes = [1, 128], strides = [1, 1]} : vector<8x128xf32> to vector<1x128xf32>
    %c98 = arith.constant 98 : index
    %c0_66 = arith.constant 0 : index
    %219 = vector.load %arg17[%c98, %c0_66] : memref<192x128xf32, #tpu.memory_space<vmem>>, vector<1x128xf32>
    tpu.vector_store %arg17[%c98, %c0_66], %218 {strides = array<i32>} : memref<192x128xf32, #tpu.memory_space<vmem>>, vector<1x128xf32>,
    %220 = vector.extract_strided_slice %209 {offsets = [5, 0], sizes = [1, 128], strides = [1, 1]} : vector<8x128xf32> to vector<1x128xf32>
    %c114 = arith.constant 114 : index
    %c0_67 = arith.constant 0 : index
    %221 = vector.load %arg17[%c114, %c0_67] : memref<192x128xf32, #tpu.memory_space<vmem>>, vector<1x128xf32>
    tpu.vector_store %arg17[%c114, %c0_67], %220 {strides = array<i32>} : memref<192x128xf32, #tpu.memory_space<vmem>>, vector<1x128xf32>,
    %222 = vector.extract_strided_slice %209 {offsets = [6, 0], sizes = [1, 128], strides = [1, 1]} : vector<8x128xf32> to vector<1x128xf32>
    %c130 = arith.constant 130 : index
    %c0_68 = arith.constant 0 : index
    %223 = vector.load %arg17[%c130, %c0_68] : memref<192x128xf32, #tpu.memory_space<vmem>>, vector<1x128xf32>
    tpu.vector_store %arg17[%c130, %c0_68], %222 {strides = array<i32>} : memref<192x128xf32, #tpu.memory_space<vmem>>, vector<1x128xf32>,
    %224 = vector.extract_strided_slice %209 {offsets = [7, 0], sizes = [1, 128], strides = [1, 1]} : vector<8x128xf32> to vector<1x128xf32>
    %c146 = arith.constant 146 : index
    %c0_69 = arith.constant 0 : index
    %225 = vector.load %arg17[%c146, %c0_69] : memref<192x128xf32, #tpu.memory_space<vmem>>, vector<1x128xf32>
    tpu.vector_store %arg17[%c146, %c0_69], %224 {strides = array<i32>} : memref<192x128xf32, #tpu.memory_space<vmem>>, vector<1x128xf32>,
    %226 = vector.extract_strided_slice %11 {offsets = [0, 32], sizes = [12, 96], strides = [1, 1]} : vector<16x128xf32> to vector<12x96xf32>
    %227 = vector.extract_strided_slice %11 {offsets = [1, 0], sizes = [12, 32], strides = [1, 1]} : vector<16x128xf32> to vector<12x32xf32>
    %228 = tpu.concatenate %226, %227 in 1 : vector<12x96xf32>, vector<12x32xf32> -> vector<12x128xf32>
    %229 = vector.extract_strided_slice %228 {offsets = [0, 0], sizes = [8, 128], strides = [1, 1]} : vector<12x128xf32> to vector<8x128xf32>
    %230 = vector.extract_strided_slice %228 {offsets = [1, 0], sizes = [8, 128], strides = [1, 1]} : vector<12x128xf32> to vector<8x128xf32>
    %231 = vector.extract_strided_slice %228 {offsets = [2, 0], sizes = [8, 128], strides = [1, 1]} : vector<12x128xf32> to vector<8x128xf32>
    %232 = vector.extract_strided_slice %228 {offsets = [3, 0], sizes = [8, 128], strides = [1, 1]} : vector<12x128xf32> to vector<8x128xf32>
    %233 = tpu.concatenate %229, %230, %231, %232 in 1 : vector<8x128xf32>, vector<8x128xf32>, vector<8x128xf32>, vector<8x128xf32> -> vector<8x512xf32>
    %234 = arith.truncf %233 : vector<8x512xf32> to vector<8x512xbf16>
    %cst_70 = arith.constant dense<0.000000e+00> : vector<8x128xf32>
    %235 = tpu.matmul %234, %12, %cst_70 {dimension_numbers = #tpu.dot_dimension_numbers<[1], [0], [0], [1], [0, 0, 1, 1], [], []>} : vector<8x512xbf16>, vector<512x128xbf16>, vector<8x128xf32> -> vector<8x128xf32>
    %236 = vector.broadcast %13 : vector<1x128xf32> to vector<8x128xf32>
    %237 = arith.addf %235, %236 : vector<8x128xf32>
    %cst_71 = arith.constant 0.000000e+00 : f32
    %238 = vector.broadcast %cst_71 : f32 to vector<8x128xf32>
    %239 = arith.maximumf %237, %238 : vector<8x128xf32>
    %240 = vector.broadcast %14 : vector<1x128xf32> to vector<8x128xf32>
    %241 = arith.mulf %239, %240 : vector<8x128xf32>
    %242 = vector.broadcast %15 : vector<1x128xf32> to vector<8x128xf32>
    %243 = arith.addf %241, %242 : vector<8x128xf32>
    %244 = vector.extract_strided_slice %11 {offsets = [0, 36], sizes = [12, 92], strides = [1, 1]} : vector<16x128xf32> to vector<12x92xf32>
    %245 = vector.extract_strided_slice %11 {offsets = [1, 0], sizes = [12, 36], strides = [1, 1]} : vector<16x128xf32> to vector<12x36xf32>
    %246 = tpu.concatenate %244, %245 in 1 : vector<12x92xf32>, vector<12x36xf32> -> vector<12x128xf32>
    %247 = vector.extract_strided_slice %246 {offsets = [0, 0], sizes = [8, 128], strides = [1, 1]} : vector<12x128xf32> to vector<8x128xf32>
    %248 = vector.extract_strided_slice %246 {offsets = [1, 0], sizes = [8, 128], strides = [1, 1]} : vector<12x128xf32> to vector<8x128xf32>
    %249 = vector.extract_strided_slice %246 {offsets = [2, 0], sizes = [8, 128], strides = [1, 1]} : vector<12x128xf32> to vector<8x128xf32>
    %250 = vector.extract_strided_slice %246 {offsets = [3, 0], sizes = [8, 128], strides = [1, 1]} : vector<12x128xf32> to vector<8x128xf32>
    %251 = tpu.concatenate %247, %248, %249, %250 in 1 : vector<8x128xf32>, vector<8x128xf32>, vector<8x128xf32>, vector<8x128xf32> -> vector<8x512xf32>
    %252 = arith.truncf %251 : vector<8x512xf32> to vector<8x512xbf16>
    %cst_72 = arith.constant dense<0.000000e+00> : vector<8x128xf32>
    %253 = tpu.matmul %252, %12, %cst_72 {dimension_numbers = #tpu.dot_dimension_numbers<[1], [0], [0], [1], [0, 0, 1, 1], [], []>} : vector<8x512xbf16>, vector<512x128xbf16>, vector<8x128xf32> -> vector<8x128xf32>
    %254 = vector.broadcast %13 : vector<1x128xf32> to vector<8x128xf32>
    %255 = arith.addf %253, %254 : vector<8x128xf32>
    %cst_73 = arith.constant 0.000000e+00 : f32
    %256 = vector.broadcast %cst_73 : f32 to vector<8x128xf32>
    %257 = arith.maximumf %255, %256 : vector<8x128xf32>
    %258 = vector.broadcast %14 : vector<1x128xf32> to vector<8x128xf32>
    %259 = arith.mulf %257, %258 : vector<8x128xf32>
    %260 = vector.broadcast %15 : vector<1x128xf32> to vector<8x128xf32>
    %261 = arith.addf %259, %260 : vector<8x128xf32>
    %262 = arith.maximumf %243, %261 : vector<8x128xf32>
    %263 = vector.extract_strided_slice %262 {offsets = [0, 0], sizes = [1, 128], strides = [1, 1]} : vector<8x128xf32> to vector<1x128xf32>
    %c35 = arith.constant 35 : index
    %c0_74 = arith.constant 0 : index
    %264 = vector.load %arg17[%c35, %c0_74] : memref<192x128xf32, #tpu.memory_space<vmem>>, vector<1x128xf32>
    tpu.vector_store %arg17[%c35, %c0_74], %263 {strides = array<i32>} : memref<192x128xf32, #tpu.memory_space<vmem>>, vector<1x128xf32>,
    %265 = vector.extract_strided_slice %262 {offsets = [1, 0], sizes = [1, 128], strides = [1, 1]} : vector<8x128xf32> to vector<1x128xf32>
    %c51 = arith.constant 51 : index
    %c0_75 = arith.constant 0 : index
    %266 = vector.load %arg17[%c51, %c0_75] : memref<192x128xf32, #tpu.memory_space<vmem>>, vector<1x128xf32>
    tpu.vector_store %arg17[%c51, %c0_75], %265 {strides = array<i32>} : memref<192x128xf32, #tpu.memory_space<vmem>>, vector<1x128xf32>,
    %267 = vector.extract_strided_slice %262 {offsets = [2, 0], sizes = [1, 128], strides = [1, 1]} : vector<8x128xf32> to vector<1x128xf32>
    %c67 = arith.constant 67 : index
    %c0_76 = arith.constant 0 : index
    %268 = vector.load %arg17[%c67, %c0_76] : memref<192x128xf32, #tpu.memory_space<vmem>>, vector<1x128xf32>
    tpu.vector_store %arg17[%c67, %c0_76], %267 {strides = array<i32>} : memref<192x128xf32, #tpu.memory_space<vmem>>, vector<1x128xf32>,
    %269 = vector.extract_strided_slice %262 {offsets = [3, 0], sizes = [1, 128], strides = [1, 1]} : vector<8x128xf32> to vector<1x128xf32>
    %c83 = arith.constant 83 : index
    %c0_77 = arith.constant 0 : index
    %270 = vector.load %arg17[%c83, %c0_77] : memref<192x128xf32, #tpu.memory_space<vmem>>, vector<1x128xf32>
    tpu.vector_store %arg17[%c83, %c0_77], %269 {strides = array<i32>} : memref<192x128xf32, #tpu.memory_space<vmem>>, vector<1x128xf32>,
    %271 = vector.extract_strided_slice %262 {offsets = [4, 0], sizes = [1, 128], strides = [1, 1]} : vector<8x128xf32> to vector<1x128xf32>
    %c99 = arith.constant 99 : index
    %c0_78 = arith.constant 0 : index
    %272 = vector.load %arg17[%c99, %c0_78] : memref<192x128xf32, #tpu.memory_space<vmem>>, vector<1x128xf32>
    tpu.vector_store %arg17[%c99, %c0_78], %271 {strides = array<i32>} : memref<192x128xf32, #tpu.memory_space<vmem>>, vector<1x128xf32>,
    %273 = vector.extract_strided_slice %262 {offsets = [5, 0], sizes = [1, 128], strides = [1, 1]} : vector<8x128xf32> to vector<1x128xf32>
    %c115 = arith.constant 115 : index
    %c0_79 = arith.constant 0 : index
    %274 = vector.load %arg17[%c115, %c0_79] : memref<192x128xf32, #tpu.memory_space<vmem>>, vector<1x128xf32>
    tpu.vector_store %arg17[%c115, %c0_79], %273 {strides = array<i32>} : memref<192x128xf32, #tpu.memory_space<vmem>>, vector<1x128xf32>,
    %275 = vector.extract_strided_slice %262 {offsets = [6, 0], sizes = [1, 128], strides = [1, 1]} : vector<8x128xf32> to vector<1x128xf32>
    %c131 = arith.constant 131 : index
    %c0_80 = arith.constant 0 : index
    %276 = vector.load %arg17[%c131, %c0_80] : memref<192x128xf32, #tpu.memory_space<vmem>>, vector<1x128xf32>
    tpu.vector_store %arg17[%c131, %c0_80], %275 {strides = array<i32>} : memref<192x128xf32, #tpu.memory_space<vmem>>, vector<1x128xf32>,
    %277 = vector.extract_strided_slice %262 {offsets = [7, 0], sizes = [1, 128], strides = [1, 1]} : vector<8x128xf32> to vector<1x128xf32>
    %c147 = arith.constant 147 : index
    %c0_81 = arith.constant 0 : index
    %278 = vector.load %arg17[%c147, %c0_81] : memref<192x128xf32, #tpu.memory_space<vmem>>, vector<1x128xf32>
    tpu.vector_store %arg17[%c147, %c0_81], %277 {strides = array<i32>} : memref<192x128xf32, #tpu.memory_space<vmem>>, vector<1x128xf32>,
    %279 = vector.extract_strided_slice %11 {offsets = [0, 40], sizes = [12, 88], strides = [1, 1]} : vector<16x128xf32> to vector<12x88xf32>
    %280 = vector.extract_strided_slice %11 {offsets = [1, 0], sizes = [12, 40], strides = [1, 1]} : vector<16x128xf32> to vector<12x40xf32>
    %281 = tpu.concatenate %279, %280 in 1 : vector<12x88xf32>, vector<12x40xf32> -> vector<12x128xf32>
    %282 = vector.extract_strided_slice %281 {offsets = [0, 0], sizes = [8, 128], strides = [1, 1]} : vector<12x128xf32> to vector<8x128xf32>
    %283 = vector.extract_strided_slice %281 {offsets = [1, 0], sizes = [8, 128], strides = [1, 1]} : vector<12x128xf32> to vector<8x128xf32>
    %284 = vector.extract_strided_slice %281 {offsets = [2, 0], sizes = [8, 128], strides = [1, 1]} : vector<12x128xf32> to vector<8x128xf32>
    %285 = vector.extract_strided_slice %281 {offsets = [3, 0], sizes = [8, 128], strides = [1, 1]} : vector<12x128xf32> to vector<8x128xf32>
    %286 = tpu.concatenate %282, %283, %284, %285 in 1 : vector<8x128xf32>, vector<8x128xf32>, vector<8x128xf32>, vector<8x128xf32> -> vector<8x512xf32>
    %287 = arith.truncf %286 : vector<8x512xf32> to vector<8x512xbf16>
    %cst_82 = arith.constant dense<0.000000e+00> : vector<8x128xf32>
    %288 = tpu.matmul %287, %12, %cst_82 {dimension_numbers = #tpu.dot_dimension_numbers<[1], [0], [0], [1], [0, 0, 1, 1], [], []>} : vector<8x512xbf16>, vector<512x128xbf16>, vector<8x128xf32> -> vector<8x128xf32>
    %289 = vector.broadcast %13 : vector<1x128xf32> to vector<8x128xf32>
    %290 = arith.addf %288, %289 : vector<8x128xf32>
    %cst_83 = arith.constant 0.000000e+00 : f32
    %291 = vector.broadcast %cst_83 : f32 to vector<8x128xf32>
    %292 = arith.maximumf %290, %291 : vector<8x128xf32>
    %293 = vector.broadcast %14 : vector<1x128xf32> to vector<8x128xf32>
    %294 = arith.mulf %292, %293 : vector<8x128xf32>
    %295 = vector.broadcast %15 : vector<1x128xf32> to vector<8x128xf32>
    %296 = arith.addf %294, %295 : vector<8x128xf32>
    %297 = vector.extract_strided_slice %11 {offsets = [0, 44], sizes = [12, 84], strides = [1, 1]} : vector<16x128xf32> to vector<12x84xf32>
    %298 = vector.extract_strided_slice %11 {offsets = [1, 0], sizes = [12, 44], strides = [1, 1]} : vector<16x128xf32> to vector<12x44xf32>
    %299 = tpu.concatenate %297, %298 in 1 : vector<12x84xf32>, vector<12x44xf32> -> vector<12x128xf32>
    %300 = vector.extract_strided_slice %299 {offsets = [0, 0], sizes = [8, 128], strides = [1, 1]} : vector<12x128xf32> to vector<8x128xf32>
    %301 = vector.extract_strided_slice %299 {offsets = [1, 0], sizes = [8, 128], strides = [1, 1]} : vector<12x128xf32> to vector<8x128xf32>
    %302 = vector.extract_strided_slice %299 {offsets = [2, 0], sizes = [8, 128], strides = [1, 1]} : vector<12x128xf32> to vector<8x128xf32>
    %303 = vector.extract_strided_slice %299 {offsets = [3, 0], sizes = [8, 128], strides = [1, 1]} : vector<12x128xf32> to vector<8x128xf32>
    %304 = tpu.concatenate %300, %301, %302, %303 in 1 : vector<8x128xf32>, vector<8x128xf32>, vector<8x128xf32>, vector<8x128xf32> -> vector<8x512xf32>
    %305 = arith.truncf %304 : vector<8x512xf32> to vector<8x512xbf16>
    %cst_84 = arith.constant dense<0.000000e+00> : vector<8x128xf32>
    %306 = tpu.matmul %305, %12, %cst_84 {dimension_numbers = #tpu.dot_dimension_numbers<[1], [0], [0], [1], [0, 0, 1, 1], [], []>} : vector<8x512xbf16>, vector<512x128xbf16>, vector<8x128xf32> -> vector<8x128xf32>
    %307 = vector.broadcast %13 : vector<1x128xf32> to vector<8x128xf32>
    %308 = arith.addf %306, %307 : vector<8x128xf32>
    %cst_85 = arith.constant 0.000000e+00 : f32
    %309 = vector.broadcast %cst_85 : f32 to vector<8x128xf32>
    %310 = arith.maximumf %308, %309 : vector<8x128xf32>
    %311 = vector.broadcast %14 : vector<1x128xf32> to vector<8x128xf32>
    %312 = arith.mulf %310, %311 : vector<8x128xf32>
    %313 = vector.broadcast %15 : vector<1x128xf32> to vector<8x128xf32>
    %314 = arith.addf %312, %313 : vector<8x128xf32>
    %315 = arith.maximumf %296, %314 : vector<8x128xf32>
    %316 = vector.extract_strided_slice %315 {offsets = [0, 0], sizes = [1, 128], strides = [1, 1]} : vector<8x128xf32> to vector<1x128xf32>
    %c36 = arith.constant 36 : index
    %c0_86 = arith.constant 0 : index
    %317 = vector.load %arg17[%c36, %c0_86] : memref<192x128xf32, #tpu.memory_space<vmem>>, vector<1x128xf32>
    tpu.vector_store %arg17[%c36, %c0_86], %316 {strides = array<i32>} : memref<192x128xf32, #tpu.memory_space<vmem>>, vector<1x128xf32>,
    %318 = vector.extract_strided_slice %315 {offsets = [1, 0], sizes = [1, 128], strides = [1, 1]} : vector<8x128xf32> to vector<1x128xf32>
    %c52 = arith.constant 52 : index
    %c0_87 = arith.constant 0 : index
    %319 = vector.load %arg17[%c52, %c0_87] : memref<192x128xf32, #tpu.memory_space<vmem>>, vector<1x128xf32>
    tpu.vector_store %arg17[%c52, %c0_87], %318 {strides = array<i32>} : memref<192x128xf32, #tpu.memory_space<vmem>>, vector<1x128xf32>,
    %320 = vector.extract_strided_slice %315 {offsets = [2, 0], sizes = [1, 128], strides = [1, 1]} : vector<8x128xf32> to vector<1x128xf32>
    %c68 = arith.constant 68 : index
    %c0_88 = arith.constant 0 : index
    %321 = vector.load %arg17[%c68, %c0_88] : memref<192x128xf32, #tpu.memory_space<vmem>>, vector<1x128xf32>
    tpu.vector_store %arg17[%c68, %c0_88], %320 {strides = array<i32>} : memref<192x128xf32, #tpu.memory_space<vmem>>, vector<1x128xf32>,
    %322 = vector.extract_strided_slice %315 {offsets = [3, 0], sizes = [1, 128], strides = [1, 1]} : vector<8x128xf32> to vector<1x128xf32>
    %c84 = arith.constant 84 : index
    %c0_89 = arith.constant 0 : index
    %323 = vector.load %arg17[%c84, %c0_89] : memref<192x128xf32, #tpu.memory_space<vmem>>, vector<1x128xf32>
    tpu.vector_store %arg17[%c84, %c0_89], %322 {strides = array<i32>} : memref<192x128xf32, #tpu.memory_space<vmem>>, vector<1x128xf32>,
    %324 = vector.extract_strided_slice %315 {offsets = [4, 0], sizes = [1, 128], strides = [1, 1]} : vector<8x128xf32> to vector<1x128xf32>
    %c100 = arith.constant 100 : index
    %c0_90 = arith.constant 0 : index
    %325 = vector.load %arg17[%c100, %c0_90] : memref<192x128xf32, #tpu.memory_space<vmem>>, vector<1x128xf32>
    tpu.vector_store %arg17[%c100, %c0_90], %324 {strides = array<i32>} : memref<192x128xf32, #tpu.memory_space<vmem>>, vector<1x128xf32>,
    %326 = vector.extract_strided_slice %315 {offsets = [5, 0], sizes = [1, 128], strides = [1, 1]} : vector<8x128xf32> to vector<1x128xf32>
    %c116 = arith.constant 116 : index
    %c0_91 = arith.constant 0 : index
    %327 = vector.load %arg17[%c116, %c0_91] : memref<192x128xf32, #tpu.memory_space<vmem>>, vector<1x128xf32>
    tpu.vector_store %arg17[%c116, %c0_91], %326 {strides = array<i32>} : memref<192x128xf32, #tpu.memory_space<vmem>>, vector<1x128xf32>,
    %328 = vector.extract_strided_slice %315 {offsets = [6, 0], sizes = [1, 128], strides = [1, 1]} : vector<8x128xf32> to vector<1x128xf32>
    %c132 = arith.constant 132 : index
    %c0_92 = arith.constant 0 : index
    %329 = vector.load %arg17[%c132, %c0_92] : memref<192x128xf32, #tpu.memory_space<vmem>>, vector<1x128xf32>
    tpu.vector_store %arg17[%c132, %c0_92], %328 {strides = array<i32>} : memref<192x128xf32, #tpu.memory_space<vmem>>, vector<1x128xf32>,
    %330 = vector.extract_strided_slice %315 {offsets = [7, 0], sizes = [1, 128], strides = [1, 1]} : vector<8x128xf32> to vector<1x128xf32>
    %c148 = arith.constant 148 : index
    %c0_93 = arith.constant 0 : index
    %331 = vector.load %arg17[%c148, %c0_93] : memref<192x128xf32, #tpu.memory_space<vmem>>, vector<1x128xf32>
    tpu.vector_store %arg17[%c148, %c0_93], %330 {strides = array<i32>} : memref<192x128xf32, #tpu.memory_space<vmem>>, vector<1x128xf32>,
    %332 = vector.extract_strided_slice %11 {offsets = [0, 48], sizes = [12, 80], strides = [1, 1]} : vector<16x128xf32> to vector<12x80xf32>
    %333 = vector.extract_strided_slice %11 {offsets = [1, 0], sizes = [12, 48], strides = [1, 1]} : vector<16x128xf32> to vector<12x48xf32>
    %334 = tpu.concatenate %332, %333 in 1 : vector<12x80xf32>, vector<12x48xf32> -> vector<12x128xf32>
    %335 = vector.extract_strided_slice %334 {offsets = [0, 0], sizes = [8, 128], strides = [1, 1]} : vector<12x128xf32> to vector<8x128xf32>
    %336 = vector.extract_strided_slice %334 {offsets = [1, 0], sizes = [8, 128], strides = [1, 1]} : vector<12x128xf32> to vector<8x128xf32>
    %337 = vector.extract_strided_slice %334 {offsets = [2, 0], sizes = [8, 128], strides = [1, 1]} : vector<12x128xf32> to vector<8x128xf32>
    %338 = vector.extract_strided_slice %334 {offsets = [3, 0], sizes = [8, 128], strides = [1, 1]} : vector<12x128xf32> to vector<8x128xf32>
    %339 = tpu.concatenate %335, %336, %337, %338 in 1 : vector<8x128xf32>, vector<8x128xf32>, vector<8x128xf32>, vector<8x128xf32> -> vector<8x512xf32>
    %340 = arith.truncf %339 : vector<8x512xf32> to vector<8x512xbf16>
    %cst_94 = arith.constant dense<0.000000e+00> : vector<8x128xf32>
    %341 = tpu.matmul %340, %12, %cst_94 {dimension_numbers = #tpu.dot_dimension_numbers<[1], [0], [0], [1], [0, 0, 1, 1], [], []>} : vector<8x512xbf16>, vector<512x128xbf16>, vector<8x128xf32> -> vector<8x128xf32>
    %342 = vector.broadcast %13 : vector<1x128xf32> to vector<8x128xf32>
    %343 = arith.addf %341, %342 : vector<8x128xf32>
    %cst_95 = arith.constant 0.000000e+00 : f32
    %344 = vector.broadcast %cst_95 : f32 to vector<8x128xf32>
    %345 = arith.maximumf %343, %344 : vector<8x128xf32>
    %346 = vector.broadcast %14 : vector<1x128xf32> to vector<8x128xf32>
    %347 = arith.mulf %345, %346 : vector<8x128xf32>
    %348 = vector.broadcast %15 : vector<1x128xf32> to vector<8x128xf32>
    %349 = arith.addf %347, %348 : vector<8x128xf32>
    %350 = vector.extract_strided_slice %11 {offsets = [0, 52], sizes = [12, 76], strides = [1, 1]} : vector<16x128xf32> to vector<12x76xf32>
    %351 = vector.extract_strided_slice %11 {offsets = [1, 0], sizes = [12, 52], strides = [1, 1]} : vector<16x128xf32> to vector<12x52xf32>
    %352 = tpu.concatenate %350, %351 in 1 : vector<12x76xf32>, vector<12x52xf32> -> vector<12x128xf32>
    %353 = vector.extract_strided_slice %352 {offsets = [0, 0], sizes = [8, 128], strides = [1, 1]} : vector<12x128xf32> to vector<8x128xf32>
    %354 = vector.extract_strided_slice %352 {offsets = [1, 0], sizes = [8, 128], strides = [1, 1]} : vector<12x128xf32> to vector<8x128xf32>
    %355 = vector.extract_strided_slice %352 {offsets = [2, 0], sizes = [8, 128], strides = [1, 1]} : vector<12x128xf32> to vector<8x128xf32>
    %356 = vector.extract_strided_slice %352 {offsets = [3, 0], sizes = [8, 128], strides = [1, 1]} : vector<12x128xf32> to vector<8x128xf32>
    %357 = tpu.concatenate %353, %354, %355, %356 in 1 : vector<8x128xf32>, vector<8x128xf32>, vector<8x128xf32>, vector<8x128xf32> -> vector<8x512xf32>
    %358 = arith.truncf %357 : vector<8x512xf32> to vector<8x512xbf16>
    %cst_96 = arith.constant dense<0.000000e+00> : vector<8x128xf32>
    %359 = tpu.matmul %358, %12, %cst_96 {dimension_numbers = #tpu.dot_dimension_numbers<[1], [0], [0], [1], [0, 0, 1, 1], [], []>} : vector<8x512xbf16>, vector<512x128xbf16>, vector<8x128xf32> -> vector<8x128xf32>
    %360 = vector.broadcast %13 : vector<1x128xf32> to vector<8x128xf32>
    %361 = arith.addf %359, %360 : vector<8x128xf32>
    %cst_97 = arith.constant 0.000000e+00 : f32
    %362 = vector.broadcast %cst_97 : f32 to vector<8x128xf32>
    %363 = arith.maximumf %361, %362 : vector<8x128xf32>
    %364 = vector.broadcast %14 : vector<1x128xf32> to vector<8x128xf32>
    %365 = arith.mulf %363, %364 : vector<8x128xf32>
    %366 = vector.broadcast %15 : vector<1x128xf32> to vector<8x128xf32>
    %367 = arith.addf %365, %366 : vector<8x128xf32>
    %368 = arith.maximumf %349, %367 : vector<8x128xf32>
    %369 = vector.extract_strided_slice %368 {offsets = [0, 0], sizes = [1, 128], strides = [1, 1]} : vector<8x128xf32> to vector<1x128xf32>
    %c37 = arith.constant 37 : index
    %c0_98 = arith.constant 0 : index
    %370 = vector.load %arg17[%c37, %c0_98] : memref<192x128xf32, #tpu.memory_space<vmem>>, vector<1x128xf32>
    tpu.vector_store %arg17[%c37, %c0_98], %369 {strides = array<i32>} : memref<192x128xf32, #tpu.memory_space<vmem>>, vector<1x128xf32>,
    %371 = vector.extract_strided_slice %368 {offsets = [1, 0], sizes = [1, 128], strides = [1, 1]} : vector<8x128xf32> to vector<1x128xf32>
    %c53 = arith.constant 53 : index
    %c0_99 = arith.constant 0 : index
    %372 = vector.load %arg17[%c53, %c0_99] : memref<192x128xf32, #tpu.memory_space<vmem>>, vector<1x128xf32>
    tpu.vector_store %arg17[%c53, %c0_99], %371 {strides = array<i32>} : memref<192x128xf32, #tpu.memory_space<vmem>>, vector<1x128xf32>,
    %373 = vector.extract_strided_slice %368 {offsets = [2, 0], sizes = [1, 128], strides = [1, 1]} : vector<8x128xf32> to vector<1x128xf32>
    %c69 = arith.constant 69 : index
    %c0_100 = arith.constant 0 : index
    %374 = vector.load %arg17[%c69, %c0_100] : memref<192x128xf32, #tpu.memory_space<vmem>>, vector<1x128xf32>
    tpu.vector_store %arg17[%c69, %c0_100], %373 {strides = array<i32>} : memref<192x128xf32, #tpu.memory_space<vmem>>, vector<1x128xf32>,
    %375 = vector.extract_strided_slice %368 {offsets = [3, 0], sizes = [1, 128], strides = [1, 1]} : vector<8x128xf32> to vector<1x128xf32>
    %c85 = arith.constant 85 : index
    %c0_101 = arith.constant 0 : index
    %376 = vector.load %arg17[%c85, %c0_101] : memref<192x128xf32, #tpu.memory_space<vmem>>, vector<1x128xf32>
    tpu.vector_store %arg17[%c85, %c0_101], %375 {strides = array<i32>} : memref<192x128xf32, #tpu.memory_space<vmem>>, vector<1x128xf32>,
    %377 = vector.extract_strided_slice %368 {offsets = [4, 0], sizes = [1, 128], strides = [1, 1]} : vector<8x128xf32> to vector<1x128xf32>
    %c101 = arith.constant 101 : index
    %c0_102 = arith.constant 0 : index
    %378 = vector.load %arg17[%c101, %c0_102] : memref<192x128xf32, #tpu.memory_space<vmem>>, vector<1x128xf32>
    tpu.vector_store %arg17[%c101, %c0_102], %377 {strides = array<i32>} : memref<192x128xf32, #tpu.memory_space<vmem>>, vector<1x128xf32>,
    %379 = vector.extract_strided_slice %368 {offsets = [5, 0], sizes = [1, 128], strides = [1, 1]} : vector<8x128xf32> to vector<1x128xf32>
    %c117 = arith.constant 117 : index
    %c0_103 = arith.constant 0 : index
    %380 = vector.load %arg17[%c117, %c0_103] : memref<192x128xf32, #tpu.memory_space<vmem>>, vector<1x128xf32>
    tpu.vector_store %arg17[%c117, %c0_103], %379 {strides = array<i32>} : memref<192x128xf32, #tpu.memory_space<vmem>>, vector<1x128xf32>,
    %381 = vector.extract_strided_slice %368 {offsets = [6, 0], sizes = [1, 128], strides = [1, 1]} : vector<8x128xf32> to vector<1x128xf32>
    %c133 = arith.constant 133 : index
    %c0_104 = arith.constant 0 : index
    %382 = vector.load %arg17[%c133, %c0_104] : memref<192x128xf32, #tpu.memory_space<vmem>>, vector<1x128xf32>
    tpu.vector_store %arg17[%c133, %c0_104], %381 {strides = array<i32>} : memref<192x128xf32, #tpu.memory_space<vmem>>, vector<1x128xf32>,
    %383 = vector.extract_strided_slice %368 {offsets = [7, 0], sizes = [1, 128], strides = [1, 1]} : vector<8x128xf32> to vector<1x128xf32>
    %c149 = arith.constant 149 : index
    %c0_105 = arith.constant 0 : index
    %384 = vector.load %arg17[%c149, %c0_105] : memref<192x128xf32, #tpu.memory_space<vmem>>, vector<1x128xf32>
    tpu.vector_store %arg17[%c149, %c0_105], %383 {strides = array<i32>} : memref<192x128xf32, #tpu.memory_space<vmem>>, vector<1x128xf32>,
    %385 = vector.extract_strided_slice %11 {offsets = [0, 56], sizes = [12, 72], strides = [1, 1]} : vector<16x128xf32> to vector<12x72xf32>
    %386 = vector.extract_strided_slice %11 {offsets = [1, 0], sizes = [12, 56], strides = [1, 1]} : vector<16x128xf32> to vector<12x56xf32>
    %387 = tpu.concatenate %385, %386 in 1 : vector<12x72xf32>, vector<12x56xf32> -> vector<12x128xf32>
    %388 = vector.extract_strided_slice %387 {offsets = [0, 0], sizes = [8, 128], strides = [1, 1]} : vector<12x128xf32> to vector<8x128xf32>
    %389 = vector.extract_strided_slice %387 {offsets = [1, 0], sizes = [8, 128], strides = [1, 1]} : vector<12x128xf32> to vector<8x128xf32>
    %390 = vector.extract_strided_slice %387 {offsets = [2, 0], sizes = [8, 128], strides = [1, 1]} : vector<12x128xf32> to vector<8x128xf32>
    %391 = vector.extract_strided_slice %387 {offsets = [3, 0], sizes = [8, 128], strides = [1, 1]} : vector<12x128xf32> to vector<8x128xf32>
    %392 = tpu.concatenate %388, %389, %390, %391 in 1 : vector<8x128xf32>, vector<8x128xf32>, vector<8x128xf32>, vector<8x128xf32> -> vector<8x512xf32>
    %393 = arith.truncf %392 : vector<8x512xf32> to vector<8x512xbf16>
    %cst_106 = arith.constant dense<0.000000e+00> : vector<8x128xf32>
    %394 = tpu.matmul %393, %12, %cst_106 {dimension_numbers = #tpu.dot_dimension_numbers<[1], [0], [0], [1], [0, 0, 1, 1], [], []>} : vector<8x512xbf16>, vector<512x128xbf16>, vector<8x128xf32> -> vector<8x128xf32>
    %395 = vector.broadcast %13 : vector<1x128xf32> to vector<8x128xf32>
    %396 = arith.addf %394, %395 : vector<8x128xf32>
    %cst_107 = arith.constant 0.000000e+00 : f32
    %397 = vector.broadcast %cst_107 : f32 to vector<8x128xf32>
    %398 = arith.maximumf %396, %397 : vector<8x128xf32>
    %399 = vector.broadcast %14 : vector<1x128xf32> to vector<8x128xf32>
    %400 = arith.mulf %398, %399 : vector<8x128xf32>
    %401 = vector.broadcast %15 : vector<1x128xf32> to vector<8x128xf32>
    %402 = arith.addf %400, %401 : vector<8x128xf32>
    %403 = vector.extract_strided_slice %11 {offsets = [0, 60], sizes = [12, 68], strides = [1, 1]} : vector<16x128xf32> to vector<12x68xf32>
    %404 = vector.extract_strided_slice %11 {offsets = [1, 0], sizes = [12, 60], strides = [1, 1]} : vector<16x128xf32> to vector<12x60xf32>
    %405 = tpu.concatenate %403, %404 in 1 : vector<12x68xf32>, vector<12x60xf32> -> vector<12x128xf32>
    %406 = vector.extract_strided_slice %405 {offsets = [0, 0], sizes = [8, 128], strides = [1, 1]} : vector<12x128xf32> to vector<8x128xf32>
    %407 = vector.extract_strided_slice %405 {offsets = [1, 0], sizes = [8, 128], strides = [1, 1]} : vector<12x128xf32> to vector<8x128xf32>
    %408 = vector.extract_strided_slice %405 {offsets = [2, 0], sizes = [8, 128], strides = [1, 1]} : vector<12x128xf32> to vector<8x128xf32>
    %409 = vector.extract_strided_slice %405 {offsets = [3, 0], sizes = [8, 128], strides = [1, 1]} : vector<12x128xf32> to vector<8x128xf32>
    %410 = tpu.concatenate %406, %407, %408, %409 in 1 : vector<8x128xf32>, vector<8x128xf32>, vector<8x128xf32>, vector<8x128xf32> -> vector<8x512xf32>
    %411 = arith.truncf %410 : vector<8x512xf32> to vector<8x512xbf16>
    %cst_108 = arith.constant dense<0.000000e+00> : vector<8x128xf32>
    %412 = tpu.matmul %411, %12, %cst_108 {dimension_numbers = #tpu.dot_dimension_numbers<[1], [0], [0], [1], [0, 0, 1, 1], [], []>} : vector<8x512xbf16>, vector<512x128xbf16>, vector<8x128xf32> -> vector<8x128xf32>
    %413 = vector.broadcast %13 : vector<1x128xf32> to vector<8x128xf32>
    %414 = arith.addf %412, %413 : vector<8x128xf32>
    %cst_109 = arith.constant 0.000000e+00 : f32
    %415 = vector.broadcast %cst_109 : f32 to vector<8x128xf32>
    %416 = arith.maximumf %414, %415 : vector<8x128xf32>
    %417 = vector.broadcast %14 : vector<1x128xf32> to vector<8x128xf32>
    %418 = arith.mulf %416, %417 : vector<8x128xf32>
    %419 = vector.broadcast %15 : vector<1x128xf32> to vector<8x128xf32>
    %420 = arith.addf %418, %419 : vector<8x128xf32>
    %421 = arith.maximumf %402, %420 : vector<8x128xf32>
    %422 = vector.extract_strided_slice %421 {offsets = [0, 0], sizes = [1, 128], strides = [1, 1]} : vector<8x128xf32> to vector<1x128xf32>
    %c38 = arith.constant 38 : index
    %c0_110 = arith.constant 0 : index
    %423 = vector.load %arg17[%c38, %c0_110] : memref<192x128xf32, #tpu.memory_space<vmem>>, vector<1x128xf32>
    tpu.vector_store %arg17[%c38, %c0_110], %422 {strides = array<i32>} : memref<192x128xf32, #tpu.memory_space<vmem>>, vector<1x128xf32>,
    %424 = vector.extract_strided_slice %421 {offsets = [1, 0], sizes = [1, 128], strides = [1, 1]} : vector<8x128xf32> to vector<1x128xf32>
    %c54 = arith.constant 54 : index
    %c0_111 = arith.constant 0 : index
    %425 = vector.load %arg17[%c54, %c0_111] : memref<192x128xf32, #tpu.memory_space<vmem>>, vector<1x128xf32>
    tpu.vector_store %arg17[%c54, %c0_111], %424 {strides = array<i32>} : memref<192x128xf32, #tpu.memory_space<vmem>>, vector<1x128xf32>,
    %426 = vector.extract_strided_slice %421 {offsets = [2, 0], sizes = [1, 128], strides = [1, 1]} : vector<8x128xf32> to vector<1x128xf32>
    %c70 = arith.constant 70 : index
    %c0_112 = arith.constant 0 : index
    %427 = vector.load %arg17[%c70, %c0_112] : memref<192x128xf32, #tpu.memory_space<vmem>>, vector<1x128xf32>
    tpu.vector_store %arg17[%c70, %c0_112], %426 {strides = array<i32>} : memref<192x128xf32, #tpu.memory_space<vmem>>, vector<1x128xf32>,
    %428 = vector.extract_strided_slice %421 {offsets = [3, 0], sizes = [1, 128], strides = [1, 1]} : vector<8x128xf32> to vector<1x128xf32>
    %c86 = arith.constant 86 : index
    %c0_113 = arith.constant 0 : index
    %429 = vector.load %arg17[%c86, %c0_113] : memref<192x128xf32, #tpu.memory_space<vmem>>, vector<1x128xf32>
    tpu.vector_store %arg17[%c86, %c0_113], %428 {strides = array<i32>} : memref<192x128xf32, #tpu.memory_space<vmem>>, vector<1x128xf32>,
    %430 = vector.extract_strided_slice %421 {offsets = [4, 0], sizes = [1, 128], strides = [1, 1]} : vector<8x128xf32> to vector<1x128xf32>
    %c102 = arith.constant 102 : index
    %c0_114 = arith.constant 0 : index
    %431 = vector.load %arg17[%c102, %c0_114] : memref<192x128xf32, #tpu.memory_space<vmem>>, vector<1x128xf32>
    tpu.vector_store %arg17[%c102, %c0_114], %430 {strides = array<i32>} : memref<192x128xf32, #tpu.memory_space<vmem>>, vector<1x128xf32>,
    %432 = vector.extract_strided_slice %421 {offsets = [5, 0], sizes = [1, 128], strides = [1, 1]} : vector<8x128xf32> to vector<1x128xf32>
    %c118 = arith.constant 118 : index
    %c0_115 = arith.constant 0 : index
    %433 = vector.load %arg17[%c118, %c0_115] : memref<192x128xf32, #tpu.memory_space<vmem>>, vector<1x128xf32>
    tpu.vector_store %arg17[%c118, %c0_115], %432 {strides = array<i32>} : memref<192x128xf32, #tpu.memory_space<vmem>>, vector<1x128xf32>,
    %434 = vector.extract_strided_slice %421 {offsets = [6, 0], sizes = [1, 128], strides = [1, 1]} : vector<8x128xf32> to vector<1x128xf32>
    %c134 = arith.constant 134 : index
    %c0_116 = arith.constant 0 : index
    %435 = vector.load %arg17[%c134, %c0_116] : memref<192x128xf32, #tpu.memory_space<vmem>>, vector<1x128xf32>
    tpu.vector_store %arg17[%c134, %c0_116], %434 {strides = array<i32>} : memref<192x128xf32, #tpu.memory_space<vmem>>, vector<1x128xf32>,
    %436 = vector.extract_strided_slice %421 {offsets = [7, 0], sizes = [1, 128], strides = [1, 1]} : vector<8x128xf32> to vector<1x128xf32>
    %c150 = arith.constant 150 : index
    %c0_117 = arith.constant 0 : index
    %437 = vector.load %arg17[%c150, %c0_117] : memref<192x128xf32, #tpu.memory_space<vmem>>, vector<1x128xf32>
    tpu.vector_store %arg17[%c150, %c0_117], %436 {strides = array<i32>} : memref<192x128xf32, #tpu.memory_space<vmem>>, vector<1x128xf32>,
    %438 = vector.extract_strided_slice %11 {offsets = [0, 64], sizes = [12, 64], strides = [1, 1]} : vector<16x128xf32> to vector<12x64xf32>
    %439 = vector.extract_strided_slice %11 {offsets = [1, 0], sizes = [12, 64], strides = [1, 1]} : vector<16x128xf32> to vector<12x64xf32>
    %440 = tpu.concatenate %438, %439 in 1 : vector<12x64xf32>, vector<12x64xf32> -> vector<12x128xf32>
    %441 = vector.extract_strided_slice %440 {offsets = [0, 0], sizes = [8, 128], strides = [1, 1]} : vector<12x128xf32> to vector<8x128xf32>
    %442 = vector.extract_strided_slice %440 {offsets = [1, 0], sizes = [8, 128], strides = [1, 1]} : vector<12x128xf32> to vector<8x128xf32>
    %443 = vector.extract_strided_slice %440 {offsets = [2, 0], sizes = [8, 128], strides = [1, 1]} : vector<12x128xf32> to vector<8x128xf32>
    %444 = vector.extract_strided_slice %440 {offsets = [3, 0], sizes = [8, 128], strides = [1, 1]} : vector<12x128xf32> to vector<8x128xf32>
    %445 = tpu.concatenate %441, %442, %443, %444 in 1 : vector<8x128xf32>, vector<8x128xf32>, vector<8x128xf32>, vector<8x128xf32> -> vector<8x512xf32>
    %446 = arith.truncf %445 : vector<8x512xf32> to vector<8x512xbf16>
    %cst_118 = arith.constant dense<0.000000e+00> : vector<8x128xf32>
    %447 = tpu.matmul %446, %12, %cst_118 {dimension_numbers = #tpu.dot_dimension_numbers<[1], [0], [0], [1], [0, 0, 1, 1], [], []>} : vector<8x512xbf16>, vector<512x128xbf16>, vector<8x128xf32> -> vector<8x128xf32>
    %448 = vector.broadcast %13 : vector<1x128xf32> to vector<8x128xf32>
    %449 = arith.addf %447, %448 : vector<8x128xf32>
    %cst_119 = arith.constant 0.000000e+00 : f32
    %450 = vector.broadcast %cst_119 : f32 to vector<8x128xf32>
    %451 = arith.maximumf %449, %450 : vector<8x128xf32>
    %452 = vector.broadcast %14 : vector<1x128xf32> to vector<8x128xf32>
    %453 = arith.mulf %451, %452 : vector<8x128xf32>
    %454 = vector.broadcast %15 : vector<1x128xf32> to vector<8x128xf32>
    %455 = arith.addf %453, %454 : vector<8x128xf32>
    %456 = vector.extract_strided_slice %11 {offsets = [0, 68], sizes = [12, 60], strides = [1, 1]} : vector<16x128xf32> to vector<12x60xf32>
    %457 = vector.extract_strided_slice %11 {offsets = [1, 0], sizes = [12, 68], strides = [1, 1]} : vector<16x128xf32> to vector<12x68xf32>
    %458 = tpu.concatenate %456, %457 in 1 : vector<12x60xf32>, vector<12x68xf32> -> vector<12x128xf32>
    %459 = vector.extract_strided_slice %458 {offsets = [0, 0], sizes = [8, 128], strides = [1, 1]} : vector<12x128xf32> to vector<8x128xf32>
    %460 = vector.extract_strided_slice %458 {offsets = [1, 0], sizes = [8, 128], strides = [1, 1]} : vector<12x128xf32> to vector<8x128xf32>
    %461 = vector.extract_strided_slice %458 {offsets = [2, 0], sizes = [8, 128], strides = [1, 1]} : vector<12x128xf32> to vector<8x128xf32>
    %462 = vector.extract_strided_slice %458 {offsets = [3, 0], sizes = [8, 128], strides = [1, 1]} : vector<12x128xf32> to vector<8x128xf32>
    %463 = tpu.concatenate %459, %460, %461, %462 in 1 : vector<8x128xf32>, vector<8x128xf32>, vector<8x128xf32>, vector<8x128xf32> -> vector<8x512xf32>
    %464 = arith.truncf %463 : vector<8x512xf32> to vector<8x512xbf16>
    %cst_120 = arith.constant dense<0.000000e+00> : vector<8x128xf32>
    %465 = tpu.matmul %464, %12, %cst_120 {dimension_numbers = #tpu.dot_dimension_numbers<[1], [0], [0], [1], [0, 0, 1, 1], [], []>} : vector<8x512xbf16>, vector<512x128xbf16>, vector<8x128xf32> -> vector<8x128xf32>
    %466 = vector.broadcast %13 : vector<1x128xf32> to vector<8x128xf32>
    %467 = arith.addf %465, %466 : vector<8x128xf32>
    %cst_121 = arith.constant 0.000000e+00 : f32
    %468 = vector.broadcast %cst_121 : f32 to vector<8x128xf32>
    %469 = arith.maximumf %467, %468 : vector<8x128xf32>
    %470 = vector.broadcast %14 : vector<1x128xf32> to vector<8x128xf32>
    %471 = arith.mulf %469, %470 : vector<8x128xf32>
    %472 = vector.broadcast %15 : vector<1x128xf32> to vector<8x128xf32>
    %473 = arith.addf %471, %472 : vector<8x128xf32>
    %474 = arith.maximumf %455, %473 : vector<8x128xf32>
    %475 = vector.extract_strided_slice %474 {offsets = [0, 0], sizes = [1, 128], strides = [1, 1]} : vector<8x128xf32> to vector<1x128xf32>
    %c39 = arith.constant 39 : index
    %c0_122 = arith.constant 0 : index
    %476 = vector.load %arg17[%c39, %c0_122] : memref<192x128xf32, #tpu.memory_space<vmem>>, vector<1x128xf32>
    tpu.vector_store %arg17[%c39, %c0_122], %475 {strides = array<i32>} : memref<192x128xf32, #tpu.memory_space<vmem>>, vector<1x128xf32>,
    %477 = vector.extract_strided_slice %474 {offsets = [1, 0], sizes = [1, 128], strides = [1, 1]} : vector<8x128xf32> to vector<1x128xf32>
    %c55 = arith.constant 55 : index
    %c0_123 = arith.constant 0 : index
    %478 = vector.load %arg17[%c55, %c0_123] : memref<192x128xf32, #tpu.memory_space<vmem>>, vector<1x128xf32>
    tpu.vector_store %arg17[%c55, %c0_123], %477 {strides = array<i32>} : memref<192x128xf32, #tpu.memory_space<vmem>>, vector<1x128xf32>,
    %479 = vector.extract_strided_slice %474 {offsets = [2, 0], sizes = [1, 128], strides = [1, 1]} : vector<8x128xf32> to vector<1x128xf32>
    %c71 = arith.constant 71 : index
    %c0_124 = arith.constant 0 : index
    %480 = vector.load %arg17[%c71, %c0_124] : memref<192x128xf32, #tpu.memory_space<vmem>>, vector<1x128xf32>
    tpu.vector_store %arg17[%c71, %c0_124], %479 {strides = array<i32>} : memref<192x128xf32, #tpu.memory_space<vmem>>, vector<1x128xf32>,
    %481 = vector.extract_strided_slice %474 {offsets = [3, 0], sizes = [1, 128], strides = [1, 1]} : vector<8x128xf32> to vector<1x128xf32>
    %c87 = arith.constant 87 : index
    %c0_125 = arith.constant 0 : index
    %482 = vector.load %arg17[%c87, %c0_125] : memref<192x128xf32, #tpu.memory_space<vmem>>, vector<1x128xf32>
    tpu.vector_store %arg17[%c87, %c0_125], %481 {strides = array<i32>} : memref<192x128xf32, #tpu.memory_space<vmem>>, vector<1x128xf32>,
    %483 = vector.extract_strided_slice %474 {offsets = [4, 0], sizes = [1, 128], strides = [1, 1]} : vector<8x128xf32> to vector<1x128xf32>
    %c103 = arith.constant 103 : index
    %c0_126 = arith.constant 0 : index
    %484 = vector.load %arg17[%c103, %c0_126] : memref<192x128xf32, #tpu.memory_space<vmem>>, vector<1x128xf32>
    tpu.vector_store %arg17[%c103, %c0_126], %483 {strides = array<i32>} : memref<192x128xf32, #tpu.memory_space<vmem>>, vector<1x128xf32>,
    %485 = vector.extract_strided_slice %474 {offsets = [5, 0], sizes = [1, 128], strides = [1, 1]} : vector<8x128xf32> to vector<1x128xf32>
    %c119 = arith.constant 119 : index
    %c0_127 = arith.constant 0 : index
    %486 = vector.load %arg17[%c119, %c0_127] : memref<192x128xf32, #tpu.memory_space<vmem>>, vector<1x128xf32>
    tpu.vector_store %arg17[%c119, %c0_127], %485 {strides = array<i32>} : memref<192x128xf32, #tpu.memory_space<vmem>>, vector<1x128xf32>,
    %487 = vector.extract_strided_slice %474 {offsets = [6, 0], sizes = [1, 128], strides = [1, 1]} : vector<8x128xf32> to vector<1x128xf32>
    %c135 = arith.constant 135 : index
    %c0_128 = arith.constant 0 : index
    %488 = vector.load %arg17[%c135, %c0_128] : memref<192x128xf32, #tpu.memory_space<vmem>>, vector<1x128xf32>
    tpu.vector_store %arg17[%c135, %c0_128], %487 {strides = array<i32>} : memref<192x128xf32, #tpu.memory_space<vmem>>, vector<1x128xf32>,
    %489 = vector.extract_strided_slice %474 {offsets = [7, 0], sizes = [1, 128], strides = [1, 1]} : vector<8x128xf32> to vector<1x128xf32>
    %c151 = arith.constant 151 : index
    %c0_129 = arith.constant 0 : index
    %490 = vector.load %arg17[%c151, %c0_129] : memref<192x128xf32, #tpu.memory_space<vmem>>, vector<1x128xf32>
    tpu.vector_store %arg17[%c151, %c0_129], %489 {strides = array<i32>} : memref<192x128xf32, #tpu.memory_space<vmem>>, vector<1x128xf32>,
    %491 = vector.extract_strided_slice %11 {offsets = [0, 72], sizes = [12, 56], strides = [1, 1]} : vector<16x128xf32> to vector<12x56xf32>
    %492 = vector.extract_strided_slice %11 {offsets = [1, 0], sizes = [12, 72], strides = [1, 1]} : vector<16x128xf32> to vector<12x72xf32>
    %493 = tpu.concatenate %491, %492 in 1 : vector<12x56xf32>, vector<12x72xf32> -> vector<12x128xf32>
    %494 = vector.extract_strided_slice %493 {offsets = [0, 0], sizes = [8, 128], strides = [1, 1]} : vector<12x128xf32> to vector<8x128xf32>
    %495 = vector.extract_strided_slice %493 {offsets = [1, 0], sizes = [8, 128], strides = [1, 1]} : vector<12x128xf32> to vector<8x128xf32>
    %496 = vector.extract_strided_slice %493 {offsets = [2, 0], sizes = [8, 128], strides = [1, 1]} : vector<12x128xf32> to vector<8x128xf32>
    %497 = vector.extract_strided_slice %493 {offsets = [3, 0], sizes = [8, 128], strides = [1, 1]} : vector<12x128xf32> to vector<8x128xf32>
    %498 = tpu.concatenate %494, %495, %496, %497 in 1 : vector<8x128xf32>, vector<8x128xf32>, vector<8x128xf32>, vector<8x128xf32> -> vector<8x512xf32>
    %499 = arith.truncf %498 : vector<8x512xf32> to vector<8x512xbf16>
    %cst_130 = arith.constant dense<0.000000e+00> : vector<8x128xf32>
    %500 = tpu.matmul %499, %12, %cst_130 {dimension_numbers = #tpu.dot_dimension_numbers<[1], [0], [0], [1], [0, 0, 1, 1], [], []>} : vector<8x512xbf16>, vector<512x128xbf16>, vector<8x128xf32> -> vector<8x128xf32>
    %501 = vector.broadcast %13 : vector<1x128xf32> to vector<8x128xf32>
    %502 = arith.addf %500, %501 : vector<8x128xf32>
    %cst_131 = arith.constant 0.000000e+00 : f32
    %503 = vector.broadcast %cst_131 : f32 to vector<8x128xf32>
    %504 = arith.maximumf %502, %503 : vector<8x128xf32>
    %505 = vector.broadcast %14 : vector<1x128xf32> to vector<8x128xf32>
    %506 = arith.mulf %504, %505 : vector<8x128xf32>
    %507 = vector.broadcast %15 : vector<1x128xf32> to vector<8x128xf32>
    %508 = arith.addf %506, %507 : vector<8x128xf32>
    %509 = vector.extract_strided_slice %11 {offsets = [0, 76], sizes = [12, 52], strides = [1, 1]} : vector<16x128xf32> to vector<12x52xf32>
    %510 = vector.extract_strided_slice %11 {offsets = [1, 0], sizes = [12, 76], strides = [1, 1]} : vector<16x128xf32> to vector<12x76xf32>
    %511 = tpu.concatenate %509, %510 in 1 : vector<12x52xf32>, vector<12x76xf32> -> vector<12x128xf32>
    %512 = vector.extract_strided_slice %511 {offsets = [0, 0], sizes = [8, 128], strides = [1, 1]} : vector<12x128xf32> to vector<8x128xf32>
    %513 = vector.extract_strided_slice %511 {offsets = [1, 0], sizes = [8, 128], strides = [1, 1]} : vector<12x128xf32> to vector<8x128xf32>
    %514 = vector.extract_strided_slice %511 {offsets = [2, 0], sizes = [8, 128], strides = [1, 1]} : vector<12x128xf32> to vector<8x128xf32>
    %515 = vector.extract_strided_slice %511 {offsets = [3, 0], sizes = [8, 128], strides = [1, 1]} : vector<12x128xf32> to vector<8x128xf32>
    %516 = tpu.concatenate %512, %513, %514, %515 in 1 : vector<8x128xf32>, vector<8x128xf32>, vector<8x128xf32>, vector<8x128xf32> -> vector<8x512xf32>
    %517 = arith.truncf %516 : vector<8x512xf32> to vector<8x512xbf16>
    %cst_132 = arith.constant dense<0.000000e+00> : vector<8x128xf32>
    %518 = tpu.matmul %517, %12, %cst_132 {dimension_numbers = #tpu.dot_dimension_numbers<[1], [0], [0], [1], [0, 0, 1, 1], [], []>} : vector<8x512xbf16>, vector<512x128xbf16>, vector<8x128xf32> -> vector<8x128xf32>
    %519 = vector.broadcast %13 : vector<1x128xf32> to vector<8x128xf32>
    %520 = arith.addf %518, %519 : vector<8x128xf32>
    %cst_133 = arith.constant 0.000000e+00 : f32
    %521 = vector.broadcast %cst_133 : f32 to vector<8x128xf32>
    %522 = arith.maximumf %520, %521 : vector<8x128xf32>
    %523 = vector.broadcast %14 : vector<1x128xf32> to vector<8x128xf32>
    %524 = arith.mulf %522, %523 : vector<8x128xf32>
    %525 = vector.broadcast %15 : vector<1x128xf32> to vector<8x128xf32>
    %526 = arith.addf %524, %525 : vector<8x128xf32>
    %527 = arith.maximumf %508, %526 : vector<8x128xf32>
    %528 = vector.extract_strided_slice %527 {offsets = [0, 0], sizes = [1, 128], strides = [1, 1]} : vector<8x128xf32> to vector<1x128xf32>
    %c40 = arith.constant 40 : index
    %c0_134 = arith.constant 0 : index
    %529 = vector.load %arg17[%c40, %c0_134] : memref<192x128xf32, #tpu.memory_space<vmem>>, vector<1x128xf32>
    tpu.vector_store %arg17[%c40, %c0_134], %528 {strides = array<i32>} : memref<192x128xf32, #tpu.memory_space<vmem>>, vector<1x128xf32>,
    %530 = vector.extract_strided_slice %527 {offsets = [1, 0], sizes = [1, 128], strides = [1, 1]} : vector<8x128xf32> to vector<1x128xf32>
    %c56 = arith.constant 56 : index
    %c0_135 = arith.constant 0 : index
    %531 = vector.load %arg17[%c56, %c0_135] : memref<192x128xf32, #tpu.memory_space<vmem>>, vector<1x128xf32>
    tpu.vector_store %arg17[%c56, %c0_135], %530 {strides = array<i32>} : memref<192x128xf32, #tpu.memory_space<vmem>>, vector<1x128xf32>,
    %532 = vector.extract_strided_slice %527 {offsets = [2, 0], sizes = [1, 128], strides = [1, 1]} : vector<8x128xf32> to vector<1x128xf32>
    %c72 = arith.constant 72 : index
    %c0_136 = arith.constant 0 : index
    %533 = vector.load %arg17[%c72, %c0_136] : memref<192x128xf32, #tpu.memory_space<vmem>>, vector<1x128xf32>
    tpu.vector_store %arg17[%c72, %c0_136], %532 {strides = array<i32>} : memref<192x128xf32, #tpu.memory_space<vmem>>, vector<1x128xf32>,
    %534 = vector.extract_strided_slice %527 {offsets = [3, 0], sizes = [1, 128], strides = [1, 1]} : vector<8x128xf32> to vector<1x128xf32>
    %c88 = arith.constant 88 : index
    %c0_137 = arith.constant 0 : index
    %535 = vector.load %arg17[%c88, %c0_137] : memref<192x128xf32, #tpu.memory_space<vmem>>, vector<1x128xf32>
    tpu.vector_store %arg17[%c88, %c0_137], %534 {strides = array<i32>} : memref<192x128xf32, #tpu.memory_space<vmem>>, vector<1x128xf32>,
    %536 = vector.extract_strided_slice %527 {offsets = [4, 0], sizes = [1, 128], strides = [1, 1]} : vector<8x128xf32> to vector<1x128xf32>
    %c104 = arith.constant 104 : index
    %c0_138 = arith.constant 0 : index
    %537 = vector.load %arg17[%c104, %c0_138] : memref<192x128xf32, #tpu.memory_space<vmem>>, vector<1x128xf32>
    tpu.vector_store %arg17[%c104, %c0_138], %536 {strides = array<i32>} : memref<192x128xf32, #tpu.memory_space<vmem>>, vector<1x128xf32>,
    %538 = vector.extract_strided_slice %527 {offsets = [5, 0], sizes = [1, 128], strides = [1, 1]} : vector<8x128xf32> to vector<1x128xf32>
    %c120 = arith.constant 120 : index
    %c0_139 = arith.constant 0 : index
    %539 = vector.load %arg17[%c120, %c0_139] : memref<192x128xf32, #tpu.memory_space<vmem>>, vector<1x128xf32>
    tpu.vector_store %arg17[%c120, %c0_139], %538 {strides = array<i32>} : memref<192x128xf32, #tpu.memory_space<vmem>>, vector<1x128xf32>,
    %540 = vector.extract_strided_slice %527 {offsets = [6, 0], sizes = [1, 128], strides = [1, 1]} : vector<8x128xf32> to vector<1x128xf32>
    %c136 = arith.constant 136 : index
    %c0_140 = arith.constant 0 : index
    %541 = vector.load %arg17[%c136, %c0_140] : memref<192x128xf32, #tpu.memory_space<vmem>>, vector<1x128xf32>
    tpu.vector_store %arg17[%c136, %c0_140], %540 {strides = array<i32>} : memref<192x128xf32, #tpu.memory_space<vmem>>, vector<1x128xf32>,
    %542 = vector.extract_strided_slice %527 {offsets = [7, 0], sizes = [1, 128], strides = [1, 1]} : vector<8x128xf32> to vector<1x128xf32>
    %c152 = arith.constant 152 : index
    %c0_141 = arith.constant 0 : index
    %543 = vector.load %arg17[%c152, %c0_141] : memref<192x128xf32, #tpu.memory_space<vmem>>, vector<1x128xf32>
    tpu.vector_store %arg17[%c152, %c0_141], %542 {strides = array<i32>} : memref<192x128xf32, #tpu.memory_space<vmem>>, vector<1x128xf32>,
    %544 = vector.extract_strided_slice %11 {offsets = [0, 80], sizes = [12, 48], strides = [1, 1]} : vector<16x128xf32> to vector<12x48xf32>
    %545 = vector.extract_strided_slice %11 {offsets = [1, 0], sizes = [12, 80], strides = [1, 1]} : vector<16x128xf32> to vector<12x80xf32>
    %546 = tpu.concatenate %544, %545 in 1 : vector<12x48xf32>, vector<12x80xf32> -> vector<12x128xf32>
    %547 = vector.extract_strided_slice %546 {offsets = [0, 0], sizes = [8, 128], strides = [1, 1]} : vector<12x128xf32> to vector<8x128xf32>
    %548 = vector.extract_strided_slice %546 {offsets = [1, 0], sizes = [8, 128], strides = [1, 1]} : vector<12x128xf32> to vector<8x128xf32>
    %549 = vector.extract_strided_slice %546 {offsets = [2, 0], sizes = [8, 128], strides = [1, 1]} : vector<12x128xf32> to vector<8x128xf32>
    %550 = vector.extract_strided_slice %546 {offsets = [3, 0], sizes = [8, 128], strides = [1, 1]} : vector<12x128xf32> to vector<8x128xf32>
    %551 = tpu.concatenate %547, %548, %549, %550 in 1 : vector<8x128xf32>, vector<8x128xf32>, vector<8x128xf32>, vector<8x128xf32> -> vector<8x512xf32>
    %552 = arith.truncf %551 : vector<8x512xf32> to vector<8x512xbf16>
    %cst_142 = arith.constant dense<0.000000e+00> : vector<8x128xf32>
    %553 = tpu.matmul %552, %12, %cst_142 {dimension_numbers = #tpu.dot_dimension_numbers<[1], [0], [0], [1], [0, 0, 1, 1], [], []>} : vector<8x512xbf16>, vector<512x128xbf16>, vector<8x128xf32> -> vector<8x128xf32>
    %554 = vector.broadcast %13 : vector<1x128xf32> to vector<8x128xf32>
    %555 = arith.addf %553, %554 : vector<8x128xf32>
    %cst_143 = arith.constant 0.000000e+00 : f32
    %556 = vector.broadcast %cst_143 : f32 to vector<8x128xf32>
    %557 = arith.maximumf %555, %556 : vector<8x128xf32>
    %558 = vector.broadcast %14 : vector<1x128xf32> to vector<8x128xf32>
    %559 = arith.mulf %557, %558 : vector<8x128xf32>
    %560 = vector.broadcast %15 : vector<1x128xf32> to vector<8x128xf32>
    %561 = arith.addf %559, %560 : vector<8x128xf32>
    %562 = vector.extract_strided_slice %11 {offsets = [0, 84], sizes = [12, 44], strides = [1, 1]} : vector<16x128xf32> to vector<12x44xf32>
    %563 = vector.extract_strided_slice %11 {offsets = [1, 0], sizes = [12, 84], strides = [1, 1]} : vector<16x128xf32> to vector<12x84xf32>
    %564 = tpu.concatenate %562, %563 in 1 : vector<12x44xf32>, vector<12x84xf32> -> vector<12x128xf32>
    %565 = vector.extract_strided_slice %564 {offsets = [0, 0], sizes = [8, 128], strides = [1, 1]} : vector<12x128xf32> to vector<8x128xf32>
    %566 = vector.extract_strided_slice %564 {offsets = [1, 0], sizes = [8, 128], strides = [1, 1]} : vector<12x128xf32> to vector<8x128xf32>
    %567 = vector.extract_strided_slice %564 {offsets = [2, 0], sizes = [8, 128], strides = [1, 1]} : vector<12x128xf32> to vector<8x128xf32>
    %568 = vector.extract_strided_slice %564 {offsets = [3, 0], sizes = [8, 128], strides = [1, 1]} : vector<12x128xf32> to vector<8x128xf32>
    %569 = tpu.concatenate %565, %566, %567, %568 in 1 : vector<8x128xf32>, vector<8x128xf32>, vector<8x128xf32>, vector<8x128xf32> -> vector<8x512xf32>
    %570 = arith.truncf %569 : vector<8x512xf32> to vector<8x512xbf16>
    %cst_144 = arith.constant dense<0.000000e+00> : vector<8x128xf32>
    %571 = tpu.matmul %570, %12, %cst_144 {dimension_numbers = #tpu.dot_dimension_numbers<[1], [0], [0], [1], [0, 0, 1, 1], [], []>} : vector<8x512xbf16>, vector<512x128xbf16>, vector<8x128xf32> -> vector<8x128xf32>
    %572 = vector.broadcast %13 : vector<1x128xf32> to vector<8x128xf32>
    %573 = arith.addf %571, %572 : vector<8x128xf32>
    %cst_145 = arith.constant 0.000000e+00 : f32
    %574 = vector.broadcast %cst_145 : f32 to vector<8x128xf32>
    %575 = arith.maximumf %573, %574 : vector<8x128xf32>
    %576 = vector.broadcast %14 : vector<1x128xf32> to vector<8x128xf32>
    %577 = arith.mulf %575, %576 : vector<8x128xf32>
    %578 = vector.broadcast %15 : vector<1x128xf32> to vector<8x128xf32>
    %579 = arith.addf %577, %578 : vector<8x128xf32>
    %580 = arith.maximumf %561, %579 : vector<8x128xf32>
    %581 = vector.extract_strided_slice %580 {offsets = [0, 0], sizes = [1, 128], strides = [1, 1]} : vector<8x128xf32> to vector<1x128xf32>
    %c41 = arith.constant 41 : index
    %c0_146 = arith.constant 0 : index
    %582 = vector.load %arg17[%c41, %c0_146] : memref<192x128xf32, #tpu.memory_space<vmem>>, vector<1x128xf32>
    tpu.vector_store %arg17[%c41, %c0_146], %581 {strides = array<i32>} : memref<192x128xf32, #tpu.memory_space<vmem>>, vector<1x128xf32>,
    %583 = vector.extract_strided_slice %580 {offsets = [1, 0], sizes = [1, 128], strides = [1, 1]} : vector<8x128xf32> to vector<1x128xf32>
    %c57 = arith.constant 57 : index
    %c0_147 = arith.constant 0 : index
    %584 = vector.load %arg17[%c57, %c0_147] : memref<192x128xf32, #tpu.memory_space<vmem>>, vector<1x128xf32>
    tpu.vector_store %arg17[%c57, %c0_147], %583 {strides = array<i32>} : memref<192x128xf32, #tpu.memory_space<vmem>>, vector<1x128xf32>,
    %585 = vector.extract_strided_slice %580 {offsets = [2, 0], sizes = [1, 128], strides = [1, 1]} : vector<8x128xf32> to vector<1x128xf32>
    %c73 = arith.constant 73 : index
    %c0_148 = arith.constant 0 : index
    %586 = vector.load %arg17[%c73, %c0_148] : memref<192x128xf32, #tpu.memory_space<vmem>>, vector<1x128xf32>
    tpu.vector_store %arg17[%c73, %c0_148], %585 {strides = array<i32>} : memref<192x128xf32, #tpu.memory_space<vmem>>, vector<1x128xf32>,
    %587 = vector.extract_strided_slice %580 {offsets = [3, 0], sizes = [1, 128], strides = [1, 1]} : vector<8x128xf32> to vector<1x128xf32>
    %c89 = arith.constant 89 : index
    %c0_149 = arith.constant 0 : index
    %588 = vector.load %arg17[%c89, %c0_149] : memref<192x128xf32, #tpu.memory_space<vmem>>, vector<1x128xf32>
    tpu.vector_store %arg17[%c89, %c0_149], %587 {strides = array<i32>} : memref<192x128xf32, #tpu.memory_space<vmem>>, vector<1x128xf32>,
    %589 = vector.extract_strided_slice %580 {offsets = [4, 0], sizes = [1, 128], strides = [1, 1]} : vector<8x128xf32> to vector<1x128xf32>
    %c105 = arith.constant 105 : index
    %c0_150 = arith.constant 0 : index
    %590 = vector.load %arg17[%c105, %c0_150] : memref<192x128xf32, #tpu.memory_space<vmem>>, vector<1x128xf32>
    tpu.vector_store %arg17[%c105, %c0_150], %589 {strides = array<i32>} : memref<192x128xf32, #tpu.memory_space<vmem>>, vector<1x128xf32>,
    %591 = vector.extract_strided_slice %580 {offsets = [5, 0], sizes = [1, 128], strides = [1, 1]} : vector<8x128xf32> to vector<1x128xf32>
    %c121 = arith.constant 121 : index
    %c0_151 = arith.constant 0 : index
    %592 = vector.load %arg17[%c121, %c0_151] : memref<192x128xf32, #tpu.memory_space<vmem>>, vector<1x128xf32>
    tpu.vector_store %arg17[%c121, %c0_151], %591 {strides = array<i32>} : memref<192x128xf32, #tpu.memory_space<vmem>>, vector<1x128xf32>,
    %593 = vector.extract_strided_slice %580 {offsets = [6, 0], sizes = [1, 128], strides = [1, 1]} : vector<8x128xf32> to vector<1x128xf32>
    %c137 = arith.constant 137 : index
    %c0_152 = arith.constant 0 : index
    %594 = vector.load %arg17[%c137, %c0_152] : memref<192x128xf32, #tpu.memory_space<vmem>>, vector<1x128xf32>
    tpu.vector_store %arg17[%c137, %c0_152], %593 {strides = array<i32>} : memref<192x128xf32, #tpu.memory_space<vmem>>, vector<1x128xf32>,
    %595 = vector.extract_strided_slice %580 {offsets = [7, 0], sizes = [1, 128], strides = [1, 1]} : vector<8x128xf32> to vector<1x128xf32>
    %c153 = arith.constant 153 : index
    %c0_153 = arith.constant 0 : index
    %596 = vector.load %arg17[%c153, %c0_153] : memref<192x128xf32, #tpu.memory_space<vmem>>, vector<1x128xf32>
    tpu.vector_store %arg17[%c153, %c0_153], %595 {strides = array<i32>} : memref<192x128xf32, #tpu.memory_space<vmem>>, vector<1x128xf32>,
    %597 = vector.extract_strided_slice %11 {offsets = [0, 88], sizes = [12, 40], strides = [1, 1]} : vector<16x128xf32> to vector<12x40xf32>
    %598 = vector.extract_strided_slice %11 {offsets = [1, 0], sizes = [12, 88], strides = [1, 1]} : vector<16x128xf32> to vector<12x88xf32>
    %599 = tpu.concatenate %597, %598 in 1 : vector<12x40xf32>, vector<12x88xf32> -> vector<12x128xf32>
    %600 = vector.extract_strided_slice %599 {offsets = [0, 0], sizes = [8, 128], strides = [1, 1]} : vector<12x128xf32> to vector<8x128xf32>
    %601 = vector.extract_strided_slice %599 {offsets = [1, 0], sizes = [8, 128], strides = [1, 1]} : vector<12x128xf32> to vector<8x128xf32>
    %602 = vector.extract_strided_slice %599 {offsets = [2, 0], sizes = [8, 128], strides = [1, 1]} : vector<12x128xf32> to vector<8x128xf32>
    %603 = vector.extract_strided_slice %599 {offsets = [3, 0], sizes = [8, 128], strides = [1, 1]} : vector<12x128xf32> to vector<8x128xf32>
    %604 = tpu.concatenate %600, %601, %602, %603 in 1 : vector<8x128xf32>, vector<8x128xf32>, vector<8x128xf32>, vector<8x128xf32> -> vector<8x512xf32>
    %605 = arith.truncf %604 : vector<8x512xf32> to vector<8x512xbf16>
    %cst_154 = arith.constant dense<0.000000e+00> : vector<8x128xf32>
    %606 = tpu.matmul %605, %12, %cst_154 {dimension_numbers = #tpu.dot_dimension_numbers<[1], [0], [0], [1], [0, 0, 1, 1], [], []>} : vector<8x512xbf16>, vector<512x128xbf16>, vector<8x128xf32> -> vector<8x128xf32>
    %607 = vector.broadcast %13 : vector<1x128xf32> to vector<8x128xf32>
    %608 = arith.addf %606, %607 : vector<8x128xf32>
    %cst_155 = arith.constant 0.000000e+00 : f32
    %609 = vector.broadcast %cst_155 : f32 to vector<8x128xf32>
    %610 = arith.maximumf %608, %609 : vector<8x128xf32>
    %611 = vector.broadcast %14 : vector<1x128xf32> to vector<8x128xf32>
    %612 = arith.mulf %610, %611 : vector<8x128xf32>
    %613 = vector.broadcast %15 : vector<1x128xf32> to vector<8x128xf32>
    %614 = arith.addf %612, %613 : vector<8x128xf32>
    %615 = vector.extract_strided_slice %11 {offsets = [0, 92], sizes = [12, 36], strides = [1, 1]} : vector<16x128xf32> to vector<12x36xf32>
    %616 = vector.extract_strided_slice %11 {offsets = [1, 0], sizes = [12, 92], strides = [1, 1]} : vector<16x128xf32> to vector<12x92xf32>
    %617 = tpu.concatenate %615, %616 in 1 : vector<12x36xf32>, vector<12x92xf32> -> vector<12x128xf32>
    %618 = vector.extract_strided_slice %617 {offsets = [0, 0], sizes = [8, 128], strides = [1, 1]} : vector<12x128xf32> to vector<8x128xf32>
    %619 = vector.extract_strided_slice %617 {offsets = [1, 0], sizes = [8, 128], strides = [1, 1]} : vector<12x128xf32> to vector<8x128xf32>
    %620 = vector.extract_strided_slice %617 {offsets = [2, 0], sizes = [8, 128], strides = [1, 1]} : vector<12x128xf32> to vector<8x128xf32>
    %621 = vector.extract_strided_slice %617 {offsets = [3, 0], sizes = [8, 128], strides = [1, 1]} : vector<12x128xf32> to vector<8x128xf32>
    %622 = tpu.concatenate %618, %619, %620, %621 in 1 : vector<8x128xf32>, vector<8x128xf32>, vector<8x128xf32>, vector<8x128xf32> -> vector<8x512xf32>
    %623 = arith.truncf %622 : vector<8x512xf32> to vector<8x512xbf16>
    %cst_156 = arith.constant dense<0.000000e+00> : vector<8x128xf32>
    %624 = tpu.matmul %623, %12, %cst_156 {dimension_numbers = #tpu.dot_dimension_numbers<[1], [0], [0], [1], [0, 0, 1, 1], [], []>} : vector<8x512xbf16>, vector<512x128xbf16>, vector<8x128xf32> -> vector<8x128xf32>
    %625 = vector.broadcast %13 : vector<1x128xf32> to vector<8x128xf32>
    %626 = arith.addf %624, %625 : vector<8x128xf32>
    %cst_157 = arith.constant 0.000000e+00 : f32
    %627 = vector.broadcast %cst_157 : f32 to vector<8x128xf32>
    %628 = arith.maximumf %626, %627 : vector<8x128xf32>
    %629 = vector.broadcast %14 : vector<1x128xf32> to vector<8x128xf32>
    %630 = arith.mulf %628, %629 : vector<8x128xf32>
    %631 = vector.broadcast %15 : vector<1x128xf32> to vector<8x128xf32>
    %632 = arith.addf %630, %631 : vector<8x128xf32>
    %633 = arith.maximumf %614, %632 : vector<8x128xf32>
    %634 = vector.extract_strided_slice %633 {offsets = [0, 0], sizes = [1, 128], strides = [1, 1]} : vector<8x128xf32> to vector<1x128xf32>
    %c42 = arith.constant 42 : index
    %c0_158 = arith.constant 0 : index
    %635 = vector.load %arg17[%c42, %c0_158] : memref<192x128xf32, #tpu.memory_space<vmem>>, vector<1x128xf32>
    tpu.vector_store %arg17[%c42, %c0_158], %634 {strides = array<i32>} : memref<192x128xf32, #tpu.memory_space<vmem>>, vector<1x128xf32>,
    %636 = vector.extract_strided_slice %633 {offsets = [1, 0], sizes = [1, 128], strides = [1, 1]} : vector<8x128xf32> to vector<1x128xf32>
    %c58 = arith.constant 58 : index
    %c0_159 = arith.constant 0 : index
    %637 = vector.load %arg17[%c58, %c0_159] : memref<192x128xf32, #tpu.memory_space<vmem>>, vector<1x128xf32>
    tpu.vector_store %arg17[%c58, %c0_159], %636 {strides = array<i32>} : memref<192x128xf32, #tpu.memory_space<vmem>>, vector<1x128xf32>,
    %638 = vector.extract_strided_slice %633 {offsets = [2, 0], sizes = [1, 128], strides = [1, 1]} : vector<8x128xf32> to vector<1x128xf32>
    %c74 = arith.constant 74 : index
    %c0_160 = arith.constant 0 : index
    %639 = vector.load %arg17[%c74, %c0_160] : memref<192x128xf32, #tpu.memory_space<vmem>>, vector<1x128xf32>
    tpu.vector_store %arg17[%c74, %c0_160], %638 {strides = array<i32>} : memref<192x128xf32, #tpu.memory_space<vmem>>, vector<1x128xf32>,
    %640 = vector.extract_strided_slice %633 {offsets = [3, 0], sizes = [1, 128], strides = [1, 1]} : vector<8x128xf32> to vector<1x128xf32>
    %c90 = arith.constant 90 : index
    %c0_161 = arith.constant 0 : index
    %641 = vector.load %arg17[%c90, %c0_161] : memref<192x128xf32, #tpu.memory_space<vmem>>, vector<1x128xf32>
    tpu.vector_store %arg17[%c90, %c0_161], %640 {strides = array<i32>} : memref<192x128xf32, #tpu.memory_space<vmem>>, vector<1x128xf32>,
    %642 = vector.extract_strided_slice %633 {offsets = [4, 0], sizes = [1, 128], strides = [1, 1]} : vector<8x128xf32> to vector<1x128xf32>
    %c106 = arith.constant 106 : index
    %c0_162 = arith.constant 0 : index
    %643 = vector.load %arg17[%c106, %c0_162] : memref<192x128xf32, #tpu.memory_space<vmem>>, vector<1x128xf32>
    tpu.vector_store %arg17[%c106, %c0_162], %642 {strides = array<i32>} : memref<192x128xf32, #tpu.memory_space<vmem>>, vector<1x128xf32>,
    %644 = vector.extract_strided_slice %633 {offsets = [5, 0], sizes = [1, 128], strides = [1, 1]} : vector<8x128xf32> to vector<1x128xf32>
    %c122 = arith.constant 122 : index
    %c0_163 = arith.constant 0 : index
    %645 = vector.load %arg17[%c122, %c0_163] : memref<192x128xf32, #tpu.memory_space<vmem>>, vector<1x128xf32>
    tpu.vector_store %arg17[%c122, %c0_163], %644 {strides = array<i32>} : memref<192x128xf32, #tpu.memory_space<vmem>>, vector<1x128xf32>,
    %646 = vector.extract_strided_slice %633 {offsets = [6, 0], sizes = [1, 128], strides = [1, 1]} : vector<8x128xf32> to vector<1x128xf32>
    %c138 = arith.constant 138 : index
    %c0_164 = arith.constant 0 : index
    %647 = vector.load %arg17[%c138, %c0_164] : memref<192x128xf32, #tpu.memory_space<vmem>>, vector<1x128xf32>
    tpu.vector_store %arg17[%c138, %c0_164], %646 {strides = array<i32>} : memref<192x128xf32, #tpu.memory_space<vmem>>, vector<1x128xf32>,
    %648 = vector.extract_strided_slice %633 {offsets = [7, 0], sizes = [1, 128], strides = [1, 1]} : vector<8x128xf32> to vector<1x128xf32>
    %c154 = arith.constant 154 : index
    %c0_165 = arith.constant 0 : index
    %649 = vector.load %arg17[%c154, %c0_165] : memref<192x128xf32, #tpu.memory_space<vmem>>, vector<1x128xf32>
    tpu.vector_store %arg17[%c154, %c0_165], %648 {strides = array<i32>} : memref<192x128xf32, #tpu.memory_space<vmem>>, vector<1x128xf32>,
    %650 = vector.extract_strided_slice %11 {offsets = [0, 96], sizes = [12, 32], strides = [1, 1]} : vector<16x128xf32> to vector<12x32xf32>
    %651 = vector.extract_strided_slice %11 {offsets = [1, 0], sizes = [12, 96], strides = [1, 1]} : vector<16x128xf32> to vector<12x96xf32>
    %652 = tpu.concatenate %650, %651 in 1 : vector<12x32xf32>, vector<12x96xf32> -> vector<12x128xf32>
    %653 = vector.extract_strided_slice %652 {offsets = [0, 0], sizes = [8, 128], strides = [1, 1]} : vector<12x128xf32> to vector<8x128xf32>
    %654 = vector.extract_strided_slice %652 {offsets = [1, 0], sizes = [8, 128], strides = [1, 1]} : vector<12x128xf32> to vector<8x128xf32>
    %655 = vector.extract_strided_slice %652 {offsets = [2, 0], sizes = [8, 128], strides = [1, 1]} : vector<12x128xf32> to vector<8x128xf32>
    %656 = vector.extract_strided_slice %652 {offsets = [3, 0], sizes = [8, 128], strides = [1, 1]} : vector<12x128xf32> to vector<8x128xf32>
    %657 = tpu.concatenate %653, %654, %655, %656 in 1 : vector<8x128xf32>, vector<8x128xf32>, vector<8x128xf32>, vector<8x128xf32> -> vector<8x512xf32>
    %658 = arith.truncf %657 : vector<8x512xf32> to vector<8x512xbf16>
    %cst_166 = arith.constant dense<0.000000e+00> : vector<8x128xf32>
    %659 = tpu.matmul %658, %12, %cst_166 {dimension_numbers = #tpu.dot_dimension_numbers<[1], [0], [0], [1], [0, 0, 1, 1], [], []>} : vector<8x512xbf16>, vector<512x128xbf16>, vector<8x128xf32> -> vector<8x128xf32>
    %660 = vector.broadcast %13 : vector<1x128xf32> to vector<8x128xf32>
    %661 = arith.addf %659, %660 : vector<8x128xf32>
    %cst_167 = arith.constant 0.000000e+00 : f32
    %662 = vector.broadcast %cst_167 : f32 to vector<8x128xf32>
    %663 = arith.maximumf %661, %662 : vector<8x128xf32>
    %664 = vector.broadcast %14 : vector<1x128xf32> to vector<8x128xf32>
    %665 = arith.mulf %663, %664 : vector<8x128xf32>
    %666 = vector.broadcast %15 : vector<1x128xf32> to vector<8x128xf32>
    %667 = arith.addf %665, %666 : vector<8x128xf32>
    %668 = vector.extract_strided_slice %11 {offsets = [0, 100], sizes = [12, 28], strides = [1, 1]} : vector<16x128xf32> to vector<12x28xf32>
    %669 = vector.extract_strided_slice %11 {offsets = [1, 0], sizes = [12, 100], strides = [1, 1]} : vector<16x128xf32> to vector<12x100xf32>
    %670 = tpu.concatenate %668, %669 in 1 : vector<12x28xf32>, vector<12x100xf32> -> vector<12x128xf32>
    %671 = vector.extract_strided_slice %670 {offsets = [0, 0], sizes = [8, 128], strides = [1, 1]} : vector<12x128xf32> to vector<8x128xf32>
    %672 = vector.extract_strided_slice %670 {offsets = [1, 0], sizes = [8, 128], strides = [1, 1]} : vector<12x128xf32> to vector<8x128xf32>
    %673 = vector.extract_strided_slice %670 {offsets = [2, 0], sizes = [8, 128], strides = [1, 1]} : vector<12x128xf32> to vector<8x128xf32>
    %674 = vector.extract_strided_slice %670 {offsets = [3, 0], sizes = [8, 128], strides = [1, 1]} : vector<12x128xf32> to vector<8x128xf32>
    %675 = tpu.concatenate %671, %672, %673, %674 in 1 : vector<8x128xf32>, vector<8x128xf32>, vector<8x128xf32>, vector<8x128xf32> -> vector<8x512xf32>
    %676 = arith.truncf %675 : vector<8x512xf32> to vector<8x512xbf16>
    %cst_168 = arith.constant dense<0.000000e+00> : vector<8x128xf32>
    %677 = tpu.matmul %676, %12, %cst_168 {dimension_numbers = #tpu.dot_dimension_numbers<[1], [0], [0], [1], [0, 0, 1, 1], [], []>} : vector<8x512xbf16>, vector<512x128xbf16>, vector<8x128xf32> -> vector<8x128xf32>
    %678 = vector.broadcast %13 : vector<1x128xf32> to vector<8x128xf32>
    %679 = arith.addf %677, %678 : vector<8x128xf32>
    %cst_169 = arith.constant 0.000000e+00 : f32
    %680 = vector.broadcast %cst_169 : f32 to vector<8x128xf32>
    %681 = arith.maximumf %679, %680 : vector<8x128xf32>
    %682 = vector.broadcast %14 : vector<1x128xf32> to vector<8x128xf32>
    %683 = arith.mulf %681, %682 : vector<8x128xf32>
    %684 = vector.broadcast %15 : vector<1x128xf32> to vector<8x128xf32>
    %685 = arith.addf %683, %684 : vector<8x128xf32>
    %686 = arith.maximumf %667, %685 : vector<8x128xf32>
    %687 = vector.extract_strided_slice %686 {offsets = [0, 0], sizes = [1, 128], strides = [1, 1]} : vector<8x128xf32> to vector<1x128xf32>
    %c43 = arith.constant 43 : index
    %c0_170 = arith.constant 0 : index
    %688 = vector.load %arg17[%c43, %c0_170] : memref<192x128xf32, #tpu.memory_space<vmem>>, vector<1x128xf32>
    tpu.vector_store %arg17[%c43, %c0_170], %687 {strides = array<i32>} : memref<192x128xf32, #tpu.memory_space<vmem>>, vector<1x128xf32>,
    %689 = vector.extract_strided_slice %686 {offsets = [1, 0], sizes = [1, 128], strides = [1, 1]} : vector<8x128xf32> to vector<1x128xf32>
    %c59 = arith.constant 59 : index
    %c0_171 = arith.constant 0 : index
    %690 = vector.load %arg17[%c59, %c0_171] : memref<192x128xf32, #tpu.memory_space<vmem>>, vector<1x128xf32>
    tpu.vector_store %arg17[%c59, %c0_171], %689 {strides = array<i32>} : memref<192x128xf32, #tpu.memory_space<vmem>>, vector<1x128xf32>,
    %691 = vector.extract_strided_slice %686 {offsets = [2, 0], sizes = [1, 128], strides = [1, 1]} : vector<8x128xf32> to vector<1x128xf32>
    %c75 = arith.constant 75 : index
    %c0_172 = arith.constant 0 : index
    %692 = vector.load %arg17[%c75, %c0_172] : memref<192x128xf32, #tpu.memory_space<vmem>>, vector<1x128xf32>
    tpu.vector_store %arg17[%c75, %c0_172], %691 {strides = array<i32>} : memref<192x128xf32, #tpu.memory_space<vmem>>, vector<1x128xf32>,
    %693 = vector.extract_strided_slice %686 {offsets = [3, 0], sizes = [1, 128], strides = [1, 1]} : vector<8x128xf32> to vector<1x128xf32>
    %c91 = arith.constant 91 : index
    %c0_173 = arith.constant 0 : index
    %694 = vector.load %arg17[%c91, %c0_173] : memref<192x128xf32, #tpu.memory_space<vmem>>, vector<1x128xf32>
    tpu.vector_store %arg17[%c91, %c0_173], %693 {strides = array<i32>} : memref<192x128xf32, #tpu.memory_space<vmem>>, vector<1x128xf32>,
    %695 = vector.extract_strided_slice %686 {offsets = [4, 0], sizes = [1, 128], strides = [1, 1]} : vector<8x128xf32> to vector<1x128xf32>
    %c107 = arith.constant 107 : index
    %c0_174 = arith.constant 0 : index
    %696 = vector.load %arg17[%c107, %c0_174] : memref<192x128xf32, #tpu.memory_space<vmem>>, vector<1x128xf32>
    tpu.vector_store %arg17[%c107, %c0_174], %695 {strides = array<i32>} : memref<192x128xf32, #tpu.memory_space<vmem>>, vector<1x128xf32>,
    %697 = vector.extract_strided_slice %686 {offsets = [5, 0], sizes = [1, 128], strides = [1, 1]} : vector<8x128xf32> to vector<1x128xf32>
    %c123 = arith.constant 123 : index
    %c0_175 = arith.constant 0 : index
    %698 = vector.load %arg17[%c123, %c0_175] : memref<192x128xf32, #tpu.memory_space<vmem>>, vector<1x128xf32>
    tpu.vector_store %arg17[%c123, %c0_175], %697 {strides = array<i32>} : memref<192x128xf32, #tpu.memory_space<vmem>>, vector<1x128xf32>,
    %699 = vector.extract_strided_slice %686 {offsets = [6, 0], sizes = [1, 128], strides = [1, 1]} : vector<8x128xf32> to vector<1x128xf32>
    %c139 = arith.constant 139 : index
    %c0_176 = arith.constant 0 : index
    %700 = vector.load %arg17[%c139, %c0_176] : memref<192x128xf32, #tpu.memory_space<vmem>>, vector<1x128xf32>
    tpu.vector_store %arg17[%c139, %c0_176], %699 {strides = array<i32>} : memref<192x128xf32, #tpu.memory_space<vmem>>, vector<1x128xf32>,
    %701 = vector.extract_strided_slice %686 {offsets = [7, 0], sizes = [1, 128], strides = [1, 1]} : vector<8x128xf32> to vector<1x128xf32>
    %c155 = arith.constant 155 : index
    %c0_177 = arith.constant 0 : index
    %702 = vector.load %arg17[%c155, %c0_177] : memref<192x128xf32, #tpu.memory_space<vmem>>, vector<1x128xf32>
    tpu.vector_store %arg17[%c155, %c0_177], %701 {strides = array<i32>} : memref<192x128xf32, #tpu.memory_space<vmem>>, vector<1x128xf32>,
    %703 = vector.extract_strided_slice %11 {offsets = [0, 104], sizes = [12, 24], strides = [1, 1]} : vector<16x128xf32> to vector<12x24xf32>
    %704 = vector.extract_strided_slice %11 {offsets = [1, 0], sizes = [12, 104], strides = [1, 1]} : vector<16x128xf32> to vector<12x104xf32>
    %705 = tpu.concatenate %703, %704 in 1 : vector<12x24xf32>, vector<12x104xf32> -> vector<12x128xf32>
    %706 = vector.extract_strided_slice %705 {offsets = [0, 0], sizes = [8, 128], strides = [1, 1]} : vector<12x128xf32> to vector<8x128xf32>
    %707 = vector.extract_strided_slice %705 {offsets = [1, 0], sizes = [8, 128], strides = [1, 1]} : vector<12x128xf32> to vector<8x128xf32>
    %708 = vector.extract_strided_slice %705 {offsets = [2, 0], sizes = [8, 128], strides = [1, 1]} : vector<12x128xf32> to vector<8x128xf32>
    %709 = vector.extract_strided_slice %705 {offsets = [3, 0], sizes = [8, 128], strides = [1, 1]} : vector<12x128xf32> to vector<8x128xf32>
    %710 = tpu.concatenate %706, %707, %708, %709 in 1 : vector<8x128xf32>, vector<8x128xf32>, vector<8x128xf32>, vector<8x128xf32> -> vector<8x512xf32>
    %711 = arith.truncf %710 : vector<8x512xf32> to vector<8x512xbf16>
    %cst_178 = arith.constant dense<0.000000e+00> : vector<8x128xf32>
    %712 = tpu.matmul %711, %12, %cst_178 {dimension_numbers = #tpu.dot_dimension_numbers<[1], [0], [0], [1], [0, 0, 1, 1], [], []>} : vector<8x512xbf16>, vector<512x128xbf16>, vector<8x128xf32> -> vector<8x128xf32>
    %713 = vector.broadcast %13 : vector<1x128xf32> to vector<8x128xf32>
    %714 = arith.addf %712, %713 : vector<8x128xf32>
    %cst_179 = arith.constant 0.000000e+00 : f32
    %715 = vector.broadcast %cst_179 : f32 to vector<8x128xf32>
    %716 = arith.maximumf %714, %715 : vector<8x128xf32>
    %717 = vector.broadcast %14 : vector<1x128xf32> to vector<8x128xf32>
    %718 = arith.mulf %716, %717 : vector<8x128xf32>
    %719 = vector.broadcast %15 : vector<1x128xf32> to vector<8x128xf32>
    %720 = arith.addf %718, %719 : vector<8x128xf32>
    %721 = vector.extract_strided_slice %11 {offsets = [0, 108], sizes = [12, 20], strides = [1, 1]} : vector<16x128xf32> to vector<12x20xf32>
    %722 = vector.extract_strided_slice %11 {offsets = [1, 0], sizes = [12, 108], strides = [1, 1]} : vector<16x128xf32> to vector<12x108xf32>
    %723 = tpu.concatenate %721, %722 in 1 : vector<12x20xf32>, vector<12x108xf32> -> vector<12x128xf32>
    %724 = vector.extract_strided_slice %723 {offsets = [0, 0], sizes = [8, 128], strides = [1, 1]} : vector<12x128xf32> to vector<8x128xf32>
    %725 = vector.extract_strided_slice %723 {offsets = [1, 0], sizes = [8, 128], strides = [1, 1]} : vector<12x128xf32> to vector<8x128xf32>
    %726 = vector.extract_strided_slice %723 {offsets = [2, 0], sizes = [8, 128], strides = [1, 1]} : vector<12x128xf32> to vector<8x128xf32>
    %727 = vector.extract_strided_slice %723 {offsets = [3, 0], sizes = [8, 128], strides = [1, 1]} : vector<12x128xf32> to vector<8x128xf32>
    %728 = tpu.concatenate %724, %725, %726, %727 in 1 : vector<8x128xf32>, vector<8x128xf32>, vector<8x128xf32>, vector<8x128xf32> -> vector<8x512xf32>
    %729 = arith.truncf %728 : vector<8x512xf32> to vector<8x512xbf16>
    %cst_180 = arith.constant dense<0.000000e+00> : vector<8x128xf32>
    %730 = tpu.matmul %729, %12, %cst_180 {dimension_numbers = #tpu.dot_dimension_numbers<[1], [0], [0], [1], [0, 0, 1, 1], [], []>} : vector<8x512xbf16>, vector<512x128xbf16>, vector<8x128xf32> -> vector<8x128xf32>
    %731 = vector.broadcast %13 : vector<1x128xf32> to vector<8x128xf32>
    %732 = arith.addf %730, %731 : vector<8x128xf32>
    %cst_181 = arith.constant 0.000000e+00 : f32
    %733 = vector.broadcast %cst_181 : f32 to vector<8x128xf32>
    %734 = arith.maximumf %732, %733 : vector<8x128xf32>
    %735 = vector.broadcast %14 : vector<1x128xf32> to vector<8x128xf32>
    %736 = arith.mulf %734, %735 : vector<8x128xf32>
    %737 = vector.broadcast %15 : vector<1x128xf32> to vector<8x128xf32>
    %738 = arith.addf %736, %737 : vector<8x128xf32>
    %739 = arith.maximumf %720, %738 : vector<8x128xf32>
    %740 = vector.extract_strided_slice %739 {offsets = [0, 0], sizes = [1, 128], strides = [1, 1]} : vector<8x128xf32> to vector<1x128xf32>
    %c44 = arith.constant 44 : index
    %c0_182 = arith.constant 0 : index
    %741 = vector.load %arg17[%c44, %c0_182] : memref<192x128xf32, #tpu.memory_space<vmem>>, vector<1x128xf32>
    tpu.vector_store %arg17[%c44, %c0_182], %740 {strides = array<i32>} : memref<192x128xf32, #tpu.memory_space<vmem>>, vector<1x128xf32>,
    %742 = vector.extract_strided_slice %739 {offsets = [1, 0], sizes = [1, 128], strides = [1, 1]} : vector<8x128xf32> to vector<1x128xf32>
    %c60 = arith.constant 60 : index
    %c0_183 = arith.constant 0 : index
    %743 = vector.load %arg17[%c60, %c0_183] : memref<192x128xf32, #tpu.memory_space<vmem>>, vector<1x128xf32>
    tpu.vector_store %arg17[%c60, %c0_183], %742 {strides = array<i32>} : memref<192x128xf32, #tpu.memory_space<vmem>>, vector<1x128xf32>,
    %744 = vector.extract_strided_slice %739 {offsets = [2, 0], sizes = [1, 128], strides = [1, 1]} : vector<8x128xf32> to vector<1x128xf32>
    %c76 = arith.constant 76 : index
    %c0_184 = arith.constant 0 : index
    %745 = vector.load %arg17[%c76, %c0_184] : memref<192x128xf32, #tpu.memory_space<vmem>>, vector<1x128xf32>
    tpu.vector_store %arg17[%c76, %c0_184], %744 {strides = array<i32>} : memref<192x128xf32, #tpu.memory_space<vmem>>, vector<1x128xf32>,
    %746 = vector.extract_strided_slice %739 {offsets = [3, 0], sizes = [1, 128], strides = [1, 1]} : vector<8x128xf32> to vector<1x128xf32>
    %c92 = arith.constant 92 : index
    %c0_185 = arith.constant 0 : index
    %747 = vector.load %arg17[%c92, %c0_185] : memref<192x128xf32, #tpu.memory_space<vmem>>, vector<1x128xf32>
    tpu.vector_store %arg17[%c92, %c0_185], %746 {strides = array<i32>} : memref<192x128xf32, #tpu.memory_space<vmem>>, vector<1x128xf32>,
    %748 = vector.extract_strided_slice %739 {offsets = [4, 0], sizes = [1, 128], strides = [1, 1]} : vector<8x128xf32> to vector<1x128xf32>
    %c108 = arith.constant 108 : index
    %c0_186 = arith.constant 0 : index
    %749 = vector.load %arg17[%c108, %c0_186] : memref<192x128xf32, #tpu.memory_space<vmem>>, vector<1x128xf32>
    tpu.vector_store %arg17[%c108, %c0_186], %748 {strides = array<i32>} : memref<192x128xf32, #tpu.memory_space<vmem>>, vector<1x128xf32>,
    %750 = vector.extract_strided_slice %739 {offsets = [5, 0], sizes = [1, 128], strides = [1, 1]} : vector<8x128xf32> to vector<1x128xf32>
    %c124 = arith.constant 124 : index
    %c0_187 = arith.constant 0 : index
    %751 = vector.load %arg17[%c124, %c0_187] : memref<192x128xf32, #tpu.memory_space<vmem>>, vector<1x128xf32>
    tpu.vector_store %arg17[%c124, %c0_187], %750 {strides = array<i32>} : memref<192x128xf32, #tpu.memory_space<vmem>>, vector<1x128xf32>,
    %752 = vector.extract_strided_slice %739 {offsets = [6, 0], sizes = [1, 128], strides = [1, 1]} : vector<8x128xf32> to vector<1x128xf32>
    %c140 = arith.constant 140 : index
    %c0_188 = arith.constant 0 : index
    %753 = vector.load %arg17[%c140, %c0_188] : memref<192x128xf32, #tpu.memory_space<vmem>>, vector<1x128xf32>
    tpu.vector_store %arg17[%c140, %c0_188], %752 {strides = array<i32>} : memref<192x128xf32, #tpu.memory_space<vmem>>, vector<1x128xf32>,
    %754 = vector.extract_strided_slice %739 {offsets = [7, 0], sizes = [1, 128], strides = [1, 1]} : vector<8x128xf32> to vector<1x128xf32>
    %c156 = arith.constant 156 : index
    %c0_189 = arith.constant 0 : index
    %755 = vector.load %arg17[%c156, %c0_189] : memref<192x128xf32, #tpu.memory_space<vmem>>, vector<1x128xf32>
    tpu.vector_store %arg17[%c156, %c0_189], %754 {strides = array<i32>} : memref<192x128xf32, #tpu.memory_space<vmem>>, vector<1x128xf32>,
    %756 = vector.extract_strided_slice %11 {offsets = [0, 112], sizes = [12, 16], strides = [1, 1]} : vector<16x128xf32> to vector<12x16xf32>
    %757 = vector.extract_strided_slice %11 {offsets = [1, 0], sizes = [12, 112], strides = [1, 1]} : vector<16x128xf32> to vector<12x112xf32>
    %758 = tpu.concatenate %756, %757 in 1 : vector<12x16xf32>, vector<12x112xf32> -> vector<12x128xf32>
    %759 = vector.extract_strided_slice %758 {offsets = [0, 0], sizes = [8, 128], strides = [1, 1]} : vector<12x128xf32> to vector<8x128xf32>
    %760 = vector.extract_strided_slice %758 {offsets = [1, 0], sizes = [8, 128], strides = [1, 1]} : vector<12x128xf32> to vector<8x128xf32>
    %761 = vector.extract_strided_slice %758 {offsets = [2, 0], sizes = [8, 128], strides = [1, 1]} : vector<12x128xf32> to vector<8x128xf32>
    %762 = vector.extract_strided_slice %758 {offsets = [3, 0], sizes = [8, 128], strides = [1, 1]} : vector<12x128xf32> to vector<8x128xf32>
    %763 = tpu.concatenate %759, %760, %761, %762 in 1 : vector<8x128xf32>, vector<8x128xf32>, vector<8x128xf32>, vector<8x128xf32> -> vector<8x512xf32>
    %764 = arith.truncf %763 : vector<8x512xf32> to vector<8x512xbf16>
    %cst_190 = arith.constant dense<0.000000e+00> : vector<8x128xf32>
    %765 = tpu.matmul %764, %12, %cst_190 {dimension_numbers = #tpu.dot_dimension_numbers<[1], [0], [0], [1], [0, 0, 1, 1], [], []>} : vector<8x512xbf16>, vector<512x128xbf16>, vector<8x128xf32> -> vector<8x128xf32>
    %766 = vector.broadcast %13 : vector<1x128xf32> to vector<8x128xf32>
    %767 = arith.addf %765, %766 : vector<8x128xf32>
    %cst_191 = arith.constant 0.000000e+00 : f32
    %768 = vector.broadcast %cst_191 : f32 to vector<8x128xf32>
    %769 = arith.maximumf %767, %768 : vector<8x128xf32>
    %770 = vector.broadcast %14 : vector<1x128xf32> to vector<8x128xf32>
    %771 = arith.mulf %769, %770 : vector<8x128xf32>
    %772 = vector.broadcast %15 : vector<1x128xf32> to vector<8x128xf32>
    %773 = arith.addf %771, %772 : vector<8x128xf32>
    %774 = vector.extract_strided_slice %11 {offsets = [0, 116], sizes = [12, 12], strides = [1, 1]} : vector<16x128xf32> to vector<12x12xf32>
    %775 = vector.extract_strided_slice %11 {offsets = [1, 0], sizes = [12, 116], strides = [1, 1]} : vector<16x128xf32> to vector<12x116xf32>
    %776 = tpu.concatenate %774, %775 in 1 : vector<12x12xf32>, vector<12x116xf32> -> vector<12x128xf32>
    %777 = vector.extract_strided_slice %776 {offsets = [0, 0], sizes = [8, 128], strides = [1, 1]} : vector<12x128xf32> to vector<8x128xf32>
    %778 = vector.extract_strided_slice %776 {offsets = [1, 0], sizes = [8, 128], strides = [1, 1]} : vector<12x128xf32> to vector<8x128xf32>
    %779 = vector.extract_strided_slice %776 {offsets = [2, 0], sizes = [8, 128], strides = [1, 1]} : vector<12x128xf32> to vector<8x128xf32>
    %780 = vector.extract_strided_slice %776 {offsets = [3, 0], sizes = [8, 128], strides = [1, 1]} : vector<12x128xf32> to vector<8x128xf32>
    %781 = tpu.concatenate %777, %778, %779, %780 in 1 : vector<8x128xf32>, vector<8x128xf32>, vector<8x128xf32>, vector<8x128xf32> -> vector<8x512xf32>
    %782 = arith.truncf %781 : vector<8x512xf32> to vector<8x512xbf16>
    %cst_192 = arith.constant dense<0.000000e+00> : vector<8x128xf32>
    %783 = tpu.matmul %782, %12, %cst_192 {dimension_numbers = #tpu.dot_dimension_numbers<[1], [0], [0], [1], [0, 0, 1, 1], [], []>} : vector<8x512xbf16>, vector<512x128xbf16>, vector<8x128xf32> -> vector<8x128xf32>
    %784 = vector.broadcast %13 : vector<1x128xf32> to vector<8x128xf32>
    %785 = arith.addf %783, %784 : vector<8x128xf32>
    %cst_193 = arith.constant 0.000000e+00 : f32
    %786 = vector.broadcast %cst_193 : f32 to vector<8x128xf32>
    %787 = arith.maximumf %785, %786 : vector<8x128xf32>
    %788 = vector.broadcast %14 : vector<1x128xf32> to vector<8x128xf32>
    %789 = arith.mulf %787, %788 : vector<8x128xf32>
    %790 = vector.broadcast %15 : vector<1x128xf32> to vector<8x128xf32>
    %791 = arith.addf %789, %790 : vector<8x128xf32>
    %792 = arith.maximumf %773, %791 : vector<8x128xf32>
    %793 = vector.extract_strided_slice %792 {offsets = [0, 0], sizes = [1, 128], strides = [1, 1]} : vector<8x128xf32> to vector<1x128xf32>
    %c45 = arith.constant 45 : index
    %c0_194 = arith.constant 0 : index
    %794 = vector.load %arg17[%c45, %c0_194] : memref<192x128xf32, #tpu.memory_space<vmem>>, vector<1x128xf32>
    tpu.vector_store %arg17[%c45, %c0_194], %793 {strides = array<i32>} : memref<192x128xf32, #tpu.memory_space<vmem>>, vector<1x128xf32>,
    %795 = vector.extract_strided_slice %792 {offsets = [1, 0], sizes = [1, 128], strides = [1, 1]} : vector<8x128xf32> to vector<1x128xf32>
    %c61 = arith.constant 61 : index
    %c0_195 = arith.constant 0 : index
    %796 = vector.load %arg17[%c61, %c0_195] : memref<192x128xf32, #tpu.memory_space<vmem>>, vector<1x128xf32>
    tpu.vector_store %arg17[%c61, %c0_195], %795 {strides = array<i32>} : memref<192x128xf32, #tpu.memory_space<vmem>>, vector<1x128xf32>,
    %797 = vector.extract_strided_slice %792 {offsets = [2, 0], sizes = [1, 128], strides = [1, 1]} : vector<8x128xf32> to vector<1x128xf32>
    %c77 = arith.constant 77 : index
    %c0_196 = arith.constant 0 : index
    %798 = vector.load %arg17[%c77, %c0_196] : memref<192x128xf32, #tpu.memory_space<vmem>>, vector<1x128xf32>
    tpu.vector_store %arg17[%c77, %c0_196], %797 {strides = array<i32>} : memref<192x128xf32, #tpu.memory_space<vmem>>, vector<1x128xf32>,
    %799 = vector.extract_strided_slice %792 {offsets = [3, 0], sizes = [1, 128], strides = [1, 1]} : vector<8x128xf32> to vector<1x128xf32>
    %c93 = arith.constant 93 : index
    %c0_197 = arith.constant 0 : index
    %800 = vector.load %arg17[%c93, %c0_197] : memref<192x128xf32, #tpu.memory_space<vmem>>, vector<1x128xf32>
    tpu.vector_store %arg17[%c93, %c0_197], %799 {strides = array<i32>} : memref<192x128xf32, #tpu.memory_space<vmem>>, vector<1x128xf32>,
    %801 = vector.extract_strided_slice %792 {offsets = [4, 0], sizes = [1, 128], strides = [1, 1]} : vector<8x128xf32> to vector<1x128xf32>
    %c109 = arith.constant 109 : index
    %c0_198 = arith.constant 0 : index
    %802 = vector.load %arg17[%c109, %c0_198] : memref<192x128xf32, #tpu.memory_space<vmem>>, vector<1x128xf32>
    tpu.vector_store %arg17[%c109, %c0_198], %801 {strides = array<i32>} : memref<192x128xf32, #tpu.memory_space<vmem>>, vector<1x128xf32>,
    %803 = vector.extract_strided_slice %792 {offsets = [5, 0], sizes = [1, 128], strides = [1, 1]} : vector<8x128xf32> to vector<1x128xf32>
    %c125 = arith.constant 125 : index
    %c0_199 = arith.constant 0 : index
    %804 = vector.load %arg17[%c125, %c0_199] : memref<192x128xf32, #tpu.memory_space<vmem>>, vector<1x128xf32>
    tpu.vector_store %arg17[%c125, %c0_199], %803 {strides = array<i32>} : memref<192x128xf32, #tpu.memory_space<vmem>>, vector<1x128xf32>,
    %805 = vector.extract_strided_slice %792 {offsets = [6, 0], sizes = [1, 128], strides = [1, 1]} : vector<8x128xf32> to vector<1x128xf32>
    %c141 = arith.constant 141 : index
    %c0_200 = arith.constant 0 : index
    %806 = vector.load %arg17[%c141, %c0_200] : memref<192x128xf32, #tpu.memory_space<vmem>>, vector<1x128xf32>
    tpu.vector_store %arg17[%c141, %c0_200], %805 {strides = array<i32>} : memref<192x128xf32, #tpu.memory_space<vmem>>, vector<1x128xf32>,
    %807 = vector.extract_strided_slice %792 {offsets = [7, 0], sizes = [1, 128], strides = [1, 1]} : vector<8x128xf32> to vector<1x128xf32>
    %c157 = arith.constant 157 : index
    %c0_201 = arith.constant 0 : index
    %808 = vector.load %arg17[%c157, %c0_201] : memref<192x128xf32, #tpu.memory_space<vmem>>, vector<1x128xf32>
    tpu.vector_store %arg17[%c157, %c0_201], %807 {strides = array<i32>} : memref<192x128xf32, #tpu.memory_space<vmem>>, vector<1x128xf32>,
    %809 = vector.extract_strided_slice %11 {offsets = [0, 120], sizes = [12, 8], strides = [1, 1]} : vector<16x128xf32> to vector<12x8xf32>
    %810 = vector.extract_strided_slice %11 {offsets = [1, 0], sizes = [12, 120], strides = [1, 1]} : vector<16x128xf32> to vector<12x120xf32>
    %811 = tpu.concatenate %809, %810 in 1 : vector<12x8xf32>, vector<12x120xf32> -> vector<12x128xf32>
    %812 = vector.extract_strided_slice %811 {offsets = [0, 0], sizes = [8, 128], strides = [1, 1]} : vector<12x128xf32> to vector<8x128xf32>
    %813 = vector.extract_strided_slice %811 {offsets = [1, 0], sizes = [8, 128], strides = [1, 1]} : vector<12x128xf32> to vector<8x128xf32>
    %814 = vector.extract_strided_slice %811 {offsets = [2, 0], sizes = [8, 128], strides = [1, 1]} : vector<12x128xf32> to vector<8x128xf32>
    %815 = vector.extract_strided_slice %811 {offsets = [3, 0], sizes = [8, 128], strides = [1, 1]} : vector<12x128xf32> to vector<8x128xf32>
    %816 = tpu.concatenate %812, %813, %814, %815 in 1 : vector<8x128xf32>, vector<8x128xf32>, vector<8x128xf32>, vector<8x128xf32> -> vector<8x512xf32>
    %817 = arith.truncf %816 : vector<8x512xf32> to vector<8x512xbf16>
    %cst_202 = arith.constant dense<0.000000e+00> : vector<8x128xf32>
    %818 = tpu.matmul %817, %12, %cst_202 {dimension_numbers = #tpu.dot_dimension_numbers<[1], [0], [0], [1], [0, 0, 1, 1], [], []>} : vector<8x512xbf16>, vector<512x128xbf16>, vector<8x128xf32> -> vector<8x128xf32>
    %819 = vector.broadcast %13 : vector<1x128xf32> to vector<8x128xf32>
    %820 = arith.addf %818, %819 : vector<8x128xf32>
    %cst_203 = arith.constant 0.000000e+00 : f32
    %821 = vector.broadcast %cst_203 : f32 to vector<8x128xf32>
    %822 = arith.maximumf %820, %821 : vector<8x128xf32>
    %823 = vector.broadcast %14 : vector<1x128xf32> to vector<8x128xf32>
    %824 = arith.mulf %822, %823 : vector<8x128xf32>
    %825 = vector.broadcast %15 : vector<1x128xf32> to vector<8x128xf32>
    %826 = arith.addf %824, %825 : vector<8x128xf32>
    %827 = vector.extract_strided_slice %11 {offsets = [0, 124], sizes = [12, 4], strides = [1, 1]} : vector<16x128xf32> to vector<12x4xf32>
    %828 = vector.extract_strided_slice %11 {offsets = [1, 0], sizes = [12, 124], strides = [1, 1]} : vector<16x128xf32> to vector<12x124xf32>
    %829 = tpu.concatenate %827, %828 in 1 : vector<12x4xf32>, vector<12x124xf32> -> vector<12x128xf32>
    %830 = vector.extract_strided_slice %829 {offsets = [0, 0], sizes = [8, 128], strides = [1, 1]} : vector<12x128xf32> to vector<8x128xf32>
    %831 = vector.extract_strided_slice %829 {offsets = [1, 0], sizes = [8, 128], strides = [1, 1]} : vector<12x128xf32> to vector<8x128xf32>
    %832 = vector.extract_strided_slice %829 {offsets = [2, 0], sizes = [8, 128], strides = [1, 1]} : vector<12x128xf32> to vector<8x128xf32>
    %833 = vector.extract_strided_slice %829 {offsets = [3, 0], sizes = [8, 128], strides = [1, 1]} : vector<12x128xf32> to vector<8x128xf32>
    %834 = tpu.concatenate %830, %831, %832, %833 in 1 : vector<8x128xf32>, vector<8x128xf32>, vector<8x128xf32>, vector<8x128xf32> -> vector<8x512xf32>
    %835 = arith.truncf %834 : vector<8x512xf32> to vector<8x512xbf16>
    %cst_204 = arith.constant dense<0.000000e+00> : vector<8x128xf32>
    %836 = tpu.matmul %835, %12, %cst_204 {dimension_numbers = #tpu.dot_dimension_numbers<[1], [0], [0], [1], [0, 0, 1, 1], [], []>} : vector<8x512xbf16>, vector<512x128xbf16>, vector<8x128xf32> -> vector<8x128xf32>
    %837 = vector.broadcast %13 : vector<1x128xf32> to vector<8x128xf32>
    %838 = arith.addf %836, %837 : vector<8x128xf32>
    %cst_205 = arith.constant 0.000000e+00 : f32
    %839 = vector.broadcast %cst_205 : f32 to vector<8x128xf32>
    %840 = arith.maximumf %838, %839 : vector<8x128xf32>
    %841 = vector.broadcast %14 : vector<1x128xf32> to vector<8x128xf32>
    %842 = arith.mulf %840, %841 : vector<8x128xf32>
    %843 = vector.broadcast %15 : vector<1x128xf32> to vector<8x128xf32>
    %844 = arith.addf %842, %843 : vector<8x128xf32>
    %845 = arith.maximumf %826, %844 : vector<8x128xf32>
    %846 = vector.extract_strided_slice %845 {offsets = [0, 0], sizes = [1, 128], strides = [1, 1]} : vector<8x128xf32> to vector<1x128xf32>
    %c46 = arith.constant 46 : index
    %c0_206 = arith.constant 0 : index
    %847 = vector.load %arg17[%c46, %c0_206] : memref<192x128xf32, #tpu.memory_space<vmem>>, vector<1x128xf32>
    tpu.vector_store %arg17[%c46, %c0_206], %846 {strides = array<i32>} : memref<192x128xf32, #tpu.memory_space<vmem>>, vector<1x128xf32>,
    %848 = vector.extract_strided_slice %845 {offsets = [1, 0], sizes = [1, 128], strides = [1, 1]} : vector<8x128xf32> to vector<1x128xf32>
    %c62 = arith.constant 62 : index
    %c0_207 = arith.constant 0 : index
    %849 = vector.load %arg17[%c62, %c0_207] : memref<192x128xf32, #tpu.memory_space<vmem>>, vector<1x128xf32>
    tpu.vector_store %arg17[%c62, %c0_207], %848 {strides = array<i32>} : memref<192x128xf32, #tpu.memory_space<vmem>>, vector<1x128xf32>,
    %850 = vector.extract_strided_slice %845 {offsets = [2, 0], sizes = [1, 128], strides = [1, 1]} : vector<8x128xf32> to vector<1x128xf32>
    %c78 = arith.constant 78 : index
    %c0_208 = arith.constant 0 : index
    %851 = vector.load %arg17[%c78, %c0_208] : memref<192x128xf32, #tpu.memory_space<vmem>>, vector<1x128xf32>
    tpu.vector_store %arg17[%c78, %c0_208], %850 {strides = array<i32>} : memref<192x128xf32, #tpu.memory_space<vmem>>, vector<1x128xf32>,
    %852 = vector.extract_strided_slice %845 {offsets = [3, 0], sizes = [1, 128], strides = [1, 1]} : vector<8x128xf32> to vector<1x128xf32>
    %c94 = arith.constant 94 : index
    %c0_209 = arith.constant 0 : index
    %853 = vector.load %arg17[%c94, %c0_209] : memref<192x128xf32, #tpu.memory_space<vmem>>, vector<1x128xf32>
    tpu.vector_store %arg17[%c94, %c0_209], %852 {strides = array<i32>} : memref<192x128xf32, #tpu.memory_space<vmem>>, vector<1x128xf32>,
    %854 = vector.extract_strided_slice %845 {offsets = [4, 0], sizes = [1, 128], strides = [1, 1]} : vector<8x128xf32> to vector<1x128xf32>
    %c110 = arith.constant 110 : index
    %c0_210 = arith.constant 0 : index
    %855 = vector.load %arg17[%c110, %c0_210] : memref<192x128xf32, #tpu.memory_space<vmem>>, vector<1x128xf32>
    tpu.vector_store %arg17[%c110, %c0_210], %854 {strides = array<i32>} : memref<192x128xf32, #tpu.memory_space<vmem>>, vector<1x128xf32>,
    %856 = vector.extract_strided_slice %845 {offsets = [5, 0], sizes = [1, 128], strides = [1, 1]} : vector<8x128xf32> to vector<1x128xf32>
    %c126 = arith.constant 126 : index
    %c0_211 = arith.constant 0 : index
    %857 = vector.load %arg17[%c126, %c0_211] : memref<192x128xf32, #tpu.memory_space<vmem>>, vector<1x128xf32>
    tpu.vector_store %arg17[%c126, %c0_211], %856 {strides = array<i32>} : memref<192x128xf32, #tpu.memory_space<vmem>>, vector<1x128xf32>,
    %858 = vector.extract_strided_slice %845 {offsets = [6, 0], sizes = [1, 128], strides = [1, 1]} : vector<8x128xf32> to vector<1x128xf32>
    %c142 = arith.constant 142 : index
    %c0_212 = arith.constant 0 : index
    %859 = vector.load %arg17[%c142, %c0_212] : memref<192x128xf32, #tpu.memory_space<vmem>>, vector<1x128xf32>
    tpu.vector_store %arg17[%c142, %c0_212], %858 {strides = array<i32>} : memref<192x128xf32, #tpu.memory_space<vmem>>, vector<1x128xf32>,
    %860 = vector.extract_strided_slice %845 {offsets = [7, 0], sizes = [1, 128], strides = [1, 1]} : vector<8x128xf32> to vector<1x128xf32>
    %c158 = arith.constant 158 : index
    %c0_213 = arith.constant 0 : index
    %861 = vector.load %arg17[%c158, %c0_213] : memref<192x128xf32, #tpu.memory_space<vmem>>, vector<1x128xf32>
    tpu.vector_store %arg17[%c158, %c0_213], %860 {strides = array<i32>} : memref<192x128xf32, #tpu.memory_space<vmem>>, vector<1x128xf32>,
    %cst_214 = arith.constant 0.000000e+00 : f32
    %862 = vector.broadcast %cst_214 : f32 to vector<128x16xf32>
    %c0_i32 = arith.constant 0 : i32
    %c64_i32 = arith.constant 64 : i32
    %863 = arith.addi %c0_i32, %c64_i32 : i32
    %c1_i32 = arith.constant 1 : i32
    %864 = scf.for %arg23 = %c0_i32 to %863 step %c1_i32 iter_args(%arg24 = %862) -> (vector<128x16xf32>)  : i32 {
      %974 = arith.index_cast %arg23 : i32 to index
      %c0_305 = arith.constant 0 : index
      %975 = vector.load %arg17[%974, %c0_305] : memref<192x128xf32, #tpu.memory_space<vmem>>, vector<128x128xf32>
      %976 = arith.truncf %975 : vector<128x128xf32> to vector<128x128xbf16>
      %c128_i32 = arith.constant 128 : i32
      %977 = arith.muli %arg23, %c128_i32 : i32
      %978 = tpu.assume_multiple %977, 128 : i32
      %979 = arith.index_cast %978 : i32 to index
      %c0_306 = arith.constant 0 : index
      %980 = vector.load %arg4[%979, %c0_306] : memref<8192x16xbf16, #tpu.memory_space<vmem>>, vector<128x16xbf16>
      %cst_307 = arith.constant dense<0.000000e+00> : vector<128x16xf32>
      %981 = tpu.matmul %976, %980, %cst_307 {dimension_numbers = #tpu.dot_dimension_numbers<[1], [0], [0], [1], [0, 0, 1, 1], [], []>} : vector<128x128xbf16>, vector<128x16xbf16>, vector<128x16xf32> -> vector<128x16xf32>
      %982 = arith.addf %arg24, %981 : vector<128x16xf32>
      scf.yield %982 : vector<128x16xf32>
    }
    %c64_i32_215 = arith.constant 64 : i32
    %c0_216 = arith.constant 0 : index
    %c0_217 = arith.constant 0 : index
    %865 = vector.load %arg5[%c0_216, %c0_217] : memref<3x16xf32, #tpu.memory_space<vmem>>, vector<1x16xf32>
    %c1_218 = arith.constant 1 : index
    %c0_219 = arith.constant 0 : index
    %866 = vector.load %arg5[%c1_218, %c0_219] : memref<3x16xf32, #tpu.memory_space<vmem>>, vector<1x16xf32>
    %c2_220 = arith.constant 2 : index
    %c0_221 = arith.constant 0 : index
    %867 = vector.load %arg5[%c2_220, %c0_221] : memref<3x16xf32, #tpu.memory_space<vmem>>, vector<1x16xf32>
    %868 = vector.broadcast %865 : vector<1x16xf32> to vector<128x16xf32>
    %869 = arith.addf %864, %868 : vector<128x16xf32>
    %cst_222 = arith.constant 0.000000e+00 : f32
    %870 = vector.broadcast %cst_222 : f32 to vector<128x16xf32>
    %871 = arith.maximumf %869, %870 : vector<128x16xf32>
    %872 = vector.broadcast %866 : vector<1x16xf32> to vector<128x16xf32>
    %873 = arith.mulf %871, %872 : vector<128x16xf32>
    %874 = vector.broadcast %867 : vector<1x16xf32> to vector<128x16xf32>
    %875 = arith.addf %873, %874 : vector<128x16xf32>
    %c0_223 = arith.constant 0 : index
    %c0_224 = arith.constant 0 : index
    %876 = vector.load %arg22[%c0_223, %c0_224] : memref<128x64xf32, #tpu.memory_space<vmem>>, vector<128x16xf32>
    tpu.vector_store %arg22[%c0_223, %c0_224], %875 {strides = array<i32>} : memref<128x64xf32, #tpu.memory_space<vmem>>, vector<128x16xf32>,
    %c0_i32_225 = arith.constant 0 : i32
    %c64_i32_226 = arith.constant 64 : i32
    %877 = arith.addi %c0_i32_225, %c64_i32_226 : i32
    %c1_i32_227 = arith.constant 1 : i32
    scf.for %arg23 = %c0_i32_225 to %877 step %c1_i32_227  : i32 {
      %c1_i32_305 = arith.constant 1 : i32
      %974 = arith.muli %arg23, %c1_i32_305 : i32
      %c0_i32_306 = arith.constant 0 : i32
      %975 = arith.addi %c0_i32_306, %974 : i32
      %c2_i32 = arith.constant 2 : i32
      %976 = arith.muli %c2_i32, %975 : i32
      %977 = arith.index_cast %976 : i32 to index
      %c0_307 = arith.constant 0 : index
      %978 = vector.load %arg22[%977, %c0_307] : memref<128x64xf32, #tpu.memory_space<vmem>>, vector<1x16xf32>
      %c2_i32_308 = arith.constant 2 : i32
      %979 = arith.muli %c2_i32_308, %975 : i32
      %c1_i32_309 = arith.constant 1 : i32
      %980 = arith.addi %979, %c1_i32_309 : i32
      %981 = arith.index_cast %980 : i32 to index
      %c0_310 = arith.constant 0 : index
      %982 = vector.load %arg22[%981, %c0_310] : memref<128x64xf32, #tpu.memory_space<vmem>>, vector<1x16xf32>
      %983 = arith.maximumf %978, %982 : vector<1x16xf32>
      %c31_i32 = arith.constant 31 : i32
      %984 = arith.addi %c31_i32, %975 : i32
      %985 = arith.index_cast %984 : i32 to index
      %c0_311 = arith.constant 0 : index
      %986 = vector.load %arg18[%985, %c0_311] : memref<128x16xf32, #tpu.memory_space<vmem>>, vector<1x16xf32>
      tpu.vector_store %arg18[%985, %c0_311], %983 {strides = array<i32>} : memref<128x16xf32, #tpu.memory_space<vmem>>, vector<1x16xf32>,
    }
    %c64_i32_228 = arith.constant 64 : i32
    %cst_229 = arith.constant 0.000000e+00 : f32
    %878 = vector.broadcast %cst_229 : f32 to vector<64x16xf32>
    %c0_i32_230 = arith.constant 0 : i32
    %c64_i32_231 = arith.constant 64 : i32
    %879 = arith.addi %c0_i32_230, %c64_i32_231 : i32
    %c1_i32_232 = arith.constant 1 : i32
    %880 = scf.for %arg23 = %c0_i32_230 to %879 step %c1_i32_232 iter_args(%arg24 = %878) -> (vector<64x16xf32>)  : i32 {
      %974 = arith.index_cast %arg23 : i32 to index
      %c0_305 = arith.constant 0 : index
      %975 = vector.load %arg18[%974, %c0_305] : memref<128x16xf32, #tpu.memory_space<vmem>>, vector<64x16xf32>
      %976 = arith.truncf %975 : vector<64x16xf32> to vector<64x16xbf16>
      %c16_i32_306 = arith.constant 16 : i32
      %977 = arith.muli %arg23, %c16_i32_306 : i32
      %978 = tpu.assume_multiple %977, 16 : i32
      %979 = arith.index_cast %978 : i32 to index
      %c0_307 = arith.constant 0 : index
      %980 = vector.load %arg6[%979, %c0_307] : memref<1024x16xbf16, #tpu.memory_space<vmem>>, vector<16x16xbf16>
      %cst_308 = arith.constant dense<0.000000e+00> : vector<64x16xf32>
      %981 = tpu.matmul %976, %980, %cst_308 {dimension_numbers = #tpu.dot_dimension_numbers<[1], [0], [0], [1], [0, 0, 1, 1], [], []>} : vector<64x16xbf16>, vector<16x16xbf16>, vector<64x16xf32> -> vector<64x16xf32>
      %982 = arith.addf %arg24, %981 : vector<64x16xf32>
      scf.yield %982 : vector<64x16xf32>
    }
    %c64_i32_233 = arith.constant 64 : i32
    %c0_234 = arith.constant 0 : index
    %c0_235 = arith.constant 0 : index
    %881 = vector.load %arg7[%c0_234, %c0_235] : memref<3x16xf32, #tpu.memory_space<vmem>>, vector<1x16xf32>
    %c1_236 = arith.constant 1 : index
    %c0_237 = arith.constant 0 : index
    %882 = vector.load %arg7[%c1_236, %c0_237] : memref<3x16xf32, #tpu.memory_space<vmem>>, vector<1x16xf32>
    %c2_238 = arith.constant 2 : index
    %c0_239 = arith.constant 0 : index
    %883 = vector.load %arg7[%c2_238, %c0_239] : memref<3x16xf32, #tpu.memory_space<vmem>>, vector<1x16xf32>
    %884 = vector.broadcast %881 : vector<1x16xf32> to vector<64x16xf32>
    %885 = arith.addf %880, %884 : vector<64x16xf32>
    %cst_240 = arith.constant 0.000000e+00 : f32
    %886 = vector.broadcast %cst_240 : f32 to vector<64x16xf32>
    %887 = arith.maximumf %885, %886 : vector<64x16xf32>
    %888 = vector.broadcast %882 : vector<1x16xf32> to vector<64x16xf32>
    %889 = arith.mulf %887, %888 : vector<64x16xf32>
    %890 = vector.broadcast %883 : vector<1x16xf32> to vector<64x16xf32>
    %891 = arith.addf %889, %890 : vector<64x16xf32>
    %c0_241 = arith.constant 0 : index
    %c0_242 = arith.constant 0 : index
    %892 = vector.load %arg22[%c0_241, %c0_242] : memref<128x64xf32, #tpu.memory_space<vmem>>, vector<64x16xf32>
    tpu.vector_store %arg22[%c0_241, %c0_242], %891 {strides = array<i32>} : memref<128x64xf32, #tpu.memory_space<vmem>>, vector<64x16xf32>,
    %c0_i32_243 = arith.constant 0 : i32
    %c32_i32 = arith.constant 32 : i32
    %893 = arith.addi %c0_i32_243, %c32_i32 : i32
    %c1_i32_244 = arith.constant 1 : i32
    scf.for %arg23 = %c0_i32_243 to %893 step %c1_i32_244  : i32 {
      %c1_i32_305 = arith.constant 1 : i32
      %974 = arith.muli %arg23, %c1_i32_305 : i32
      %c0_i32_306 = arith.constant 0 : i32
      %975 = arith.addi %c0_i32_306, %974 : i32
      %c2_i32 = arith.constant 2 : i32
      %976 = arith.muli %c2_i32, %975 : i32
      %977 = arith.index_cast %976 : i32 to index
      %c0_307 = arith.constant 0 : index
      %978 = vector.load %arg22[%977, %c0_307] : memref<128x64xf32, #tpu.memory_space<vmem>>, vector<1x16xf32>
      %c2_i32_308 = arith.constant 2 : i32
      %979 = arith.muli %c2_i32_308, %975 : i32
      %c1_i32_309 = arith.constant 1 : i32
      %980 = arith.addi %979, %c1_i32_309 : i32
      %981 = arith.index_cast %980 : i32 to index
      %c0_310 = arith.constant 0 : index
      %982 = vector.load %arg22[%981, %c0_310] : memref<128x64xf32, #tpu.memory_space<vmem>>, vector<1x16xf32>
      %983 = arith.maximumf %978, %982 : vector<1x16xf32>
      %c31_i32 = arith.constant 31 : i32
      %984 = arith.addi %c31_i32, %975 : i32
      %985 = arith.index_cast %984 : i32 to index
      %c0_311 = arith.constant 0 : index
      %986 = vector.load %arg19[%985, %c0_311] : memref<96x16xf32, #tpu.memory_space<vmem>>, vector<1x16xf32>
      tpu.vector_store %arg19[%985, %c0_311], %983 {strides = array<i32>} : memref<96x16xf32, #tpu.memory_space<vmem>>, vector<1x16xf32>,
    }
    %c32_i32_245 = arith.constant 32 : i32
    %cst_246 = arith.constant 0.000000e+00 : f32
    %894 = vector.broadcast %cst_246 : f32 to vector<32x16xf32>
    %c0_i32_247 = arith.constant 0 : i32
    %c64_i32_248 = arith.constant 64 : i32
    %895 = arith.addi %c0_i32_247, %c64_i32_248 : i32
    %c1_i32_249 = arith.constant 1 : i32
    %896 = scf.for %arg23 = %c0_i32_247 to %895 step %c1_i32_249 iter_args(%arg24 = %894) -> (vector<32x16xf32>)  : i32 {
      %974 = arith.index_cast %arg23 : i32 to index
      %c0_305 = arith.constant 0 : index
      %975 = vector.load %arg19[%974, %c0_305] : memref<96x16xf32, #tpu.memory_space<vmem>>, vector<32x16xf32>
      %976 = arith.truncf %975 : vector<32x16xf32> to vector<32x16xbf16>
      %c16_i32_306 = arith.constant 16 : i32
      %977 = arith.muli %arg23, %c16_i32_306 : i32
      %978 = tpu.assume_multiple %977, 16 : i32
      %979 = arith.index_cast %978 : i32 to index
      %c0_307 = arith.constant 0 : index
      %980 = vector.load %arg8[%979, %c0_307] : memref<1024x16xbf16, #tpu.memory_space<vmem>>, vector<16x16xbf16>
      %cst_308 = arith.constant dense<0.000000e+00> : vector<32x16xf32>
      %981 = tpu.matmul %976, %980, %cst_308 {dimension_numbers = #tpu.dot_dimension_numbers<[1], [0], [0], [1], [0, 0, 1, 1], [], []>} : vector<32x16xbf16>, vector<16x16xbf16>, vector<32x16xf32> -> vector<32x16xf32>
      %982 = arith.addf %arg24, %981 : vector<32x16xf32>
      scf.yield %982 : vector<32x16xf32>
    }
    %c64_i32_250 = arith.constant 64 : i32
    %c0_251 = arith.constant 0 : index
    %c0_252 = arith.constant 0 : index
    %897 = vector.load %arg9[%c0_251, %c0_252] : memref<3x16xf32, #tpu.memory_space<vmem>>, vector<1x16xf32>
    %c1_253 = arith.constant 1 : index
    %c0_254 = arith.constant 0 : index
    %898 = vector.load %arg9[%c1_253, %c0_254] : memref<3x16xf32, #tpu.memory_space<vmem>>, vector<1x16xf32>
    %c2_255 = arith.constant 2 : index
    %c0_256 = arith.constant 0 : index
    %899 = vector.load %arg9[%c2_255, %c0_256] : memref<3x16xf32, #tpu.memory_space<vmem>>, vector<1x16xf32>
    %900 = vector.broadcast %897 : vector<1x16xf32> to vector<32x16xf32>
    %901 = arith.addf %896, %900 : vector<32x16xf32>
    %cst_257 = arith.constant 0.000000e+00 : f32
    %902 = vector.broadcast %cst_257 : f32 to vector<32x16xf32>
    %903 = arith.maximumf %901, %902 : vector<32x16xf32>
    %904 = vector.broadcast %898 : vector<1x16xf32> to vector<32x16xf32>
    %905 = arith.mulf %903, %904 : vector<32x16xf32>
    %906 = vector.broadcast %899 : vector<1x16xf32> to vector<32x16xf32>
    %907 = arith.addf %905, %906 : vector<32x16xf32>
    %c0_258 = arith.constant 0 : index
    %c0_259 = arith.constant 0 : index
    %908 = vector.load %arg22[%c0_258, %c0_259] : memref<128x64xf32, #tpu.memory_space<vmem>>, vector<32x16xf32>
    tpu.vector_store %arg22[%c0_258, %c0_259], %907 {strides = array<i32>} : memref<128x64xf32, #tpu.memory_space<vmem>>, vector<32x16xf32>,
    %c0_i32_260 = arith.constant 0 : i32
    %c16_i32 = arith.constant 16 : i32
    %909 = arith.addi %c0_i32_260, %c16_i32 : i32
    %c1_i32_261 = arith.constant 1 : i32
    scf.for %arg23 = %c0_i32_260 to %909 step %c1_i32_261  : i32 {
      %c1_i32_305 = arith.constant 1 : i32
      %974 = arith.muli %arg23, %c1_i32_305 : i32
      %c0_i32_306 = arith.constant 0 : i32
      %975 = arith.addi %c0_i32_306, %974 : i32
      %c2_i32 = arith.constant 2 : i32
      %976 = arith.muli %c2_i32, %975 : i32
      %977 = arith.index_cast %976 : i32 to index
      %c0_307 = arith.constant 0 : index
      %978 = vector.load %arg22[%977, %c0_307] : memref<128x64xf32, #tpu.memory_space<vmem>>, vector<1x16xf32>
      %c2_i32_308 = arith.constant 2 : i32
      %979 = arith.muli %c2_i32_308, %975 : i32
      %c1_i32_309 = arith.constant 1 : i32
      %980 = arith.addi %979, %c1_i32_309 : i32
      %981 = arith.index_cast %980 : i32 to index
      %c0_310 = arith.constant 0 : index
      %982 = vector.load %arg22[%981, %c0_310] : memref<128x64xf32, #tpu.memory_space<vmem>>, vector<1x16xf32>
      %983 = arith.maximumf %978, %982 : vector<1x16xf32>
      %c31_i32 = arith.constant 31 : i32
      %984 = arith.addi %c31_i32, %975 : i32
      %985 = arith.index_cast %984 : i32 to index
      %c0_311 = arith.constant 0 : index
      %986 = vector.load %arg20[%985, %c0_311] : memref<80x16xf32, #tpu.memory_space<vmem>>, vector<1x16xf32>
      tpu.vector_store %arg20[%985, %c0_311], %983 {strides = array<i32>} : memref<80x16xf32, #tpu.memory_space<vmem>>, vector<1x16xf32>,
    }
    %c16_i32_262 = arith.constant 16 : i32
    %cst_263 = arith.constant 0.000000e+00 : f32
    %910 = vector.broadcast %cst_263 : f32 to vector<16x32xf32>
    %c0_i32_264 = arith.constant 0 : i32
    %c64_i32_265 = arith.constant 64 : i32
    %911 = arith.addi %c0_i32_264, %c64_i32_265 : i32
    %c1_i32_266 = arith.constant 1 : i32
    %912 = scf.for %arg23 = %c0_i32_264 to %911 step %c1_i32_266 iter_args(%arg24 = %910) -> (vector<16x32xf32>)  : i32 {
      %974 = arith.index_cast %arg23 : i32 to index
      %c0_305 = arith.constant 0 : index
      %975 = vector.load %arg20[%974, %c0_305] : memref<80x16xf32, #tpu.memory_space<vmem>>, vector<16x16xf32>
      %976 = arith.truncf %975 : vector<16x16xf32> to vector<16x16xbf16>
      %c16_i32_306 = arith.constant 16 : i32
      %977 = arith.muli %arg23, %c16_i32_306 : i32
      %978 = tpu.assume_multiple %977, 16 : i32
      %979 = arith.index_cast %978 : i32 to index
      %c0_307 = arith.constant 0 : index
      %980 = vector.load %arg10[%979, %c0_307] : memref<1024x32xbf16, #tpu.memory_space<vmem>>, vector<16x32xbf16>
      %cst_308 = arith.constant dense<0.000000e+00> : vector<16x32xf32>
      %981 = tpu.matmul %976, %980, %cst_308 {dimension_numbers = #tpu.dot_dimension_numbers<[1], [0], [0], [1], [0, 0, 1, 1], [], []>} : vector<16x16xbf16>, vector<16x32xbf16>, vector<16x32xf32> -> vector<16x32xf32>
      %982 = arith.addf %arg24, %981 : vector<16x32xf32>
      scf.yield %982 : vector<16x32xf32>
    }
    %c64_i32_267 = arith.constant 64 : i32
    %c0_268 = arith.constant 0 : index
    %c0_269 = arith.constant 0 : index
    %913 = vector.load %arg11[%c0_268, %c0_269] : memref<3x32xf32, #tpu.memory_space<vmem>>, vector<1x32xf32>
    %c1_270 = arith.constant 1 : index
    %c0_271 = arith.constant 0 : index
    %914 = vector.load %arg11[%c1_270, %c0_271] : memref<3x32xf32, #tpu.memory_space<vmem>>, vector<1x32xf32>
    %c2_272 = arith.constant 2 : index
    %c0_273 = arith.constant 0 : index
    %915 = vector.load %arg11[%c2_272, %c0_273] : memref<3x32xf32, #tpu.memory_space<vmem>>, vector<1x32xf32>
    %916 = vector.broadcast %913 : vector<1x32xf32> to vector<16x32xf32>
    %917 = arith.addf %912, %916 : vector<16x32xf32>
    %cst_274 = arith.constant 0.000000e+00 : f32
    %918 = vector.broadcast %cst_274 : f32 to vector<16x32xf32>
    %919 = arith.maximumf %917, %918 : vector<16x32xf32>
    %920 = vector.broadcast %914 : vector<1x32xf32> to vector<16x32xf32>
    %921 = arith.mulf %919, %920 : vector<16x32xf32>
    %922 = vector.broadcast %915 : vector<1x32xf32> to vector<16x32xf32>
    %923 = arith.addf %921, %922 : vector<16x32xf32>
    %c0_275 = arith.constant 0 : index
    %c0_276 = arith.constant 0 : index
    %924 = vector.load %arg22[%c0_275, %c0_276] : memref<128x64xf32, #tpu.memory_space<vmem>>, vector<16x32xf32>
    tpu.vector_store %arg22[%c0_275, %c0_276], %923 {strides = array<i32>} : memref<128x64xf32, #tpu.memory_space<vmem>>, vector<16x32xf32>,
    %c0_i32_277 = arith.constant 0 : i32
    %c8_i32 = arith.constant 8 : i32
    %925 = arith.addi %c0_i32_277, %c8_i32 : i32
    %c1_i32_278 = arith.constant 1 : i32
    scf.for %arg23 = %c0_i32_277 to %925 step %c1_i32_278  : i32 {
      %c1_i32_305 = arith.constant 1 : i32
      %974 = arith.muli %arg23, %c1_i32_305 : i32
      %c0_i32_306 = arith.constant 0 : i32
      %975 = arith.addi %c0_i32_306, %974 : i32
      %c2_i32 = arith.constant 2 : i32
      %976 = arith.muli %c2_i32, %975 : i32
      %977 = arith.index_cast %976 : i32 to index
      %c0_307 = arith.constant 0 : index
      %978 = vector.load %arg22[%977, %c0_307] : memref<128x64xf32, #tpu.memory_space<vmem>>, vector<1x32xf32>
      %c2_i32_308 = arith.constant 2 : i32
      %979 = arith.muli %c2_i32_308, %975 : i32
      %c1_i32_309 = arith.constant 1 : i32
      %980 = arith.addi %979, %c1_i32_309 : i32
      %981 = arith.index_cast %980 : i32 to index
      %c0_310 = arith.constant 0 : index
      %982 = vector.load %arg22[%981, %c0_310] : memref<128x64xf32, #tpu.memory_space<vmem>>, vector<1x32xf32>
      %983 = arith.maximumf %978, %982 : vector<1x32xf32>
      %c31_i32 = arith.constant 31 : i32
      %984 = arith.addi %c31_i32, %975 : i32
      %985 = arith.index_cast %984 : i32 to index
      %c0_311 = arith.constant 0 : index
      %986 = vector.load %arg21[%985, %c0_311] : memref<72x32xf32, #tpu.memory_space<vmem>>, vector<1x32xf32>
      tpu.vector_store %arg21[%985, %c0_311], %983 {strides = array<i32>} : memref<72x32xf32, #tpu.memory_space<vmem>>, vector<1x32xf32>,
    }
    %c8_i32_279 = arith.constant 8 : i32
    %cst_280 = arith.constant 0.000000e+00 : f32
    %926 = vector.broadcast %cst_280 : f32 to vector<8x64xf32>
    %c0_i32_281 = arith.constant 0 : i32
    %c64_i32_282 = arith.constant 64 : i32
    %927 = arith.addi %c0_i32_281, %c64_i32_282 : i32
    %c1_i32_283 = arith.constant 1 : i32
    %928 = scf.for %arg23 = %c0_i32_281 to %927 step %c1_i32_283 iter_args(%arg24 = %926) -> (vector<8x64xf32>)  : i32 {
      %974 = arith.index_cast %arg23 : i32 to index
      %c0_305 = arith.constant 0 : index
      %975 = vector.load %arg21[%974, %c0_305] : memref<72x32xf32, #tpu.memory_space<vmem>>, vector<8x32xf32>
      %976 = arith.truncf %975 : vector<8x32xf32> to vector<8x32xbf16>
      %c32_i32_306 = arith.constant 32 : i32
      %977 = arith.muli %arg23, %c32_i32_306 : i32
      %978 = tpu.assume_multiple %977, 32 : i32
      %979 = arith.index_cast %978 : i32 to index
      %c0_307 = arith.constant 0 : index
      %980 = vector.load %arg12[%979, %c0_307] : memref<2048x64xbf16, #tpu.memory_space<vmem>>, vector<32x64xbf16>
      %cst_308 = arith.constant dense<0.000000e+00> : vector<8x64xf32>
      %981 = tpu.matmul %976, %980, %cst_308 {dimension_numbers = #tpu.dot_dimension_numbers<[1], [0], [0], [1], [0, 0, 1, 1], [], []>} : vector<8x32xbf16>, vector<32x64xbf16>, vector<8x64xf32> -> vector<8x64xf32>
      %982 = arith.addf %arg24, %981 : vector<8x64xf32>
      scf.yield %982 : vector<8x64xf32>
    }
    %c64_i32_284 = arith.constant 64 : i32
    %c0_285 = arith.constant 0 : index
    %c0_286 = arith.constant 0 : index
    %929 = vector.load %arg13[%c0_285, %c0_286] : memref<3x64xf32, #tpu.memory_space<vmem>>, vector<1x64xf32>
    %c1_287 = arith.constant 1 : index
    %c0_288 = arith.constant 0 : index
    %930 = vector.load %arg13[%c1_287, %c0_288] : memref<3x64xf32, #tpu.memory_space<vmem>>, vector<1x64xf32>
    %c2_289 = arith.constant 2 : index
    %c0_290 = arith.constant 0 : index
    %931 = vector.load %arg13[%c2_289, %c0_290] : memref<3x64xf32, #tpu.memory_space<vmem>>, vector<1x64xf32>
    %932 = vector.broadcast %929 : vector<1x64xf32> to vector<8x64xf32>
    %933 = arith.addf %928, %932 : vector<8x64xf32>
    %cst_291 = arith.constant 0.000000e+00 : f32
    %934 = vector.broadcast %cst_291 : f32 to vector<8x64xf32>
    %935 = arith.maximumf %933, %934 : vector<8x64xf32>
    %936 = vector.broadcast %930 : vector<1x64xf32> to vector<8x64xf32>
    %937 = arith.mulf %935, %936 : vector<8x64xf32>
    %938 = vector.broadcast %931 : vector<1x64xf32> to vector<8x64xf32>
    %939 = arith.addf %937, %938 : vector<8x64xf32>
    %940 = vector.extract_strided_slice %939 {offsets = [0, 0], sizes = [1, 64], strides = [1, 1]} : vector<8x64xf32> to vector<1x64xf32>
    %941 = vector.extract_strided_slice %939 {offsets = [1, 0], sizes = [1, 64], strides = [1, 1]} : vector<8x64xf32> to vector<1x64xf32>
    %942 = arith.maximumf %940, %941 : vector<1x64xf32>
    %943 = vector.extract_strided_slice %939 {offsets = [2, 0], sizes = [1, 64], strides = [1, 1]} : vector<8x64xf32> to vector<1x64xf32>
    %944 = vector.extract_strided_slice %939 {offsets = [3, 0], sizes = [1, 64], strides = [1, 1]} : vector<8x64xf32> to vector<1x64xf32>
    %945 = arith.maximumf %943, %944 : vector<1x64xf32>
    %946 = vector.extract_strided_slice %939 {offsets = [4, 0], sizes = [1, 64], strides = [1, 1]} : vector<8x64xf32> to vector<1x64xf32>
    %947 = vector.extract_strided_slice %939 {offsets = [5, 0], sizes = [1, 64], strides = [1, 1]} : vector<8x64xf32> to vector<1x64xf32>
    %948 = arith.maximumf %946, %947 : vector<1x64xf32>
    %949 = vector.extract_strided_slice %939 {offsets = [6, 0], sizes = [1, 64], strides = [1, 1]} : vector<8x64xf32> to vector<1x64xf32>
    %950 = vector.extract_strided_slice %939 {offsets = [7, 0], sizes = [1, 64], strides = [1, 1]} : vector<8x64xf32> to vector<1x64xf32>
    %951 = arith.maximumf %949, %950 : vector<1x64xf32>
    %952 = tpu.concatenate %942, %945, %948, %951 in 1 : vector<1x64xf32>, vector<1x64xf32>, vector<1x64xf32>, vector<1x64xf32> -> vector<1x256xf32>
    %953 = arith.truncf %952 : vector<1x256xf32> to vector<1x256xbf16>
    %c0_292 = arith.constant 0 : index
    %c0_293 = arith.constant 0 : index
    %954 = vector.load %arg14[%c0_292, %c0_293] : memref<256x360xbf16, #tpu.memory_space<vmem>>, vector<256x360xbf16>
    %cst_294 = arith.constant dense<0.000000e+00> : vector<1x360xf32>
    %955 = tpu.matmul %953, %954, %cst_294 {dimension_numbers = #tpu.dot_dimension_numbers<[1], [0], [0], [1], [0, 0, 1, 1], [], []>} : vector<1x256xbf16>, vector<256x360xbf16>, vector<1x360xf32> -> vector<1x360xf32>
    %c0_295 = arith.constant 0 : index
    %c0_296 = arith.constant 0 : index
    %956 = vector.load %arg15[%c0_295, %c0_296] : memref<1x360xf32, #tpu.memory_space<vmem>>, vector<1x360xf32>
    %957 = arith.addf %955, %956 : vector<1x360xf32>
    %958 = math.absf %957 : vector<1x360xf32>
    %cst_297 = arith.constant 0.000000e+00 : f32
    %959 = vector.broadcast %cst_297 : f32 to vector<1x360xf32>
    %960 = arith.subf %959, %958 : vector<1x360xf32>
    %961 = math.exp %960 : vector<1x360xf32>
    %cst_298 = arith.constant 0.000000e+00 : f32
    %962 = vector.broadcast %cst_298 : f32 to vector<1x360xf32>
    %963 = arith.cmpf oge, %957, %962 : vector<1x360xf32>
    %cst_299 = arith.constant 1.000000e+00 : f32
    %964 = vector.broadcast %cst_299 : f32 to vector<1x360xf32>
    %965 = arith.addf %964, %961 : vector<1x360xf32>
    %cst_300 = arith.constant 1.000000e+00 : f32
    %966 = vector.broadcast %cst_300 : f32 to vector<1x360xf32>
    %967 = arith.divf %966, %965 : vector<1x360xf32>
    %cst_301 = arith.constant 1.000000e+00 : f32
    %968 = vector.broadcast %cst_301 : f32 to vector<1x360xf32>
    %969 = arith.addf %968, %961 : vector<1x360xf32>
    %970 = arith.divf %961, %969 : vector<1x360xf32>
    %971 = arith.select %963, %967, %970 : vector<1x360xi1>, vector<1x360xf32>
    %972 = vector.shape_cast %971 : vector<1x360xf32> to vector<1x1x360xf32>
    %c0_302 = arith.constant 0 : index
    %c0_303 = arith.constant 0 : index
    %c0_304 = arith.constant 0 : index
    %973 = vector.load %arg16[%c0_302, %c0_303, %c0_304] : memref<1x1x360xf32, #tpu.memory_space<vmem>>, vector<1x1x360xf32>
    tpu.vector_store %arg16[%c0_302, %c0_303, %c0_304], %972 {strides = array<i32>} : memref<1x1x360xf32, #tpu.memory_space<vmem>>, vector<1x1x360xf32>,
    return
  }
  func.func @transform_0(%arg0: i32) -> (i32, i32, i32) {
    %c0_i32 = arith.constant 0 : i32
    %c0_i32_0 = arith.constant 0 : i32
    %c0_i32_1 = arith.constant 0 : i32
    return %arg0, %c0_i32, %c0_i32_0 : i32, i32, i32
  }
  func.func @transform_1(%arg0: i32) -> (i32, i32) {
    %c0_i32 = arith.constant 0 : i32
    %c0_i32_0 = arith.constant 0 : i32
    %c0_i32_1 = arith.constant 0 : i32
    return %c0_i32, %c0_i32_0 : i32, i32
  }
  func.func @transform_2(%arg0: i32) -> (i32, i32) {
    %c0_i32 = arith.constant 0 : i32
    %c0_i32_0 = arith.constant 0 : i32
    %c0_i32_1 = arith.constant 0 : i32
    return %c0_i32, %c0_i32_0 : i32, i32
  }
  func.func @transform_3(%arg0: i32) -> (i32, i32) {
    %c0_i32 = arith.constant 0 : i32
    %c0_i32_0 = arith.constant 0 : i32
    %c0_i32_1 = arith.constant 0 : i32
    return %c0_i32, %c0_i32_0 : i32, i32
  }
  func.func @transform_4(%arg0: i32) -> (i32, i32) {
    %c0_i32 = arith.constant 0 : i32
    %c0_i32_0 = arith.constant 0 : i32
    %c0_i32_1 = arith.constant 0 : i32
    return %c0_i32, %c0_i32_0 : i32, i32
  }
  func.func @transform_5(%arg0: i32) -> (i32, i32) {
    %c0_i32 = arith.constant 0 : i32
    %c0_i32_0 = arith.constant 0 : i32
    %c0_i32_1 = arith.constant 0 : i32
    return %c0_i32, %c0_i32_0 : i32, i32
  }
  func.func @transform_6(%arg0: i32) -> (i32, i32) {
    %c0_i32 = arith.constant 0 : i32
    %c0_i32_0 = arith.constant 0 : i32
    %c0_i32_1 = arith.constant 0 : i32
    return %c0_i32, %c0_i32_0 : i32, i32
  }
  func.func @transform_7(%arg0: i32) -> (i32, i32) {
    %c0_i32 = arith.constant 0 : i32
    %c0_i32_0 = arith.constant 0 : i32
    %c0_i32_1 = arith.constant 0 : i32
    return %c0_i32, %c0_i32_0 : i32, i32
  }
  func.func @transform_8(%arg0: i32) -> (i32, i32) {
    %c0_i32 = arith.constant 0 : i32
    %c0_i32_0 = arith.constant 0 : i32
    %c0_i32_1 = arith.constant 0 : i32
    return %c0_i32, %c0_i32_0 : i32, i32
  }
  func.func @transform_9(%arg0: i32) -> (i32, i32) {
    %c0_i32 = arith.constant 0 : i32
    %c0_i32_0 = arith.constant 0 : i32
    %c0_i32_1 = arith.constant 0 : i32
    return %c0_i32, %c0_i32_0 : i32, i32
  }
  func.func @transform_10(%arg0: i32) -> (i32, i32) {
    %c0_i32 = arith.constant 0 : i32
    %c0_i32_0 = arith.constant 0 : i32
    %c0_i32_1 = arith.constant 0 : i32
    return %c0_i32, %c0_i32_0 : i32, i32
  }
  func.func @transform_11(%arg0: i32) -> (i32, i32) {
    %c0_i32 = arith.constant 0 : i32
    %c0_i32_0 = arith.constant 0 : i32
    %c0_i32_1 = arith.constant 0 : i32
    return %c0_i32, %c0_i32_0 : i32, i32
  }
  func.func @transform_12(%arg0: i32) -> (i32, i32) {
    %c0_i32 = arith.constant 0 : i32
    %c0_i32_0 = arith.constant 0 : i32
    %c0_i32_1 = arith.constant 0 : i32
    return %c0_i32, %c0_i32_0 : i32, i32
  }
  func.func @transform_13(%arg0: i32) -> (i32, i32) {
    %c0_i32 = arith.constant 0 : i32
    %c0_i32_0 = arith.constant 0 : i32
    %c0_i32_1 = arith.constant 0 : i32
    return %c0_i32, %c0_i32_0 : i32, i32
  }
  func.func @transform_14(%arg0: i32) -> (i32, i32) {
    %c0_i32 = arith.constant 0 : i32
    %c0_i32_0 = arith.constant 0 : i32
    %c0_i32_1 = arith.constant 0 : i32
    return %c0_i32, %c0_i32_0 : i32, i32
  }
  func.func @transform_15(%arg0: i32) -> (i32, i32, i32) {
    %c0_i32 = arith.constant 0 : i32
    %c0_i32_0 = arith.constant 0 : i32
    %c0_i32_1 = arith.constant 0 : i32
    return %arg0, %c0_i32, %c0_i32_0 : i32, i32, i32
  }
}

</mosaic_0001>

<llo_original>
// kernel: crepe_forward.1
$region0: #{crepe_forward.1}
  #allocation0 [shape = 'u32[]', space=smem, size = 0x4, offset = 0x4, fixed_abs, tag = 'smem constant byte address 0x4 - core index']
  #allocation1 [shape = 'u32[72,128]{1,0:T(1,128)}', space=vmem, size = 0x9000, scoped, tag = 'internal scratch']
  #allocation2 [shape = 'f32[192,128]{1,0:T(8,128)}', space=vmem, size = 0x18000, scoped, tag = 'scratch operand']
  #allocation3 [shape = 'f32[128,16]{1,0:T(8,128)}', space=vmem, size = 0x10000, scoped, tag = 'scratch operand']
  #allocation4 [shape = 'f32[96,16]{1,0:T(8,128)}', space=vmem, size = 0xc000, scoped, tag = 'scratch operand']
  #allocation5 [shape = 'f32[80,16]{1,0:T(8,128)}', space=vmem, size = 0xa000, scoped, tag = 'scratch operand']
  #allocation6 [shape = 'f32[72,32]{1,0:T(8,128)}', space=vmem, size = 0x9000, scoped, tag = 'scratch operand']
  #allocation7 [shape = 'f32[128,64]{1,0:T(8,128)}', space=vmem, size = 0x10000, scoped, tag = 'scratch operand']
  %s0 = inlined_call_operand.vmem [shape: f32[2,16,128], index: 0, kind: input, shape index: {}]
  %s1 = inlined_call_operand.vmem [shape: bf16[512,128], index: 1, kind: input, shape index: {}]
  %s2 = inlined_call_operand.vmem [shape: f32[3,128], index: 2, kind: input, shape index: {}]
  %s3 = inlined_call_operand.vmem [shape: bf16[8192,16], index: 3, kind: input, shape index: {}]
  %s4 = inlined_call_operand.vmem [shape: f32[3,16], index: 4, kind: input, shape index: {}]
  %s5 = inlined_call_operand.vmem [shape: bf16[1024,16], index: 5, kind: input, shape index: {}]
  %s6 = inlined_call_operand.vmem [shape: f32[3,16], index: 6, kind: input, shape index: {}]
  %s7 = inlined_call_operand.vmem [shape: bf16[1024,16], index: 7, kind: input, shape index: {}]
  %s8 = inlined_call_operand.vmem [shape: f32[3,16], index: 8, kind: input, shape index: {}]
  %s9 = inlined_call_operand.vmem [shape: bf16[1024,32], index: 9, kind: input, shape index: {}]
  %s10 = inlined_call_operand.vmem [shape: f32[3,32], index: 10, kind: input, shape index: {}]
  %s11 = inlined_call_operand.vmem [shape: bf16[2048,64], index: 11, kind: input, shape index: {}]
  %s12 = inlined_call_operand.vmem [shape: f32[3,64], index: 12, kind: input, shape index: {}]
  %s13 = inlined_call_operand.vmem [shape: bf16[256,360], index: 13, kind: input, shape index: {}]
  %s14 = inlined_call_operand.vmem [shape: f32[1,360], index: 14, kind: input, shape index: {}]
  %s15 = inlined_call_operand.vmem [shape: f32[2,1,360], index: 15, kind: output, shape index: {}]
  %s16 = sld [smem:[#allocation0]]
  $region156: #{crepe_forward.1} parent=0
    _
  %s18 = ssub.s32 1, %s16
  %s19 = scalar_select 0, %s18, %s16
  loop: start=0, step=1, limit=4
  $region2: #{crepe_forward.1} parent=0 // loop_pre_header
    _
  $region3: #{crepe_forward.1} parent=0 // loop_header
    %s21 = sphi 0, %s25
    %p22 = scmp.ge.s32.totalorder %s21, 4
    %s31 = sphi 0, %s33
    %s34 = sphi 0, %s31
    %s35 = sphi 0, %s34
    %s51 = sphi 0, %s35
    %s55 = sphi 0, %s55
    %s57 = sphi 0, %s55
    %s58 = sphi 0, %s57
    %s72 = sphi 0, %s58
    %s76 = sphi 0, %s76
    %s78 = sphi 0, %s76
    %s79 = sphi 0, %s78
    %s93 = sphi 0, %s79
    %s97 = sphi 0, %s97
    %s99 = sphi 0, %s97
    %s100 = sphi 0, %s99
    %s114 = sphi 0, %s100
    %s118 = sphi 0, %s118
    %s120 = sphi 0, %s118
    %s121 = sphi 0, %s120
    %s135 = sphi 0, %s121
    %s139 = sphi 0, %s139
    %s141 = sphi 0, %s139
    %s142 = sphi 0, %s141
    %s156 = sphi 0, %s142
    %s160 = sphi 0, %s160
    %s162 = sphi 0, %s160
    %s163 = sphi 0, %s162
    %s177 = sphi 0, %s163
    %s181 = sphi 0, %s181
    %s183 = sphi 0, %s181
    %s184 = sphi 0, %s183
    %s198 = sphi 0, %s184
    %s202 = sphi 0, %s202
    %s204 = sphi 0, %s202
    %s205 = sphi 0, %s204
    %s219 = sphi 0, %s205
    %s223 = sphi 0, %s223
    %s225 = sphi 0, %s223
    %s226 = sphi 0, %s225
    %s240 = sphi 0, %s226
    %s244 = sphi 0, %s244
    %s246 = sphi 0, %s244
    %s247 = sphi 0, %s246
    %s261 = sphi 0, %s247
    %s265 = sphi 0, %s265
    %s267 = sphi 0, %s265
    %s268 = sphi 0, %s267
    %s282 = sphi 0, %s268
    %s286 = sphi 0, %s286
    %s288 = sphi 0, %s286
    %s289 = sphi 0, %s288
    %s303 = sphi 0, %s289
    %s307 = sphi 0, %s307
    %s309 = sphi 0, %s307
    %s310 = sphi 0, %s309
    %s324 = sphi 0, %s310
    %s328 = sphi 0, %s328
    %s330 = sphi 0, %s328
    %s331 = sphi 0, %s330
    %s345 = sphi 0, %s331
    %s351 = sphi 0, %s353
    %s354 = sphi 0, %s351
    %s355 = sphi 0, %s354
    %s371 = sphi 0, %s355
  $region4: #{crepe_forward.1} parent=0 // loop_header_branch
    %24 = sbr.rel (%p22) target = $region8
  $region5: #{crepe_forward.1} parent=0 // loop_body
    %s26 = ssub.s32 %s21, 1
    %s27 = ssub.s32 %s21, 2
    %s28 = sadd.s32 %s21, 1
    %s29 = ssub.s32 %s21, %s28
    %p30 = scmp.eq.s32.totalorder %s29, 0
    %s32 = sadd.s32 %s31, 1
    %s33 = scalar_select %p30, %s31, %s32
    %p36 = pneg %p30
    %p37 = scmp.eq.s32.totalorder %s21, 1
    %p38 = por %p36, %p37
    %p39 = scmp.ne.s32.totalorder %s31, %s34
    %p40 = scmp.eq.s32.totalorder %s21, 0
    %p41 = por %p39, %p40
    %p42 = scmp.ne.s32.totalorder %s31, %s34
    %p43 = scmp.eq.s32.totalorder %s26, 1
    %p44 = por %p42, %p43
    %p45 = scmp.ne.s32.totalorder %s34, %s35
    %p46 = scmp.eq.s32.totalorder %s26, 0
    %p47 = por %p45, %p46
    %p48 = scmp.ne.s32.totalorder %s34, %s35
    %p49 = scmp.eq.s32.totalorder %s27, 1
    %p50 = por %p48, %p49
    %p52 = scmp.ne.s32.totalorder %s35, %s51
    %p53 = scmp.eq.s32.totalorder %s27, 0
    %p54 = por %p52, %p53
    %s56 = sadd.s32 %s55, 1
    %p59 = scmp.eq.s32.totalorder %s21, 1
    %p60 = scmp.ne.s32.totalorder %s55, %s57
    %p61 = scmp.eq.s32.totalorder %s21, 0
    %p62 = por %p60, %p61
    %p63 = scmp.ne.s32.totalorder %s55, %s57
    %p64 = scmp.eq.s32.totalorder %s26, 1
    %p65 = por %p63, %p64
    %p66 = scmp.ne.s32.totalorder %s57, %s58
    %p67 = scmp.eq.s32.totalorder %s26, 0
    %p68 = por %p66, %p67
    %p69 = scmp.ne.s32.totalorder %s57, %s58
    %p70 = scmp.eq.s32.totalorder %s27, 1
    %p71 = por %p69, %p70
    %p73 = scmp.ne.s32.totalorder %s58, %s72
    %p74 = scmp.eq.s32.totalorder %s27, 0
    %p75 = por %p73, %p74
    %s77 = sadd.s32 %s76, 1
    %p80 = scmp.eq.s32.totalorder %s21, 1
    %p81 = scmp.ne.s32.totalorder %s76, %s78
    %p82 = scmp.eq.s32.totalorder %s21, 0
    %p83 = por %p81, %p82
    %p84 = scmp.ne.s32.totalorder %s76, %s78
    %p85 = scmp.eq.s32.totalorder %s26, 1
    %p86 = por %p84, %p85
    %p87 = scmp.ne.s32.totalorder %s78, %s79
    %p88 = scmp.eq.s32.totalorder %s26, 0
    %p89 = por %p87, %p88
    %p90 = scmp.ne.s32.totalorder %s78, %s79
    %p91 = scmp.eq.s32.totalorder %s27, 1
    %p92 = por %p90, %p91
    %p94 = scmp.ne.s32.totalorder %s79, %s93
    %p95 = scmp.eq.s32.totalorder %s27, 0
    %p96 = por %p94, %p95
    %s98 = sadd.s32 %s97, 1
    %p101 = scmp.eq.s32.totalorder %s21, 1
    %p102 = scmp.ne.s32.totalorder %s97, %s99
    %p103 = scmp.eq.s32.totalorder %s21, 0
    %p104 = por %p102, %p103
    %p105 = scmp.ne.s32.totalorder %s97, %s99
    %p106 = scmp.eq.s32.totalorder %s26, 1
    %p107 = por %p105, %p106
    %p108 = scmp.ne.s32.totalorder %s99, %s100
    %p109 = scmp.eq.s32.totalorder %s26, 0
    %p110 = por %p108, %p109
    %p111 = scmp.ne.s32.totalorder %s99, %s100
    %p112 = scmp.eq.s32.totalorder %s27, 1
    %p113 = por %p111, %p112
    %p115 = scmp.ne.s32.totalorder %s100, %s114
    %p116 = scmp.eq.s32.totalorder %s27, 0
    %p117 = por %p115, %p116
    %s119 = sadd.s32 %s118, 1
    %p122 = scmp.eq.s32.totalorder %s21, 1
    %p123 = scmp.ne.s32.totalorder %s118, %s120
    %p124 = scmp.eq.s32.totalorder %s21, 0
    %p125 = por %p123, %p124
    %p126 = scmp.ne.s32.totalorder %s118, %s120
    %p127 = scmp.eq.s32.totalorder %s26, 1
    %p128 = por %p126, %p127
    %p129 = scmp.ne.s32.totalorder %s120, %s121
    %p130 = scmp.eq.s32.totalorder %s26, 0
    %p131 = por %p129, %p130
    %p132 = scmp.ne.s32.totalorder %s120, %s121
    %p133 = scmp.eq.s32.totalorder %s27, 1
    %p134 = por %p132, %p133
    %p136 = scmp.ne.s32.totalorder %s121, %s135
    %p137 = scmp.eq.s32.totalorder %s27, 0
    %p138 = por %p136, %p137
    %s140 = sadd.s32 %s139, 1
    %p143 = scmp.eq.s32.totalorder %s21, 1
    %p144 = scmp.ne.s32.totalorder %s139, %s141
    %p145 = scmp.eq.s32.totalorder %s21, 0
    %p146 = por %p144, %p145
    %p147 = scmp.ne.s32.totalorder %s139, %s141
    %p148 = scmp.eq.s32.totalorder %s26, 1
    %p149 = por %p147, %p148
    %p150 = scmp.ne.s32.totalorder %s141, %s142
    %p151 = scmp.eq.s32.totalorder %s26, 0
    %p152 = por %p150, %p151
    %p153 = scmp.ne.s32.totalorder %s141, %s142
    %p154 = scmp.eq.s32.totalorder %s27, 1
    %p155 = por %p153, %p154
    %p157 = scmp.ne.s32.totalorder %s142, %s156
    %p158 = scmp.eq.s32.totalorder %s27, 0
    %p159 = por %p157, %p158
    %s161 = sadd.s32 %s160, 1
    %p164 = scmp.eq.s32.totalorder %s21, 1
    %p165 = scmp.ne.s32.totalorder %s160, %s162
    %p166 = scmp.eq.s32.totalorder %s21, 0
    %p167 = por %p165, %p166
    %p168 = scmp.ne.s32.totalorder %s160, %s162
    %p169 = scmp.eq.s32.totalorder %s26, 1
    %p170 = por %p168, %p169
    %p171 = scmp.ne.s32.totalorder %s162, %s163
    %p172 = scmp.eq.s32.totalorder %s26, 0
    %p173 = por %p171, %p172
    %p174 = scmp.ne.s32.totalorder %s162, %s163
    %p175 = scmp.eq.s32.totalorder %s27, 1
    %p176 = por %p174, %p175
    %p178 = scmp.ne.s32.totalorder %s163, %s177
    %p179 = scmp.eq.s32.totalorder %s27, 0
    %p180 = por %p178, %p179
    %s182 = sadd.s32 %s181, 1
    %p185 = scmp.eq.s32.totalorder %s21, 1
    %p186 = scmp.ne.s32.totalorder %s181, %s183
    %p187 = scmp.eq.s32.totalorder %s21, 0
    %p188 = por %p186, %p187
    %p189 = scmp.ne.s32.totalorder %s181, %s183
    %p190 = scmp.eq.s32.totalorder %s26, 1
    %p191 = por %p189, %p190
    %p192 = scmp.ne.s32.totalorder %s183, %s184
    %p193 = scmp.eq.s32.totalorder %s26, 0
    %p194 = por %p192, %p193
    %p195 = scmp.ne.s32.totalorder %s183, %s184
    %p196 = scmp.eq.s32.totalorder %s27, 1
    %p197 = por %p195, %p196
    %p199 = scmp.ne.s32.totalorder %s184, %s198
    %p200 = scmp.eq.s32.totalorder %s27, 0
    %p201 = por %p199, %p200
    %s203 = sadd.s32 %s202, 1
    %p206 = scmp.eq.s32.totalorder %s21, 1
    %p207 = scmp.ne.s32.totalorder %s202, %s204
    %p208 = scmp.eq.s32.totalorder %s21, 0
    %p209 = por %p207, %p208
    %p210 = scmp.ne.s32.totalorder %s202, %s204
    %p211 = scmp.eq.s32.totalorder %s26, 1
    %p212 = por %p210, %p211
    %p213 = scmp.ne.s32.totalorder %s204, %s205
    %p214 = scmp.eq.s32.totalorder %s26, 0
    %p215 = por %p213, %p214
    %p216 = scmp.ne.s32.totalorder %s204, %s205
    %p217 = scmp.eq.s32.totalorder %s27, 1
    %p218 = por %p216, %p217
    %p220 = scmp.ne.s32.totalorder %s205, %s219
    %p221 = scmp.eq.s32.totalorder %s27, 0
    %p222 = por %p220, %p221
    %s224 = sadd.s32 %s223, 1
    %p227 = scmp.eq.s32.totalorder %s21, 1
    %p228 = scmp.ne.s32.totalorder %s223, %s225
    %p229 = scmp.eq.s32.totalorder %s21, 0
    %p230 = por %p228, %p229
    %p231 = scmp.ne.s32.totalorder %s223, %s225
    %p232 = scmp.eq.s32.totalorder %s26, 1
    %p233 = por %p231, %p232
    %p234 = scmp.ne.s32.totalorder %s225, %s226
    %p235 = scmp.eq.s32.totalorder %s26, 0
    %p236 = por %p234, %p235
    %p237 = scmp.ne.s32.totalorder %s225, %s226
    %p238 = scmp.eq.s32.totalorder %s27, 1
    %p239 = por %p237, %p238
    %p241 = scmp.ne.s32.totalorder %s226, %s240
    %p242 = scmp.eq.s32.totalorder %s27, 0
    %p243 = por %p241, %p242
    %s245 = sadd.s32 %s244, 1
    %p248 = scmp.eq.s32.totalorder %s21, 1
    %p249 = scmp.ne.s32.totalorder %s244, %s246
    %p250 = scmp.eq.s32.totalorder %s21, 0
    %p251 = por %p249, %p250
    %p252 = scmp.ne.s32.totalorder %s244, %s246
    %p253 = scmp.eq.s32.totalorder %s26, 1
    %p254 = por %p252, %p253
    %p255 = scmp.ne.s32.totalorder %s246, %s247
    %p256 = scmp.eq.s32.totalorder %s26, 0
    %p257 = por %p255, %p256
    %p258 = scmp.ne.s32.totalorder %s246, %s247
    %p259 = scmp.eq.s32.totalorder %s27, 1
    %p260 = por %p258, %p259
    %p262 = scmp.ne.s32.totalorder %s247, %s261
    %p263 = scmp.eq.s32.totalorder %s27, 0
    %p264 = por %p262, %p263
    %s266 = sadd.s32 %s265, 1
    %p269 = scmp.eq.s32.totalorder %s21, 1
    %p270 = scmp.ne.s32.totalorder %s265, %s267
    %p271 = scmp.eq.s32.totalorder %s21, 0
    %p272 = por %p270, %p271
    %p273 = scmp.ne.s32.totalorder %s265, %s267
    %p274 = scmp.eq.s32.totalorder %s26, 1
    %p275 = por %p273, %p274
    %p276 = scmp.ne.s32.totalorder %s267, %s268
    %p277 = scmp.eq.s32.totalorder %s26, 0
    %p278 = por %p276, %p277
    %p279 = scmp.ne.s32.totalorder %s267, %s268
    %p280 = scmp.eq.s32.totalorder %s27, 1
    %p281 = por %p279, %p280
    %p283 = scmp.ne.s32.totalorder %s268, %s282
    %p284 = scmp.eq.s32.totalorder %s27, 0
    %p285 = por %p283, %p284
    %s287 = sadd.s32 %s286, 1
    %p290 = scmp.eq.s32.totalorder %s21, 1
    %p291 = scmp.ne.s32.totalorder %s286, %s288
    %p292 = scmp.eq.s32.totalorder %s21, 0
    %p293 = por %p291, %p292
    %p294 = scmp.ne.s32.totalorder %s286, %s288
    %p295 = scmp.eq.s32.totalorder %s26, 1
    %p296 = por %p294, %p295
    %p297 = scmp.ne.s32.totalorder %s288, %s289
    %p298 = scmp.eq.s32.totalorder %s26, 0
    %p299 = por %p297, %p298
    %p300 = scmp.ne.s32.totalorder %s288, %s289
    %p301 = scmp.eq.s32.totalorder %s27, 1
    %p302 = por %p300, %p301
    %p304 = scmp.ne.s32.totalorder %s289, %s303
    %p305 = scmp.eq.s32.totalorder %s27, 0
    %p306 = por %p304, %p305
    %s308 = sadd.s32 %s307, 1
    %p311 = scmp.eq.s32.totalorder %s21, 1
    %p312 = scmp.ne.s32.totalorder %s307, %s309
    %p313 = scmp.eq.s32.totalorder %s21, 0
    %p314 = por %p312, %p313
    %p315 = scmp.ne.s32.totalorder %s307, %s309
    %p316 = scmp.eq.s32.totalorder %s26, 1
    %p317 = por %p315, %p316
    %p318 = scmp.ne.s32.totalorder %s309, %s310
    %p319 = scmp.eq.s32.totalorder %s26, 0
    %p320 = por %p318, %p319
    %p321 = scmp.ne.s32.totalorder %s309, %s310
    %p322 = scmp.eq.s32.totalorder %s27, 1
    %p323 = por %p321, %p322
    %p325 = scmp.ne.s32.totalorder %s310, %s324
    %p326 = scmp.eq.s32.totalorder %s27, 0
    %p327 = por %p325, %p326
    %s329 = sadd.s32 %s328, 1
    %p332 = scmp.eq.s32.totalorder %s21, 1
    %p333 = scmp.ne.s32.totalorder %s328, %s330
    %p334 = scmp.eq.s32.totalorder %s21, 0
    %p335 = por %p333, %p334
    %p336 = scmp.ne.s32.totalorder %s328, %s330
    %p337 = scmp.eq.s32.totalorder %s26, 1
    %p338 = por %p336, %p337
    %p339 = scmp.ne.s32.totalorder %s330, %s331
    %p340 = scmp.eq.s32.totalorder %s26, 0
    %p341 = por %p339, %p340
    %p342 = scmp.ne.s32.totalorder %s330, %s331
    %p343 = scmp.eq.s32.totalorder %s27, 1
    %p344 = por %p342, %p343
    %p346 = scmp.ne.s32.totalorder %s331, %s345
    %p347 = scmp.eq.s32.totalorder %s27, 0
    %p348 = por %p346, %p347
    %s349 = ssub.s32 %s21, %s28
    %p350 = scmp.eq.s32.totalorder %s349, 0
    %s352 = sadd.s32 %s351, 1
    %s353 = scalar_select %p350, %s351, %s352
    %p356 = pneg %p350
    %p357 = scmp.eq.s32.totalorder %s21, 1
    %p358 = por %p356, %p357
    %p359 = scmp.ne.s32.totalorder %s351, %s354
    %p360 = scmp.eq.s32.totalorder %s21, 0
    %p361 = por %p359, %p360
    %p362 = scmp.ne.s32.totalorder %s351, %s354
    %p363 = scmp.eq.s32.totalorder %s26, 1
    %p364 = por %p362, %p363
    %p365 = scmp.ne.s32.totalorder %s354, %s355
    %p366 = scmp.eq.s32.totalorder %s26, 0
    %p367 = por %p365, %p366
    %p368 = scmp.ne.s32.totalorder %s354, %s355
    %p369 = scmp.eq.s32.totalorder %s27, 1
    %p370 = por %p368, %p369
    %p372 = scmp.ne.s32.totalorder %s355, %s371
    %p373 = scmp.eq.s32.totalorder %s27, 0
    %p374 = por %p372, %p373
    %p375 = scmp.le.s32.totalorder 1, %s21
    %p376 = scmp.lt.s32.totalorder %s21, 3
    %p377 = pnand %p375, %p376
    %p378 = pneg %p377
    // Predicated region
    $region9: #{crepe_forward.1} parent=5 // pred_check
      _
    $region10: #{crepe_forward.1} parent=5 // pred_check_branch
      %380 = sbr.rel (%p377) target = $region12
    $region11: #{crepe_forward.1} parent=5 // pred_region
      %s381 = ssub.s32 %s21, 1
      // Predicated region
      $region13: #{crepe_forward.1} parent=11 // pred_check
        %p382 = pneg %p68
      $region14: #{crepe_forward.1} parent=11 // pred_check_branch
        %384 = sbr.rel (%p382) target = $region16
      $region15: #{crepe_forward.1} parent=11 // pred_region
        _
      $region16: #{crepe_forward.1} parent=11 // pred_fallthru
        _
      // Predicated region
      $region17: #{crepe_forward.1} parent=11 // pred_check
        %p385 = pneg %p89
      $region18: #{crepe_forward.1} parent=11 // pred_check_branch
        %387 = sbr.rel (%p385) target = $region20
      $region19: #{crepe_forward.1} parent=11 // pred_region
        _
      $region20: #{crepe_forward.1} parent=11 // pred_fallthru
        _
      // Predicated region
      $region21: #{crepe_forward.1} parent=11 // pred_check
        %p388 = pneg %p110
      $region22: #{crepe_forward.1} parent=11 // pred_check_branch
        %390 = sbr.rel (%p388) target = $region24
      $region23: #{crepe_forward.1} parent=11 // pred_region
        _
      $region24: #{crepe_forward.1} parent=11 // pred_fallthru
        _
      // Predicated region
      $region25: #{crepe_forward.1} parent=11 // pred_check
        %p391 = pneg %p131
      $region26: #{crepe_forward.1} parent=11 // pred_check_branch
        %393 = sbr.rel (%p391) target = $region28
      $region27: #{crepe_forward.1} parent=11 // pred_region
        _
      $region28: #{crepe_forward.1} parent=11 // pred_fallthru
        _
      // Predicated region
      $region29: #{crepe_forward.1} parent=11 // pred_check
        %p394 = pneg %p152
      $region30: #{crepe_forward.1} parent=11 // pred_check_branch
        %396 = sbr.rel (%p394) target = $region32
      $region31: #{crepe_forward.1} parent=11 // pred_region
        _
      $region32: #{crepe_forward.1} parent=11 // pred_fallthru
        _
      // Predicated region
      $region33: #{crepe_forward.1} parent=11 // pred_check
        %p397 = pneg %p173
      $region34: #{crepe_forward.1} parent=11 // pred_check_branch
        %399 = sbr.rel (%p397) target = $region36
      $region35: #{crepe_forward.1} parent=11 // pred_region
        _
      $region36: #{crepe_forward.1} parent=11 // pred_fallthru
        _
      // Predicated region
      $region37: #{crepe_forward.1} parent=11 // pred_check
        %p400 = pneg %p194
      $region38: #{crepe_forward.1} parent=11 // pred_check_branch
        %402 = sbr.rel (%p400) target = $region40
      $region39: #{crepe_forward.1} parent=11 // pred_region
        _
      $region40: #{crepe_forward.1} parent=11 // pred_fallthru
        _
      // Predicated region
      $region41: #{crepe_forward.1} parent=11 // pred_check
        %p403 = pneg %p215
      $region42: #{crepe_forward.1} parent=11 // pred_check_branch
        %405 = sbr.rel (%p403) target = $region44
      $region43: #{crepe_forward.1} parent=11 // pred_region
        _
      $region44: #{crepe_forward.1} parent=11 // pred_fallthru
        _
      // Predicated region
      $region45: #{crepe_forward.1} parent=11 // pred_check
        %p406 = pneg %p236
      $region46: #{crepe_forward.1} parent=11 // pred_check_branch
        %408 = sbr.rel (%p406) target = $region48
      $region47: #{crepe_forward.1} parent=11 // pred_region
        _
      $region48: #{crepe_forward.1} parent=11 // pred_fallthru
        _
      // Predicated region
      $region49: #{crepe_forward.1} parent=11 // pred_check
        %p409 = pneg %p257
      $region50: #{crepe_forward.1} parent=11 // pred_check_branch
        %411 = sbr.rel (%p409) target = $region52
      $region51: #{crepe_forward.1} parent=11 // pred_region
        _
      $region52: #{crepe_forward.1} parent=11 // pred_fallthru
        _
      // Predicated region
      $region53: #{crepe_forward.1} parent=11 // pred_check
        %p412 = pneg %p278
      $region54: #{crepe_forward.1} parent=11 // pred_check_branch
        %414 = sbr.rel (%p412) target = $region56
      $region55: #{crepe_forward.1} parent=11 // pred_region
        _
      $region56: #{crepe_forward.1} parent=11 // pred_fallthru
        _
      // Predicated region
      $region57: #{crepe_forward.1} parent=11 // pred_check
        %p415 = pneg %p299
      $region58: #{crepe_forward.1} parent=11 // pred_check_branch
        %417 = sbr.rel (%p415) target = $region60
      $region59: #{crepe_forward.1} parent=11 // pred_region
        _
      $region60: #{crepe_forward.1} parent=11 // pred_fallthru
        _
      // Predicated region
      $region61: #{crepe_forward.1} parent=11 // pred_check
        %p418 = pneg %p320
      $region62: #{crepe_forward.1} parent=11 // pred_check_branch
        %420 = sbr.rel (%p418) target = $region64
      $region63: #{crepe_forward.1} parent=11 // pred_region
        _
      $region64: #{crepe_forward.1} parent=11 // pred_fallthru
        _
      // Predicated region
      $region65: #{crepe_forward.1} parent=11 // pred_check
        %p421 = pneg %p341
      $region66: #{crepe_forward.1} parent=11 // pred_check_branch
        %423 = sbr.rel (%p421) target = $region68
      $region67: #{crepe_forward.1} parent=11 // pred_region
        _
      $region68: #{crepe_forward.1} parent=11 // pred_fallthru
        _
    $region12: #{crepe_forward.1} parent=5 // pred_fallthru
      _
    %p424 = scmp.lt.s32.totalorder %s21, 2
    // Predicated region
    $region69: #{crepe_forward.1} parent=5 // pred_check
      %p425 = pneg %p424
    $region70: #{crepe_forward.1} parent=5 // pred_check_branch
      %427 = sbr.rel (%p425) target = $region72
    $region71: #{crepe_forward.1} parent=5 // pred_region
      // Predicated region
      $region73: #{crepe_forward.1} parent=71 // pred_check
        %p428 = pneg %p41
      $region74: #{crepe_forward.1} parent=71 // pred_check_branch
        %430 = sbr.rel (%p428) target = $region76
      $region75: #{crepe_forward.1} parent=71 // pred_region
        %p431 = scmp.lt.s32.totalorder %s21, 1
        %s432 = scalar_select %p431, %s21, 1
        %s433 = smul.addr %s432, 2
        %s434 = smul.addr %s433, 8
        %s435 = scalar_lea.vmem %s0, %s434
      $region76: #{crepe_forward.1} parent=71 // pred_fallthru
        _
    $region72: #{crepe_forward.1} parent=5 // pred_fallthru
      _
    %p436 = scmp.le.s32.totalorder 1, %s21
    %p437 = scmp.lt.s32.totalorder %s21, 3
    %p438 = pnand %p436, %p437
    %p439 = pneg %p438
    // Predicated region
    $region77: #{crepe_forward.1} parent=5 // pred_check
      _
    $region78: #{crepe_forward.1} parent=5 // pred_check_branch
      %441 = sbr.rel (%p438) target = $region80
    $region79: #{crepe_forward.1} parent=5 // pred_region
      %s442 = ssub.s32 %s21, 1
      %p443 = scmp.lt.s32.totalorder %s26, 1
      %s444 = scalar_select %p443, %s26, 1
      %s445 = smul.addr %s444, 2
      %s446 = smul.addr %s445, 8
      %s447 = scalar_lea.vmem %s0, %s446
      %p448 = pneg %p47
      %p449 = pneg %p44
      %p450 = pneg %p68
      %p451 = pneg %p65
      %p452 = pneg %p89
      %p453 = pneg %p86
      %p454 = pneg %p110
      %p455 = pneg %p107
      %p456 = pneg %p131
      %p457 = pneg %p128
      %p458 = pneg %p152
      %p459 = pneg %p149
      %p460 = pneg %p173
      %p461 = pneg %p170
      %p462 = pneg %p194
      %p463 = pneg %p191
      %p464 = pneg %p215
      %p465 = pneg %p212
      %p466 = pneg %p236
      %p467 = pneg %p233
      %p468 = pneg %p257
      %p469 = pneg %p254
      %p470 = pneg %p278
      %p471 = pneg %p275
      %p472 = pneg %p299
      %p473 = pneg %p296
      %p474 = pneg %p320
      %p475 = pneg %p317
      %p476 = pneg %p341
      %p477 = pneg %p338
      %p478 = pneg %p367
      %p479 = pneg %p364
      %p480 = scmp.lt.s32.totalorder %s26, 1
      %s481 = scalar_select %p480, %s26, 1
      %s482 = smul.addr %s481, 3
      %s483 = scalar_lea.vmem %s15, %s482
      %p484 = scmp.lt.s32.totalorder %s26, 1
      %s485 = scalar_select %p484, %s26, 1
      %s486 = smul.addr %s485, 2
      %s487 = smul.addr %s486, 8
      %s488 = scalar_lea.vmem %s0, %s487
      %p489 = scmp.lt.s32.totalorder %s26, 1
      %s490 = scalar_select %p489, %s26, 1
      %s491 = smul.addr %s490, 3
      %s492 = scalar_lea.vmem %s15, %s491
      %494 = vst [vmem:[#allocation2] sm:$0xff] 0.0
      %495 = vst [vmem:[#allocation2 + $0x8] sm:$0xff] 0.0
      %496 = vst [vmem:[#allocation2 + $0x10] sm:$0xff] 0.0
      %497 = vst [vmem:[#allocation2 + $0x18] sm:$0xff] 0.0
      %498 = vst [vmem:[#allocation2 + $0x20] sm:$0xff] 0.0
      %499 = vst [vmem:[#allocation2 + $0x28] sm:$0xff] 0.0
      %500 = vst [vmem:[#allocation2 + $0x30] sm:$0xff] 0.0
      %501 = vst [vmem:[#allocation2 + $0x38] sm:$0xff] 0.0
      %502 = vst [vmem:[#allocation2 + $0x40] sm:$0xff] 0.0
      %503 = vst [vmem:[#allocation2 + $0x48] sm:$0xff] 0.0
      %504 = vst [vmem:[#allocation2 + $0x50] sm:$0xff] 0.0
      %505 = vst [vmem:[#allocation2 + $0x58] sm:$0xff] 0.0
      %506 = vst [vmem:[#allocation2 + $0x60] sm:$0xff] 0.0
      %507 = vst [vmem:[#allocation2 + $0x68] sm:$0xff] 0.0
      %508 = vst [vmem:[#allocation2 + $0x70] sm:$0xff] 0.0
      %509 = vst [vmem:[#allocation2 + $0x78] sm:$0xff] 0.0
      %510 = vst [vmem:[#allocation2 + $0x80] sm:$0xff] 0.0
      %511 = vst [vmem:[#allocation2 + $0x88] sm:$0xff] 0.0
      %512 = vst [vmem:[#allocation2 + $0x90] sm:$0xff] 0.0
      %513 = vst [vmem:[#allocation2 + $0x98] sm:$0xff] 0.0
      %514 = vst [vmem:[#allocation2 + $0xa0] sm:$0xff] 0.0
      %515 = vst [vmem:[#allocation2 + $0xa8] sm:$0xff] 0.0
      %516 = vst [vmem:[#allocation2 + $0xb0] sm:$0xff] 0.0
      %517 = vst [vmem:[#allocation2 + $0xb8] sm:$0xff] 0.0
      %vm518 = vcmask 130048
      %519 = vst.msk [vmem:[#allocation3] sm:$0xff] %vm518, 0.0
      %520 = vst.msk [vmem:[#allocation3 + $0x8] sm:$0xff] %vm518, 0.0
      %521 = vst.msk [vmem:[#allocation3 + $0x10] sm:$0xff] %vm518, 0.0
      %522 = vst.msk [vmem:[#allocation3 + $0x18] sm:$0xff] %vm518, 0.0
      %523 = vst.msk [vmem:[#allocation3 + $0x20] sm:$0xff] %vm518, 0.0
      %524 = vst.msk [vmem:[#allocation3 + $0x28] sm:$0xff] %vm518, 0.0
      %525 = vst.msk [vmem:[#allocation3 + $0x30] sm:$0xff] %vm518, 0.0
      %526 = vst.msk [vmem:[#allocation3 + $0x38] sm:$0xff] %vm518, 0.0
      %527 = vst.msk [vmem:[#allocation3 + $0x40] sm:$0xff] %vm518, 0.0
      %528 = vst.msk [vmem:[#allocation3 + $0x48] sm:$0xff] %vm518, 0.0
      %529 = vst.msk [vmem:[#allocation3 + $0x50] sm:$0xff] %vm518, 0.0
      %530 = vst.msk [vmem:[#allocation3 + $0x58] sm:$0xff] %vm518, 0.0
      %531 = vst.msk [vmem:[#allocation3 + $0x60] sm:$0xff] %vm518, 0.0
      %532 = vst.msk [vmem:[#allocation3 + $0x68] sm:$0xff] %vm518, 0.0
      %533 = vst.msk [vmem:[#allocation3 + $0x70] sm:$0xff] %vm518, 0.0
      %534 = vst.msk [vmem:[#allocation3 + $0x78] sm:$0xff] %vm518, 0.0
      %535 = vst.msk [vmem:[#allocation4] sm:$0xff] %vm518, 0.0
      %536 = vst.msk [vmem:[#allocation4 + $0x8] sm:$0xff] %vm518, 0.0
      %537 = vst.msk [vmem:[#allocation4 + $0x10] sm:$0xff] %vm518, 0.0
      %538 = vst.msk [vmem:[#allocation4 + $0x18] sm:$0xff] %vm518, 0.0
      %539 = vst.msk [vmem:[#allocation4 + $0x20] sm:$0xff] %vm518, 0.0
      %540 = vst.msk [vmem:[#allocation4 + $0x28] sm:$0xff] %vm518, 0.0
      %541 = vst.msk [vmem:[#allocation4 + $0x30] sm:$0xff] %vm518, 0.0
      %542 = vst.msk [vmem:[#allocation4 + $0x38] sm:$0xff] %vm518, 0.0
      %543 = vst.msk [vmem:[#allocation4 + $0x40] sm:$0xff] %vm518, 0.0
      %544 = vst.msk [vmem:[#allocation4 + $0x48] sm:$0xff] %vm518, 0.0
      %545 = vst.msk [vmem:[#allocation4 + $0x50] sm:$0xff] %vm518, 0.0
      %546 = vst.msk [vmem:[#allocation4 + $0x58] sm:$0xff] %vm518, 0.0
      %547 = vst.msk [vmem:[#allocation5] sm:$0xff] %vm518, 0.0
      %548 = vst.msk [vmem:[#allocation5 + $0x8] sm:$0xff] %vm518, 0.0
      %549 = vst.msk [vmem:[#allocation5 + $0x10] sm:$0xff] %vm518, 0.0
      %550 = vst.msk [vmem:[#allocation5 + $0x18] sm:$0xff] %vm518, 0.0
      %551 = vst.msk [vmem:[#allocation5 + $0x20] sm:$0xff] %vm518, 0.0
      %552 = vst.msk [vmem:[#allocation5 + $0x28] sm:$0xff] %vm518, 0.0
      %553 = vst.msk [vmem:[#allocation5 + $0x30] sm:$0xff] %vm518, 0.0
      %554 = vst.msk [vmem:[#allocation5 + $0x38] sm:$0xff] %vm518, 0.0
      %555 = vst.msk [vmem:[#allocation5 + $0x40] sm:$0xff] %vm518, 0.0
      %556 = vst.msk [vmem:[#allocation5 + $0x48] sm:$0xff] %vm518, 0.0
      %vm557 = vcmask 261120
      %558 = vst.msk [vmem:[#allocation6] sm:$0xff] %vm557, 0.0
      %559 = vst.msk [vmem:[#allocation6 + $0x8] sm:$0xff] %vm557, 0.0
      %560 = vst.msk [vmem:[#allocation6 + $0x10] sm:$0xff] %vm557, 0.0
      %561 = vst.msk [vmem:[#allocation6 + $0x18] sm:$0xff] %vm557, 0.0
      %562 = vst.msk [vmem:[#allocation6 + $0x20] sm:$0xff] %vm557, 0.0
      %563 = vst.msk [vmem:[#allocation6 + $0x28] sm:$0xff] %vm557, 0.0
      %564 = vst.msk [vmem:[#allocation6 + $0x30] sm:$0xff] %vm557, 0.0
      %565 = vst.msk [vmem:[#allocation6 + $0x38] sm:$0xff] %vm557, 0.0
      %566 = vst.msk [vmem:[#allocation6 + $0x40] sm:$0xff] %vm557, 0.0
      %v567 = vld [vmem:[%s488] sm:$0xff]
      %v568 = vld [vmem:[%s488 + $0x8] sm:$0xff]
      %v569 = vld [vmem:[%s1] sm:$0xf]
      %v570 = vld [vmem:[%s1 + $0x4] sm:$0xf]
      %v571 = vld [vmem:[%s1 + $0x8] sm:$0xf]
      %v572 = vld [vmem:[%s1 + $0xc] sm:$0xf]
      %v573 = vld [vmem:[%s1 + $0x10] sm:$0xf]
      %v574 = vld [vmem:[%s1 + $0x14] sm:$0xf]
      %v575 = vld [vmem:[%s1 + $0x18] sm:$0xf]
      %v576 = vld [vmem:[%s1 + $0x1c] sm:$0xf]
      %v577 = vld [vmem:[%s1 + $0x20] sm:$0xf]
      %v578 = vld [vmem:[%s1 + $0x24] sm:$0xf]
      %v579 = vld [vmem:[%s1 + $0x28] sm:$0xf]
      %v580 = vld [vmem:[%s1 + $0x2c] sm:$0xf]
      %v581 = vld [vmem:[%s1 + $0x30] sm:$0xf]
      %v582 = vld [vmem:[%s1 + $0x34] sm:$0xf]
      %v583 = vld [vmem:[%s1 + $0x38] sm:$0xf]
      %v584 = vld [vmem:[%s1 + $0x3c] sm:$0xf]
      %v585 = vld [vmem:[%s1 + $0x40] sm:$0xf]
      %v586 = vld [vmem:[%s1 + $0x44] sm:$0xf]
      %v587 = vld [vmem:[%s1 + $0x48] sm:$0xf]
      %v588 = vld [vmem:[%s1 + $0x4c] sm:$0xf]
      %v589 = vld [vmem:[%s1 + $0x50] sm:$0xf]
      %v590 = vld [vmem:[%s1 + $0x54] sm:$0xf]
      %v591 = vld [vmem:[%s1 + $0x58] sm:$0xf]
      %v592 = vld [vmem:[%s1 + $0x5c] sm:$0xf]
      %v593 = vld [vmem:[%s1 + $0x60] sm:$0xf]
      %v594 = vld [vmem:[%s1 + $0x64] sm:$0xf]
      %v595 = vld [vmem:[%s1 + $0x68] sm:$0xf]
      %v596 = vld [vmem:[%s1 + $0x6c] sm:$0xf]
      %v597 = vld [vmem:[%s1 + $0x70] sm:$0xf]
      %v598 = vld [vmem:[%s1 + $0x74] sm:$0xf]
      %v599 = vld [vmem:[%s1 + $0x78] sm:$0xf]
      %v600 = vld [vmem:[%s1 + $0x7c] sm:$0xf]
      %v601 = vld [vmem:[%s1 + $0x80] sm:$0xf]
      %v602 = vld [vmem:[%s1 + $0x84] sm:$0xf]
      %v603 = vld [vmem:[%s1 + $0x88] sm:$0xf]
      %v604 = vld [vmem:[%s1 + $0x8c] sm:$0xf]
      %v605 = vld [vmem:[%s1 + $0x90] sm:$0xf]
      %v606 = vld [vmem:[%s1 + $0x94] sm:$0xf]
      %v607 = vld [vmem:[%s1 + $0x98] sm:$0xf]
      %v608 = vld [vmem:[%s1 + $0x9c] sm:$0xf]
      %v609 = vld [vmem:[%s1 + $0xa0] sm:$0xf]
      %v610 = vld [vmem:[%s1 + $0xa4] sm:$0xf]
      %v611 = vld [vmem:[%s1 + $0xa8] sm:$0xf]
      %v612 = vld [vmem:[%s1 + $0xac] sm:$0xf]
      %v613 = vld [vmem:[%s1 + $0xb0] sm:$0xf]
      %v614 = vld [vmem:[%s1 + $0xb4] sm:$0xf]
      %v615 = vld [vmem:[%s1 + $0xb8] sm:$0xf]
      %v616 = vld [vmem:[%s1 + $0xbc] sm:$0xf]
      %v617 = vld [vmem:[%s1 + $0xc0] sm:$0xf]
      %v618 = vld [vmem:[%s1 + $0xc4] sm:$0xf]
      %v619 = vld [vmem:[%s1 + $0xc8] sm:$0xf]
      %v620 = vld [vmem:[%s1 + $0xcc] sm:$0xf]
      %v621 = vld [vmem:[%s1 + $0xd0] sm:$0xf]
      %v622 = vld [vmem:[%s1 + $0xd4] sm:$0xf]
      %v623 = vld [vmem:[%s1 + $0xd8] sm:$0xf]
      %v624 = vld [vmem:[%s1 + $0xdc] sm:$0xf]
      %v625 = vld [vmem:[%s1 + $0xe0] sm:$0xf]
      %v626 = vld [vmem:[%s1 + $0xe4] sm:$0xf]
      %v627 = vld [vmem:[%s1 + $0xe8] sm:$0xf]
      %v628 = vld [vmem:[%s1 + $0xec] sm:$0xf]
      %v629 = vld [vmem:[%s1 + $0xf0] sm:$0xf]
      %v630 = vld [vmem:[%s1 + $0xf4] sm:$0xf]
      %v631 = vld [vmem:[%s1 + $0xf8] sm:$0xf]
      %v632 = vld [vmem:[%s1 + $0xfc] sm:$0xf]
      %v633 = vld [vmem:[%s2] sm:$0x1]
      %v634 = vld [vmem:[%s2 + $0x1] sm:$0x1]
      %v635 = vld [vmem:[%s2 + $0x2] sm:$0x1]
      %vm638 = vcmask 1046528
      %v639 = vrot.slane %v567, 1
      %v640 = vrot.slane %v568, 1
      %v641 = vsel %vm638, %v639, %v640
      %vm643 = vcmask 1045504
      %v644 = vrot.slane %v567, 2
      %v645 = vrot.slane %v568, 2
      %v646 = vsel %vm643, %v644, %v645
      %vm648 = vcmask 1044480
      %v649 = vrot.slane %v567, 3
      %v650 = vrot.slane %v568, 3
      %v651 = vsel %vm648, %v649, %v650
      %v653 = vpack.c.bf16 %v567, %v567
      %v654 = vpack.c.bf16 %v641, %v641
      %v655 = vpack.c.bf16 %v646, %v646
      %v656 = vpack.c.bf16 %v651, %v651
      %v657 = vperm.slane %v633, 0
      %v722 = vunpack.c.l.b16 %v569
      %v723 = vunpack.c.l.b16 %v570
      %v724 = vunpack.c.l.b16 %v571
      %v725 = vunpack.c.l.b16 %v572
      %v726 = vunpack.c.l.b16 %v573
      %v727 = vunpack.c.l.b16 %v574
      %v728 = vunpack.c.l.b16 %v575
      %v729 = vunpack.c.l.b16 %v576
      %v730 = vunpack.c.l.b16 %v577
      %v731 = vunpack.c.l.b16 %v578
      %v732 = vunpack.c.l.b16 %v579
      %v733 = vunpack.c.l.b16 %v580
      %v734 = vunpack.c.l.b16 %v581
      %v735 = vunpack.c.l.b16 %v582
      %v736 = vunpack.c.l.b16 %v583
      %v737 = vunpack.c.l.b16 %v584
      %v738 = vunpack.c.l.b16 %v585
      %v739 = vunpack.c.l.b16 %v586
      %v740 = vunpack.c.l.b16 %v587
      %v741 = vunpack.c.l.b16 %v588
      %v742 = vunpack.c.l.b16 %v589
      %v743 = vunpack.c.l.b16 %v590
      %v744 = vunpack.c.l.b16 %v591
      %v745 = vunpack.c.l.b16 %v592
      %v746 = vunpack.c.l.b16 %v593
      %v747 = vunpack.c.l.b16 %v594
      %v748 = vunpack.c.l.b16 %v595
      %v749 = vunpack.c.l.b16 %v596
      %v750 = vunpack.c.l.b16 %v597
      %v751 = vunpack.c.l.b16 %v598
      %v752 = vunpack.c.l.b16 %v599
      %v753 = vunpack.c.l.b16 %v600
      %v754 = vunpack.c.l.b16 %v601
      %v755 = vunpack.c.l.b16 %v602
      %v756 = vunpack.c.l.b16 %v603
      %v757 = vunpack.c.l.b16 %v604
      %v758 = vunpack.c.l.b16 %v605
      %v759 = vunpack.c.l.b16 %v606
      %v760 = vunpack.c.l.b16 %v607
      %v761 = vunpack.c.l.b16 %v608
      %v762 = vunpack.c.l.b16 %v609
      %v763 = vunpack.c.l.b16 %v610
      %v764 = vunpack.c.l.b16 %v611
      %v765 = vunpack.c.l.b16 %v612
      %v766 = vunpack.c.l.b16 %v613
      %v767 = vunpack.c.l.b16 %v614
      %v768 = vunpack.c.l.b16 %v615
      %v769 = vunpack.c.l.b16 %v616
      %v770 = vunpack.c.l.b16 %v617
      %v771 = vunpack.c.l.b16 %v618
      %v772 = vunpack.c.l.b16 %v619
      %v773 = vunpack.c.l.b16 %v620
      %v774 = vunpack.c.l.b16 %v621
      %v775 = vunpack.c.l.b16 %v622
      %v776 = vunpack.c.l.b16 %v623
      %v777 = vunpack.c.l.b16 %v624
      %v778 = vunpack.c.l.b16 %v625
      %v779 = vunpack.c.l.b16 %v626
      %v780 = vunpack.c.l.b16 %v627
      %v781 = vunpack.c.l.b16 %v628
      %v782 = vunpack.c.l.b16 %v629
      %v783 = vunpack.c.l.b16 %v630
      %v784 = vunpack.c.l.b16 %v631
      %v785 = vunpack.c.l.b16 %v632
      %v786 = vpack.c.b16 %v723, %v722
      %v787 = vpack.c.b16 %v725, %v724
      %v788 = vpack.c.b16 %v727, %v726
      %v789 = vpack.c.b16 %v729, %v728
      %v790 = vpack.c.b16 %v731, %v730
      %v791 = vpack.c.b16 %v733, %v732
      %v792 = vpack.c.b16 %v735, %v734
      %v793 = vpack.c.b16 %v737, %v736
      %v794 = vpack.c.b16 %v739, %v738
      %v795 = vpack.c.b16 %v741, %v740
      %v796 = vpack.c.b16 %v743, %v742
      %v797 = vpack.c.b16 %v745, %v744
      %v798 = vpack.c.b16 %v747, %v746
      %v799 = vpack.c.b16 %v749, %v748
      %v800 = vpack.c.b16 %v751, %v750
      %v801 = vpack.c.b16 %v753, %v752
      %v802 = vpack.c.b16 %v755, %v754
      %v803 = vpack.c.b16 %v757, %v756
      %v804 = vpack.c.b16 %v759, %v758
      %v805 = vpack.c.b16 %v761, %v760
      %v806 = vpack.c.b16 %v763, %v762
      %v807 = vpack.c.b16 %v765, %v764
      %v808 = vpack.c.b16 %v767, %v766
      %v809 = vpack.c.b16 %v769, %v768
      %v810 = vpack.c.b16 %v771, %v770
      %v811 = vpack.c.b16 %v773, %v772
      %v812 = vpack.c.b16 %v775, %v774
      %v813 = vpack.c.b16 %v777, %v776
      %v814 = vpack.c.b16 %v779, %v778
      %v815 = vpack.c.b16 %v781, %v780
      %v816 = vpack.c.b16 %v783, %v782
      %v817 = vpack.c.b16 %v785, %v784
      %850 = vmatpush.bf16.msra.mxu0 %v793
      %851 = vmatpush.bf16.msra.mxu0 %v792
      %852 = vmatpush.bf16.msra.mxu0 %v791
      %853 = vmatpush.bf16.msra.mxu0 %v790
      %854 = vmatpush.bf16.msra.mxu0 %v789
      %855 = vmatpush.bf16.msra.mxu0 %v788
      %856 = vmatpush.bf16.msra.mxu0 %v787
      %857 = vmatpush.bf16.msra.mxu0 %v786
      %858 = vmatmul.bf16.gmra.mxu0 %v653
      %v859 = vpop.f32.mrf.mxu0
      %v860 = vadd.f32 %v657, %v859
      %v861 = vpop.f32.mrf.mxu0
      %862 = vdwg.mxu0
      %863 = vmatpush.bf16.msra.mxu0 %v801
      %864 = vmatpush.bf16.msra.mxu0 %v800
      %865 = vmatpush.bf16.msra.mxu0 %v799
      %866 = vmatpush.bf16.msra.mxu0 %v798
      %867 = vmatpush.bf16.msra.mxu0 %v797
      %868 = vmatpush.bf16.msra.mxu0 %v796
      %869 = vmatpush.bf16.msra.mxu0 %v795
      %870 = vmatpush.bf16.msra.mxu0 %v794
      %871 = vmatmul.bf16.gmra.mxu0 %v654
      %v872 = vpop.f32.mrf.mxu0
      %v873 = vadd.f32 %v860, %v872
      %v874 = vpop.f32.mrf.mxu0
      %875 = vdwg.mxu0
      %876 = vmatpush.bf16.msra.mxu0 %v809
      %877 = vmatpush.bf16.msra.mxu0 %v808
      %878 = vmatpush.bf16.msra.mxu0 %v807
      %879 = vmatpush.bf16.msra.mxu0 %v806
      %880 = vmatpush.bf16.msra.mxu0 %v805
      %881 = vmatpush.bf16.msra.mxu0 %v804
      %882 = vmatpush.bf16.msra.mxu0 %v803
      %883 = vmatpush.bf16.msra.mxu0 %v802
      %884 = vmatmul.bf16.gmra.mxu0 %v655
      %v885 = vpop.f32.mrf.mxu0
      %v886 = vadd.f32 %v873, %v885
      %v887 = vpop.f32.mrf.mxu0
      %888 = vdwg.mxu0
      %889 = vmatpush.bf16.msra.mxu0 %v817
      %890 = vmatpush.bf16.msra.mxu0 %v816
      %891 = vmatpush.bf16.msra.mxu0 %v815
      %892 = vmatpush.bf16.msra.mxu0 %v814
      %893 = vmatpush.bf16.msra.mxu0 %v813
      %894 = vmatpush.bf16.msra.mxu0 %v812
      %895 = vmatpush.bf16.msra.mxu0 %v811
      %896 = vmatpush.bf16.msra.mxu0 %v810
      %897 = vmatmul.bf16.gmra.mxu0 %v656
      %v898 = vpop.f32.mrf.mxu0
      %v899 = vadd.f32 %v886, %v898
      %v900 = vpop.f32.mrf.mxu0
      %901 = vdwg.mxu0
      %v902 = vmax.f32 %v899, 0.0
      %v903 = vperm.slane %v634, 0
      %v904 = vmul.f32 %v902, %v903
      %v905 = vperm.slane %v635, 0
      %v906 = vadd.f32 %v904, %v905
      %907 = vrot.lane.b32.xlu0 %v567, 124
      %v908 = vpop.permute.xlu0 %907
      %909 = vrot.lane.b32.xlu0 %v568, 124
      %v910 = vpop.permute.xlu0 %909
      %913 = vrot.lane.b32.xlu0 %v641, 124
      %v914 = vpop.permute.xlu0 %913
      %915 = vrot.lane.b32.xlu0 %v640, 124
      %v916 = vpop.permute.xlu0 %915
      %vm919 = vcmask 1014784
      %v920 = vsel %vm919, %v908, %v914
      %v921 = vsel %vm919, %v910, %v916
      %v924 = vrot.slane %v920, 1
      %v925 = vrot.slane %v921, 1
      %v926 = vsel %vm638, %v924, %v925
      %v928 = vrot.slane %v920, 2
      %v929 = vrot.slane %v921, 2
      %v930 = vsel %vm643, %v928, %v929
      %v932 = vrot.slane %v920, 3
      %v933 = vrot.slane %v921, 3
      %v934 = vsel %vm648, %v932, %v933
      %v936 = vpack.c.bf16 %v920, %v920
      %v937 = vpack.c.bf16 %v926, %v926
      %v938 = vpack.c.bf16 %v930, %v930
      %v939 = vpack.c.bf16 %v934, %v934
      %940 = vmatpush.bf16.msra.mxu0 %v793
      %941 = vmatpush.bf16.msra.mxu0 %v792
      %942 = vmatpush.bf16.msra.mxu0 %v791
      %943 = vmatpush.bf16.msra.mxu0 %v790
      %944 = vmatpush.bf16.msra.mxu0 %v789
      %945 = vmatpush.bf16.msra.mxu0 %v788
      %946 = vmatpush.bf16.msra.mxu0 %v787
      %947 = vmatpush.bf16.msra.mxu0 %v786
      %948 = vmatmul.bf16.gmra.mxu0 %v936
      %v949 = vpop.f32.mrf.mxu0
      %v950 = vadd.f32 %v657, %v949
      %v951 = vpop.f32.mrf.mxu0
      %952 = vdwg.mxu0
      %953 = vmatpush.bf16.msra.mxu0 %v801
      %954 = vmatpush.bf16.msra.mxu0 %v800
      %955 = vmatpush.bf16.msra.mxu0 %v799
      %956 = vmatpush.bf16.msra.mxu0 %v798
      %957 = vmatpush.bf16.msra.mxu0 %v797
      %958 = vmatpush.bf16.msra.mxu0 %v796
      %959 = vmatpush.bf16.msra.mxu0 %v795
      %960 = vmatpush.bf16.msra.mxu0 %v794
      %961 = vmatmul.bf16.gmra.mxu0 %v937
      %v962 = vpop.f32.mrf.mxu0
      %v963 = vadd.f32 %v950, %v962
      %v964 = vpop.f32.mrf.mxu0
      %965 = vdwg.mxu0
      %966 = vmatpush.bf16.msra.mxu0 %v809
      %967 = vmatpush.bf16.msra.mxu0 %v808
      %968 = vmatpush.bf16.msra.mxu0 %v807
      %969 = vmatpush.bf16.msra.mxu0 %v806
      %970 = vmatpush.bf16.msra.mxu0 %v805
      %971 = vmatpush.bf16.msra.mxu0 %v804
      %972 = vmatpush.bf16.msra.mxu0 %v803
      %973 = vmatpush.bf16.msra.mxu0 %v802
      %974 = vmatmul.bf16.gmra.mxu0 %v938
      %v975 = vpop.f32.mrf.mxu0
      %v976 = vadd.f32 %v963, %v975
      %v977 = vpop.f32.mrf.mxu0
      %978 = vdwg.mxu0
      %979 = vmatpush.bf16.msra.mxu0 %v817
      %980 = vmatpush.bf16.msra.mxu0 %v816
      %981 = vmatpush.bf16.msra.mxu0 %v815
      %982 = vmatpush.bf16.msra.mxu0 %v814
      %983 = vmatpush.bf16.msra.mxu0 %v813
      %984 = vmatpush.bf16.msra.mxu0 %v812
      %985 = vmatpush.bf16.msra.mxu0 %v811
      %986 = vmatpush.bf16.msra.mxu0 %v810
      %987 = vmatmul.bf16.gmra.mxu0 %v939
      %v988 = vpop.f32.mrf.mxu0
      %v989 = vadd.f32 %v976, %v988
      %v990 = vpop.f32.mrf.mxu0
      %991 = vdwg.mxu0
      %v992 = vmax.f32 %v989, 0.0
      %v993 = vmul.f32 %v992, %v903
      %v994 = vadd.f32 %v993, %v905
      %v995 = vmax.f32 %v906, %v994
      %996 = vst [vmem:[#allocation2 + $0x1f] sm:$0x1] %v995
      %997 = vst [vmem:[#allocation2 + $0x2e] sm:$0x2] %v995
      %998 = vst [vmem:[#allocation2 + $0x3d] sm:$0x4] %v995
      %999 = vst [vmem:[#allocation2 + $0x4c] sm:$0x8] %v995
      %1000 = vst [vmem:[#allocation2 + $0x5b] sm:$0x10] %v995
      %1001 = vst [vmem:[#allocation2 + $0x6a] sm:$0x20] %v995
      %1002 = vst [vmem:[#allocation2 + $0x79] sm:$0x40] %v995
      %1003 = vst [vmem:[#allocation2 + $0x88] sm:$0x80] %v995
      %1004 = vrot.lane.b32.xlu0 %v567, 120
      %v1005 = vpop.permute.xlu0 %1004
      %1006 = vrot.lane.b32.xlu0 %v568, 120
      %v1007 = vpop.permute.xlu0 %1006
      %1010 = vrot.lane.b32.xlu0 %v641, 120
      %v1011 = vpop.permute.xlu0 %1010
      %1012 = vrot.lane.b32.xlu0 %v640, 120
      %v1013 = vpop.permute.xlu0 %1012
      %vm1016 = vcmask 982016
      %v1017 = vsel %vm1016, %v1005, %v1011
      %v1018 = vsel %vm1016, %v1007, %v1013
      %v1021 = vrot.slane %v1017, 1
      %v1022 = vrot.slane %v1018, 1
      %v1023 = vsel %vm638, %v1021, %v1022
      %v1025 = vrot.slane %v1017, 2
      %v1026 = vrot.slane %v1018, 2
      %v1027 = vsel %vm643, %v1025, %v1026
      %v1029 = vrot.slane %v1017, 3
      %v1030 = vrot.slane %v1018, 3
      %v1031 = vsel %vm648, %v1029, %v1030
      %v1033 = vpack.c.bf16 %v1017, %v1017
      %v1034 = vpack.c.bf16 %v1023, %v1023
      %v1035 = vpack.c.bf16 %v1027, %v1027
      %v1036 = vpack.c.bf16 %v1031, %v1031
      %1037 = vmatpush.bf16.msra.mxu0 %v793
      %1038 = vmatpush.bf16.msra.mxu0 %v792
      %1039 = vmatpush.bf16.msra.mxu0 %v791
      %1040 = vmatpush.bf16.msra.mxu0 %v790
      %1041 = vmatpush.bf16.msra.mxu0 %v789
      %1042 = vmatpush.bf16.msra.mxu0 %v788
      %1043 = vmatpush.bf16.msra.mxu0 %v787
      %1044 = vmatpush.bf16.msra.mxu0 %v786
      %1045 = vmatmul.bf16.gmra.mxu0 %v1033
      %v1046 = vpop.f32.mrf.mxu0
      %v1047 = vadd.f32 %v657, %v1046
      %v1048 = vpop.f32.mrf.mxu0
      %1049 = vdwg.mxu0
      %1050 = vmatpush.bf16.msra.mxu0 %v801
      %1051 = vmatpush.bf16.msra.mxu0 %v800
      %1052 = vmatpush.bf16.msra.mxu0 %v799
      %1053 = vmatpush.bf16.msra.mxu0 %v798
      %1054 = vmatpush.bf16.msra.mxu0 %v797
      %1055 = vmatpush.bf16.msra.mxu0 %v796
      %1056 = vmatpush.bf16.msra.mxu0 %v795
      %1057 = vmatpush.bf16.msra.mxu0 %v794
      %1058 = vmatmul.bf16.gmra.mxu0 %v1034
      %v1059 = vpop.f32.mrf.mxu0
      %v1060 = vadd.f32 %v1047, %v1059
      %v1061 = vpop.f32.mrf.mxu0
      %1062 = vdwg.mxu0
      %1063 = vmatpush.bf16.msra.mxu0 %v809
      %1064 = vmatpush.bf16.msra.mxu0 %v808
      %1065 = vmatpush.bf16.msra.mxu0 %v807
      %1066 = vmatpush.bf16.msra.mxu0 %v806
      %1067 = vmatpush.bf16.msra.mxu0 %v805
      %1068 = vmatpush.bf16.msra.mxu0 %v804
      %1069 = vmatpush.bf16.msra.mxu0 %v803
      %1070 = vmatpush.bf16.msra.mxu0 %v802
      %1071 = vmatmul.bf16.gmra.mxu0 %v1035
      %v1072 = vpop.f32.mrf.mxu0
      %v1073 = vadd.f32 %v1060, %v1072
      %v1074 = vpop.f32.mrf.mxu0
      %1075 = vdwg.mxu0
      %1076 = vmatpush.bf16.msra.mxu0 %v817
      %1077 = vmatpush.bf16.msra.mxu0 %v816
      %1078 = vmatpush.bf16.msra.mxu0 %v815
      %1079 = vmatpush.bf16.msra.mxu0 %v814
      %1080 = vmatpush.bf16.msra.mxu0 %v813
      %1081 = vmatpush.bf16.msra.mxu0 %v812
      %1082 = vmatpush.bf16.msra.mxu0 %v811
      %1083 = vmatpush.bf16.msra.mxu0 %v810
      %1084 = vmatmul.bf16.gmra.mxu0 %v1036
      %v1085 = vpop.f32.mrf.mxu0
      %v1086 = vadd.f32 %v1073, %v1085
      %v1087 = vpop.f32.mrf.mxu0
      %1088 = vdwg.mxu0
      %v1089 = vmax.f32 %v1086, 0.0
      %v1090 = vmul.f32 %v1089, %v903
      %v1091 = vadd.f32 %v1090, %v905
      %1092 = vrot.lane.b32.xlu0 %v567, 116
      %v1093 = vpop.permute.xlu0 %1092
      %1094 = vrot.lane.b32.xlu0 %v568, 116
      %v1095 = vpop.permute.xlu0 %1094
      %1098 = vrot.lane.b32.xlu0 %v641, 116
      %v1099 = vpop.permute.xlu0 %1098
      %1100 = vrot.lane.b32.xlu0 %v640, 116
      %v1101 = vpop.permute.xlu0 %1100
      %vm1104 = vcmask 949248
      %v1105 = vsel %vm1104, %v1093, %v1099
      %v1106 = vsel %vm1104, %v1095, %v1101
      %v1109 = vrot.slane %v1105, 1
      %v1110 = vrot.slane %v1106, 1
      %v1111 = vsel %vm638, %v1109, %v1110
      %v1113 = vrot.slane %v1105, 2
      %v1114 = vrot.slane %v1106, 2
      %v1115 = vsel %vm643, %v1113, %v1114
      %v1117 = vrot.slane %v1105, 3
      %v1118 = vrot.slane %v1106, 3
      %v1119 = vsel %vm648, %v1117, %v1118
      %v1121 = vpack.c.bf16 %v1105, %v1105
      %v1122 = vpack.c.bf16 %v1111, %v1111
      %v1123 = vpack.c.bf16 %v1115, %v1115
      %v1124 = vpack.c.bf16 %v1119, %v1119
      %1125 = vmatpush.bf16.msra.mxu0 %v793
      %1126 = vmatpush.bf16.msra.mxu0 %v792
      %1127 = vmatpush.bf16.msra.mxu0 %v791
      %1128 = vmatpush.bf16.msra.mxu0 %v790
      %1129 = vmatpush.bf16.msra.mxu0 %v789
      %1130 = vmatpush.bf16.msra.mxu0 %v788
      %1131 = vmatpush.bf16.msra.mxu0 %v787
      %1132 = vmatpush.bf16.msra.mxu0 %v786
      %1133 = vmatmul.bf16.gmra.mxu0 %v1121
      %v1134 = vpop.f32.mrf.mxu0
      %v1135 = vadd.f32 %v657, %v1134
      %v1136 = vpop.f32.mrf.mxu0
      %1137 = vdwg.mxu0
      %1138 = vmatpush.bf16.msra.mxu0 %v801
      %1139 = vmatpush.bf16.msra.mxu0 %v800
      %1140 = vmatpush.bf16.msra.mxu0 %v799
      %1141 = vmatpush.bf16.msra.mxu0 %v798
      %1142 = vmatpush.bf16.msra.mxu0 %v797
      %1143 = vmatpush.bf16.msra.mxu0 %v796
      %1144 = vmatpush.bf16.msra.mxu0 %v795
      %1145 = vmatpush.bf16.msra.mxu0 %v794
      %1146 = vmatmul.bf16.gmra.mxu0 %v1122
      %v1147 = vpop.f32.mrf.mxu0
      %v1148 = vadd.f32 %v1135, %v1147
      %v1149 = vpop.f32.mrf.mxu0
      %1150 = vdwg.mxu0
      %1151 = vmatpush.bf16.msra.mxu0 %v809
      %1152 = vmatpush.bf16.msra.mxu0 %v808
      %1153 = vmatpush.bf16.msra.mxu0 %v807
      %1154 = vmatpush.bf16.msra.mxu0 %v806
      %1155 = vmatpush.bf16.msra.mxu0 %v805
      %1156 = vmatpush.bf16.msra.mxu0 %v804
      %1157 = vmatpush.bf16.msra.mxu0 %v803
      %1158 = vmatpush.bf16.msra.mxu0 %v802
      %1159 = vmatmul.bf16.gmra.mxu0 %v1123
      %v1160 = vpop.f32.mrf.mxu0
      %v1161 = vadd.f32 %v1148, %v1160
      %v1162 = vpop.f32.mrf.mxu0
      %1163 = vdwg.mxu0
      %1164 = vmatpush.bf16.msra.mxu0 %v817
      %1165 = vmatpush.bf16.msra.mxu0 %v816
      %1166 = vmatpush.bf16.msra.mxu0 %v815
      %1167 = vmatpush.bf16.msra.mxu0 %v814
      %1168 = vmatpush.bf16.msra.mxu0 %v813
      %1169 = vmatpush.bf16.msra.mxu0 %v812
      %1170 = vmatpush.bf16.msra.mxu0 %v811
      %1171 = vmatpush.bf16.msra.mxu0 %v810
      %1172 = vmatmul.bf16.gmra.mxu0 %v1124
      %v1173 = vpop.f32.mrf.mxu0
      %v1174 = vadd.f32 %v1161, %v1173
      %v1175 = vpop.f32.mrf.mxu0
      %1176 = vdwg.mxu0
      %v1177 = vmax.f32 %v1174, 0.0
      %v1178 = vmul.f32 %v1177, %v903
      %v1179 = vadd.f32 %v1178, %v905
      %v1180 = vmax.f32 %v1091, %v1179
      %1181 = vst [vmem:[#allocation2 + $0x20] sm:$0x1] %v1180
      %1182 = vst [vmem:[#allocation2 + $0x2f] sm:$0x2] %v1180
      %1183 = vst [vmem:[#allocation2 + $0x3e] sm:$0x4] %v1180
      %1184 = vst [vmem:[#allocation2 + $0x4d] sm:$0x8] %v1180
      %1185 = vst [vmem:[#allocation2 + $0x5c] sm:$0x10] %v1180
      %1186 = vst [vmem:[#allocation2 + $0x6b] sm:$0x20] %v1180
      %1187 = vst [vmem:[#allocation2 + $0x7a] sm:$0x40] %v1180
      %1188 = vst [vmem:[#allocation2 + $0x89] sm:$0x80] %v1180
      %1189 = vrot.lane.b32.xlu0 %v567, 112
      %v1190 = vpop.permute.xlu0 %1189
      %1191 = vrot.lane.b32.xlu0 %v568, 112
      %v1192 = vpop.permute.xlu0 %1191
      %1195 = vrot.lane.b32.xlu0 %v641, 112
      %v1196 = vpop.permute.xlu0 %1195
      %1197 = vrot.lane.b32.xlu0 %v640, 112
      %v1198 = vpop.permute.xlu0 %1197
      %vm1201 = vcmask 916480
      %v1202 = vsel %vm1201, %v1190, %v1196
      %v1203 = vsel %vm1201, %v1192, %v1198
      %v1206 = vrot.slane %v1202, 1
      %v1207 = vrot.slane %v1203, 1
      %v1208 = vsel %vm638, %v1206, %v1207
      %v1210 = vrot.slane %v1202, 2
      %v1211 = vrot.slane %v1203, 2
      %v1212 = vsel %vm643, %v1210, %v1211
      %v1214 = vrot.slane %v1202, 3
      %v1215 = vrot.slane %v1203, 3
      %v1216 = vsel %vm648, %v1214, %v1215
      %v1218 = vpack.c.bf16 %v1202, %v1202
      %v1219 = vpack.c.bf16 %v1208, %v1208
      %v1220 = vpack.c.bf16 %v1212, %v1212
      %v1221 = vpack.c.bf16 %v1216, %v1216
      %1222 = vmatpush.bf16.msra.mxu0 %v793
      %1223 = vmatpush.bf16.msra.mxu0 %v792
      %1224 = vmatpush.bf16.msra.mxu0 %v791
      %1225 = vmatpush.bf16.msra.mxu0 %v790
      %1226 = vmatpush.bf16.msra.mxu0 %v789
      %1227 = vmatpush.bf16.msra.mxu0 %v788
      %1228 = vmatpush.bf16.msra.mxu0 %v787
      %1229 = vmatpush.bf16.msra.mxu0 %v786
      %1230 = vmatmul.bf16.gmra.mxu0 %v1218
      %v1231 = vpop.f32.mrf.mxu0
      %v1232 = vadd.f32 %v657, %v1231
      %v1233 = vpop.f32.mrf.mxu0
      %1234 = vdwg.mxu0
      %1235 = vmatpush.bf16.msra.mxu0 %v801
      %1236 = vmatpush.bf16.msra.mxu0 %v800
      %1237 = vmatpush.bf16.msra.mxu0 %v799
      %1238 = vmatpush.bf16.msra.mxu0 %v798
      %1239 = vmatpush.bf16.msra.mxu0 %v797
      %1240 = vmatpush.bf16.msra.mxu0 %v796
      %1241 = vmatpush.bf16.msra.mxu0 %v795
      %1242 = vmatpush.bf16.msra.mxu0 %v794
      %1243 = vmatmul.bf16.gmra.mxu0 %v1219
      %v1244 = vpop.f32.mrf.mxu0
      %v1245 = vadd.f32 %v1232, %v1244
      %v1246 = vpop.f32.mrf.mxu0
      %1247 = vdwg.mxu0
      %1248 = vmatpush.bf16.msra.mxu0 %v809
      %1249 = vmatpush.bf16.msra.mxu0 %v808
      %1250 = vmatpush.bf16.msra.mxu0 %v807
      %1251 = vmatpush.bf16.msra.mxu0 %v806
      %1252 = vmatpush.bf16.msra.mxu0 %v805
      %1253 = vmatpush.bf16.msra.mxu0 %v804
      %1254 = vmatpush.bf16.msra.mxu0 %v803
      %1255 = vmatpush.bf16.msra.mxu0 %v802
      %1256 = vmatmul.bf16.gmra.mxu0 %v1220
      %v1257 = vpop.f32.mrf.mxu0
      %v1258 = vadd.f32 %v1245, %v1257
      %v1259 = vpop.f32.mrf.mxu0
      %1260 = vdwg.mxu0
      %1261 = vmatpush.bf16.msra.mxu0 %v817
      %1262 = vmatpush.bf16.msra.mxu0 %v816
      %1263 = vmatpush.bf16.msra.mxu0 %v815
      %1264 = vmatpush.bf16.msra.mxu0 %v814
      %1265 = vmatpush.bf16.msra.mxu0 %v813
      %1266 = vmatpush.bf16.msra.mxu0 %v812
      %1267 = vmatpush.bf16.msra.mxu0 %v811
      %1268 = vmatpush.bf16.msra.mxu0 %v810
      %1269 = vmatmul.bf16.gmra.mxu0 %v1221
      %v1270 = vpop.f32.mrf.mxu0
      %v1271 = vadd.f32 %v1258, %v1270
      %v1272 = vpop.f32.mrf.mxu0
      %1273 = vdwg.mxu0
      %v1274 = vmax.f32 %v1271, 0.0
      %v1275 = vmul.f32 %v1274, %v903
      %v1276 = vadd.f32 %v1275, %v905
      %1277 = vrot.lane.b32.xlu0 %v567, 108
      %v1278 = vpop.permute.xlu0 %1277
      %1279 = vrot.lane.b32.xlu0 %v568, 108
      %v1280 = vpop.permute.xlu0 %1279
      %1283 = vrot.lane.b32.xlu0 %v641, 108
      %v1284 = vpop.permute.xlu0 %1283
      %1285 = vrot.lane.b32.xlu0 %v640, 108
      %v1286 = vpop.permute.xlu0 %1285
      %vm1289 = vcmask 883712
      %v1290 = vsel %vm1289, %v1278, %v1284
      %v1291 = vsel %vm1289, %v1280, %v1286
      %v1294 = vrot.slane %v1290, 1
      %v1295 = vrot.slane %v1291, 1
      %v1296 = vsel %vm638, %v1294, %v1295
      %v1298 = vrot.slane %v1290, 2
      %v1299 = vrot.slane %v1291, 2
      %v1300 = vsel %vm643, %v1298, %v1299
      %v1302 = vrot.slane %v1290, 3
      %v1303 = vrot.slane %v1291, 3
      %v1304 = vsel %vm648, %v1302, %v1303
      %v1306 = vpack.c.bf16 %v1290, %v1290
      %v1307 = vpack.c.bf16 %v1296, %v1296
      %v1308 = vpack.c.bf16 %v1300, %v1300
      %v1309 = vpack.c.bf16 %v1304, %v1304
      %1310 = vmatpush.bf16.msra.mxu0 %v793
      %1311 = vmatpush.bf16.msra.mxu0 %v792
      %1312 = vmatpush.bf16.msra.mxu0 %v791
      %1313 = vmatpush.bf16.msra.mxu0 %v790
      %1314 = vmatpush.bf16.msra.mxu0 %v789
      %1315 = vmatpush.bf16.msra.mxu0 %v788
      %1316 = vmatpush.bf16.msra.mxu0 %v787
      %1317 = vmatpush.bf16.msra.mxu0 %v786
      %1318 = vmatmul.bf16.gmra.mxu0 %v1306
      %v1319 = vpop.f32.mrf.mxu0
      %v1320 = vadd.f32 %v657, %v1319
      %v1321 = vpop.f32.mrf.mxu0
      %1322 = vdwg.mxu0
      %1323 = vmatpush.bf16.msra.mxu0 %v801
      %1324 = vmatpush.bf16.msra.mxu0 %v800
      %1325 = vmatpush.bf16.msra.mxu0 %v799
      %1326 = vmatpush.bf16.msra.mxu0 %v798
      %1327 = vmatpush.bf16.msra.mxu0 %v797
      %1328 = vmatpush.bf16.msra.mxu0 %v796
      %1329 = vmatpush.bf16.msra.mxu0 %v795
      %1330 = vmatpush.bf16.msra.mxu0 %v794
      %1331 = vmatmul.bf16.gmra.mxu0 %v1307
      %v1332 = vpop.f32.mrf.mxu0
      %v1333 = vadd.f32 %v1320, %v1332
      %v1334 = vpop.f32.mrf.mxu0
      %1335 = vdwg.mxu0
      %1336 = vmatpush.bf16.msra.mxu0 %v809
      %1337 = vmatpush.bf16.msra.mxu0 %v808
      %1338 = vmatpush.bf16.msra.mxu0 %v807
      %1339 = vmatpush.bf16.msra.mxu0 %v806
      %1340 = vmatpush.bf16.msra.mxu0 %v805
      %1341 = vmatpush.bf16.msra.mxu0 %v804
      %1342 = vmatpush.bf16.msra.mxu0 %v803
      %1343 = vmatpush.bf16.msra.mxu0 %v802
      %1344 = vmatmul.bf16.gmra.mxu0 %v1308
      %v1345 = vpop.f32.mrf.mxu0
      %v1346 = vadd.f32 %v1333, %v1345
      %v1347 = vpop.f32.mrf.mxu0
      %1348 = vdwg.mxu0
      %1349 = vmatpush.bf16.msra.mxu0 %v817
      %1350 = vmatpush.bf16.msra.mxu0 %v816
      %1351 = vmatpush.bf16.msra.mxu0 %v815
      %1352 = vmatpush.bf16.msra.mxu0 %v814
      %1353 = vmatpush.bf16.msra.mxu0 %v813
      %1354 = vmatpush.bf16.msra.mxu0 %v812
      %1355 = vmatpush.bf16.msra.mxu0 %v811
      %1356 = vmatpush.bf16.msra.mxu0 %v810
      %1357 = vmatmul.bf16.gmra.mxu0 %v1309
      %v1358 = vpop.f32.mrf.mxu0
      %v1359 = vadd.f32 %v1346, %v1358
      %v1360 = vpop.f32.mrf.mxu0
      %1361 = vdwg.mxu0
      %v1362 = vmax.f32 %v1359, 0.0
      %v1363 = vmul.f32 %v1362, %v903
      %v1364 = vadd.f32 %v1363, %v905
      %v1365 = vmax.f32 %v1276, %v1364
      %1366 = vst [vmem:[#allocation2 + $0x21] sm:$0x1] %v1365
      %1367 = vst [vmem:[#allocation2 + $0x30] sm:$0x2] %v1365
      %1368 = vst [vmem:[#allocation2 + $0x3f] sm:$0x4] %v1365
      %1369 = vst [vmem:[#allocation2 + $0x4e] sm:$0x8] %v1365
      %1370 = vst [vmem:[#allocation2 + $0x5d] sm:$0x10] %v1365
      %1371 = vst [vmem:[#allocation2 + $0x6c] sm:$0x20] %v1365
      %1372 = vst [vmem:[#allocation2 + $0x7b] sm:$0x40] %v1365
      %1373 = vst [vmem:[#allocation2 + $0x8a] sm:$0x80] %v1365
      %1374 = vrot.lane.b32.xlu0 %v567, 104
      %v1375 = vpop.permute.xlu0 %1374
      %1376 = vrot.lane.b32.xlu0 %v568, 104
      %v1377 = vpop.permute.xlu0 %1376
      %1380 = vrot.lane.b32.xlu0 %v641, 104
      %v1381 = vpop.permute.xlu0 %1380
      %1382 = vrot.lane.b32.xlu0 %v640, 104
      %v1383 = vpop.permute.xlu0 %1382
      %vm1386 = vcmask 850944
      %v1387 = vsel %vm1386, %v1375, %v1381
      %v1388 = vsel %vm1386, %v1377, %v1383
      %v1391 = vrot.slane %v1387, 1
      %v1392 = vrot.slane %v1388, 1
      %v1393 = vsel %vm638, %v1391, %v1392
      %v1395 = vrot.slane %v1387, 2
      %v1396 = vrot.slane %v1388, 2
      %v1397 = vsel %vm643, %v1395, %v1396
      %v1399 = vrot.slane %v1387, 3
      %v1400 = vrot.slane %v1388, 3
      %v1401 = vsel %vm648, %v1399, %v1400
      %v1403 = vpack.c.bf16 %v1387, %v1387
      %v1404 = vpack.c.bf16 %v1393, %v1393
      %v1405 = vpack.c.bf16 %v1397, %v1397
      %v1406 = vpack.c.bf16 %v1401, %v1401
      %1407 = vmatpush.bf16.msra.mxu0 %v793
      %1408 = vmatpush.bf16.msra.mxu0 %v792
      %1409 = vmatpush.bf16.msra.mxu0 %v791
      %1410 = vmatpush.bf16.msra.mxu0 %v790
      %1411 = vmatpush.bf16.msra.mxu0 %v789
      %1412 = vmatpush.bf16.msra.mxu0 %v788
      %1413 = vmatpush.bf16.msra.mxu0 %v787
      %1414 = vmatpush.bf16.msra.mxu0 %v786
      %1415 = vmatmul.bf16.gmra.mxu0 %v1403
      %v1416 = vpop.f32.mrf.mxu0
      %v1417 = vadd.f32 %v657, %v1416
      %v1418 = vpop.f32.mrf.mxu0
      %1419 = vdwg.mxu0
      %1420 = vmatpush.bf16.msra.mxu0 %v801
      %1421 = vmatpush.bf16.msra.mxu0 %v800
      %1422 = vmatpush.bf16.msra.mxu0 %v799
      %1423 = vmatpush.bf16.msra.mxu0 %v798
      %1424 = vmatpush.bf16.msra.mxu0 %v797
      %1425 = vmatpush.bf16.msra.mxu0 %v796
      %1426 = vmatpush.bf16.msra.mxu0 %v795
      %1427 = vmatpush.bf16.msra.mxu0 %v794
      %1428 = vmatmul.bf16.gmra.mxu0 %v1404
      %v1429 = vpop.f32.mrf.mxu0
      %v1430 = vadd.f32 %v1417, %v1429
      %v1431 = vpop.f32.mrf.mxu0
      %1432 = vdwg.mxu0
      %1433 = vmatpush.bf16.msra.mxu0 %v809
      %1434 = vmatpush.bf16.msra.mxu0 %v808
      %1435 = vmatpush.bf16.msra.mxu0 %v807
      %1436 = vmatpush.bf16.msra.mxu0 %v806
      %1437 = vmatpush.bf16.msra.mxu0 %v805
      %1438 = vmatpush.bf16.msra.mxu0 %v804
      %1439 = vmatpush.bf16.msra.mxu0 %v803
      %1440 = vmatpush.bf16.msra.mxu0 %v802
      %1441 = vmatmul.bf16.gmra.mxu0 %v1405
      %v1442 = vpop.f32.mrf.mxu0
      %v1443 = vadd.f32 %v1430, %v1442
      %v1444 = vpop.f32.mrf.mxu0
      %1445 = vdwg.mxu0
      %1446 = vmatpush.bf16.msra.mxu0 %v817
      %1447 = vmatpush.bf16.msra.mxu0 %v816
      %1448 = vmatpush.bf16.msra.mxu0 %v815
      %1449 = vmatpush.bf16.msra.mxu0 %v814
      %1450 = vmatpush.bf16.msra.mxu0 %v813
      %1451 = vmatpush.bf16.msra.mxu0 %v812
      %1452 = vmatpush.bf16.msra.mxu0 %v811
      %1453 = vmatpush.bf16.msra.mxu0 %v810
      %1454 = vmatmul.bf16.gmra.mxu0 %v1406
      %v1455 = vpop.f32.mrf.mxu0
      %v1456 = vadd.f32 %v1443, %v1455
      %v1457 = vpop.f32.mrf.mxu0
      %1458 = vdwg.mxu0
      %v1459 = vmax.f32 %v1456, 0.0
      %v1460 = vmul.f32 %v1459, %v903
      %v1461 = vadd.f32 %v1460, %v905
      %1462 = vrot.lane.b32.xlu0 %v567, 100
      %v1463 = vpop.permute.xlu0 %1462
      %1464 = vrot.lane.b32.xlu0 %v568, 100
      %v1465 = vpop.permute.xlu0 %1464
      %1468 = vrot.lane.b32.xlu0 %v641, 100
      %v1469 = vpop.permute.xlu0 %1468
      %1470 = vrot.lane.b32.xlu0 %v640, 100
      %v1471 = vpop.permute.xlu0 %1470
      %vm1474 = vcmask 818176
      %v1475 = vsel %vm1474, %v1463, %v1469
      %v1476 = vsel %vm1474, %v1465, %v1471
      %v1479 = vrot.slane %v1475, 1
      %v1480 = vrot.slane %v1476, 1
      %v1481 = vsel %vm638, %v1479, %v1480
      %v1483 = vrot.slane %v1475, 2
      %v1484 = vrot.slane %v1476, 2
      %v1485 = vsel %vm643, %v1483, %v1484
      %v1487 = vrot.slane %v1475, 3
      %v1488 = vrot.slane %v1476, 3
      %v1489 = vsel %vm648, %v1487, %v1488
      %v1491 = vpack.c.bf16 %v1475, %v1475
      %v1492 = vpack.c.bf16 %v1481, %v1481
      %v1493 = vpack.c.bf16 %v1485, %v1485
      %v1494 = vpack.c.bf16 %v1489, %v1489
      %1495 = vmatpush.bf16.msra.mxu0 %v793
      %1496 = vmatpush.bf16.msra.mxu0 %v792
      %1497 = vmatpush.bf16.msra.mxu0 %v791
      %1498 = vmatpush.bf16.msra.mxu0 %v790
      %1499 = vmatpush.bf16.msra.mxu0 %v789
      %1500 = vmatpush.bf16.msra.mxu0 %v788
      %1501 = vmatpush.bf16.msra.mxu0 %v787
      %1502 = vmatpush.bf16.msra.mxu0 %v786
      %1503 = vmatmul.bf16.gmra.mxu0 %v1491
      %v1504 = vpop.f32.mrf.mxu0
      %v1505 = vadd.f32 %v657, %v1504
      %v1506 = vpop.f32.mrf.mxu0
      %1507 = vdwg.mxu0
      %1508 = vmatpush.bf16.msra.mxu0 %v801
      %1509 = vmatpush.bf16.msra.mxu0 %v800
      %1510 = vmatpush.bf16.msra.mxu0 %v799
      %1511 = vmatpush.bf16.msra.mxu0 %v798
      %1512 = vmatpush.bf16.msra.mxu0 %v797
      %1513 = vmatpush.bf16.msra.mxu0 %v796
      %1514 = vmatpush.bf16.msra.mxu0 %v795
      %1515 = vmatpush.bf16.msra.mxu0 %v794
      %1516 = vmatmul.bf16.gmra.mxu0 %v1492
      %v1517 = vpop.f32.mrf.mxu0
      %v1518 = vadd.f32 %v1505, %v1517
      %v1519 = vpop.f32.mrf.mxu0
      %1520 = vdwg.mxu0
      %1521 = vmatpush.bf16.msra.mxu0 %v809
      %1522 = vmatpush.bf16.msra.mxu0 %v808
      %1523 = vmatpush.bf16.msra.mxu0 %v807
      %1524 = vmatpush.bf16.msra.mxu0 %v806
      %1525 = vmatpush.bf16.msra.mxu0 %v805
      %1526 = vmatpush.bf16.msra.mxu0 %v804
      %1527 = vmatpush.bf16.msra.mxu0 %v803
      %1528 = vmatpush.bf16.msra.mxu0 %v802
      %1529 = vmatmul.bf16.gmra.mxu0 %v1493
      %v1530 = vpop.f32.mrf.mxu0
      %v1531 = vadd.f32 %v1518, %v1530
      %v1532 = vpop.f32.mrf.mxu0
      %1533 = vdwg.mxu0
      %1534 = vmatpush.bf16.msra.mxu0 %v817
      %1535 = vmatpush.bf16.msra.mxu0 %v816
      %1536 = vmatpush.bf16.msra.mxu0 %v815
      %1537 = vmatpush.bf16.msra.mxu0 %v814
      %1538 = vmatpush.bf16.msra.mxu0 %v813
      %1539 = vmatpush.bf16.msra.mxu0 %v812
      %1540 = vmatpush.bf16.msra.mxu0 %v811
      %1541 = vmatpush.bf16.msra.mxu0 %v810
      %1542 = vmatmul.bf16.gmra.mxu0 %v1494
      %v1543 = vpop.f32.mrf.mxu0
      %v1544 = vadd.f32 %v1531, %v1543
      %v1545 = vpop.f32.mrf.mxu0
      %1546 = vdwg.mxu0
      %v1547 = vmax.f32 %v1544, 0.0
      %v1548 = vmul.f32 %v1547, %v903
      %v1549 = vadd.f32 %v1548, %v905
      %v1550 = vmax.f32 %v1461, %v1549
      %1551 = vst [vmem:[#allocation2 + $0x22] sm:$0x1] %v1550
      %1552 = vst [vmem:[#allocation2 + $0x31] sm:$0x2] %v1550
      %1553 = vst [vmem:[#allocation2 + $0x40] sm:$0x4] %v1550
      %1554 = vst [vmem:[#allocation2 + $0x4f] sm:$0x8] %v1550
      %1555 = vst [vmem:[#allocation2 + $0x5e] sm:$0x10] %v1550
      %1556 = vst [vmem:[#allocation2 + $0x6d] sm:$0x20] %v1550
      %1557 = vst [vmem:[#allocation2 + $0x7c] sm:$0x40] %v1550
      %1558 = vst [vmem:[#allocation2 + $0x8b] sm:$0x80] %v1550
      %1559 = vrot.lane.b32.xlu0 %v567, 96
      %v1560 = vpop.permute.xlu0 %1559
      %1561 = vrot.lane.b32.xlu0 %v568, 96
      %v1562 = vpop.permute.xlu0 %1561
      %1565 = vrot.lane.b32.xlu0 %v641, 96
      %v1566 = vpop.permute.xlu0 %1565
      %1567 = vrot.lane.b32.xlu0 %v640, 96
      %v1568 = vpop.permute.xlu0 %1567
      %vm1571 = vcmask 785408
      %v1572 = vsel %vm1571, %v1560, %v1566
      %v1573 = vsel %vm1571, %v1562, %v1568
      %v1576 = vrot.slane %v1572, 1
      %v1577 = vrot.slane %v1573, 1
      %v1578 = vsel %vm638, %v1576, %v1577
      %v1580 = vrot.slane %v1572, 2
      %v1581 = vrot.slane %v1573, 2
      %v1582 = vsel %vm643, %v1580, %v1581
      %v1584 = vrot.slane %v1572, 3
      %v1585 = vrot.slane %v1573, 3
      %v1586 = vsel %vm648, %v1584, %v1585
      %v1588 = vpack.c.bf16 %v1572, %v1572
      %v1589 = vpack.c.bf16 %v1578, %v1578
      %v1590 = vpack.c.bf16 %v1582, %v1582
      %v1591 = vpack.c.bf16 %v1586, %v1586
      %1592 = vmatpush.bf16.msra.mxu0 %v793
      %1593 = vmatpush.bf16.msra.mxu0 %v792
      %1594 = vmatpush.bf16.msra.mxu0 %v791
      %1595 = vmatpush.bf16.msra.mxu0 %v790
      %1596 = vmatpush.bf16.msra.mxu0 %v789
      %1597 = vmatpush.bf16.msra.mxu0 %v788
      %1598 = vmatpush.bf16.msra.mxu0 %v787
      %1599 = vmatpush.bf16.msra.mxu0 %v786
      %1600 = vmatmul.bf16.gmra.mxu0 %v1588
      %v1601 = vpop.f32.mrf.mxu0
      %v1602 = vadd.f32 %v657, %v1601
      %v1603 = vpop.f32.mrf.mxu0
      %1604 = vdwg.mxu0
      %1605 = vmatpush.bf16.msra.mxu0 %v801
      %1606 = vmatpush.bf16.msra.mxu0 %v800
      %1607 = vmatpush.bf16.msra.mxu0 %v799
      %1608 = vmatpush.bf16.msra.mxu0 %v798
      %1609 = vmatpush.bf16.msra.mxu0 %v797
      %1610 = vmatpush.bf16.msra.mxu0 %v796
      %1611 = vmatpush.bf16.msra.mxu0 %v795
      %1612 = vmatpush.bf16.msra.mxu0 %v794
      %1613 = vmatmul.bf16.gmra.mxu0 %v1589
      %v1614 = vpop.f32.mrf.mxu0
      %v1615 = vadd.f32 %v1602, %v1614
      %v1616 = vpop.f32.mrf.mxu0
      %1617 = vdwg.mxu0
      %1618 = vmatpush.bf16.msra.mxu0 %v809
      %1619 = vmatpush.bf16.msra.mxu0 %v808
      %1620 = vmatpush.bf16.msra.mxu0 %v807
      %1621 = vmatpush.bf16.msra.mxu0 %v806
      %1622 = vmatpush.bf16.msra.mxu0 %v805
      %1623 = vmatpush.bf16.msra.mxu0 %v804
      %1624 = vmatpush.bf16.msra.mxu0 %v803
      %1625 = vmatpush.bf16.msra.mxu0 %v802
      %1626 = vmatmul.bf16.gmra.mxu0 %v1590
      %v1627 = vpop.f32.mrf.mxu0
      %v1628 = vadd.f32 %v1615, %v1627
      %v1629 = vpop.f32.mrf.mxu0
      %1630 = vdwg.mxu0
      %1631 = vmatpush.bf16.msra.mxu0 %v817
      %1632 = vmatpush.bf16.msra.mxu0 %v816
      %1633 = vmatpush.bf16.msra.mxu0 %v815
      %1634 = vmatpush.bf16.msra.mxu0 %v814
      %1635 = vmatpush.bf16.msra.mxu0 %v813
      %1636 = vmatpush.bf16.msra.mxu0 %v812
      %1637 = vmatpush.bf16.msra.mxu0 %v811
      %1638 = vmatpush.bf16.msra.mxu0 %v810
      %1639 = vmatmul.bf16.gmra.mxu0 %v1591
      %v1640 = vpop.f32.mrf.mxu0
      %v1641 = vadd.f32 %v1628, %v1640
      %v1642 = vpop.f32.mrf.mxu0
      %1643 = vdwg.mxu0
      %v1644 = vmax.f32 %v1641, 0.0
      %v1645 = vmul.f32 %v1644, %v903
      %v1646 = vadd.f32 %v1645, %v905
      %1647 = vrot.lane.b32.xlu0 %v567, 92
      %v1648 = vpop.permute.xlu0 %1647
      %1649 = vrot.lane.b32.xlu0 %v568, 92
      %v1650 = vpop.permute.xlu0 %1649
      %1653 = vrot.lane.b32.xlu0 %v641, 92
      %v1654 = vpop.permute.xlu0 %1653
      %1655 = vrot.lane.b32.xlu0 %v640, 92
      %v1656 = vpop.permute.xlu0 %1655
      %vm1659 = vcmask 752640
      %v1660 = vsel %vm1659, %v1648, %v1654
      %v1661 = vsel %vm1659, %v1650, %v1656
      %v1664 = vrot.slane %v1660, 1
      %v1665 = vrot.slane %v1661, 1
      %v1666 = vsel %vm638, %v1664, %v1665
      %v1668 = vrot.slane %v1660, 2
      %v1669 = vrot.slane %v1661, 2
      %v1670 = vsel %vm643, %v1668, %v1669
      %v1672 = vrot.slane %v1660, 3
      %v1673 = vrot.slane %v1661, 3
      %v1674 = vsel %vm648, %v1672, %v1673
      %v1676 = vpack.c.bf16 %v1660, %v1660
      %v1677 = vpack.c.bf16 %v1666, %v1666
      %v1678 = vpack.c.bf16 %v1670, %v1670
      %v1679 = vpack.c.bf16 %v1674, %v1674
      %1680 = vmatpush.bf16.msra.mxu0 %v793
      %1681 = vmatpush.bf16.msra.mxu0 %v792
      %1682 = vmatpush.bf16.msra.mxu0 %v791
      %1683 = vmatpush.bf16.msra.mxu0 %v790
      %1684 = vmatpush.bf16.msra.mxu0 %v789
      %1685 = vmatpush.bf16.msra.mxu0 %v788
      %1686 = vmatpush.bf16.msra.mxu0 %v787
      %1687 = vmatpush.bf16.msra.mxu0 %v786
      %1688 = vmatmul.bf16.gmra.mxu0 %v1676
      %v1689 = vpop.f32.mrf.mxu0
      %v1690 = vadd.f32 %v657, %v1689
      %v1691 = vpop.f32.mrf.mxu0
      %1692 = vdwg.mxu0
      %1693 = vmatpush.bf16.msra.mxu0 %v801
      %1694 = vmatpush.bf16.msra.mxu0 %v800
      %1695 = vmatpush.bf16.msra.mxu0 %v799
      %1696 = vmatpush.bf16.msra.mxu0 %v798
      %1697 = vmatpush.bf16.msra.mxu0 %v797
      %1698 = vmatpush.bf16.msra.mxu0 %v796
      %1699 = vmatpush.bf16.msra.mxu0 %v795
      %1700 = vmatpush.bf16.msra.mxu0 %v794
      %1701 = vmatmul.bf16.gmra.mxu0 %v1677
      %v1702 = vpop.f32.mrf.mxu0
      %v1703 = vadd.f32 %v1690, %v1702
      %v1704 = vpop.f32.mrf.mxu0
      %1705 = vdwg.mxu0
      %1706 = vmatpush.bf16.msra.mxu0 %v809
      %1707 = vmatpush.bf16.msra.mxu0 %v808
      %1708 = vmatpush.bf16.msra.mxu0 %v807
      %1709 = vmatpush.bf16.msra.mxu0 %v806
      %1710 = vmatpush.bf16.msra.mxu0 %v805
      %1711 = vmatpush.bf16.msra.mxu0 %v804
      %1712 = vmatpush.bf16.msra.mxu0 %v803
      %1713 = vmatpush.bf16.msra.mxu0 %v802
      %1714 = vmatmul.bf16.gmra.mxu0 %v1678
      %v1715 = vpop.f32.mrf.mxu0
      %v1716 = vadd.f32 %v1703, %v1715
      %v1717 = vpop.f32.mrf.mxu0
      %1718 = vdwg.mxu0
      %1719 = vmatpush.bf16.msra.mxu0 %v817
      %1720 = vmatpush.bf16.msra.mxu0 %v816
      %1721 = vmatpush.bf16.msra.mxu0 %v815
      %1722 = vmatpush.bf16.msra.mxu0 %v814
      %1723 = vmatpush.bf16.msra.mxu0 %v813
      %1724 = vmatpush.bf16.msra.mxu0 %v812
      %1725 = vmatpush.bf16.msra.mxu0 %v811
      %1726 = vmatpush.bf16.msra.mxu0 %v810
      %1727 = vmatmul.bf16.gmra.mxu0 %v1679
      %v1728 = vpop.f32.mrf.mxu0
      %v1729 = vadd.f32 %v1716, %v1728
      %v1730 = vpop.f32.mrf.mxu0
      %1731 = vdwg.mxu0
      %v1732 = vmax.f32 %v1729, 0.0
      %v1733 = vmul.f32 %v1732, %v903
      %v1734 = vadd.f32 %v1733, %v905
      %v1735 = vmax.f32 %v1646, %v1734
      %1736 = vst [vmem:[#allocation2 + $0x23] sm:$0x1] %v1735
      %1737 = vst [vmem:[#allocation2 + $0x32] sm:$0x2] %v1735
      %1738 = vst [vmem:[#allocation2 + $0x41] sm:$0x4] %v1735
      %1739 = vst [vmem:[#allocation2 + $0x50] sm:$0x8] %v1735
      %1740 = vst [vmem:[#allocation2 + $0x5f] sm:$0x10] %v1735
      %1741 = vst [vmem:[#allocation2 + $0x6e] sm:$0x20] %v1735
      %1742 = vst [vmem:[#allocation2 + $0x7d] sm:$0x40] %v1735
      %1743 = vst [vmem:[#allocation2 + $0x8c] sm:$0x80] %v1735
      %1744 = vrot.lane.b32.xlu0 %v567, 88
      %v1745 = vpop.permute.xlu0 %1744
      %1746 = vrot.lane.b32.xlu0 %v568, 88
      %v1747 = vpop.permute.xlu0 %1746
      %1750 = vrot.lane.b32.xlu0 %v641, 88
      %v1751 = vpop.permute.xlu0 %1750
      %1752 = vrot.lane.b32.xlu0 %v640, 88
      %v1753 = vpop.permute.xlu0 %1752
      %vm1756 = vcmask 719872
      %v1757 = vsel %vm1756, %v1745, %v1751
      %v1758 = vsel %vm1756, %v1747, %v1753
      %v1761 = vrot.slane %v1757, 1
      %v1762 = vrot.slane %v1758, 1
      %v1763 = vsel %vm638, %v1761, %v1762
      %v1765 = vrot.slane %v1757, 2
      %v1766 = vrot.slane %v1758, 2
      %v1767 = vsel %vm643, %v1765, %v1766
      %v1769 = vrot.slane %v1757, 3
      %v1770 = vrot.slane %v1758, 3
      %v1771 = vsel %vm648, %v1769, %v1770
      %v1773 = vpack.c.bf16 %v1757, %v1757
      %v1774 = vpack.c.bf16 %v1763, %v1763
      %v1775 = vpack.c.bf16 %v1767, %v1767
      %v1776 = vpack.c.bf16 %v1771, %v1771
      %1777 = vmatpush.bf16.msra.mxu0 %v793
      %1778 = vmatpush.bf16.msra.mxu0 %v792
      %1779 = vmatpush.bf16.msra.mxu0 %v791
      %1780 = vmatpush.bf16.msra.mxu0 %v790
      %1781 = vmatpush.bf16.msra.mxu0 %v789
      %1782 = vmatpush.bf16.msra.mxu0 %v788
      %1783 = vmatpush.bf16.msra.mxu0 %v787
      %1784 = vmatpush.bf16.msra.mxu0 %v786
      %1785 = vmatmul.bf16.gmra.mxu0 %v1773
      %v1786 = vpop.f32.mrf.mxu0
      %v1787 = vadd.f32 %v657, %v1786
      %v1788 = vpop.f32.mrf.mxu0
      %1789 = vdwg.mxu0
      %1790 = vmatpush.bf16.msra.mxu0 %v801
      %1791 = vmatpush.bf16.msra.mxu0 %v800
      %1792 = vmatpush.bf16.msra.mxu0 %v799
      %1793 = vmatpush.bf16.msra.mxu0 %v798
      %1794 = vmatpush.bf16.msra.mxu0 %v797
      %1795 = vmatpush.bf16.msra.mxu0 %v796
      %1796 = vmatpush.bf16.msra.mxu0 %v795
      %1797 = vmatpush.bf16.msra.mxu0 %v794
      %1798 = vmatmul.bf16.gmra.mxu0 %v1774
      %v1799 = vpop.f32.mrf.mxu0
      %v1800 = vadd.f32 %v1787, %v1799
      %v1801 = vpop.f32.mrf.mxu0
      %1802 = vdwg.mxu0
      %1803 = vmatpush.bf16.msra.mxu0 %v809
      %1804 = vmatpush.bf16.msra.mxu0 %v808
      %1805 = vmatpush.bf16.msra.mxu0 %v807
      %1806 = vmatpush.bf16.msra.mxu0 %v806
      %1807 = vmatpush.bf16.msra.mxu0 %v805
      %1808 = vmatpush.bf16.msra.mxu0 %v804
      %1809 = vmatpush.bf16.msra.mxu0 %v803
      %1810 = vmatpush.bf16.msra.mxu0 %v802
      %1811 = vmatmul.bf16.gmra.mxu0 %v1775
      %v1812 = vpop.f32.mrf.mxu0
      %v1813 = vadd.f32 %v1800, %v1812
      %v1814 = vpop.f32.mrf.mxu0
      %1815 = vdwg.mxu0
      %1816 = vmatpush.bf16.msra.mxu0 %v817
      %1817 = vmatpush.bf16.msra.mxu0 %v816
      %1818 = vmatpush.bf16.msra.mxu0 %v815
      %1819 = vmatpush.bf16.msra.mxu0 %v814
      %1820 = vmatpush.bf16.msra.mxu0 %v813
      %1821 = vmatpush.bf16.msra.mxu0 %v812
      %1822 = vmatpush.bf16.msra.mxu0 %v811
      %1823 = vmatpush.bf16.msra.mxu0 %v810
      %1824 = vmatmul.bf16.gmra.mxu0 %v1776
      %v1825 = vpop.f32.mrf.mxu0
      %v1826 = vadd.f32 %v1813, %v1825
      %v1827 = vpop.f32.mrf.mxu0
      %1828 = vdwg.mxu0
      %v1829 = vmax.f32 %v1826, 0.0
      %v1830 = vmul.f32 %v1829, %v903
      %v1831 = vadd.f32 %v1830, %v905
      %1832 = vrot.lane.b32.xlu0 %v567, 84
      %v1833 = vpop.permute.xlu0 %1832
      %1834 = vrot.lane.b32.xlu0 %v568, 84
      %v1835 = vpop.permute.xlu0 %1834
      %1838 = vrot.lane.b32.xlu0 %v641, 84
      %v1839 = vpop.permute.xlu0 %1838
      %1840 = vrot.lane.b32.xlu0 %v640, 84
      %v1841 = vpop.permute.xlu0 %1840
      %vm1844 = vcmask 687104
      %v1845 = vsel %vm1844, %v1833, %v1839
      %v1846 = vsel %vm1844, %v1835, %v1841
      %v1849 = vrot.slane %v1845, 1
      %v1850 = vrot.slane %v1846, 1
      %v1851 = vsel %vm638, %v1849, %v1850
      %v1853 = vrot.slane %v1845, 2
      %v1854 = vrot.slane %v1846, 2
      %v1855 = vsel %vm643, %v1853, %v1854
      %v1857 = vrot.slane %v1845, 3
      %v1858 = vrot.slane %v1846, 3
      %v1859 = vsel %vm648, %v1857, %v1858
      %v1861 = vpack.c.bf16 %v1845, %v1845
      %v1862 = vpack.c.bf16 %v1851, %v1851
      %v1863 = vpack.c.bf16 %v1855, %v1855
      %v1864 = vpack.c.bf16 %v1859, %v1859
      %1865 = vmatpush.bf16.msra.mxu0 %v793
      %1866 = vmatpush.bf16.msra.mxu0 %v792
      %1867 = vmatpush.bf16.msra.mxu0 %v791
      %1868 = vmatpush.bf16.msra.mxu0 %v790
      %1869 = vmatpush.bf16.msra.mxu0 %v789
      %1870 = vmatpush.bf16.msra.mxu0 %v788
      %1871 = vmatpush.bf16.msra.mxu0 %v787
      %1872 = vmatpush.bf16.msra.mxu0 %v786
      %1873 = vmatmul.bf16.gmra.mxu0 %v1861
      %v1874 = vpop.f32.mrf.mxu0
      %v1875 = vadd.f32 %v657, %v1874
      %v1876 = vpop.f32.mrf.mxu0
      %1877 = vdwg.mxu0
      %1878 = vmatpush.bf16.msra.mxu0 %v801
      %1879 = vmatpush.bf16.msra.mxu0 %v800
      %1880 = vmatpush.bf16.msra.mxu0 %v799
      %1881 = vmatpush.bf16.msra.mxu0 %v798
      %1882 = vmatpush.bf16.msra.mxu0 %v797
      %1883 = vmatpush.bf16.msra.mxu0 %v796
      %1884 = vmatpush.bf16.msra.mxu0 %v795
      %1885 = vmatpush.bf16.msra.mxu0 %v794
      %1886 = vmatmul.bf16.gmra.mxu0 %v1862
      %v1887 = vpop.f32.mrf.mxu0
      %v1888 = vadd.f32 %v1875, %v1887
      %v1889 = vpop.f32.mrf.mxu0
      %1890 = vdwg.mxu0
      %1891 = vmatpush.bf16.msra.mxu0 %v809
      %1892 = vmatpush.bf16.msra.mxu0 %v808
      %1893 = vmatpush.bf16.msra.mxu0 %v807
      %1894 = vmatpush.bf16.msra.mxu0 %v806
      %1895 = vmatpush.bf16.msra.mxu0 %v805
      %1896 = vmatpush.bf16.msra.mxu0 %v804
      %1897 = vmatpush.bf16.msra.mxu0 %v803
      %1898 = vmatpush.bf16.msra.mxu0 %v802
      %1899 = vmatmul.bf16.gmra.mxu0 %v1863
      %v1900 = vpop.f32.mrf.mxu0
      %v1901 = vadd.f32 %v1888, %v1900
      %v1902 = vpop.f32.mrf.mxu0
      %1903 = vdwg.mxu0
      %1904 = vmatpush.bf16.msra.mxu0 %v817
      %1905 = vmatpush.bf16.msra.mxu0 %v816
      %1906 = vmatpush.bf16.msra.mxu0 %v815
      %1907 = vmatpush.bf16.msra.mxu0 %v814
      %1908 = vmatpush.bf16.msra.mxu0 %v813
      %1909 = vmatpush.bf16.msra.mxu0 %v812
      %1910 = vmatpush.bf16.msra.mxu0 %v811
      %1911 = vmatpush.bf16.msra.mxu0 %v810
      %1912 = vmatmul.bf16.gmra.mxu0 %v1864
      %v1913 = vpop.f32.mrf.mxu0
      %v1914 = vadd.f32 %v1901, %v1913
      %v1915 = vpop.f32.mrf.mxu0
      %1916 = vdwg.mxu0
      %v1917 = vmax.f32 %v1914, 0.0
      %v1918 = vmul.f32 %v1917, %v903
      %v1919 = vadd.f32 %v1918, %v905
      %v1920 = vmax.f32 %v1831, %v1919
      %1921 = vst [vmem:[#allocation2 + $0x24] sm:$0x1] %v1920
      %1922 = vst [vmem:[#allocation2 + $0x33] sm:$0x2] %v1920
      %1923 = vst [vmem:[#allocation2 + $0x42] sm:$0x4] %v1920
      %1924 = vst [vmem:[#allocation2 + $0x51] sm:$0x8] %v1920
      %1925 = vst [vmem:[#allocation2 + $0x60] sm:$0x10] %v1920
      %1926 = vst [vmem:[#allocation2 + $0x6f] sm:$0x20] %v1920
      %1927 = vst [vmem:[#allocation2 + $0x7e] sm:$0x40] %v1920
      %1928 = vst [vmem:[#allocation2 + $0x8d] sm:$0x80] %v1920
      %1929 = vrot.lane.b32.xlu0 %v567, 80
      %v1930 = vpop.permute.xlu0 %1929
      %1931 = vrot.lane.b32.xlu0 %v568, 80
      %v1932 = vpop.permute.xlu0 %1931
      %1935 = vrot.lane.b32.xlu0 %v641, 80
      %v1936 = vpop.permute.xlu0 %1935
      %1937 = vrot.lane.b32.xlu0 %v640, 80
      %v1938 = vpop.permute.xlu0 %1937
      %vm1941 = vcmask 654336
      %v1942 = vsel %vm1941, %v1930, %v1936
      %v1943 = vsel %vm1941, %v1932, %v1938
      %v1946 = vrot.slane %v1942, 1
      %v1947 = vrot.slane %v1943, 1
      %v1948 = vsel %vm638, %v1946, %v1947
      %v1950 = vrot.slane %v1942, 2
      %v1951 = vrot.slane %v1943, 2
      %v1952 = vsel %vm643, %v1950, %v1951
      %v1954 = vrot.slane %v1942, 3
      %v1955 = vrot.slane %v1943, 3
      %v1956 = vsel %vm648, %v1954, %v1955
      %v1958 = vpack.c.bf16 %v1942, %v1942
      %v1959 = vpack.c.bf16 %v1948, %v1948
      %v1960 = vpack.c.bf16 %v1952, %v1952
      %v1961 = vpack.c.bf16 %v1956, %v1956
      %1962 = vmatpush.bf16.msra.mxu0 %v793
      %1963 = vmatpush.bf16.msra.mxu0 %v792
      %1964 = vmatpush.bf16.msra.mxu0 %v791
      %1965 = vmatpush.bf16.msra.mxu0 %v790
      %1966 = vmatpush.bf16.msra.mxu0 %v789
      %1967 = vmatpush.bf16.msra.mxu0 %v788
      %1968 = vmatpush.bf16.msra.mxu0 %v787
      %1969 = vmatpush.bf16.msra.mxu0 %v786
      %1970 = vmatmul.bf16.gmra.mxu0 %v1958
      %v1971 = vpop.f32.mrf.mxu0
      %v1972 = vadd.f32 %v657, %v1971
      %v1973 = vpop.f32.mrf.mxu0
      %1974 = vdwg.mxu0
      %1975 = vmatpush.bf16.msra.mxu0 %v801
      %1976 = vmatpush.bf16.msra.mxu0 %v800
      %1977 = vmatpush.bf16.msra.mxu0 %v799
      %1978 = vmatpush.bf16.msra.mxu0 %v798
      %1979 = vmatpush.bf16.msra.mxu0 %v797
      %1980 = vmatpush.bf16.msra.mxu0 %v796
      %1981 = vmatpush.bf16.msra.mxu0 %v795
      %1982 = vmatpush.bf16.msra.mxu0 %v794
      %1983 = vmatmul.bf16.gmra.mxu0 %v1959
      %v1984 = vpop.f32.mrf.mxu0
      %v1985 = vadd.f32 %v1972, %v1984
      %v1986 = vpop.f32.mrf.mxu0
      %1987 = vdwg.mxu0
      %1988 = vmatpush.bf16.msra.mxu0 %v809
      %1989 = vmatpush.bf16.msra.mxu0 %v808
      %1990 = vmatpush.bf16.msra.mxu0 %v807
      %1991 = vmatpush.bf16.msra.mxu0 %v806
      %1992 = vmatpush.bf16.msra.mxu0 %v805
      %1993 = vmatpush.bf16.msra.mxu0 %v804
      %1994 = vmatpush.bf16.msra.mxu0 %v803
      %1995 = vmatpush.bf16.msra.mxu0 %v802
      %1996 = vmatmul.bf16.gmra.mxu0 %v1960
      %v1997 = vpop.f32.mrf.mxu0
      %v1998 = vadd.f32 %v1985, %v1997
      %v1999 = vpop.f32.mrf.mxu0
      %2000 = vdwg.mxu0
      %2001 = vmatpush.bf16.msra.mxu0 %v817
      %2002 = vmatpush.bf16.msra.mxu0 %v816
      %2003 = vmatpush.bf16.msra.mxu0 %v815
      %2004 = vmatpush.bf16.msra.mxu0 %v814
      %2005 = vmatpush.bf16.msra.mxu0 %v813
      %2006 = vmatpush.bf16.msra.mxu0 %v812
      %2007 = vmatpush.bf16.msra.mxu0 %v811
      %2008 = vmatpush.bf16.msra.mxu0 %v810
      %2009 = vmatmul.bf16.gmra.mxu0 %v1961
      %v2010 = vpop.f32.mrf.mxu0
      %v2011 = vadd.f32 %v1998, %v2010
      %v2012 = vpop.f32.mrf.mxu0
      %2013 = vdwg.mxu0
      %v2014 = vmax.f32 %v2011, 0.0
      %v2015 = vmul.f32 %v2014, %v903
      %v2016 = vadd.f32 %v2015, %v905
      %2017 = vrot.lane.b32.xlu0 %v567, 76
      %v2018 = vpop.permute.xlu0 %2017
      %2019 = vrot.lane.b32.xlu0 %v568, 76
      %v2020 = vpop.permute.xlu0 %2019
      %2023 = vrot.lane.b32.xlu0 %v641, 76
      %v2024 = vpop.permute.xlu0 %2023
      %2025 = vrot.lane.b32.xlu0 %v640, 76
      %v2026 = vpop.permute.xlu0 %2025
      %vm2029 = vcmask 621568
      %v2030 = vsel %vm2029, %v2018, %v2024
      %v2031 = vsel %vm2029, %v2020, %v2026
      %v2034 = vrot.slane %v2030, 1
      %v2035 = vrot.slane %v2031, 1
      %v2036 = vsel %vm638, %v2034, %v2035
      %v2038 = vrot.slane %v2030, 2
      %v2039 = vrot.slane %v2031, 2
      %v2040 = vsel %vm643, %v2038, %v2039
      %v2042 = vrot.slane %v2030, 3
      %v2043 = vrot.slane %v2031, 3
      %v2044 = vsel %vm648, %v2042, %v2043
      %v2046 = vpack.c.bf16 %v2030, %v2030
      %v2047 = vpack.c.bf16 %v2036, %v2036
      %v2048 = vpack.c.bf16 %v2040, %v2040
      %v2049 = vpack.c.bf16 %v2044, %v2044
      %2050 = vmatpush.bf16.msra.mxu0 %v793
      %2051 = vmatpush.bf16.msra.mxu0 %v792
      %2052 = vmatpush.bf16.msra.mxu0 %v791
      %2053 = vmatpush.bf16.msra.mxu0 %v790
      %2054 = vmatpush.bf16.msra.mxu0 %v789
      %2055 = vmatpush.bf16.msra.mxu0 %v788
      %2056 = vmatpush.bf16.msra.mxu0 %v787
      %2057 = vmatpush.bf16.msra.mxu0 %v786
      %2058 = vmatmul.bf16.gmra.mxu0 %v2046
      %v2059 = vpop.f32.mrf.mxu0
      %v2060 = vadd.f32 %v657, %v2059
      %v2061 = vpop.f32.mrf.mxu0
      %2062 = vdwg.mxu0
      %2063 = vmatpush.bf16.msra.mxu0 %v801
      %2064 = vmatpush.bf16.msra.mxu0 %v800
      %2065 = vmatpush.bf16.msra.mxu0 %v799
      %2066 = vmatpush.bf16.msra.mxu0 %v798
      %2067 = vmatpush.bf16.msra.mxu0 %v797
      %2068 = vmatpush.bf16.msra.mxu0 %v796
      %2069 = vmatpush.bf16.msra.mxu0 %v795
      %2070 = vmatpush.bf16.msra.mxu0 %v794
      %2071 = vmatmul.bf16.gmra.mxu0 %v2047
      %v2072 = vpop.f32.mrf.mxu0
      %v2073 = vadd.f32 %v2060, %v2072
      %v2074 = vpop.f32.mrf.mxu0
      %2075 = vdwg.mxu0
      %2076 = vmatpush.bf16.msra.mxu0 %v809
      %2077 = vmatpush.bf16.msra.mxu0 %v808
      %2078 = vmatpush.bf16.msra.mxu0 %v807
      %2079 = vmatpush.bf16.msra.mxu0 %v806
      %2080 = vmatpush.bf16.msra.mxu0 %v805
      %2081 = vmatpush.bf16.msra.mxu0 %v804
      %2082 = vmatpush.bf16.msra.mxu0 %v803
      %2083 = vmatpush.bf16.msra.mxu0 %v802
      %2084 = vmatmul.bf16.gmra.mxu0 %v2048
      %v2085 = vpop.f32.mrf.mxu0
      %v2086 = vadd.f32 %v2073, %v2085
      %v2087 = vpop.f32.mrf.mxu0
      %2088 = vdwg.mxu0
      %2089 = vmatpush.bf16.msra.mxu0 %v817
      %2090 = vmatpush.bf16.msra.mxu0 %v816
      %2091 = vmatpush.bf16.msra.mxu0 %v815
      %2092 = vmatpush.bf16.msra.mxu0 %v814
      %2093 = vmatpush.bf16.msra.mxu0 %v813
      %2094 = vmatpush.bf16.msra.mxu0 %v812
      %2095 = vmatpush.bf16.msra.mxu0 %v811
      %2096 = vmatpush.bf16.msra.mxu0 %v810
      %2097 = vmatmul.bf16.gmra.mxu0 %v2049
      %v2098 = vpop.f32.mrf.mxu0
      %v2099 = vadd.f32 %v2086, %v2098
      %v2100 = vpop.f32.mrf.mxu0
      %2101 = vdwg.mxu0
      %v2102 = vmax.f32 %v2099, 0.0
      %v2103 = vmul.f32 %v2102, %v903
      %v2104 = vadd.f32 %v2103, %v905
      %v2105 = vmax.f32 %v2016, %v2104
      %2106 = vst [vmem:[#allocation2 + $0x25] sm:$0x1] %v2105
      %2107 = vst [vmem:[#allocation2 + $0x34] sm:$0x2] %v2105
      %2108 = vst [vmem:[#allocation2 + $0x43] sm:$0x4] %v2105
      %2109 = vst [vmem:[#allocation2 + $0x52] sm:$0x8] %v2105
      %2110 = vst [vmem:[#allocation2 + $0x61] sm:$0x10] %v2105
      %2111 = vst [vmem:[#allocation2 + $0x70] sm:$0x20] %v2105
      %2112 = vst [vmem:[#allocation2 + $0x7f] sm:$0x40] %v2105
      %2113 = vst [vmem:[#allocation2 + $0x8e] sm:$0x80] %v2105
      %2114 = vrot.lane.b32.xlu0 %v567, 72
      %v2115 = vpop.permute.xlu0 %2114
      %2116 = vrot.lane.b32.xlu0 %v568, 72
      %v2117 = vpop.permute.xlu0 %2116
      %2120 = vrot.lane.b32.xlu0 %v641, 72
      %v2121 = vpop.permute.xlu0 %2120
      %2122 = vrot.lane.b32.xlu0 %v640, 72
      %v2123 = vpop.permute.xlu0 %2122
      %vm2126 = vcmask 588800
      %v2127 = vsel %vm2126, %v2115, %v2121
      %v2128 = vsel %vm2126, %v2117, %v2123
      %v2131 = vrot.slane %v2127, 1
      %v2132 = vrot.slane %v2128, 1
      %v2133 = vsel %vm638, %v2131, %v2132
      %v2135 = vrot.slane %v2127, 2
      %v2136 = vrot.slane %v2128, 2
      %v2137 = vsel %vm643, %v2135, %v2136
      %v2139 = vrot.slane %v2127, 3
      %v2140 = vrot.slane %v2128, 3
      %v2141 = vsel %vm648, %v2139, %v2140
      %v2143 = vpack.c.bf16 %v2127, %v2127
      %v2144 = vpack.c.bf16 %v2133, %v2133
      %v2145 = vpack.c.bf16 %v2137, %v2137
      %v2146 = vpack.c.bf16 %v2141, %v2141
      %2147 = vmatpush.bf16.msra.mxu0 %v793
      %2148 = vmatpush.bf16.msra.mxu0 %v792
      %2149 = vmatpush.bf16.msra.mxu0 %v791
      %2150 = vmatpush.bf16.msra.mxu0 %v790
      %2151 = vmatpush.bf16.msra.mxu0 %v789
      %2152 = vmatpush.bf16.msra.mxu0 %v788
      %2153 = vmatpush.bf16.msra.mxu0 %v787
      %2154 = vmatpush.bf16.msra.mxu0 %v786
      %2155 = vmatmul.bf16.gmra.mxu0 %v2143
      %v2156 = vpop.f32.mrf.mxu0
      %v2157 = vadd.f32 %v657, %v2156
      %v2158 = vpop.f32.mrf.mxu0
      %2159 = vdwg.mxu0
      %2160 = vmatpush.bf16.msra.mxu0 %v801
      %2161 = vmatpush.bf16.msra.mxu0 %v800
      %2162 = vmatpush.bf16.msra.mxu0 %v799
      %2163 = vmatpush.bf16.msra.mxu0 %v798
      %2164 = vmatpush.bf16.msra.mxu0 %v797
      %2165 = vmatpush.bf16.msra.mxu0 %v796
      %2166 = vmatpush.bf16.msra.mxu0 %v795
      %2167 = vmatpush.bf16.msra.mxu0 %v794
      %2168 = vmatmul.bf16.gmra.mxu0 %v2144
      %v2169 = vpop.f32.mrf.mxu0
      %v2170 = vadd.f32 %v2157, %v2169
      %v2171 = vpop.f32.mrf.mxu0
      %2172 = vdwg.mxu0
      %2173 = vmatpush.bf16.msra.mxu0 %v809
      %2174 = vmatpush.bf16.msra.mxu0 %v808
      %2175 = vmatpush.bf16.msra.mxu0 %v807
      %2176 = vmatpush.bf16.msra.mxu0 %v806
      %2177 = vmatpush.bf16.msra.mxu0 %v805
      %2178 = vmatpush.bf16.msra.mxu0 %v804
      %2179 = vmatpush.bf16.msra.mxu0 %v803
      %2180 = vmatpush.bf16.msra.mxu0 %v802
      %2181 = vmatmul.bf16.gmra.mxu0 %v2145
      %v2182 = vpop.f32.mrf.mxu0
      %v2183 = vadd.f32 %v2170, %v2182
      %v2184 = vpop.f32.mrf.mxu0
      %2185 = vdwg.mxu0
      %2186 = vmatpush.bf16.msra.mxu0 %v817
      %2187 = vmatpush.bf16.msra.mxu0 %v816
      %2188 = vmatpush.bf16.msra.mxu0 %v815
      %2189 = vmatpush.bf16.msra.mxu0 %v814
      %2190 = vmatpush.bf16.msra.mxu0 %v813
      %2191 = vmatpush.bf16.msra.mxu0 %v812
      %2192 = vmatpush.bf16.msra.mxu0 %v811
      %2193 = vmatpush.bf16.msra.mxu0 %v810
      %2194 = vmatmul.bf16.gmra.mxu0 %v2146
      %v2195 = vpop.f32.mrf.mxu0
      %v2196 = vadd.f32 %v2183, %v2195
      %v2197 = vpop.f32.mrf.mxu0
      %2198 = vdwg.mxu0
      %v2199 = vmax.f32 %v2196, 0.0
      %v2200 = vmul.f32 %v2199, %v903
      %v2201 = vadd.f32 %v2200, %v905
      %2202 = vrot.lane.b32.xlu0 %v567, 68
      %v2203 = vpop.permute.xlu0 %2202
      %2204 = vrot.lane.b32.xlu0 %v568, 68
      %v2205 = vpop.permute.xlu0 %2204
      %2208 = vrot.lane.b32.xlu0 %v641, 68
      %v2209 = vpop.permute.xlu0 %2208
      %2210 = vrot.lane.b32.xlu0 %v640, 68
      %v2211 = vpop.permute.xlu0 %2210
      %vm2214 = vcmask 556032
      %v2215 = vsel %vm2214, %v2203, %v2209
      %v2216 = vsel %vm2214, %v2205, %v2211
      %v2219 = vrot.slane %v2215, 1
      %v2220 = vrot.slane %v2216, 1
      %v2221 = vsel %vm638, %v2219, %v2220
      %v2223 = vrot.slane %v2215, 2
      %v2224 = vrot.slane %v2216, 2
      %v2225 = vsel %vm643, %v2223, %v2224
      %v2227 = vrot.slane %v2215, 3
      %v2228 = vrot.slane %v2216, 3
      %v2229 = vsel %vm648, %v2227, %v2228
      %v2231 = vpack.c.bf16 %v2215, %v2215
      %v2232 = vpack.c.bf16 %v2221, %v2221
      %v2233 = vpack.c.bf16 %v2225, %v2225
      %v2234 = vpack.c.bf16 %v2229, %v2229
      %2235 = vmatpush.bf16.msra.mxu0 %v793
      %2236 = vmatpush.bf16.msra.mxu0 %v792
      %2237 = vmatpush.bf16.msra.mxu0 %v791
      %2238 = vmatpush.bf16.msra.mxu0 %v790
      %2239 = vmatpush.bf16.msra.mxu0 %v789
      %2240 = vmatpush.bf16.msra.mxu0 %v788
      %2241 = vmatpush.bf16.msra.mxu0 %v787
      %2242 = vmatpush.bf16.msra.mxu0 %v786
      %2243 = vmatmul.bf16.gmra.mxu0 %v2231
      %v2244 = vpop.f32.mrf.mxu0
      %v2245 = vadd.f32 %v657, %v2244
      %v2246 = vpop.f32.mrf.mxu0
      %2247 = vdwg.mxu0
      %2248 = vmatpush.bf16.msra.mxu0 %v801
      %2249 = vmatpush.bf16.msra.mxu0 %v800
      %2250 = vmatpush.bf16.msra.mxu0 %v799
      %2251 = vmatpush.bf16.msra.mxu0 %v798
      %2252 = vmatpush.bf16.msra.mxu0 %v797
      %2253 = vmatpush.bf16.msra.mxu0 %v796
      %2254 = vmatpush.bf16.msra.mxu0 %v795
      %2255 = vmatpush.bf16.msra.mxu0 %v794
      %2256 = vmatmul.bf16.gmra.mxu0 %v2232
      %v2257 = vpop.f32.mrf.mxu0
      %v2258 = vadd.f32 %v2245, %v2257
      %v2259 = vpop.f32.mrf.mxu0
      %2260 = vdwg.mxu0
      %2261 = vmatpush.bf16.msra.mxu0 %v809
      %2262 = vmatpush.bf16.msra.mxu0 %v808
      %2263 = vmatpush.bf16.msra.mxu0 %v807
      %2264 = vmatpush.bf16.msra.mxu0 %v806
      %2265 = vmatpush.bf16.msra.mxu0 %v805
      %2266 = vmatpush.bf16.msra.mxu0 %v804
      %2267 = vmatpush.bf16.msra.mxu0 %v803
      %2268 = vmatpush.bf16.msra.mxu0 %v802
      %2269 = vmatmul.bf16.gmra.mxu0 %v2233
      %v2270 = vpop.f32.mrf.mxu0
      %v2271 = vadd.f32 %v2258, %v2270
      %v2272 = vpop.f32.mrf.mxu0
      %2273 = vdwg.mxu0
      %2274 = vmatpush.bf16.msra.mxu0 %v817
      %2275 = vmatpush.bf16.msra.mxu0 %v816
      %2276 = vmatpush.bf16.msra.mxu0 %v815
      %2277 = vmatpush.bf16.msra.mxu0 %v814
      %2278 = vmatpush.bf16.msra.mxu0 %v813
      %2279 = vmatpush.bf16.msra.mxu0 %v812
      %2280 = vmatpush.bf16.msra.mxu0 %v811
      %2281 = vmatpush.bf16.msra.mxu0 %v810
      %2282 = vmatmul.bf16.gmra.mxu0 %v2234
      %v2283 = vpop.f32.mrf.mxu0
      %v2284 = vadd.f32 %v2271, %v2283
      %v2285 = vpop.f32.mrf.mxu0
      %2286 = vdwg.mxu0
      %v2287 = vmax.f32 %v2284, 0.0
      %v2288 = vmul.f32 %v2287, %v903
      %v2289 = vadd.f32 %v2288, %v905
      %v2290 = vmax.f32 %v2201, %v2289
      %2291 = vst [vmem:[#allocation2 + $0x26] sm:$0x1] %v2290
      %2292 = vst [vmem:[#allocation2 + $0x35] sm:$0x2] %v2290
      %2293 = vst [vmem:[#allocation2 + $0x44] sm:$0x4] %v2290
      %2294 = vst [vmem:[#allocation2 + $0x53] sm:$0x8] %v2290
      %2295 = vst [vmem:[#allocation2 + $0x62] sm:$0x10] %v2290
      %2296 = vst [vmem:[#allocation2 + $0x71] sm:$0x20] %v2290
      %2297 = vst [vmem:[#allocation2 + $0x80] sm:$0x40] %v2290
      %2298 = vst [vmem:[#allocation2 + $0x8f] sm:$0x80] %v2290
      %2299 = vrot.lane.b32.xlu0 %v567, 64
      %v2300 = vpop.permute.xlu0 %2299
      %2301 = vrot.lane.b32.xlu0 %v568, 64
      %v2302 = vpop.permute.xlu0 %2301
      %2305 = vrot.lane.b32.xlu0 %v641, 64
      %v2306 = vpop.permute.xlu0 %2305
      %2307 = vrot.lane.b32.xlu0 %v640, 64
      %v2308 = vpop.permute.xlu0 %2307
      %vm2311 = vcmask 523264
      %v2312 = vsel %vm2311, %v2300, %v2306
      %v2313 = vsel %vm2311, %v2302, %v2308
      %v2316 = vrot.slane %v2312, 1
      %v2317 = vrot.slane %v2313, 1
      %v2318 = vsel %vm638, %v2316, %v2317
      %v2320 = vrot.slane %v2312, 2
      %v2321 = vrot.slane %v2313, 2
      %v2322 = vsel %vm643, %v2320, %v2321
      %v2324 = vrot.slane %v2312, 3
      %v2325 = vrot.slane %v2313, 3
      %v2326 = vsel %vm648, %v2324, %v2325
      %v2328 = vpack.c.bf16 %v2312, %v2312
      %v2329 = vpack.c.bf16 %v2318, %v2318
      %v2330 = vpack.c.bf16 %v2322, %v2322
      %v2331 = vpack.c.bf16 %v2326, %v2326
      %2332 = vmatpush.bf16.msra.mxu0 %v793
      %2333 = vmatpush.bf16.msra.mxu0 %v792
      %2334 = vmatpush.bf16.msra.mxu0 %v791
      %2335 = vmatpush.bf16.msra.mxu0 %v790
      %2336 = vmatpush.bf16.msra.mxu0 %v789
      %2337 = vmatpush.bf16.msra.mxu0 %v788
      %2338 = vmatpush.bf16.msra.mxu0 %v787
      %2339 = vmatpush.bf16.msra.mxu0 %v786
      %2340 = vmatmul.bf16.gmra.mxu0 %v2328
      %v2341 = vpop.f32.mrf.mxu0
      %v2342 = vadd.f32 %v657, %v2341
      %v2343 = vpop.f32.mrf.mxu0
      %2344 = vdwg.mxu0
      %2345 = vmatpush.bf16.msra.mxu0 %v801
      %2346 = vmatpush.bf16.msra.mxu0 %v800
      %2347 = vmatpush.bf16.msra.mxu0 %v799
      %2348 = vmatpush.bf16.msra.mxu0 %v798
      %2349 = vmatpush.bf16.msra.mxu0 %v797
      %2350 = vmatpush.bf16.msra.mxu0 %v796
      %2351 = vmatpush.bf16.msra.mxu0 %v795
      %2352 = vmatpush.bf16.msra.mxu0 %v794
      %2353 = vmatmul.bf16.gmra.mxu0 %v2329
      %v2354 = vpop.f32.mrf.mxu0
      %v2355 = vadd.f32 %v2342, %v2354
      %v2356 = vpop.f32.mrf.mxu0
      %2357 = vdwg.mxu0
      %2358 = vmatpush.bf16.msra.mxu0 %v809
      %2359 = vmatpush.bf16.msra.mxu0 %v808
      %2360 = vmatpush.bf16.msra.mxu0 %v807
      %2361 = vmatpush.bf16.msra.mxu0 %v806
      %2362 = vmatpush.bf16.msra.mxu0 %v805
      %2363 = vmatpush.bf16.msra.mxu0 %v804
      %2364 = vmatpush.bf16.msra.mxu0 %v803
      %2365 = vmatpush.bf16.msra.mxu0 %v802
      %2366 = vmatmul.bf16.gmra.mxu0 %v2330
      %v2367 = vpop.f32.mrf.mxu0
      %v2368 = vadd.f32 %v2355, %v2367
      %v2369 = vpop.f32.mrf.mxu0
      %2370 = vdwg.mxu0
      %2371 = vmatpush.bf16.msra.mxu0 %v817
      %2372 = vmatpush.bf16.msra.mxu0 %v816
      %2373 = vmatpush.bf16.msra.mxu0 %v815
      %2374 = vmatpush.bf16.msra.mxu0 %v814
      %2375 = vmatpush.bf16.msra.mxu0 %v813
      %2376 = vmatpush.bf16.msra.mxu0 %v812
      %2377 = vmatpush.bf16.msra.mxu0 %v811
      %2378 = vmatpush.bf16.msra.mxu0 %v810
      %2379 = vmatmul.bf16.gmra.mxu0 %v2331
      %v2380 = vpop.f32.mrf.mxu0
      %v2381 = vadd.f32 %v2368, %v2380
      %v2382 = vpop.f32.mrf.mxu0
      %2383 = vdwg.mxu0
      %v2384 = vmax.f32 %v2381, 0.0
      %v2385 = vmul.f32 %v2384, %v903
      %v2386 = vadd.f32 %v2385, %v905
      %2387 = vrot.lane.b32.xlu0 %v567, 60
      %v2388 = vpop.permute.xlu0 %2387
      %2389 = vrot.lane.b32.xlu0 %v568, 60
      %v2390 = vpop.permute.xlu0 %2389
      %2393 = vrot.lane.b32.xlu0 %v641, 60
      %v2394 = vpop.permute.xlu0 %2393
      %2395 = vrot.lane.b32.xlu0 %v640, 60
      %v2396 = vpop.permute.xlu0 %2395
      %vm2399 = vcmask 490496
      %v2400 = vsel %vm2399, %v2388, %v2394
      %v2401 = vsel %vm2399, %v2390, %v2396
      %v2404 = vrot.slane %v2400, 1
      %v2405 = vrot.slane %v2401, 1
      %v2406 = vsel %vm638, %v2404, %v2405
      %v2408 = vrot.slane %v2400, 2
      %v2409 = vrot.slane %v2401, 2
      %v2410 = vsel %vm643, %v2408, %v2409
      %v2412 = vrot.slane %v2400, 3
      %v2413 = vrot.slane %v2401, 3
      %v2414 = vsel %vm648, %v2412, %v2413
      %v2416 = vpack.c.bf16 %v2400, %v2400
      %v2417 = vpack.c.bf16 %v2406, %v2406
      %v2418 = vpack.c.bf16 %v2410, %v2410
      %v2419 = vpack.c.bf16 %v2414, %v2414
      %2420 = vmatpush.bf16.msra.mxu0 %v793
      %2421 = vmatpush.bf16.msra.mxu0 %v792
      %2422 = vmatpush.bf16.msra.mxu0 %v791
      %2423 = vmatpush.bf16.msra.mxu0 %v790
      %2424 = vmatpush.bf16.msra.mxu0 %v789
      %2425 = vmatpush.bf16.msra.mxu0 %v788
      %2426 = vmatpush.bf16.msra.mxu0 %v787
      %2427 = vmatpush.bf16.msra.mxu0 %v786
      %2428 = vmatmul.bf16.gmra.mxu0 %v2416
      %v2429 = vpop.f32.mrf.mxu0
      %v2430 = vadd.f32 %v657, %v2429
      %v2431 = vpop.f32.mrf.mxu0
      %2432 = vdwg.mxu0
      %2433 = vmatpush.bf16.msra.mxu0 %v801
      %2434 = vmatpush.bf16.msra.mxu0 %v800
      %2435 = vmatpush.bf16.msra.mxu0 %v799
      %2436 = vmatpush.bf16.msra.mxu0 %v798
      %2437 = vmatpush.bf16.msra.mxu0 %v797
      %2438 = vmatpush.bf16.msra.mxu0 %v796
      %2439 = vmatpush.bf16.msra.mxu0 %v795
      %2440 = vmatpush.bf16.msra.mxu0 %v794
      %2441 = vmatmul.bf16.gmra.mxu0 %v2417
      %v2442 = vpop.f32.mrf.mxu0
      %v2443 = vadd.f32 %v2430, %v2442
      %v2444 = vpop.f32.mrf.mxu0
      %2445 = vdwg.mxu0
      %2446 = vmatpush.bf16.msra.mxu0 %v809
      %2447 = vmatpush.bf16.msra.mxu0 %v808
      %2448 = vmatpush.bf16.msra.mxu0 %v807
      %2449 = vmatpush.bf16.msra.mxu0 %v806
      %2450 = vmatpush.bf16.msra.mxu0 %v805
      %2451 = vmatpush.bf16.msra.mxu0 %v804
      %2452 = vmatpush.bf16.msra.mxu0 %v803
      %2453 = vmatpush.bf16.msra.mxu0 %v802
      %2454 = vmatmul.bf16.gmra.mxu0 %v2418
      %v2455 = vpop.f32.mrf.mxu0
      %v2456 = vadd.f32 %v2443, %v2455
      %v2457 = vpop.f32.mrf.mxu0
      %2458 = vdwg.mxu0
      %2459 = vmatpush.bf16.msra.mxu0 %v817
      %2460 = vmatpush.bf16.msra.mxu0 %v816
      %2461 = vmatpush.bf16.msra.mxu0 %v815
      %2462 = vmatpush.bf16.msra.mxu0 %v814
      %2463 = vmatpush.bf16.msra.mxu0 %v813
      %2464 = vmatpush.bf16.msra.mxu0 %v812
      %2465 = vmatpush.bf16.msra.mxu0 %v811
      %2466 = vmatpush.bf16.msra.mxu0 %v810
      %2467 = vmatmul.bf16.gmra.mxu0 %v2419
      %v2468 = vpop.f32.mrf.mxu0
      %v2469 = vadd.f32 %v2456, %v2468
      %v2470 = vpop.f32.mrf.mxu0
      %2471 = vdwg.mxu0
      %v2472 = vmax.f32 %v2469, 0.0
      %v2473 = vmul.f32 %v2472, %v903
      %v2474 = vadd.f32 %v2473, %v905
      %v2475 = vmax.f32 %v2386, %v2474
      %2476 = vst [vmem:[#allocation2 + $0x27] sm:$0x1] %v2475
      %2477 = vst [vmem:[#allocation2 + $0x36] sm:$0x2] %v2475
      %2478 = vst [vmem:[#allocation2 + $0x45] sm:$0x4] %v2475
      %2479 = vst [vmem:[#allocation2 + $0x54] sm:$0x8] %v2475
      %2480 = vst [vmem:[#allocation2 + $0x63] sm:$0x10] %v2475
      %2481 = vst [vmem:[#allocation2 + $0x72] sm:$0x20] %v2475
      %2482 = vst [vmem:[#allocation2 + $0x81] sm:$0x40] %v2475
      %2483 = vst [vmem:[#allocation2 + $0x90] sm:$0x80] %v2475
      %2484 = vrot.lane.b32.xlu0 %v567, 56
      %v2485 = vpop.permute.xlu0 %2484
      %2486 = vrot.lane.b32.xlu0 %v568, 56
      %v2487 = vpop.permute.xlu0 %2486
      %2490 = vrot.lane.b32.xlu0 %v641, 56
      %v2491 = vpop.permute.xlu0 %2490
      %2492 = vrot.lane.b32.xlu0 %v640, 56
      %v2493 = vpop.permute.xlu0 %2492
      %vm2496 = vcmask 457728
      %v2497 = vsel %vm2496, %v2485, %v2491
      %v2498 = vsel %vm2496, %v2487, %v2493
      %v2501 = vrot.slane %v2497, 1
      %v2502 = vrot.slane %v2498, 1
      %v2503 = vsel %vm638, %v2501, %v2502
      %v2505 = vrot.slane %v2497, 2
      %v2506 = vrot.slane %v2498, 2
      %v2507 = vsel %vm643, %v2505, %v2506
      %v2509 = vrot.slane %v2497, 3
      %v2510 = vrot.slane %v2498, 3
      %v2511 = vsel %vm648, %v2509, %v2510
      %v2513 = vpack.c.bf16 %v2497, %v2497
      %v2514 = vpack.c.bf16 %v2503, %v2503
      %v2515 = vpack.c.bf16 %v2507, %v2507
      %v2516 = vpack.c.bf16 %v2511, %v2511
      %2517 = vmatpush.bf16.msra.mxu0 %v793
      %2518 = vmatpush.bf16.msra.mxu0 %v792
      %2519 = vmatpush.bf16.msra.mxu0 %v791
      %2520 = vmatpush.bf16.msra.mxu0 %v790
      %2521 = vmatpush.bf16.msra.mxu0 %v789
      %2522 = vmatpush.bf16.msra.mxu0 %v788
      %2523 = vmatpush.bf16.msra.mxu0 %v787
      %2524 = vmatpush.bf16.msra.mxu0 %v786
      %2525 = vmatmul.bf16.gmra.mxu0 %v2513
      %v2526 = vpop.f32.mrf.mxu0
      %v2527 = vadd.f32 %v657, %v2526
      %v2528 = vpop.f32.mrf.mxu0
      %2529 = vdwg.mxu0
      %2530 = vmatpush.bf16.msra.mxu0 %v801
      %2531 = vmatpush.bf16.msra.mxu0 %v800
      %2532 = vmatpush.bf16.msra.mxu0 %v799
      %2533 = vmatpush.bf16.msra.mxu0 %v798
      %2534 = vmatpush.bf16.msra.mxu0 %v797
      %2535 = vmatpush.bf16.msra.mxu0 %v796
      %2536 = vmatpush.bf16.msra.mxu0 %v795
      %2537 = vmatpush.bf16.msra.mxu0 %v794
      %2538 = vmatmul.bf16.gmra.mxu0 %v2514
      %v2539 = vpop.f32.mrf.mxu0
      %v2540 = vadd.f32 %v2527, %v2539
      %v2541 = vpop.f32.mrf.mxu0
      %2542 = vdwg.mxu0
      %2543 = vmatpush.bf16.msra.mxu0 %v809
      %2544 = vmatpush.bf16.msra.mxu0 %v808
      %2545 = vmatpush.bf16.msra.mxu0 %v807
      %2546 = vmatpush.bf16.msra.mxu0 %v806
      %2547 = vmatpush.bf16.msra.mxu0 %v805
      %2548 = vmatpush.bf16.msra.mxu0 %v804
      %2549 = vmatpush.bf16.msra.mxu0 %v803
      %2550 = vmatpush.bf16.msra.mxu0 %v802
      %2551 = vmatmul.bf16.gmra.mxu0 %v2515
      %v2552 = vpop.f32.mrf.mxu0
      %v2553 = vadd.f32 %v2540, %v2552
      %v2554 = vpop.f32.mrf.mxu0
      %2555 = vdwg.mxu0
      %2556 = vmatpush.bf16.msra.mxu0 %v817
      %2557 = vmatpush.bf16.msra.mxu0 %v816
      %2558 = vmatpush.bf16.msra.mxu0 %v815
      %2559 = vmatpush.bf16.msra.mxu0 %v814
      %2560 = vmatpush.bf16.msra.mxu0 %v813
      %2561 = vmatpush.bf16.msra.mxu0 %v812
      %2562 = vmatpush.bf16.msra.mxu0 %v811
      %2563 = vmatpush.bf16.msra.mxu0 %v810
      %2564 = vmatmul.bf16.gmra.mxu0 %v2516
      %v2565 = vpop.f32.mrf.mxu0
      %v2566 = vadd.f32 %v2553, %v2565
      %v2567 = vpop.f32.mrf.mxu0
      %2568 = vdwg.mxu0
      %v2569 = vmax.f32 %v2566, 0.0
      %v2570 = vmul.f32 %v2569, %v903
      %v2571 = vadd.f32 %v2570, %v905
      %2572 = vrot.lane.b32.xlu0 %v567, 52
      %v2573 = vpop.permute.xlu0 %2572
      %2574 = vrot.lane.b32.xlu0 %v568, 52
      %v2575 = vpop.permute.xlu0 %2574
      %2578 = vrot.lane.b32.xlu0 %v641, 52
      %v2579 = vpop.permute.xlu0 %2578
      %2580 = vrot.lane.b32.xlu0 %v640, 52
      %v2581 = vpop.permute.xlu0 %2580
      %vm2584 = vcmask 424960
      %v2585 = vsel %vm2584, %v2573, %v2579
      %v2586 = vsel %vm2584, %v2575, %v2581
      %v2589 = vrot.slane %v2585, 1
      %v2590 = vrot.slane %v2586, 1
      %v2591 = vsel %vm638, %v2589, %v2590
      %v2593 = vrot.slane %v2585, 2
      %v2594 = vrot.slane %v2586, 2
      %v2595 = vsel %vm643, %v2593, %v2594
      %v2597 = vrot.slane %v2585, 3
      %v2598 = vrot.slane %v2586, 3
      %v2599 = vsel %vm648, %v2597, %v2598
      %v2601 = vpack.c.bf16 %v2585, %v2585
      %v2602 = vpack.c.bf16 %v2591, %v2591
      %v2603 = vpack.c.bf16 %v2595, %v2595
      %v2604 = vpack.c.bf16 %v2599, %v2599
      %2605 = vmatpush.bf16.msra.mxu0 %v793
      %2606 = vmatpush.bf16.msra.mxu0 %v792
      %2607 = vmatpush.bf16.msra.mxu0 %v791
      %2608 = vmatpush.bf16.msra.mxu0 %v790
      %2609 = vmatpush.bf16.msra.mxu0 %v789
      %2610 = vmatpush.bf16.msra.mxu0 %v788
      %2611 = vmatpush.bf16.msra.mxu0 %v787
      %2612 = vmatpush.bf16.msra.mxu0 %v786
      %2613 = vmatmul.bf16.gmra.mxu0 %v2601
      %v2614 = vpop.f32.mrf.mxu0
      %v2615 = vadd.f32 %v657, %v2614
      %v2616 = vpop.f32.mrf.mxu0
      %2617 = vdwg.mxu0
      %2618 = vmatpush.bf16.msra.mxu0 %v801
      %2619 = vmatpush.bf16.msra.mxu0 %v800
      %2620 = vmatpush.bf16.msra.mxu0 %v799
      %2621 = vmatpush.bf16.msra.mxu0 %v798
      %2622 = vmatpush.bf16.msra.mxu0 %v797
      %2623 = vmatpush.bf16.msra.mxu0 %v796
      %2624 = vmatpush.bf16.msra.mxu0 %v795
      %2625 = vmatpush.bf16.msra.mxu0 %v794
      %2626 = vmatmul.bf16.gmra.mxu0 %v2602
      %v2627 = vpop.f32.mrf.mxu0
      %v2628 = vadd.f32 %v2615, %v2627
      %v2629 = vpop.f32.mrf.mxu0
      %2630 = vdwg.mxu0
      %2631 = vmatpush.bf16.msra.mxu0 %v809
      %2632 = vmatpush.bf16.msra.mxu0 %v808
      %2633 = vmatpush.bf16.msra.mxu0 %v807
      %2634 = vmatpush.bf16.msra.mxu0 %v806
      %2635 = vmatpush.bf16.msra.mxu0 %v805
      %2636 = vmatpush.bf16.msra.mxu0 %v804
      %2637 = vmatpush.bf16.msra.mxu0 %v803
      %2638 = vmatpush.bf16.msra.mxu0 %v802
      %2639 = vmatmul.bf16.gmra.mxu0 %v2603
      %v2640 = vpop.f32.mrf.mxu0
      %v2641 = vadd.f32 %v2628, %v2640
      %v2642 = vpop.f32.mrf.mxu0
      %2643 = vdwg.mxu0
      %2644 = vmatpush.bf16.msra.mxu0 %v817
      %2645 = vmatpush.bf16.msra.mxu0 %v816
      %2646 = vmatpush.bf16.msra.mxu0 %v815
      %2647 = vmatpush.bf16.msra.mxu0 %v814
      %2648 = vmatpush.bf16.msra.mxu0 %v813
      %2649 = vmatpush.bf16.msra.mxu0 %v812
      %2650 = vmatpush.bf16.msra.mxu0 %v811
      %2651 = vmatpush.bf16.msra.mxu0 %v810
      %2652 = vmatmul.bf16.gmra.mxu0 %v2604
      %v2653 = vpop.f32.mrf.mxu0
      %v2654 = vadd.f32 %v2641, %v2653
      %v2655 = vpop.f32.mrf.mxu0
      %2656 = vdwg.mxu0
      %v2657 = vmax.f32 %v2654, 0.0
      %v2658 = vmul.f32 %v2657, %v903
      %v2659 = vadd.f32 %v2658, %v905
      %v2660 = vmax.f32 %v2571, %v2659
      %2661 = vst [vmem:[#allocation2 + $0x28] sm:$0x1] %v2660
      %2662 = vst [vmem:[#allocation2 + $0x37] sm:$0x2] %v2660
      %2663 = vst [vmem:[#allocation2 + $0x46] sm:$0x4] %v2660
      %2664 = vst [vmem:[#allocation2 + $0x55] sm:$0x8] %v2660
      %2665 = vst [vmem:[#allocation2 + $0x64] sm:$0x10] %v2660
      %2666 = vst [vmem:[#allocation2 + $0x73] sm:$0x20] %v2660
      %2667 = vst [vmem:[#allocation2 + $0x82] sm:$0x40] %v2660
      %2668 = vst [vmem:[#allocation2 + $0x91] sm:$0x80] %v2660
      %2669 = vrot.lane.b32.xlu0 %v567, 48
      %v2670 = vpop.permute.xlu0 %2669
      %2671 = vrot.lane.b32.xlu0 %v568, 48
      %v2672 = vpop.permute.xlu0 %2671
      %2675 = vrot.lane.b32.xlu0 %v641, 48
      %v2676 = vpop.permute.xlu0 %2675
      %2677 = vrot.lane.b32.xlu0 %v640, 48
      %v2678 = vpop.permute.xlu0 %2677
      %vm2681 = vcmask 392192
      %v2682 = vsel %vm2681, %v2670, %v2676
      %v2683 = vsel %vm2681, %v2672, %v2678
      %v2686 = vrot.slane %v2682, 1
      %v2687 = vrot.slane %v2683, 1
      %v2688 = vsel %vm638, %v2686, %v2687
      %v2690 = vrot.slane %v2682, 2
      %v2691 = vrot.slane %v2683, 2
      %v2692 = vsel %vm643, %v2690, %v2691
      %v2694 = vrot.slane %v2682, 3
      %v2695 = vrot.slane %v2683, 3
      %v2696 = vsel %vm648, %v2694, %v2695
      %v2698 = vpack.c.bf16 %v2682, %v2682
      %v2699 = vpack.c.bf16 %v2688, %v2688
      %v2700 = vpack.c.bf16 %v2692, %v2692
      %v2701 = vpack.c.bf16 %v2696, %v2696
      %2702 = vmatpush.bf16.msra.mxu0 %v793
      %2703 = vmatpush.bf16.msra.mxu0 %v792
      %2704 = vmatpush.bf16.msra.mxu0 %v791
      %2705 = vmatpush.bf16.msra.mxu0 %v790
      %2706 = vmatpush.bf16.msra.mxu0 %v789
      %2707 = vmatpush.bf16.msra.mxu0 %v788
      %2708 = vmatpush.bf16.msra.mxu0 %v787
      %2709 = vmatpush.bf16.msra.mxu0 %v786
      %2710 = vmatmul.bf16.gmra.mxu0 %v2698
      %v2711 = vpop.f32.mrf.mxu0
      %v2712 = vadd.f32 %v657, %v2711
      %v2713 = vpop.f32.mrf.mxu0
      %2714 = vdwg.mxu0
      %2715 = vmatpush.bf16.msra.mxu0 %v801
      %2716 = vmatpush.bf16.msra.mxu0 %v800
      %2717 = vmatpush.bf16.msra.mxu0 %v799
      %2718 = vmatpush.bf16.msra.mxu0 %v798
      %2719 = vmatpush.bf16.msra.mxu0 %v797
      %2720 = vmatpush.bf16.msra.mxu0 %v796
      %2721 = vmatpush.bf16.msra.mxu0 %v795
      %2722 = vmatpush.bf16.msra.mxu0 %v794
      %2723 = vmatmul.bf16.gmra.mxu0 %v2699
      %v2724 = vpop.f32.mrf.mxu0
      %v2725 = vadd.f32 %v2712, %v2724
      %v2726 = vpop.f32.mrf.mxu0
      %2727 = vdwg.mxu0
      %2728 = vmatpush.bf16.msra.mxu0 %v809
      %2729 = vmatpush.bf16.msra.mxu0 %v808
      %2730 = vmatpush.bf16.msra.mxu0 %v807
      %2731 = vmatpush.bf16.msra.mxu0 %v806
      %2732 = vmatpush.bf16.msra.mxu0 %v805
      %2733 = vmatpush.bf16.msra.mxu0 %v804
      %2734 = vmatpush.bf16.msra.mxu0 %v803
      %2735 = vmatpush.bf16.msra.mxu0 %v802
      %2736 = vmatmul.bf16.gmra.mxu0 %v2700
      %v2737 = vpop.f32.mrf.mxu0
      %v2738 = vadd.f32 %v2725, %v2737
      %v2739 = vpop.f32.mrf.mxu0
      %2740 = vdwg.mxu0
      %2741 = vmatpush.bf16.msra.mxu0 %v817
      %2742 = vmatpush.bf16.msra.mxu0 %v816
      %2743 = vmatpush.bf16.msra.mxu0 %v815
      %2744 = vmatpush.bf16.msra.mxu0 %v814
      %2745 = vmatpush.bf16.msra.mxu0 %v813
      %2746 = vmatpush.bf16.msra.mxu0 %v812
      %2747 = vmatpush.bf16.msra.mxu0 %v811
      %2748 = vmatpush.bf16.msra.mxu0 %v810
      %2749 = vmatmul.bf16.gmra.mxu0 %v2701
      %v2750 = vpop.f32.mrf.mxu0
      %v2751 = vadd.f32 %v2738, %v2750
      %v2752 = vpop.f32.mrf.mxu0
      %2753 = vdwg.mxu0
      %v2754 = vmax.f32 %v2751, 0.0
      %v2755 = vmul.f32 %v2754, %v903
      %v2756 = vadd.f32 %v2755, %v905
      %2757 = vrot.lane.b32.xlu0 %v567, 44
      %v2758 = vpop.permute.xlu0 %2757
      %2759 = vrot.lane.b32.xlu0 %v568, 44
      %v2760 = vpop.permute.xlu0 %2759
      %2763 = vrot.lane.b32.xlu0 %v641, 44
      %v2764 = vpop.permute.xlu0 %2763
      %2765 = vrot.lane.b32.xlu0 %v640, 44
      %v2766 = vpop.permute.xlu0 %2765
      %vm2769 = vcmask 359424
      %v2770 = vsel %vm2769, %v2758, %v2764
      %v2771 = vsel %vm2769, %v2760, %v2766
      %v2774 = vrot.slane %v2770, 1
      %v2775 = vrot.slane %v2771, 1
      %v2776 = vsel %vm638, %v2774, %v2775
      %v2778 = vrot.slane %v2770, 2
      %v2779 = vrot.slane %v2771, 2
      %v2780 = vsel %vm643, %v2778, %v2779
      %v2782 = vrot.slane %v2770, 3
      %v2783 = vrot.slane %v2771, 3
      %v2784 = vsel %vm648, %v2782, %v2783
      %v2786 = vpack.c.bf16 %v2770, %v2770
      %v2787 = vpack.c.bf16 %v2776, %v2776
      %v2788 = vpack.c.bf16 %v2780, %v2780
      %v2789 = vpack.c.bf16 %v2784, %v2784
      %2790 = vmatpush.bf16.msra.mxu0 %v793
      %2791 = vmatpush.bf16.msra.mxu0 %v792
      %2792 = vmatpush.bf16.msra.mxu0 %v791
      %2793 = vmatpush.bf16.msra.mxu0 %v790
      %2794 = vmatpush.bf16.msra.mxu0 %v789
      %2795 = vmatpush.bf16.msra.mxu0 %v788
      %2796 = vmatpush.bf16.msra.mxu0 %v787
      %2797 = vmatpush.bf16.msra.mxu0 %v786
      %2798 = vmatmul.bf16.gmra.mxu0 %v2786
      %v2799 = vpop.f32.mrf.mxu0
      %v2800 = vadd.f32 %v657, %v2799
      %v2801 = vpop.f32.mrf.mxu0
      %2802 = vdwg.mxu0
      %2803 = vmatpush.bf16.msra.mxu0 %v801
      %2804 = vmatpush.bf16.msra.mxu0 %v800
      %2805 = vmatpush.bf16.msra.mxu0 %v799
      %2806 = vmatpush.bf16.msra.mxu0 %v798
      %2807 = vmatpush.bf16.msra.mxu0 %v797
      %2808 = vmatpush.bf16.msra.mxu0 %v796
      %2809 = vmatpush.bf16.msra.mxu0 %v795
      %2810 = vmatpush.bf16.msra.mxu0 %v794
      %2811 = vmatmul.bf16.gmra.mxu0 %v2787
      %v2812 = vpop.f32.mrf.mxu0
      %v2813 = vadd.f32 %v2800, %v2812
      %v2814 = vpop.f32.mrf.mxu0
      %2815 = vdwg.mxu0
      %2816 = vmatpush.bf16.msra.mxu0 %v809
      %2817 = vmatpush.bf16.msra.mxu0 %v808
      %2818 = vmatpush.bf16.msra.mxu0 %v807
      %2819 = vmatpush.bf16.msra.mxu0 %v806
      %2820 = vmatpush.bf16.msra.mxu0 %v805
      %2821 = vmatpush.bf16.msra.mxu0 %v804
      %2822 = vmatpush.bf16.msra.mxu0 %v803
      %2823 = vmatpush.bf16.msra.mxu0 %v802
      %2824 = vmatmul.bf16.gmra.mxu0 %v2788
      %v2825 = vpop.f32.mrf.mxu0
      %v2826 = vadd.f32 %v2813, %v2825
      %v2827 = vpop.f32.mrf.mxu0
      %2828 = vdwg.mxu0
      %2829 = vmatpush.bf16.msra.mxu0 %v817
      %2830 = vmatpush.bf16.msra.mxu0 %v816
      %2831 = vmatpush.bf16.msra.mxu0 %v815
      %2832 = vmatpush.bf16.msra.mxu0 %v814
      %2833 = vmatpush.bf16.msra.mxu0 %v813
      %2834 = vmatpush.bf16.msra.mxu0 %v812
      %2835 = vmatpush.bf16.msra.mxu0 %v811
      %2836 = vmatpush.bf16.msra.mxu0 %v810
      %2837 = vmatmul.bf16.gmra.mxu0 %v2789
      %v2838 = vpop.f32.mrf.mxu0
      %v2839 = vadd.f32 %v2826, %v2838
      %v2840 = vpop.f32.mrf.mxu0
      %2841 = vdwg.mxu0
      %v2842 = vmax.f32 %v2839, 0.0
      %v2843 = vmul.f32 %v2842, %v903
      %v2844 = vadd.f32 %v2843, %v905
      %v2845 = vmax.f32 %v2756, %v2844
      %2846 = vst [vmem:[#allocation2 + $0x29] sm:$0x1] %v2845
      %2847 = vst [vmem:[#allocation2 + $0x38] sm:$0x2] %v2845
      %2848 = vst [vmem:[#allocation2 + $0x47] sm:$0x4] %v2845
      %2849 = vst [vmem:[#allocation2 + $0x56] sm:$0x8] %v2845
      %2850 = vst [vmem:[#allocation2 + $0x65] sm:$0x10] %v2845
      %2851 = vst [vmem:[#allocation2 + $0x74] sm:$0x20] %v2845
      %2852 = vst [vmem:[#allocation2 + $0x83] sm:$0x40] %v2845
      %2853 = vst [vmem:[#allocation2 + $0x92] sm:$0x80] %v2845
      %2854 = vrot.lane.b32.xlu0 %v567, 40
      %v2855 = vpop.permute.xlu0 %2854
      %2856 = vrot.lane.b32.xlu0 %v568, 40
      %v2857 = vpop.permute.xlu0 %2856
      %2860 = vrot.lane.b32.xlu0 %v641, 40
      %v2861 = vpop.permute.xlu0 %2860
      %2862 = vrot.lane.b32.xlu0 %v640, 40
      %v2863 = vpop.permute.xlu0 %2862
      %vm2866 = vcmask 326656
      %v2867 = vsel %vm2866, %v2855, %v2861
      %v2868 = vsel %vm2866, %v2857, %v2863
      %v2871 = vrot.slane %v2867, 1
      %v2872 = vrot.slane %v2868, 1
      %v2873 = vsel %vm638, %v2871, %v2872
      %v2875 = vrot.slane %v2867, 2
      %v2876 = vrot.slane %v2868, 2
      %v2877 = vsel %vm643, %v2875, %v2876
      %v2879 = vrot.slane %v2867, 3
      %v2880 = vrot.slane %v2868, 3
      %v2881 = vsel %vm648, %v2879, %v2880
      %v2883 = vpack.c.bf16 %v2867, %v2867
      %v2884 = vpack.c.bf16 %v2873, %v2873
      %v2885 = vpack.c.bf16 %v2877, %v2877
      %v2886 = vpack.c.bf16 %v2881, %v2881
      %2887 = vmatpush.bf16.msra.mxu0 %v793
      %2888 = vmatpush.bf16.msra.mxu0 %v792
      %2889 = vmatpush.bf16.msra.mxu0 %v791
      %2890 = vmatpush.bf16.msra.mxu0 %v790
      %2891 = vmatpush.bf16.msra.mxu0 %v789
      %2892 = vmatpush.bf16.msra.mxu0 %v788
      %2893 = vmatpush.bf16.msra.mxu0 %v787
      %2894 = vmatpush.bf16.msra.mxu0 %v786
      %2895 = vmatmul.bf16.gmra.mxu0 %v2883
      %v2896 = vpop.f32.mrf.mxu0
      %v2897 = vadd.f32 %v657, %v2896
      %v2898 = vpop.f32.mrf.mxu0
      %2899 = vdwg.mxu0
      %2900 = vmatpush.bf16.msra.mxu0 %v801
      %2901 = vmatpush.bf16.msra.mxu0 %v800
      %2902 = vmatpush.bf16.msra.mxu0 %v799
      %2903 = vmatpush.bf16.msra.mxu0 %v798
      %2904 = vmatpush.bf16.msra.mxu0 %v797
      %2905 = vmatpush.bf16.msra.mxu0 %v796
      %2906 = vmatpush.bf16.msra.mxu0 %v795
      %2907 = vmatpush.bf16.msra.mxu0 %v794
      %2908 = vmatmul.bf16.gmra.mxu0 %v2884
      %v2909 = vpop.f32.mrf.mxu0
      %v2910 = vadd.f32 %v2897, %v2909
      %v2911 = vpop.f32.mrf.mxu0
      %2912 = vdwg.mxu0
      %2913 = vmatpush.bf16.msra.mxu0 %v809
      %2914 = vmatpush.bf16.msra.mxu0 %v808
      %2915 = vmatpush.bf16.msra.mxu0 %v807
      %2916 = vmatpush.bf16.msra.mxu0 %v806
      %2917 = vmatpush.bf16.msra.mxu0 %v805
      %2918 = vmatpush.bf16.msra.mxu0 %v804
      %2919 = vmatpush.bf16.msra.mxu0 %v803
      %2920 = vmatpush.bf16.msra.mxu0 %v802
      %2921 = vmatmul.bf16.gmra.mxu0 %v2885
      %v2922 = vpop.f32.mrf.mxu0
      %v2923 = vadd.f32 %v2910, %v2922
      %v2924 = vpop.f32.mrf.mxu0
      %2925 = vdwg.mxu0
      %2926 = vmatpush.bf16.msra.mxu0 %v817
      %2927 = vmatpush.bf16.msra.mxu0 %v816
      %2928 = vmatpush.bf16.msra.mxu0 %v815
      %2929 = vmatpush.bf16.msra.mxu0 %v814
      %2930 = vmatpush.bf16.msra.mxu0 %v813
      %2931 = vmatpush.bf16.msra.mxu0 %v812
      %2932 = vmatpush.bf16.msra.mxu0 %v811
      %2933 = vmatpush.bf16.msra.mxu0 %v810
      %2934 = vmatmul.bf16.gmra.mxu0 %v2886
      %v2935 = vpop.f32.mrf.mxu0
      %v2936 = vadd.f32 %v2923, %v2935
      %v2937 = vpop.f32.mrf.mxu0
      %2938 = vdwg.mxu0
      %v2939 = vmax.f32 %v2936, 0.0
      %v2940 = vmul.f32 %v2939, %v903
      %v2941 = vadd.f32 %v2940, %v905
      %2942 = vrot.lane.b32.xlu0 %v567, 36
      %v2943 = vpop.permute.xlu0 %2942
      %2944 = vrot.lane.b32.xlu0 %v568, 36
      %v2945 = vpop.permute.xlu0 %2944
      %2948 = vrot.lane.b32.xlu0 %v641, 36
      %v2949 = vpop.permute.xlu0 %2948
      %2950 = vrot.lane.b32.xlu0 %v640, 36
      %v2951 = vpop.permute.xlu0 %2950
      %vm2954 = vcmask 293888
      %v2955 = vsel %vm2954, %v2943, %v2949
      %v2956 = vsel %vm2954, %v2945, %v2951
      %v2959 = vrot.slane %v2955, 1
      %v2960 = vrot.slane %v2956, 1
      %v2961 = vsel %vm638, %v2959, %v2960
      %v2963 = vrot.slane %v2955, 2
      %v2964 = vrot.slane %v2956, 2
      %v2965 = vsel %vm643, %v2963, %v2964
      %v2967 = vrot.slane %v2955, 3
      %v2968 = vrot.slane %v2956, 3
      %v2969 = vsel %vm648, %v2967, %v2968
      %v2971 = vpack.c.bf16 %v2955, %v2955
      %v2972 = vpack.c.bf16 %v2961, %v2961
      %v2973 = vpack.c.bf16 %v2965, %v2965
      %v2974 = vpack.c.bf16 %v2969, %v2969
      %2975 = vmatpush.bf16.msra.mxu0 %v793
      %2976 = vmatpush.bf16.msra.mxu0 %v792
      %2977 = vmatpush.bf16.msra.mxu0 %v791
      %2978 = vmatpush.bf16.msra.mxu0 %v790
      %2979 = vmatpush.bf16.msra.mxu0 %v789
      %2980 = vmatpush.bf16.msra.mxu0 %v788
      %2981 = vmatpush.bf16.msra.mxu0 %v787
      %2982 = vmatpush.bf16.msra.mxu0 %v786
      %2983 = vmatmul.bf16.gmra.mxu0 %v2971
      %v2984 = vpop.f32.mrf.mxu0
      %v2985 = vadd.f32 %v657, %v2984
      %v2986 = vpop.f32.mrf.mxu0
      %2987 = vdwg.mxu0
      %2988 = vmatpush.bf16.msra.mxu0 %v801
      %2989 = vmatpush.bf16.msra.mxu0 %v800
      %2990 = vmatpush.bf16.msra.mxu0 %v799
      %2991 = vmatpush.bf16.msra.mxu0 %v798
      %2992 = vmatpush.bf16.msra.mxu0 %v797
      %2993 = vmatpush.bf16.msra.mxu0 %v796
      %2994 = vmatpush.bf16.msra.mxu0 %v795
      %2995 = vmatpush.bf16.msra.mxu0 %v794
      %2996 = vmatmul.bf16.gmra.mxu0 %v2972
      %v2997 = vpop.f32.mrf.mxu0
      %v2998 = vadd.f32 %v2985, %v2997
      %v2999 = vpop.f32.mrf.mxu0
      %3000 = vdwg.mxu0
      %3001 = vmatpush.bf16.msra.mxu0 %v809
      %3002 = vmatpush.bf16.msra.mxu0 %v808
      %3003 = vmatpush.bf16.msra.mxu0 %v807
      %3004 = vmatpush.bf16.msra.mxu0 %v806
      %3005 = vmatpush.bf16.msra.mxu0 %v805
      %3006 = vmatpush.bf16.msra.mxu0 %v804
      %3007 = vmatpush.bf16.msra.mxu0 %v803
      %3008 = vmatpush.bf16.msra.mxu0 %v802
      %3009 = vmatmul.bf16.gmra.mxu0 %v2973
      %v3010 = vpop.f32.mrf.mxu0
      %v3011 = vadd.f32 %v2998, %v3010
      %v3012 = vpop.f32.mrf.mxu0
      %3013 = vdwg.mxu0
      %3014 = vmatpush.bf16.msra.mxu0 %v817
      %3015 = vmatpush.bf16.msra.mxu0 %v816
      %3016 = vmatpush.bf16.msra.mxu0 %v815
      %3017 = vmatpush.bf16.msra.mxu0 %v814
      %3018 = vmatpush.bf16.msra.mxu0 %v813
      %3019 = vmatpush.bf16.msra.mxu0 %v812
      %3020 = vmatpush.bf16.msra.mxu0 %v811
      %3021 = vmatpush.bf16.msra.mxu0 %v810
      %3022 = vmatmul.bf16.gmra.mxu0 %v2974
      %v3023 = vpop.f32.mrf.mxu0
      %v3024 = vadd.f32 %v3011, %v3023
      %v3025 = vpop.f32.mrf.mxu0
      %3026 = vdwg.mxu0
      %v3027 = vmax.f32 %v3024, 0.0
      %v3028 = vmul.f32 %v3027, %v903
      %v3029 = vadd.f32 %v3028, %v905
      %v3030 = vmax.f32 %v2941, %v3029
      %3031 = vst [vmem:[#allocation2 + $0x2a] sm:$0x1] %v3030
      %3032 = vst [vmem:[#allocation2 + $0x39] sm:$0x2] %v3030
      %3033 = vst [vmem:[#allocation2 + $0x48] sm:$0x4] %v3030
      %3034 = vst [vmem:[#allocation2 + $0x57] sm:$0x8] %v3030
      %3035 = vst [vmem:[#allocation2 + $0x66] sm:$0x10] %v3030
      %3036 = vst [vmem:[#allocation2 + $0x75] sm:$0x20] %v3030
      %3037 = vst [vmem:[#allocation2 + $0x84] sm:$0x40] %v3030
      %3038 = vst [vmem:[#allocation2 + $0x93] sm:$0x80] %v3030
      %3039 = vrot.lane.b32.xlu0 %v567, 32
      %v3040 = vpop.permute.xlu0 %3039
      %3041 = vrot.lane.b32.xlu0 %v568, 32
      %v3042 = vpop.permute.xlu0 %3041
      %3045 = vrot.lane.b32.xlu0 %v641, 32
      %v3046 = vpop.permute.xlu0 %3045
      %3047 = vrot.lane.b32.xlu0 %v640, 32
      %v3048 = vpop.permute.xlu0 %3047
      %v3051 = vsel %vm557, %v3040, %v3046
      %v3052 = vsel %vm557, %v3042, %v3048
      %v3055 = vrot.slane %v3051, 1
      %v3056 = vrot.slane %v3052, 1
      %v3057 = vsel %vm638, %v3055, %v3056
      %v3059 = vrot.slane %v3051, 2
      %v3060 = vrot.slane %v3052, 2
      %v3061 = vsel %vm643, %v3059, %v3060
      %v3063 = vrot.slane %v3051, 3
      %v3064 = vrot.slane %v3052, 3
      %v3065 = vsel %vm648, %v3063, %v3064
      %v3067 = vpack.c.bf16 %v3051, %v3051
      %v3068 = vpack.c.bf16 %v3057, %v3057
      %v3069 = vpack.c.bf16 %v3061, %v3061
      %v3070 = vpack.c.bf16 %v3065, %v3065
      %3071 = vmatpush.bf16.msra.mxu0 %v793
      %3072 = vmatpush.bf16.msra.mxu0 %v792
      %3073 = vmatpush.bf16.msra.mxu0 %v791
      %3074 = vmatpush.bf16.msra.mxu0 %v790
      %3075 = vmatpush.bf16.msra.mxu0 %v789
      %3076 = vmatpush.bf16.msra.mxu0 %v788
      %3077 = vmatpush.bf16.msra.mxu0 %v787
      %3078 = vmatpush.bf16.msra.mxu0 %v786
      %3079 = vmatmul.bf16.gmra.mxu0 %v3067
      %v3080 = vpop.f32.mrf.mxu0
      %v3081 = vadd.f32 %v657, %v3080
      %v3082 = vpop.f32.mrf.mxu0
      %3083 = vdwg.mxu0
      %3084 = vmatpush.bf16.msra.mxu0 %v801
      %3085 = vmatpush.bf16.msra.mxu0 %v800
      %3086 = vmatpush.bf16.msra.mxu0 %v799
      %3087 = vmatpush.bf16.msra.mxu0 %v798
      %3088 = vmatpush.bf16.msra.mxu0 %v797
      %3089 = vmatpush.bf16.msra.mxu0 %v796
      %3090 = vmatpush.bf16.msra.mxu0 %v795
      %3091 = vmatpush.bf16.msra.mxu0 %v794
      %3092 = vmatmul.bf16.gmra.mxu0 %v3068
      %v3093 = vpop.f32.mrf.mxu0
      %v3094 = vadd.f32 %v3081, %v3093
      %v3095 = vpop.f32.mrf.mxu0
      %3096 = vdwg.mxu0
      %3097 = vmatpush.bf16.msra.mxu0 %v809
      %3098 = vmatpush.bf16.msra.mxu0 %v808
      %3099 = vmatpush.bf16.msra.mxu0 %v807
      %3100 = vmatpush.bf16.msra.mxu0 %v806
      %3101 = vmatpush.bf16.msra.mxu0 %v805
      %3102 = vmatpush.bf16.msra.mxu0 %v804
      %3103 = vmatpush.bf16.msra.mxu0 %v803
      %3104 = vmatpush.bf16.msra.mxu0 %v802
      %3105 = vmatmul.bf16.gmra.mxu0 %v3069
      %v3106 = vpop.f32.mrf.mxu0
      %v3107 = vadd.f32 %v3094, %v3106
      %v3108 = vpop.f32.mrf.mxu0
      %3109 = vdwg.mxu0
      %3110 = vmatpush.bf16.msra.mxu0 %v817
      %3111 = vmatpush.bf16.msra.mxu0 %v816
      %3112 = vmatpush.bf16.msra.mxu0 %v815
      %3113 = vmatpush.bf16.msra.mxu0 %v814
      %3114 = vmatpush.bf16.msra.mxu0 %v813
      %3115 = vmatpush.bf16.msra.mxu0 %v812
      %3116 = vmatpush.bf16.msra.mxu0 %v811
      %3117 = vmatpush.bf16.msra.mxu0 %v810
      %3118 = vmatmul.bf16.gmra.mxu0 %v3070
      %v3119 = vpop.f32.mrf.mxu0
      %v3120 = vadd.f32 %v3107, %v3119
      %v3121 = vpop.f32.mrf.mxu0
      %3122 = vdwg.mxu0
      %v3123 = vmax.f32 %v3120, 0.0
      %v3124 = vmul.f32 %v3123, %v903
      %v3125 = vadd.f32 %v3124, %v905
      %3126 = vrot.lane.b32.xlu0 %v567, 28
      %v3127 = vpop.permute.xlu0 %3126
      %3128 = vrot.lane.b32.xlu0 %v568, 28
      %v3129 = vpop.permute.xlu0 %3128
      %3132 = vrot.lane.b32.xlu0 %v641, 28
      %v3133 = vpop.permute.xlu0 %3132
      %3134 = vrot.lane.b32.xlu0 %v640, 28
      %v3135 = vpop.permute.xlu0 %3134
      %vm3138 = vcmask 228352
      %v3139 = vsel %vm3138, %v3127, %v3133
      %v3140 = vsel %vm3138, %v3129, %v3135
      %v3143 = vrot.slane %v3139, 1
      %v3144 = vrot.slane %v3140, 1
      %v3145 = vsel %vm638, %v3143, %v3144
      %v3147 = vrot.slane %v3139, 2
      %v3148 = vrot.slane %v3140, 2
      %v3149 = vsel %vm643, %v3147, %v3148
      %v3151 = vrot.slane %v3139, 3
      %v3152 = vrot.slane %v3140, 3
      %v3153 = vsel %vm648, %v3151, %v3152
      %v3155 = vpack.c.bf16 %v3139, %v3139
      %v3156 = vpack.c.bf16 %v3145, %v3145
      %v3157 = vpack.c.bf16 %v3149, %v3149
      %v3158 = vpack.c.bf16 %v3153, %v3153
      %3159 = vmatpush.bf16.msra.mxu0 %v793
      %3160 = vmatpush.bf16.msra.mxu0 %v792
      %3161 = vmatpush.bf16.msra.mxu0 %v791
      %3162 = vmatpush.bf16.msra.mxu0 %v790
      %3163 = vmatpush.bf16.msra.mxu0 %v789
      %3164 = vmatpush.bf16.msra.mxu0 %v788
      %3165 = vmatpush.bf16.msra.mxu0 %v787
      %3166 = vmatpush.bf16.msra.mxu0 %v786
      %3167 = vmatmul.bf16.gmra.mxu0 %v3155
      %v3168 = vpop.f32.mrf.mxu0
      %v3169 = vadd.f32 %v657, %v3168
      %v3170 = vpop.f32.mrf.mxu0
      %3171 = vdwg.mxu0
      %3172 = vmatpush.bf16.msra.mxu0 %v801
      %3173 = vmatpush.bf16.msra.mxu0 %v800
      %3174 = vmatpush.bf16.msra.mxu0 %v799
      %3175 = vmatpush.bf16.msra.mxu0 %v798
      %3176 = vmatpush.bf16.msra.mxu0 %v797
      %3177 = vmatpush.bf16.msra.mxu0 %v796
      %3178 = vmatpush.bf16.msra.mxu0 %v795
      %3179 = vmatpush.bf16.msra.mxu0 %v794
      %3180 = vmatmul.bf16.gmra.mxu0 %v3156
      %v3181 = vpop.f32.mrf.mxu0
      %v3182 = vadd.f32 %v3169, %v3181
      %v3183 = vpop.f32.mrf.mxu0
      %3184 = vdwg.mxu0
      %3185 = vmatpush.bf16.msra.mxu0 %v809
      %3186 = vmatpush.bf16.msra.mxu0 %v808
      %3187 = vmatpush.bf16.msra.mxu0 %v807
      %3188 = vmatpush.bf16.msra.mxu0 %v806
      %3189 = vmatpush.bf16.msra.mxu0 %v805
      %3190 = vmatpush.bf16.msra.mxu0 %v804
      %3191 = vmatpush.bf16.msra.mxu0 %v803
      %3192 = vmatpush.bf16.msra.mxu0 %v802
      %3193 = vmatmul.bf16.gmra.mxu0 %v3157
      %v3194 = vpop.f32.mrf.mxu0
      %v3195 = vadd.f32 %v3182, %v3194
      %v3196 = vpop.f32.mrf.mxu0
      %3197 = vdwg.mxu0
      %3198 = vmatpush.bf16.msra.mxu0 %v817
      %3199 = vmatpush.bf16.msra.mxu0 %v816
      %3200 = vmatpush.bf16.msra.mxu0 %v815
      %3201 = vmatpush.bf16.msra.mxu0 %v814
      %3202 = vmatpush.bf16.msra.mxu0 %v813
      %3203 = vmatpush.bf16.msra.mxu0 %v812
      %3204 = vmatpush.bf16.msra.mxu0 %v811
      %3205 = vmatpush.bf16.msra.mxu0 %v810
      %3206 = vmatmul.bf16.gmra.mxu0 %v3158
      %v3207 = vpop.f32.mrf.mxu0
      %v3208 = vadd.f32 %v3195, %v3207
      %v3209 = vpop.f32.mrf.mxu0
      %3210 = vdwg.mxu0
      %v3211 = vmax.f32 %v3208, 0.0
      %v3212 = vmul.f32 %v3211, %v903
      %v3213 = vadd.f32 %v3212, %v905
      %v3214 = vmax.f32 %v3125, %v3213
      %3215 = vst [vmem:[#allocation2 + $0x2b] sm:$0x1] %v3214
      %3216 = vst [vmem:[#allocation2 + $0x3a] sm:$0x2] %v3214
      %3217 = vst [vmem:[#allocation2 + $0x49] sm:$0x4] %v3214
      %3218 = vst [vmem:[#allocation2 + $0x58] sm:$0x8] %v3214
      %3219 = vst [vmem:[#allocation2 + $0x67] sm:$0x10] %v3214
      %3220 = vst [vmem:[#allocation2 + $0x76] sm:$0x20] %v3214
      %3221 = vst [vmem:[#allocation2 + $0x85] sm:$0x40] %v3214
      %3222 = vst [vmem:[#allocation2 + $0x94] sm:$0x80] %v3214
      %3223 = vrot.lane.b32.xlu0 %v567, 24
      %v3224 = vpop.permute.xlu0 %3223
      %3225 = vrot.lane.b32.xlu0 %v568, 24
      %v3226 = vpop.permute.xlu0 %3225
      %3229 = vrot.lane.b32.xlu0 %v641, 24
      %v3230 = vpop.permute.xlu0 %3229
      %3231 = vrot.lane.b32.xlu0 %v640, 24
      %v3232 = vpop.permute.xlu0 %3231
      %vm3235 = vcmask 195584
      %v3236 = vsel %vm3235, %v3224, %v3230
      %v3237 = vsel %vm3235, %v3226, %v3232
      %v3240 = vrot.slane %v3236, 1
      %v3241 = vrot.slane %v3237, 1
      %v3242 = vsel %vm638, %v3240, %v3241
      %v3244 = vrot.slane %v3236, 2
      %v3245 = vrot.slane %v3237, 2
      %v3246 = vsel %vm643, %v3244, %v3245
      %v3248 = vrot.slane %v3236, 3
      %v3249 = vrot.slane %v3237, 3
      %v3250 = vsel %vm648, %v3248, %v3249
      %v3252 = vpack.c.bf16 %v3236, %v3236
      %v3253 = vpack.c.bf16 %v3242, %v3242
      %v3254 = vpack.c.bf16 %v3246, %v3246
      %v3255 = vpack.c.bf16 %v3250, %v3250
      %3256 = vmatpush.bf16.msra.mxu0 %v793
      %3257 = vmatpush.bf16.msra.mxu0 %v792
      %3258 = vmatpush.bf16.msra.mxu0 %v791
      %3259 = vmatpush.bf16.msra.mxu0 %v790
      %3260 = vmatpush.bf16.msra.mxu0 %v789
      %3261 = vmatpush.bf16.msra.mxu0 %v788
      %3262 = vmatpush.bf16.msra.mxu0 %v787
      %3263 = vmatpush.bf16.msra.mxu0 %v786
      %3264 = vmatmul.bf16.gmra.mxu0 %v3252
      %v3265 = vpop.f32.mrf.mxu0
      %v3266 = vadd.f32 %v657, %v3265
      %v3267 = vpop.f32.mrf.mxu0
      %3268 = vdwg.mxu0
      %3269 = vmatpush.bf16.msra.mxu0 %v801
      %3270 = vmatpush.bf16.msra.mxu0 %v800
      %3271 = vmatpush.bf16.msra.mxu0 %v799
      %3272 = vmatpush.bf16.msra.mxu0 %v798
      %3273 = vmatpush.bf16.msra.mxu0 %v797
      %3274 = vmatpush.bf16.msra.mxu0 %v796
      %3275 = vmatpush.bf16.msra.mxu0 %v795
      %3276 = vmatpush.bf16.msra.mxu0 %v794
      %3277 = vmatmul.bf16.gmra.mxu0 %v3253
      %v3278 = vpop.f32.mrf.mxu0
      %v3279 = vadd.f32 %v3266, %v3278
      %v3280 = vpop.f32.mrf.mxu0
      %3281 = vdwg.mxu0
      %3282 = vmatpush.bf16.msra.mxu0 %v809
      %3283 = vmatpush.bf16.msra.mxu0 %v808
      %3284 = vmatpush.bf16.msra.mxu0 %v807
      %3285 = vmatpush.bf16.msra.mxu0 %v806
      %3286 = vmatpush.bf16.msra.mxu0 %v805
      %3287 = vmatpush.bf16.msra.mxu0 %v804
      %3288 = vmatpush.bf16.msra.mxu0 %v803
      %3289 = vmatpush.bf16.msra.mxu0 %v802
      %3290 = vmatmul.bf16.gmra.mxu0 %v3254
      %v3291 = vpop.f32.mrf.mxu0
      %v3292 = vadd.f32 %v3279, %v3291
      %v3293 = vpop.f32.mrf.mxu0
      %3294 = vdwg.mxu0
      %3295 = vmatpush.bf16.msra.mxu0 %v817
      %3296 = vmatpush.bf16.msra.mxu0 %v816
      %3297 = vmatpush.bf16.msra.mxu0 %v815
      %3298 = vmatpush.bf16.msra.mxu0 %v814
      %3299 = vmatpush.bf16.msra.mxu0 %v813
      %3300 = vmatpush.bf16.msra.mxu0 %v812
      %3301 = vmatpush.bf16.msra.mxu0 %v811
      %3302 = vmatpush.bf16.msra.mxu0 %v810
      %3303 = vmatmul.bf16.gmra.mxu0 %v3255
      %v3304 = vpop.f32.mrf.mxu0
      %v3305 = vadd.f32 %v3292, %v3304
      %v3306 = vpop.f32.mrf.mxu0
      %3307 = vdwg.mxu0
      %v3308 = vmax.f32 %v3305, 0.0
      %v3309 = vmul.f32 %v3308, %v903
      %v3310 = vadd.f32 %v3309, %v905
      %3311 = vrot.lane.b32.xlu0 %v567, 20
      %v3312 = vpop.permute.xlu0 %3311
      %3313 = vrot.lane.b32.xlu0 %v568, 20
      %v3314 = vpop.permute.xlu0 %3313
      %3317 = vrot.lane.b32.xlu0 %v641, 20
      %v3318 = vpop.permute.xlu0 %3317
      %3319 = vrot.lane.b32.xlu0 %v640, 20
      %v3320 = vpop.permute.xlu0 %3319
      %vm3323 = vcmask 162816
      %v3324 = vsel %vm3323, %v3312, %v3318
      %v3325 = vsel %vm3323, %v3314, %v3320
      %v3328 = vrot.slane %v3324, 1
      %v3329 = vrot.slane %v3325, 1
      %v3330 = vsel %vm638, %v3328, %v3329
      %v3332 = vrot.slane %v3324, 2
      %v3333 = vrot.slane %v3325, 2
      %v3334 = vsel %vm643, %v3332, %v3333
      %v3336 = vrot.slane %v3324, 3
      %v3337 = vrot.slane %v3325, 3
      %v3338 = vsel %vm648, %v3336, %v3337
      %v3340 = vpack.c.bf16 %v3324, %v3324
      %v3341 = vpack.c.bf16 %v3330, %v3330
      %v3342 = vpack.c.bf16 %v3334, %v3334
      %v3343 = vpack.c.bf16 %v3338, %v3338
      %3344 = vmatpush.bf16.msra.mxu0 %v793
      %3345 = vmatpush.bf16.msra.mxu0 %v792
      %3346 = vmatpush.bf16.msra.mxu0 %v791
      %3347 = vmatpush.bf16.msra.mxu0 %v790
      %3348 = vmatpush.bf16.msra.mxu0 %v789
      %3349 = vmatpush.bf16.msra.mxu0 %v788
      %3350 = vmatpush.bf16.msra.mxu0 %v787
      %3351 = vmatpush.bf16.msra.mxu0 %v786
      %3352 = vmatmul.bf16.gmra.mxu0 %v3340
      %v3353 = vpop.f32.mrf.mxu0
      %v3354 = vadd.f32 %v657, %v3353
      %v3355 = vpop.f32.mrf.mxu0
      %3356 = vdwg.mxu0
      %3357 = vmatpush.bf16.msra.mxu0 %v801
      %3358 = vmatpush.bf16.msra.mxu0 %v800
      %3359 = vmatpush.bf16.msra.mxu0 %v799
      %3360 = vmatpush.bf16.msra.mxu0 %v798
      %3361 = vmatpush.bf16.msra.mxu0 %v797
      %3362 = vmatpush.bf16.msra.mxu0 %v796
      %3363 = vmatpush.bf16.msra.mxu0 %v795
      %3364 = vmatpush.bf16.msra.mxu0 %v794
      %3365 = vmatmul.bf16.gmra.mxu0 %v3341
      %v3366 = vpop.f32.mrf.mxu0
      %v3367 = vadd.f32 %v3354, %v3366
      %v3368 = vpop.f32.mrf.mxu0
      %3369 = vdwg.mxu0
      %3370 = vmatpush.bf16.msra.mxu0 %v809
      %3371 = vmatpush.bf16.msra.mxu0 %v808
      %3372 = vmatpush.bf16.msra.mxu0 %v807
      %3373 = vmatpush.bf16.msra.mxu0 %v806
      %3374 = vmatpush.bf16.msra.mxu0 %v805
      %3375 = vmatpush.bf16.msra.mxu0 %v804
      %3376 = vmatpush.bf16.msra.mxu0 %v803
      %3377 = vmatpush.bf16.msra.mxu0 %v802
      %3378 = vmatmul.bf16.gmra.mxu0 %v3342
      %v3379 = vpop.f32.mrf.mxu0
      %v3380 = vadd.f32 %v3367, %v3379
      %v3381 = vpop.f32.mrf.mxu0
      %3382 = vdwg.mxu0
      %3383 = vmatpush.bf16.msra.mxu0 %v817
      %3384 = vmatpush.bf16.msra.mxu0 %v816
      %3385 = vmatpush.bf16.msra.mxu0 %v815
      %3386 = vmatpush.bf16.msra.mxu0 %v814
      %3387 = vmatpush.bf16.msra.mxu0 %v813
      %3388 = vmatpush.bf16.msra.mxu0 %v812
      %3389 = vmatpush.bf16.msra.mxu0 %v811
      %3390 = vmatpush.bf16.msra.mxu0 %v810
      %3391 = vmatmul.bf16.gmra.mxu0 %v3343
      %v3392 = vpop.f32.mrf.mxu0
      %v3393 = vadd.f32 %v3380, %v3392
      %v3394 = vpop.f32.mrf.mxu0
      %3395 = vdwg.mxu0
      %v3396 = vmax.f32 %v3393, 0.0
      %v3397 = vmul.f32 %v3396, %v903
      %v3398 = vadd.f32 %v3397, %v905
      %v3399 = vmax.f32 %v3310, %v3398
      %3400 = vst [vmem:[#allocation2 + $0x2c] sm:$0x1] %v3399
      %3401 = vst [vmem:[#allocation2 + $0x3b] sm:$0x2] %v3399
      %3402 = vst [vmem:[#allocation2 + $0x4a] sm:$0x4] %v3399
      %3403 = vst [vmem:[#allocation2 + $0x59] sm:$0x8] %v3399
      %3404 = vst [vmem:[#allocation2 + $0x68] sm:$0x10] %v3399
      %3405 = vst [vmem:[#allocation2 + $0x77] sm:$0x20] %v3399
      %3406 = vst [vmem:[#allocation2 + $0x86] sm:$0x40] %v3399
      %3407 = vst [vmem:[#allocation2 + $0x95] sm:$0x80] %v3399
      %3408 = vrot.lane.b32.xlu0 %v567, 16
      %v3409 = vpop.permute.xlu0 %3408
      %3410 = vrot.lane.b32.xlu0 %v568, 16
      %v3411 = vpop.permute.xlu0 %3410
      %3414 = vrot.lane.b32.xlu0 %v641, 16
      %v3415 = vpop.permute.xlu0 %3414
      %3416 = vrot.lane.b32.xlu0 %v640, 16
      %v3417 = vpop.permute.xlu0 %3416
      %v3420 = vsel %vm518, %v3409, %v3415
      %v3421 = vsel %vm518, %v3411, %v3417
      %v3424 = vrot.slane %v3420, 1
      %v3425 = vrot.slane %v3421, 1
      %v3426 = vsel %vm638, %v3424, %v3425
      %v3428 = vrot.slane %v3420, 2
      %v3429 = vrot.slane %v3421, 2
      %v3430 = vsel %vm643, %v3428, %v3429
      %v3432 = vrot.slane %v3420, 3
      %v3433 = vrot.slane %v3421, 3
      %v3434 = vsel %vm648, %v3432, %v3433
      %v3436 = vpack.c.bf16 %v3420, %v3420
      %v3437 = vpack.c.bf16 %v3426, %v3426
      %v3438 = vpack.c.bf16 %v3430, %v3430
      %v3439 = vpack.c.bf16 %v3434, %v3434
      %3440 = vmatpush.bf16.msra.mxu0 %v793
      %3441 = vmatpush.bf16.msra.mxu0 %v792
      %3442 = vmatpush.bf16.msra.mxu0 %v791
      %3443 = vmatpush.bf16.msra.mxu0 %v790
      %3444 = vmatpush.bf16.msra.mxu0 %v789
      %3445 = vmatpush.bf16.msra.mxu0 %v788
      %3446 = vmatpush.bf16.msra.mxu0 %v787
      %3447 = vmatpush.bf16.msra.mxu0 %v786
      %3448 = vmatmul.bf16.gmra.mxu0 %v3436
      %v3449 = vpop.f32.mrf.mxu0
      %v3450 = vadd.f32 %v657, %v3449
      %v3451 = vpop.f32.mrf.mxu0
      %3452 = vdwg.mxu0
      %3453 = vmatpush.bf16.msra.mxu0 %v801
      %3454 = vmatpush.bf16.msra.mxu0 %v800
      %3455 = vmatpush.bf16.msra.mxu0 %v799
      %3456 = vmatpush.bf16.msra.mxu0 %v798
      %3457 = vmatpush.bf16.msra.mxu0 %v797
      %3458 = vmatpush.bf16.msra.mxu0 %v796
      %3459 = vmatpush.bf16.msra.mxu0 %v795
      %3460 = vmatpush.bf16.msra.mxu0 %v794
      %3461 = vmatmul.bf16.gmra.mxu0 %v3437
      %v3462 = vpop.f32.mrf.mxu0
      %v3463 = vadd.f32 %v3450, %v3462
      %v3464 = vpop.f32.mrf.mxu0
      %3465 = vdwg.mxu0
      %3466 = vmatpush.bf16.msra.mxu0 %v809
      %3467 = vmatpush.bf16.msra.mxu0 %v808
      %3468 = vmatpush.bf16.msra.mxu0 %v807
      %3469 = vmatpush.bf16.msra.mxu0 %v806
      %3470 = vmatpush.bf16.msra.mxu0 %v805
      %3471 = vmatpush.bf16.msra.mxu0 %v804
      %3472 = vmatpush.bf16.msra.mxu0 %v803
      %3473 = vmatpush.bf16.msra.mxu0 %v802
      %3474 = vmatmul.bf16.gmra.mxu0 %v3438
      %v3475 = vpop.f32.mrf.mxu0
      %v3476 = vadd.f32 %v3463, %v3475
      %v3477 = vpop.f32.mrf.mxu0
      %3478 = vdwg.mxu0
      %3479 = vmatpush.bf16.msra.mxu0 %v817
      %3480 = vmatpush.bf16.msra.mxu0 %v816
      %3481 = vmatpush.bf16.msra.mxu0 %v815
      %3482 = vmatpush.bf16.msra.mxu0 %v814
      %3483 = vmatpush.bf16.msra.mxu0 %v813
      %3484 = vmatpush.bf16.msra.mxu0 %v812
      %3485 = vmatpush.bf16.msra.mxu0 %v811
      %3486 = vmatpush.bf16.msra.mxu0 %v810
      %3487 = vmatmul.bf16.gmra.mxu0 %v3439
      %v3488 = vpop.f32.mrf.mxu0
      %v3489 = vadd.f32 %v3476, %v3488
      %v3490 = vpop.f32.mrf.mxu0
      %3491 = vdwg.mxu0
      %v3492 = vmax.f32 %v3489, 0.0
      %v3493 = vmul.f32 %v3492, %v903
      %v3494 = vadd.f32 %v3493, %v905
      %3495 = vrot.lane.b32.xlu0 %v567, 12
      %v3496 = vpop.permute.xlu0 %3495
      %3497 = vrot.lane.b32.xlu0 %v568, 12
      %v3498 = vpop.permute.xlu0 %3497
      %3501 = vrot.lane.b32.xlu0 %v641, 12
      %v3502 = vpop.permute.xlu0 %3501
      %3503 = vrot.lane.b32.xlu0 %v640, 12
      %v3504 = vpop.permute.xlu0 %3503
      %vm3507 = vcmask 97280
      %v3508 = vsel %vm3507, %v3496, %v3502
      %v3509 = vsel %vm3507, %v3498, %v3504
      %v3512 = vrot.slane %v3508, 1
      %v3513 = vrot.slane %v3509, 1
      %v3514 = vsel %vm638, %v3512, %v3513
      %v3516 = vrot.slane %v3508, 2
      %v3517 = vrot.slane %v3509, 2
      %v3518 = vsel %vm643, %v3516, %v3517
      %v3520 = vrot.slane %v3508, 3
      %v3521 = vrot.slane %v3509, 3
      %v3522 = vsel %vm648, %v3520, %v3521
      %v3524 = vpack.c.bf16 %v3508, %v3508
      %v3525 = vpack.c.bf16 %v3514, %v3514
      %v3526 = vpack.c.bf16 %v3518, %v3518
      %v3527 = vpack.c.bf16 %v3522, %v3522
      %3528 = vmatpush.bf16.msra.mxu0 %v793
      %3529 = vmatpush.bf16.msra.mxu0 %v792
      %3530 = vmatpush.bf16.msra.mxu0 %v791
      %3531 = vmatpush.bf16.msra.mxu0 %v790
      %3532 = vmatpush.bf16.msra.mxu0 %v789
      %3533 = vmatpush.bf16.msra.mxu0 %v788
      %3534 = vmatpush.bf16.msra.mxu0 %v787
      %3535 = vmatpush.bf16.msra.mxu0 %v786
      %3536 = vmatmul.bf16.gmra.mxu0 %v3524
      %v3537 = vpop.f32.mrf.mxu0
      %v3538 = vadd.f32 %v657, %v3537
      %v3539 = vpop.f32.mrf.mxu0
      %3540 = vdwg.mxu0
      %3541 = vmatpush.bf16.msra.mxu0 %v801
      %3542 = vmatpush.bf16.msra.mxu0 %v800
      %3543 = vmatpush.bf16.msra.mxu0 %v799
      %3544 = vmatpush.bf16.msra.mxu0 %v798
      %3545 = vmatpush.bf16.msra.mxu0 %v797
      %3546 = vmatpush.bf16.msra.mxu0 %v796
      %3547 = vmatpush.bf16.msra.mxu0 %v795
      %3548 = vmatpush.bf16.msra.mxu0 %v794
      %3549 = vmatmul.bf16.gmra.mxu0 %v3525
      %v3550 = vpop.f32.mrf.mxu0
      %v3551 = vadd.f32 %v3538, %v3550
      %v3552 = vpop.f32.mrf.mxu0
      %3553 = vdwg.mxu0
      %3554 = vmatpush.bf16.msra.mxu0 %v809
      %3555 = vmatpush.bf16.msra.mxu0 %v808
      %3556 = vmatpush.bf16.msra.mxu0 %v807
      %3557 = vmatpush.bf16.msra.mxu0 %v806
      %3558 = vmatpush.bf16.msra.mxu0 %v805
      %3559 = vmatpush.bf16.msra.mxu0 %v804
      %3560 = vmatpush.bf16.msra.mxu0 %v803
      %3561 = vmatpush.bf16.msra.mxu0 %v802
      %3562 = vmatmul.bf16.gmra.mxu0 %v3526
      %v3563 = vpop.f32.mrf.mxu0
      %v3564 = vadd.f32 %v3551, %v3563
      %v3565 = vpop.f32.mrf.mxu0
      %3566 = vdwg.mxu0
      %3567 = vmatpush.bf16.msra.mxu0 %v817
      %3568 = vmatpush.bf16.msra.mxu0 %v816
      %3569 = vmatpush.bf16.msra.mxu0 %v815
      %3570 = vmatpush.bf16.msra.mxu0 %v814
      %3571 = vmatpush.bf16.msra.mxu0 %v813
      %3572 = vmatpush.bf16.msra.mxu0 %v812
      %3573 = vmatpush.bf16.msra.mxu0 %v811
      %3574 = vmatpush.bf16.msra.mxu0 %v810
      %3575 = vmatmul.bf16.gmra.mxu0 %v3527
      %v3576 = vpop.f32.mrf.mxu0
      %v3577 = vadd.f32 %v3564, %v3576
      %v3578 = vpop.f32.mrf.mxu0
      %3579 = vdwg.mxu0
      %v3580 = vmax.f32 %v3577, 0.0
      %v3581 = vmul.f32 %v3580, %v903
      %v3582 = vadd.f32 %v3581, %v905
      %v3583 = vmax.f32 %v3494, %v3582
      %3584 = vst [vmem:[#allocation2 + $0x2d] sm:$0x1] %v3583
      %3585 = vst [vmem:[#allocation2 + $0x3c] sm:$0x2] %v3583
      %3586 = vst [vmem:[#allocation2 + $0x4b] sm:$0x4] %v3583
      %3587 = vst [vmem:[#allocation2 + $0x5a] sm:$0x8] %v3583
      %3588 = vst [vmem:[#allocation2 + $0x69] sm:$0x10] %v3583
      %3589 = vst [vmem:[#allocation2 + $0x78] sm:$0x20] %v3583
      %3590 = vst [vmem:[#allocation2 + $0x87] sm:$0x40] %v3583
      %3591 = vst [vmem:[#allocation2 + $0x96] sm:$0x80] %v3583
      %3592 = vrot.lane.b32.xlu0 %v567, 8
      %v3593 = vpop.permute.xlu0 %3592
      %3594 = vrot.lane.b32.xlu0 %v568, 8
      %v3595 = vpop.permute.xlu0 %3594
      %3598 = vrot.lane.b32.xlu0 %v641, 8
      %v3599 = vpop.permute.xlu0 %3598
      %3600 = vrot.lane.b32.xlu0 %v640, 8
      %v3601 = vpop.permute.xlu0 %3600
      %vm3604 = vcmask 64512
      %v3605 = vsel %vm3604, %v3593, %v3599
      %v3606 = vsel %vm3604, %v3595, %v3601
      %v3609 = vrot.slane %v3605, 1
      %v3610 = vrot.slane %v3606, 1
      %v3611 = vsel %vm638, %v3609, %v3610
      %v3613 = vrot.slane %v3605, 2
      %v3614 = vrot.slane %v3606, 2
      %v3615 = vsel %vm643, %v3613, %v3614
      %v3617 = vrot.slane %v3605, 3
      %v3618 = vrot.slane %v3606, 3
      %v3619 = vsel %vm648, %v3617, %v3618
      %v3621 = vpack.c.bf16 %v3605, %v3605
      %v3622 = vpack.c.bf16 %v3611, %v3611
      %v3623 = vpack.c.bf16 %v3615, %v3615
      %v3624 = vpack.c.bf16 %v3619, %v3619
      %3625 = vmatpush.bf16.msra.mxu0 %v793
      %3626 = vmatpush.bf16.msra.mxu0 %v792
      %3627 = vmatpush.bf16.msra.mxu0 %v791
      %3628 = vmatpush.bf16.msra.mxu0 %v790
      %3629 = vmatpush.bf16.msra.mxu0 %v789
      %3630 = vmatpush.bf16.msra.mxu0 %v788
      %3631 = vmatpush.bf16.msra.mxu0 %v787
      %3632 = vmatpush.bf16.msra.mxu0 %v786
      %3633 = vmatmul.bf16.gmra.mxu0 %v3621
      %v3634 = vpop.f32.mrf.mxu0
      %v3635 = vadd.f32 %v657, %v3634
      %v3636 = vpop.f32.mrf.mxu0
      %3637 = vdwg.mxu0
      %3638 = vmatpush.bf16.msra.mxu0 %v801
      %3639 = vmatpush.bf16.msra.mxu0 %v800
      %3640 = vmatpush.bf16.msra.mxu0 %v799
      %3641 = vmatpush.bf16.msra.mxu0 %v798
      %3642 = vmatpush.bf16.msra.mxu0 %v797
      %3643 = vmatpush.bf16.msra.mxu0 %v796
      %3644 = vmatpush.bf16.msra.mxu0 %v795
      %3645 = vmatpush.bf16.msra.mxu0 %v794
      %3646 = vmatmul.bf16.gmra.mxu0 %v3622
      %v3647 = vpop.f32.mrf.mxu0
      %v3648 = vadd.f32 %v3635, %v3647
      %v3649 = vpop.f32.mrf.mxu0
      %3650 = vdwg.mxu0
      %3651 = vmatpush.bf16.msra.mxu0 %v809
      %3652 = vmatpush.bf16.msra.mxu0 %v808
      %3653 = vmatpush.bf16.msra.mxu0 %v807
      %3654 = vmatpush.bf16.msra.mxu0 %v806
      %3655 = vmatpush.bf16.msra.mxu0 %v805
      %3656 = vmatpush.bf16.msra.mxu0 %v804
      %3657 = vmatpush.bf16.msra.mxu0 %v803
      %3658 = vmatpush.bf16.msra.mxu0 %v802
      %3659 = vmatmul.bf16.gmra.mxu0 %v3623
      %v3660 = vpop.f32.mrf.mxu0
      %v3661 = vadd.f32 %v3648, %v3660
      %v3662 = vpop.f32.mrf.mxu0
      %3663 = vdwg.mxu0
      %3664 = vmatpush.bf16.msra.mxu0 %v817
      %3665 = vmatpush.bf16.msra.mxu0 %v816
      %3666 = vmatpush.bf16.msra.mxu0 %v815
      %3667 = vmatpush.bf16.msra.mxu0 %v814
      %3668 = vmatpush.bf16.msra.mxu0 %v813
      %3669 = vmatpush.bf16.msra.mxu0 %v812
      %3670 = vmatpush.bf16.msra.mxu0 %v811
      %3671 = vmatpush.bf16.msra.mxu0 %v810
      %3672 = vmatmul.bf16.gmra.mxu0 %v3624
      %v3673 = vpop.f32.mrf.mxu0
      %v3674 = vadd.f32 %v3661, %v3673
      %v3675 = vpop.f32.mrf.mxu0
      %3676 = vdwg.mxu0
      %v3677 = vmax.f32 %v3674, 0.0
      %v3678 = vmul.f32 %v3677, %v903
      %v3679 = vadd.f32 %v3678, %v905
      %3680 = vrot.lane.b32.xlu0 %v567, 4
      %v3681 = vpop.permute.xlu0 %3680
      %3682 = vrot.lane.b32.xlu0 %v568, 4
      %v3683 = vpop.permute.xlu0 %3682
      %3686 = vrot.lane.b32.xlu0 %v641, 4
      %v3687 = vpop.permute.xlu0 %3686
      %3688 = vrot.lane.b32.xlu0 %v640, 4
      %v3689 = vpop.permute.xlu0 %3688
      %vm3692 = vcmask 31744
      %v3693 = vsel %vm3692, %v3681, %v3687
      %v3694 = vsel %vm3692, %v3683, %v3689
      %v3697 = vrot.slane %v3693, 1
      %v3698 = vrot.slane %v3694, 1
      %v3699 = vsel %vm638, %v3697, %v3698
      %v3701 = vrot.slane %v3693, 2
      %v3702 = vrot.slane %v3694, 2
      %v3703 = vsel %vm643, %v3701, %v3702
      %v3705 = vrot.slane %v3693, 3
      %v3706 = vrot.slane %v3694, 3
      %v3707 = vsel %vm648, %v3705, %v3706
      %v3709 = vpack.c.bf16 %v3693, %v3693
      %v3710 = vpack.c.bf16 %v3699, %v3699
      %v3711 = vpack.c.bf16 %v3703, %v3703
      %v3712 = vpack.c.bf16 %v3707, %v3707
      %3713 = vmatpush.bf16.msra.mxu0 %v793
      %3714 = vmatpush.bf16.msra.mxu0 %v792
      %3715 = vmatpush.bf16.msra.mxu0 %v791
      %3716 = vmatpush.bf16.msra.mxu0 %v790
      %3717 = vmatpush.bf16.msra.mxu0 %v789
      %3718 = vmatpush.bf16.msra.mxu0 %v788
      %3719 = vmatpush.bf16.msra.mxu0 %v787
      %3720 = vmatpush.bf16.msra.mxu0 %v786
      %3721 = vmatmul.bf16.gmra.mxu0 %v3709
      %v3722 = vpop.f32.mrf.mxu0
      %v3723 = vadd.f32 %v657, %v3722
      %v3724 = vpop.f32.mrf.mxu0
      %3725 = vdwg.mxu0
      %3726 = vmatpush.bf16.msra.mxu0 %v801
      %3727 = vmatpush.bf16.msra.mxu0 %v800
      %3728 = vmatpush.bf16.msra.mxu0 %v799
      %3729 = vmatpush.bf16.msra.mxu0 %v798
      %3730 = vmatpush.bf16.msra.mxu0 %v797
      %3731 = vmatpush.bf16.msra.mxu0 %v796
      %3732 = vmatpush.bf16.msra.mxu0 %v795
      %3733 = vmatpush.bf16.msra.mxu0 %v794
      %3734 = vmatmul.bf16.gmra.mxu0 %v3710
      %v3735 = vpop.f32.mrf.mxu0
      %v3736 = vadd.f32 %v3723, %v3735
      %v3737 = vpop.f32.mrf.mxu0
      %3738 = vdwg.mxu0
      %3739 = vmatpush.bf16.msra.mxu0 %v809
      %3740 = vmatpush.bf16.msra.mxu0 %v808
      %3741 = vmatpush.bf16.msra.mxu0 %v807
      %3742 = vmatpush.bf16.msra.mxu0 %v806
      %3743 = vmatpush.bf16.msra.mxu0 %v805
      %3744 = vmatpush.bf16.msra.mxu0 %v804
      %3745 = vmatpush.bf16.msra.mxu0 %v803
      %3746 = vmatpush.bf16.msra.mxu0 %v802
      %3747 = vmatmul.bf16.gmra.mxu0 %v3711
      %v3748 = vpop.f32.mrf.mxu0
      %v3749 = vadd.f32 %v3736, %v3748
      %v3750 = vpop.f32.mrf.mxu0
      %3751 = vdwg.mxu0
      %3752 = vmatpush.bf16.msra.mxu0 %v817
      %3753 = vmatpush.bf16.msra.mxu0 %v816
      %3754 = vmatpush.bf16.msra.mxu0 %v815
      %3755 = vmatpush.bf16.msra.mxu0 %v814
      %3756 = vmatpush.bf16.msra.mxu0 %v813
      %3757 = vmatpush.bf16.msra.mxu0 %v812
      %3758 = vmatpush.bf16.msra.mxu0 %v811
      %3759 = vmatpush.bf16.msra.mxu0 %v810
      %3760 = vmatmul.bf16.gmra.mxu0 %v3712
      %v3761 = vpop.f32.mrf.mxu0
      %v3762 = vadd.f32 %v3749, %v3761
      %v3763 = vpop.f32.mrf.mxu0
      %3764 = vdwg.mxu0
      %v3765 = vmax.f32 %v3762, 0.0
      %v3766 = vmul.f32 %v3765, %v903
      %v3767 = vadd.f32 %v3766, %v905
      %v3768 = vmax.f32 %v3679, %v3767
      %3769 = vst [vmem:[#allocation2 + $0x2e] sm:$0x1] %v3768
      %3770 = vst [vmem:[#allocation2 + $0x3d] sm:$0x2] %v3768
      %3771 = vst [vmem:[#allocation2 + $0x4c] sm:$0x4] %v3768
      %3772 = vst [vmem:[#allocation2 + $0x5b] sm:$0x8] %v3768
      %3773 = vst [vmem:[#allocation2 + $0x6a] sm:$0x10] %v3768
      %3774 = vst [vmem:[#allocation2 + $0x79] sm:$0x20] %v3768
      %3775 = vst [vmem:[#allocation2 + $0x88] sm:$0x40] %v3768
      %3776 = vst [vmem:[#allocation2 + $0x97] sm:$0x80] %v3768
      loop: start=0, step=1, limit=64
      $region81: #{crepe_forward.1} parent=79 // loop_pre_header
        _
      $region82: #{crepe_forward.1} parent=79 // loop_header
        %s3778 = sphi 0, %s3782
        %p3779 = scmp.ge.s32.totalorder %s3778, 64
        %v3783 = vphi 0.0, %v3942
        %v3784 = vphi 0.0, %v3943
        %v3785 = vphi 0.0, %v3944
        %v3786 = vphi 0.0, %v3945
        %v3787 = vphi 0.0, %v3946
        %v3788 = vphi 0.0, %v3947
        %v3789 = vphi 0.0, %v3948
        %v3790 = vphi 0.0, %v3949
        %v3791 = vphi 0.0, %v3950
        %v3792 = vphi 0.0, %v3951
        %v3793 = vphi 0.0, %v3952
        %v3794 = vphi 0.0, %v3953
        %v3795 = vphi 0.0, %v3954
        %v3796 = vphi 0.0, %v3955
        %v3797 = vphi 0.0, %v3956
        %v3798 = vphi 0.0, %v3957
      $region83: #{crepe_forward.1} parent=79 // loop_header_branch
        %3781 = sbr.rel (%p3779) target = $region87
      $region84: #{crepe_forward.1} parent=79 // loop_body
        %s3799 = scalar_lea.vmem [#allocation2], %s3778
        %v3800 = vld [vmem:[%s3799] sm:$0xff]
        %v3801 = vld [vmem:[%s3799 + $0x8] sm:$0xff]
        %v3802 = vld [vmem:[%s3799 + $0x10] sm:$0xff]
        %v3803 = vld [vmem:[%s3799 + $0x18] sm:$0xff]
        %v3804 = vld [vmem:[%s3799 + $0x20] sm:$0xff]
        %v3805 = vld [vmem:[%s3799 + $0x28] sm:$0xff]
        %v3806 = vld [vmem:[%s3799 + $0x30] sm:$0xff]
        %v3807 = vld [vmem:[%s3799 + $0x38] sm:$0xff]
        %v3808 = vld [vmem:[%s3799 + $0x40] sm:$0xff]
        %v3809 = vld [vmem:[%s3799 + $0x48] sm:$0xff]
        %v3810 = vld [vmem:[%s3799 + $0x50] sm:$0xff]
        %v3811 = vld [vmem:[%s3799 + $0x58] sm:$0xff]
        %v3812 = vld [vmem:[%s3799 + $0x60] sm:$0xff]
        %v3813 = vld [vmem:[%s3799 + $0x68] sm:$0xff]
        %v3814 = vld [vmem:[%s3799 + $0x70] sm:$0xff]
        %v3815 = vld [vmem:[%s3799 + $0x78] sm:$0xff]
        %v3816 = vpack.c.bf16 %v3801, %v3800
        %v3817 = vpack.c.bf16 %v3803, %v3802
        %v3818 = vpack.c.bf16 %v3805, %v3804
        %v3819 = vpack.c.bf16 %v3807, %v3806
        %v3820 = vpack.c.bf16 %v3809, %v3808
        %v3821 = vpack.c.bf16 %v3811, %v3810
        %v3822 = vpack.c.bf16 %v3813, %v3812
        %v3823 = vpack.c.bf16 %v3815, %v3814
        %s3824 = smul.u32 %s3778, 128
        %s3825 = sshra.s32 %s3824, 3
        %s3826 = sand.u32 %s3824, 7
        %s3827 = smul.addr %s3825, 4
        %s3828 = scalar_lea.vmem %s3, %s3827
        %v3829 = vld [vmem:[%s3828] sm:$0xf]
        %v3830 = vld [vmem:[%s3828 + $0x4] sm:$0xf]
        %v3831 = vld [vmem:[%s3828 + $0x8] sm:$0xf]
        %v3832 = vld [vmem:[%s3828 + $0xc] sm:$0xf]
        %v3833 = vld [vmem:[%s3828 + $0x10] sm:$0xf]
        %v3834 = vld [vmem:[%s3828 + $0x14] sm:$0xf]
        %v3835 = vld [vmem:[%s3828 + $0x18] sm:$0xf]
        %v3836 = vld [vmem:[%s3828 + $0x1c] sm:$0xf]
        %v3837 = vld [vmem:[%s3828 + $0x20] sm:$0xf]
        %v3838 = vld [vmem:[%s3828 + $0x24] sm:$0xf]
        %v3839 = vld [vmem:[%s3828 + $0x28] sm:$0xf]
        %v3840 = vld [vmem:[%s3828 + $0x2c] sm:$0xf]
        %v3841 = vld [vmem:[%s3828 + $0x30] sm:$0xf]
        %v3842 = vld [vmem:[%s3828 + $0x34] sm:$0xf]
        %v3843 = vld [vmem:[%s3828 + $0x38] sm:$0xf]
        %v3844 = vld [vmem:[%s3828 + $0x3c] sm:$0xf]
        %v3861 = vunpack.c.l.b16 %v3829
        %v3862 = vunpack.c.l.b16 %v3830
        %v3863 = vunpack.c.l.b16 %v3831
        %v3864 = vunpack.c.l.b16 %v3832
        %v3865 = vunpack.c.l.b16 %v3833
        %v3866 = vunpack.c.l.b16 %v3834
        %v3867 = vunpack.c.l.b16 %v3835
        %v3868 = vunpack.c.l.b16 %v3836
        %v3869 = vunpack.c.l.b16 %v3837
        %v3870 = vunpack.c.l.b16 %v3838
        %v3871 = vunpack.c.l.b16 %v3839
        %v3872 = vunpack.c.l.b16 %v3840
        %v3873 = vunpack.c.l.b16 %v3841
        %v3874 = vunpack.c.l.b16 %v3842
        %v3875 = vunpack.c.l.b16 %v3843
        %v3876 = vunpack.c.l.b16 %v3844
        %v3877 = vpack.c.b16 %v3862, %v3861
        %v3878 = vpack.c.b16 %v3864, %v3863
        %v3879 = vpack.c.b16 %v3866, %v3865
        %v3880 = vpack.c.b16 %v3868, %v3867
        %v3881 = vpack.c.b16 %v3870, %v3869
        %v3882 = vpack.c.b16 %v3872, %v3871
        %v3883 = vpack.c.b16 %v3874, %v3873
        %v3884 = vpack.c.b16 %v3876, %v3875
        %3893 = vmatpush.bf16.msra.mxu0 %v3884
        %3894 = vmatpush.bf16.msra.mxu0 %v3883
        %3895 = vmatpush.bf16.msra.mxu0 %v3882
        %3896 = vmatpush.bf16.msra.mxu0 %v3881
        %3897 = vmatpush.bf16.msra.mxu0 %v3880
        %3898 = vmatpush.bf16.msra.mxu0 %v3879
        %3899 = vmatpush.bf16.msra.mxu0 %v3878
        %3900 = vmatpush.bf16.msra.mxu0 %v3877
        %3901 = vmatmul.bf16.gmra.mxu0 %v3816
        %v3902 = vpop.f32.mrf.mxu0
        %v3903 = vadd.f32 0.0, %v3902
        %v3904 = vpop.f32.mrf.mxu0
        %v3905 = vadd.f32 0.0, %v3904
        %3906 = vmatmul.bf16.gmra.mxu0 %v3817
        %v3907 = vpop.f32.mrf.mxu0
        %v3908 = vadd.f32 0.0, %v3907
        %v3909 = vpop.f32.mrf.mxu0
        %v3910 = vadd.f32 0.0, %v3909
        %3911 = vmatmul.bf16.gmra.mxu0 %v3818
        %v3912 = vpop.f32.mrf.mxu0
        %v3913 = vadd.f32 0.0, %v3912
        %v3914 = vpop.f32.mrf.mxu0
        %v3915 = vadd.f32 0.0, %v3914
        %3916 = vmatmul.bf16.gmra.mxu0 %v3819
        %v3917 = vpop.f32.mrf.mxu0
        %v3918 = vadd.f32 0.0, %v3917
        %v3919 = vpop.f32.mrf.mxu0
        %v3920 = vadd.f32 0.0, %v3919
        %3921 = vmatmul.bf16.gmra.mxu0 %v3820
        %v3922 = vpop.f32.mrf.mxu0
        %v3923 = vadd.f32 0.0, %v3922
        %v3924 = vpop.f32.mrf.mxu0
        %v3925 = vadd.f32 0.0, %v3924
        %3926 = vmatmul.bf16.gmra.mxu0 %v3821
        %v3927 = vpop.f32.mrf.mxu0
        %v3928 = vadd.f32 0.0, %v3927
        %v3929 = vpop.f32.mrf.mxu0
        %v3930 = vadd.f32 0.0, %v3929
        %3931 = vmatmul.bf16.gmra.mxu0 %v3822
        %v3932 = vpop.f32.mrf.mxu0
        %v3933 = vadd.f32 0.0, %v3932
        %v3934 = vpop.f32.mrf.mxu0
        %v3935 = vadd.f32 0.0, %v3934
        %3936 = vmatmul.bf16.gmra.mxu0 %v3823
        %v3937 = vpop.f32.mrf.mxu0
        %v3938 = vadd.f32 0.0, %v3937
        %v3939 = vpop.f32.mrf.mxu0
        %v3940 = vadd.f32 0.0, %v3939
        %3941 = vdwg.mxu0
        %v3942 = vadd.f32 %v3783, %v3903
        %v3943 = vadd.f32 %v3784, %v3905
        %v3944 = vadd.f32 %v3785, %v3908
        %v3945 = vadd.f32 %v3786, %v3910
        %v3946 = vadd.f32 %v3787, %v3913
        %v3947 = vadd.f32 %v3788, %v3915
        %v3948 = vadd.f32 %v3789, %v3918
        %v3949 = vadd.f32 %v3790, %v3920
        %v3950 = vadd.f32 %v3791, %v3923
        %v3951 = vadd.f32 %v3792, %v3925
        %v3952 = vadd.f32 %v3793, %v3928
        %v3953 = vadd.f32 %v3794, %v3930
        %v3954 = vadd.f32 %v3795, %v3933
        %v3955 = vadd.f32 %v3796, %v3935
        %v3956 = vadd.f32 %v3797, %v3938
        %v3957 = vadd.f32 %v3798, %v3940
      $region85: #{crepe_forward.1} parent=79 // loop_footer
        %s3782 = sadd.s32 1, %s3778
      $region86: #{crepe_forward.1} parent=79 // loop_footer_branch
        %3777 = sbr.rel target = $region82
      $region87: #{crepe_forward.1} parent=79 // loop_exit
        _
      %v3958 = vld [vmem:[%s4] sm:$0x1]
      %v3959 = vld [vmem:[%s4 + $0x1] sm:$0x1]
      %v3960 = vld [vmem:[%s4 + $0x2] sm:$0x1]
      %v3961 = vperm.slane %v3958, 0
      %v3962 = vadd.f32 %v3783, %v3961
      %v3963 = vadd.f32 %v3784, %v3961
      %v3964 = vadd.f32 %v3785, %v3961
      %v3965 = vadd.f32 %v3786, %v3961
      %v3966 = vadd.f32 %v3787, %v3961
      %v3967 = vadd.f32 %v3788, %v3961
      %v3968 = vadd.f32 %v3789, %v3961
      %v3969 = vadd.f32 %v3790, %v3961
      %v3970 = vadd.f32 %v3791, %v3961
      %v3971 = vadd.f32 %v3792, %v3961
      %v3972 = vadd.f32 %v3793, %v3961
      %v3973 = vadd.f32 %v3794, %v3961
      %v3974 = vadd.f32 %v3795, %v3961
      %v3975 = vadd.f32 %v3796, %v3961
      %v3976 = vadd.f32 %v3797, %v3961
      %v3977 = vadd.f32 %v3798, %v3961
      %v3978 = vmax.f32 %v3962, 0.0
      %v3979 = vmax.f32 %v3963, 0.0
      %v3980 = vmax.f32 %v3964, 0.0
      %v3981 = vmax.f32 %v3965, 0.0
      %v3982 = vmax.f32 %v3966, 0.0
      %v3983 = vmax.f32 %v3967, 0.0
      %v3984 = vmax.f32 %v3968, 0.0
      %v3985 = vmax.f32 %v3969, 0.0
      %v3986 = vmax.f32 %v3970, 0.0
      %v3987 = vmax.f32 %v3971, 0.0
      %v3988 = vmax.f32 %v3972, 0.0
      %v3989 = vmax.f32 %v3973, 0.0
      %v3990 = vmax.f32 %v3974, 0.0
      %v3991 = vmax.f32 %v3975, 0.0
      %v3992 = vmax.f32 %v3976, 0.0
      %v3993 = vmax.f32 %v3977, 0.0
      %v3994 = vperm.slane %v3959, 0
      %v3995 = vmul.f32 %v3978, %v3994
      %v3996 = vmul.f32 %v3979, %v3994
      %v3997 = vmul.f32 %v3980, %v3994
      %v3998 = vmul.f32 %v3981, %v3994
      %v3999 = vmul.f32 %v3982, %v3994
      %v4000 = vmul.f32 %v3983, %v3994
      %v4001 = vmul.f32 %v3984, %v3994
      %v4002 = vmul.f32 %v3985, %v3994
      %v4003 = vmul.f32 %v3986, %v3994
      %v4004 = vmul.f32 %v3987, %v3994
      %v4005 = vmul.f32 %v3988, %v3994
      %v4006 = vmul.f32 %v3989, %v3994
      %v4007 = vmul.f32 %v3990, %v3994
      %v4008 = vmul.f32 %v3991, %v3994
      %v4009 = vmul.f32 %v3992, %v3994
      %v4010 = vmul.f32 %v3993, %v3994
      %v4011 = vperm.slane %v3960, 0
      %v4012 = vadd.f32 %v3995, %v4011
      %v4013 = vadd.f32 %v3996, %v4011
      %v4014 = vadd.f32 %v3997, %v4011
      %v4015 = vadd.f32 %v3998, %v4011
      %v4016 = vadd.f32 %v3999, %v4011
      %v4017 = vadd.f32 %v4000, %v4011
      %v4018 = vadd.f32 %v4001, %v4011
      %v4019 = vadd.f32 %v4002, %v4011
      %v4020 = vadd.f32 %v4003, %v4011
      %v4021 = vadd.f32 %v4004, %v4011
      %v4022 = vadd.f32 %v4005, %v4011
      %v4023 = vadd.f32 %v4006, %v4011
      %v4024 = vadd.f32 %v4007, %v4011
      %v4025 = vadd.f32 %v4008, %v4011
      %v4026 = vadd.f32 %v4009, %v4011
      %v4027 = vadd.f32 %v4010, %v4011
      %4028 = vst.msk [vmem:[#allocation7] sm:$0xff] %vm518, %v4012
      %4029 = vst.msk [vmem:[#allocation7 + $0x8] sm:$0xff] %vm518, %v4013
      %4030 = vst.msk [vmem:[#allocation7 + $0x10] sm:$0xff] %vm518, %v4014
      %4031 = vst.msk [vmem:[#allocation7 + $0x18] sm:$0xff] %vm518, %v4015
      %4032 = vst.msk [vmem:[#allocation7 + $0x20] sm:$0xff] %vm518, %v4016
      %4033 = vst.msk [vmem:[#allocation7 + $0x28] sm:$0xff] %vm518, %v4017
      %4034 = vst.msk [vmem:[#allocation7 + $0x30] sm:$0xff] %vm518, %v4018
      %4035 = vst.msk [vmem:[#allocation7 + $0x38] sm:$0xff] %vm518, %v4019
      %4036 = vst.msk [vmem:[#allocation7 + $0x40] sm:$0xff] %vm518, %v4020
      %4037 = vst.msk [vmem:[#allocation7 + $0x48] sm:$0xff] %vm518, %v4021
      %4038 = vst.msk [vmem:[#allocation7 + $0x50] sm:$0xff] %vm518, %v4022
      %4039 = vst.msk [vmem:[#allocation7 + $0x58] sm:$0xff] %vm518, %v4023
      %4040 = vst.msk [vmem:[#allocation7 + $0x60] sm:$0xff] %vm518, %v4024
      %4041 = vst.msk [vmem:[#allocation7 + $0x68] sm:$0xff] %vm518, %v4025
      %4042 = vst.msk [vmem:[#allocation7 + $0x70] sm:$0xff] %vm518, %v4026
      %4043 = vst.msk [vmem:[#allocation7 + $0x78] sm:$0xff] %vm518, %v4027
      loop: start=0, step=1, limit=64
      $region88: #{crepe_forward.1} parent=79 // loop_pre_header
        _
      $region89: #{crepe_forward.1} parent=79 // loop_header
        %s4045 = sphi 0, %s4049
        %p4046 = scmp.ge.s32.totalorder %s4045, 64
      $region90: #{crepe_forward.1} parent=79 // loop_header_branch
        %4048 = sbr.rel (%p4046) target = $region94
      $region91: #{crepe_forward.1} parent=79 // loop_body
        %s4050 = smul.u32 %s4045, 2
        %s4051 = scalar_lea.vmem [#allocation7], %s4050
        %v4052 = vld [vmem:[%s4051] sm:$0x1]
        %s4053 = sadd.s32 %s4050, 1
        %s4054 = scalar_lea.vmem [#allocation7], %s4053
        %v4055 = vld [vmem:[%s4054] sm:$0x1]
        %v4056 = vmax.f32 %v4052, %v4055
        %s4057 = sadd.s32 %s4045, 31
        %s4058 = scalar_lea.vmem [#allocation3], %s4057
        %vm4059 = vcmask 122880
        %4060 = vst.msk [vmem:[%s4058] sm:$0x1] %vm4059, %v4056
      $region92: #{crepe_forward.1} parent=79 // loop_footer
        %s4049 = sadd.s32 1, %s4045
      $region93: #{crepe_forward.1} parent=79 // loop_footer_branch
        %4044 = sbr.rel target = $region89
      $region94: #{crepe_forward.1} parent=79 // loop_exit
        _
      loop: start=0, step=1, limit=64
      $region95: #{crepe_forward.1} parent=79 // loop_pre_header
        _
      $region96: #{crepe_forward.1} parent=79 // loop_header
        %s4062 = sphi 0, %s4066
        %p4063 = scmp.ge.s32.totalorder %s4062, 64
        %v4067 = vphi 0.0, %v4142
        %v4068 = vphi 0.0, %v4143
        %v4069 = vphi 0.0, %v4144
        %v4070 = vphi 0.0, %v4145
        %v4071 = vphi 0.0, %v4146
        %v4072 = vphi 0.0, %v4147
        %v4073 = vphi 0.0, %v4148
        %v4074 = vphi 0.0, %v4149
      $region97: #{crepe_forward.1} parent=79 // loop_header_branch
        %4065 = sbr.rel (%p4063) target = $region101
      $region98: #{crepe_forward.1} parent=79 // loop_body
        %s4075 = scalar_lea.vmem [#allocation3], %s4062
        %v4076 = vld [vmem:[%s4075] sm:$0xff]
        %v4077 = vld [vmem:[%s4075 + $0x8] sm:$0xff]
        %v4078 = vld [vmem:[%s4075 + $0x10] sm:$0xff]
        %v4079 = vld [vmem:[%s4075 + $0x18] sm:$0xff]
        %v4080 = vld [vmem:[%s4075 + $0x20] sm:$0xff]
        %v4081 = vld [vmem:[%s4075 + $0x28] sm:$0xff]
        %v4082 = vld [vmem:[%s4075 + $0x30] sm:$0xff]
        %v4083 = vld [vmem:[%s4075 + $0x38] sm:$0xff]
        %v4084 = vpack.c.bf16 %v4077, %v4076
        %v4085 = vpack.c.bf16 %v4079, %v4078
        %v4086 = vpack.c.bf16 %v4081, %v4080
        %v4087 = vpack.c.bf16 %v4083, %v4082
        %s4088 = smul.u32 %s4062, 16
        %s4089 = sshra.s32 %s4088, 3
        %s4090 = sand.u32 %s4088, 7
        %s4091 = smul.addr %s4089, 4
        %s4092 = scalar_lea.vmem %s5, %s4091
        %v4093 = vld [vmem:[%s4092] sm:$0xf]
        %v4094 = vld [vmem:[%s4092 + $0x4] sm:$0xf]
        %v4097 = vunpack.c.l.b16 %v4093
        %v4098 = vunpack.c.l.b16 %v4094
        %v4099 = vpack.c.b16 %v4098, %v4097
        %v4102 = vsel %vm518, %v4084, 0
        %v4105 = vsel %vm518, %v4085, 0
        %v4108 = vsel %vm518, %v4086, 0
        %v4111 = vsel %vm518, %v4087, 0
        %4113 = vmatpush.bf16.msra.mxu0 0
        %4114 = vmatpush.bf16.msra.mxu0 0
        %4115 = vmatpush.bf16.msra.mxu0 0
        %4116 = vmatpush.bf16.msra.mxu0 0
        %4117 = vmatpush.bf16.msra.mxu0 0
        %4118 = vmatpush.bf16.msra.mxu0 0
        %4119 = vmatpush.bf16.msra.mxu0 0
        %4120 = vmatpush.bf16.msra.mxu0 %v4099
        %4121 = vmatmul.bf16.gmra.mxu0 %v4102
        %v4122 = vpop.f32.mrf.mxu0
        %v4123 = vadd.f32 0.0, %v4122
        %v4124 = vpop.f32.mrf.mxu0
        %v4125 = vadd.f32 0.0, %v4124
        %4126 = vmatmul.bf16.gmra.mxu0 %v4105
        %v4127 = vpop.f32.mrf.mxu0
        %v4128 = vadd.f32 0.0, %v4127
        %v4129 = vpop.f32.mrf.mxu0
        %v4130 = vadd.f32 0.0, %v4129
        %4131 = vmatmul.bf16.gmra.mxu0 %v4108
        %v4132 = vpop.f32.mrf.mxu0
        %v4133 = vadd.f32 0.0, %v4132
        %v4134 = vpop.f32.mrf.mxu0
        %v4135 = vadd.f32 0.0, %v4134
        %4136 = vmatmul.bf16.gmra.mxu0 %v4111
        %v4137 = vpop.f32.mrf.mxu0
        %v4138 = vadd.f32 0.0, %v4137
        %v4139 = vpop.f32.mrf.mxu0
        %v4140 = vadd.f32 0.0, %v4139
        %4141 = vdwg.mxu0
        %v4142 = vadd.f32 %v4067, %v4123
        %v4143 = vadd.f32 %v4068, %v4125
        %v4144 = vadd.f32 %v4069, %v4128
        %v4145 = vadd.f32 %v4070, %v4130
        %v4146 = vadd.f32 %v4071, %v4133
        %v4147 = vadd.f32 %v4072, %v4135
        %v4148 = vadd.f32 %v4073, %v4138
        %v4149 = vadd.f32 %v4074, %v4140
      $region99: #{crepe_forward.1} parent=79 // loop_footer
        %s4066 = sadd.s32 1, %s4062
      $region100: #{crepe_forward.1} parent=79 // loop_footer_branch
        %4061 = sbr.rel target = $region96
      $region101: #{crepe_forward.1} parent=79 // loop_exit
        _
      %v4150 = vld [vmem:[%s6] sm:$0x1]
      %v4151 = vld [vmem:[%s6 + $0x1] sm:$0x1]
      %v4152 = vld [vmem:[%s6 + $0x2] sm:$0x1]
      %v4153 = vperm.slane %v4150, 0
      %v4154 = vadd.f32 %v4067, %v4153
      %v4155 = vadd.f32 %v4068, %v4153
      %v4156 = vadd.f32 %v4069, %v4153
      %v4157 = vadd.f32 %v4070, %v4153
      %v4158 = vadd.f32 %v4071, %v4153
      %v4159 = vadd.f32 %v4072, %v4153
      %v4160 = vadd.f32 %v4073, %v4153
      %v4161 = vadd.f32 %v4074, %v4153
      %v4162 = vmax.f32 %v4154, 0.0
      %v4163 = vmax.f32 %v4155, 0.0
      %v4164 = vmax.f32 %v4156, 0.0
      %v4165 = vmax.f32 %v4157, 0.0
      %v4166 = vmax.f32 %v4158, 0.0
      %v4167 = vmax.f32 %v4159, 0.0
      %v4168 = vmax.f32 %v4160, 0.0
      %v4169 = vmax.f32 %v4161, 0.0
      %v4170 = vperm.slane %v4151, 0
      %v4171 = vmul.f32 %v4162, %v4170
      %v4172 = vmul.f32 %v4163, %v4170
      %v4173 = vmul.f32 %v4164, %v4170
      %v4174 = vmul.f32 %v4165, %v4170
      %v4175 = vmul.f32 %v4166, %v4170
      %v4176 = vmul.f32 %v4167, %v4170
      %v4177 = vmul.f32 %v4168, %v4170
      %v4178 = vmul.f32 %v4169, %v4170
      %v4179 = vperm.slane %v4152, 0
      %v4180 = vadd.f32 %v4171, %v4179
      %v4181 = vadd.f32 %v4172, %v4179
      %v4182 = vadd.f32 %v4173, %v4179
      %v4183 = vadd.f32 %v4174, %v4179
      %v4184 = vadd.f32 %v4175, %v4179
      %v4185 = vadd.f32 %v4176, %v4179
      %v4186 = vadd.f32 %v4177, %v4179
      %v4187 = vadd.f32 %v4178, %v4179
      %4188 = vst.msk [vmem:[#allocation7] sm:$0xff] %vm518, %v4180
      %4189 = vst.msk [vmem:[#allocation7 + $0x8] sm:$0xff] %vm518, %v4181
      %4190 = vst.msk [vmem:[#allocation7 + $0x10] sm:$0xff] %vm518, %v4182
      %4191 = vst.msk [vmem:[#allocation7 + $0x18] sm:$0xff] %vm518, %v4183
      %4192 = vst.msk [vmem:[#allocation7 + $0x20] sm:$0xff] %vm518, %v4184
      %4193 = vst.msk [vmem:[#allocation7 + $0x28] sm:$0xff] %vm518, %v4185
      %4194 = vst.msk [vmem:[#allocation7 + $0x30] sm:$0xff] %vm518, %v4186
      %4195 = vst.msk [vmem:[#allocation7 + $0x38] sm:$0xff] %vm518, %v4187
      loop: start=0, step=1, limit=32
      $region102: #{crepe_forward.1} parent=79 // loop_pre_header
        _
      $region103: #{crepe_forward.1} parent=79 // loop_header
        %s4197 = sphi 0, %s4201
        %p4198 = scmp.ge.s32.totalorder %s4197, 32
      $region104: #{crepe_forward.1} parent=79 // loop_header_branch
        %4200 = sbr.rel (%p4198) target = $region108
      $region105: #{crepe_forward.1} parent=79 // loop_body
        %s4202 = smul.u32 %s4197, 2
        %s4203 = scalar_lea.vmem [#allocation7], %s4202
        %v4204 = vld [vmem:[%s4203] sm:$0x1]
        %s4205 = sadd.s32 %s4202, 1
        %s4206 = scalar_lea.vmem [#allocation7], %s4205
        %v4207 = vld [vmem:[%s4206] sm:$0x1]
        %v4208 = vmax.f32 %v4204, %v4207
        %s4209 = sadd.s32 %s4197, 31
        %s4210 = scalar_lea.vmem [#allocation4], %s4209
        %vm4211 = vcmask 122880
        %4212 = vst.msk [vmem:[%s4210] sm:$0x1] %vm4211, %v4208
      $region106: #{crepe_forward.1} parent=79 // loop_footer
        %s4201 = sadd.s32 1, %s4197
      $region107: #{crepe_forward.1} parent=79 // loop_footer_branch
        %4196 = sbr.rel target = $region103
      $region108: #{crepe_forward.1} parent=79 // loop_exit
        _
      loop: start=0, step=1, limit=64
      $region109: #{crepe_forward.1} parent=79 // loop_pre_header
        _
      $region110: #{crepe_forward.1} parent=79 // loop_header
        %s4214 = sphi 0, %s4218
        %p4215 = scmp.ge.s32.totalorder %s4214, 64
        %v4219 = vphi 0.0, %v4268
        %v4220 = vphi 0.0, %v4269
        %v4221 = vphi 0.0, %v4270
        %v4222 = vphi 0.0, %v4271
      $region111: #{crepe_forward.1} parent=79 // loop_header_branch
        %4217 = sbr.rel (%p4215) target = $region115
      $region112: #{crepe_forward.1} parent=79 // loop_body
        %s4223 = scalar_lea.vmem [#allocation4], %s4214
        %v4224 = vld [vmem:[%s4223] sm:$0xff]
        %v4225 = vld [vmem:[%s4223 + $0x8] sm:$0xff]
        %v4226 = vld [vmem:[%s4223 + $0x10] sm:$0xff]
        %v4227 = vld [vmem:[%s4223 + $0x18] sm:$0xff]
        %v4228 = vpack.c.bf16 %v4225, %v4224
        %v4229 = vpack.c.bf16 %v4227, %v4226
        %s4230 = smul.u32 %s4214, 16
        %s4231 = sshra.s32 %s4230, 3
        %s4232 = sand.u32 %s4230, 7
        %s4233 = smul.addr %s4231, 4
        %s4234 = scalar_lea.vmem %s7, %s4233
        %v4235 = vld [vmem:[%s4234] sm:$0xf]
        %v4236 = vld [vmem:[%s4234 + $0x4] sm:$0xf]
        %v4239 = vunpack.c.l.b16 %v4235
        %v4240 = vunpack.c.l.b16 %v4236
        %v4241 = vpack.c.b16 %v4240, %v4239
        %v4244 = vsel %vm518, %v4228, 0
        %v4247 = vsel %vm518, %v4229, 0
        %4249 = vmatpush.bf16.msra.mxu0 0
        %4250 = vmatpush.bf16.msra.mxu0 0
        %4251 = vmatpush.bf16.msra.mxu0 0
        %4252 = vmatpush.bf16.msra.mxu0 0
        %4253 = vmatpush.bf16.msra.mxu0 0
        %4254 = vmatpush.bf16.msra.mxu0 0
        %4255 = vmatpush.bf16.msra.mxu0 0
        %4256 = vmatpush.bf16.msra.mxu0 %v4241
        %4257 = vmatmul.bf16.gmra.mxu0 %v4244
        %v4258 = vpop.f32.mrf.mxu0
        %v4259 = vadd.f32 0.0, %v4258
        %v4260 = vpop.f32.mrf.mxu0
        %v4261 = vadd.f32 0.0, %v4260
        %4262 = vmatmul.bf16.gmra.mxu0 %v4247
        %v4263 = vpop.f32.mrf.mxu0
        %v4264 = vadd.f32 0.0, %v4263
        %v4265 = vpop.f32.mrf.mxu0
        %v4266 = vadd.f32 0.0, %v4265
        %4267 = vdwg.mxu0
        %v4268 = vadd.f32 %v4219, %v4259
        %v4269 = vadd.f32 %v4220, %v4261
        %v4270 = vadd.f32 %v4221, %v4264
        %v4271 = vadd.f32 %v4222, %v4266
      $region113: #{crepe_forward.1} parent=79 // loop_footer
        %s4218 = sadd.s32 1, %s4214
      $region114: #{crepe_forward.1} parent=79 // loop_footer_branch
        %4213 = sbr.rel target = $region110
      $region115: #{crepe_forward.1} parent=79 // loop_exit
        _
      %v4272 = vld [vmem:[%s8] sm:$0x1]
      %v4273 = vld [vmem:[%s8 + $0x1] sm:$0x1]
      %v4274 = vld [vmem:[%s8 + $0x2] sm:$0x1]
      %v4275 = vperm.slane %v4272, 0
      %v4276 = vadd.f32 %v4219, %v4275
      %v4277 = vadd.f32 %v4220, %v4275
      %v4278 = vadd.f32 %v4221, %v4275
      %v4279 = vadd.f32 %v4222, %v4275
      %v4280 = vmax.f32 %v4276, 0.0
      %v4281 = vmax.f32 %v4277, 0.0
      %v4282 = vmax.f32 %v4278, 0.0
      %v4283 = vmax.f32 %v4279, 0.0
      %v4284 = vperm.slane %v4273, 0
      %v4285 = vmul.f32 %v4280, %v4284
      %v4286 = vmul.f32 %v4281, %v4284
      %v4287 = vmul.f32 %v4282, %v4284
      %v4288 = vmul.f32 %v4283, %v4284
      %v4289 = vperm.slane %v4274, 0
      %v4290 = vadd.f32 %v4285, %v4289
      %v4291 = vadd.f32 %v4286, %v4289
      %v4292 = vadd.f32 %v4287, %v4289
      %v4293 = vadd.f32 %v4288, %v4289
      %4294 = vst.msk [vmem:[#allocation7] sm:$0xff] %vm518, %v4290
      %4295 = vst.msk [vmem:[#allocation7 + $0x8] sm:$0xff] %vm518, %v4291
      %4296 = vst.msk [vmem:[#allocation7 + $0x10] sm:$0xff] %vm518, %v4292
      %4297 = vst.msk [vmem:[#allocation7 + $0x18] sm:$0xff] %vm518, %v4293
      loop: start=0, step=1, limit=16
      $region116: #{crepe_forward.1} parent=79 // loop_pre_header
        _
      $region117: #{crepe_forward.1} parent=79 // loop_header
        %s4299 = sphi 0, %s4303
        %p4300 = scmp.ge.s32.totalorder %s4299, 16
      $region118: #{crepe_forward.1} parent=79 // loop_header_branch
        %4302 = sbr.rel (%p4300) target = $region122
      $region119: #{crepe_forward.1} parent=79 // loop_body
        %s4304 = smul.u32 %s4299, 2
        %s4305 = scalar_lea.vmem [#allocation7], %s4304
        %v4306 = vld [vmem:[%s4305] sm:$0x1]
        %s4307 = sadd.s32 %s4304, 1
        %s4308 = scalar_lea.vmem [#allocation7], %s4307
        %v4309 = vld [vmem:[%s4308] sm:$0x1]
        %v4310 = vmax.f32 %v4306, %v4309
        %s4311 = sadd.s32 %s4299, 31
        %s4312 = scalar_lea.vmem [#allocation5], %s4311
        %vm4313 = vcmask 122880
        %4314 = vst.msk [vmem:[%s4312] sm:$0x1] %vm4313, %v4310
      $region120: #{crepe_forward.1} parent=79 // loop_footer
        %s4303 = sadd.s32 1, %s4299
      $region121: #{crepe_forward.1} parent=79 // loop_footer_branch
        %4298 = sbr.rel target = $region117
      $region122: #{crepe_forward.1} parent=79 // loop_exit
        _
      loop: start=0, step=1, limit=64
      $region123: #{crepe_forward.1} parent=79 // loop_pre_header
        _
      $region124: #{crepe_forward.1} parent=79 // loop_header
        %s4316 = sphi 0, %s4320
        %p4317 = scmp.ge.s32.totalorder %s4316, 64
        %v4321 = vphi 0.0, %v4357
        %v4322 = vphi 0.0, %v4358
      $region125: #{crepe_forward.1} parent=79 // loop_header_branch
        %4319 = sbr.rel (%p4317) target = $region129
      $region126: #{crepe_forward.1} parent=79 // loop_body
        %s4323 = scalar_lea.vmem [#allocation5], %s4316
        %v4324 = vld [vmem:[%s4323] sm:$0xff]
        %v4325 = vld [vmem:[%s4323 + $0x8] sm:$0xff]
        %v4326 = vpack.c.bf16 %v4325, %v4324
        %s4327 = smul.u32 %s4316, 16
        %s4328 = sshra.s32 %s4327, 3
        %s4329 = sand.u32 %s4327, 7
        %s4330 = smul.addr %s4328, 4
        %s4331 = scalar_lea.vmem %s9, %s4330
        %v4332 = vld [vmem:[%s4331] sm:$0xf]
        %v4333 = vld [vmem:[%s4331 + $0x4] sm:$0xf]
        %v4336 = vunpack.c.l.b16 %v4332
        %v4337 = vunpack.c.l.b16 %v4333
        %v4338 = vpack.c.b16 %v4337, %v4336
        %v4341 = vsel %vm518, %v4326, 0
        %4343 = vmatpush.bf16.msra.mxu0 0
        %4344 = vmatpush.bf16.msra.mxu0 0
        %4345 = vmatpush.bf16.msra.mxu0 0
        %4346 = vmatpush.bf16.msra.mxu0 0
        %4347 = vmatpush.bf16.msra.mxu0 0
        %4348 = vmatpush.bf16.msra.mxu0 0
        %4349 = vmatpush.bf16.msra.mxu0 0
        %4350 = vmatpush.bf16.msra.mxu0 %v4338
        %4351 = vmatmul.bf16.gmra.mxu0 %v4341
        %v4352 = vpop.f32.mrf.mxu0
        %v4353 = vadd.f32 0.0, %v4352
        %v4354 = vpop.f32.mrf.mxu0
        %v4355 = vadd.f32 0.0, %v4354
        %4356 = vdwg.mxu0
        %v4357 = vadd.f32 %v4321, %v4353
        %v4358 = vadd.f32 %v4322, %v4355
      $region127: #{crepe_forward.1} parent=79 // loop_footer
        %s4320 = sadd.s32 1, %s4316
      $region128: #{crepe_forward.1} parent=79 // loop_footer_branch
        %4315 = sbr.rel target = $region124
      $region129: #{crepe_forward.1} parent=79 // loop_exit
        _
      %v4359 = vld [vmem:[%s10] sm:$0x1]
      %v4360 = vld [vmem:[%s10 + $0x1] sm:$0x1]
      %v4361 = vld [vmem:[%s10 + $0x2] sm:$0x1]
      %v4362 = vperm.slane %v4359, 0
      %v4363 = vadd.f32 %v4321, %v4362
      %v4364 = vadd.f32 %v4322, %v4362
      %v4365 = vmax.f32 %v4363, 0.0
      %v4366 = vmax.f32 %v4364, 0.0
      %v4367 = vperm.slane %v4360, 0
      %v4368 = vmul.f32 %v4365, %v4367
      %v4369 = vmul.f32 %v4366, %v4367
      %v4370 = vperm.slane %v4361, 0
      %v4371 = vadd.f32 %v4368, %v4370
      %v4372 = vadd.f32 %v4369, %v4370
      %4373 = vst.msk [vmem:[#allocation7] sm:$0xff] %vm557, %v4371
      %4374 = vst.msk [vmem:[#allocation7 + $0x8] sm:$0xff] %vm557, %v4372
      loop: start=0, step=1, limit=8
      $region130: #{crepe_forward.1} parent=79 // loop_pre_header
        _
      $region131: #{crepe_forward.1} parent=79 // loop_header
        %s4376 = sphi 0, %s4380
        %p4377 = scmp.ge.s32.totalorder %s4376, 8
      $region132: #{crepe_forward.1} parent=79 // loop_header_branch
        %4379 = sbr.rel (%p4377) target = $region136
      $region133: #{crepe_forward.1} parent=79 // loop_body
        %s4381 = smul.u32 %s4376, 2
        %s4382 = scalar_lea.vmem [#allocation7], %s4381
        %v4383 = vld [vmem:[%s4382] sm:$0x1]
        %s4384 = sadd.s32 %s4381, 1
        %s4385 = scalar_lea.vmem [#allocation7], %s4384
        %v4386 = vld [vmem:[%s4385] sm:$0x1]
        %v4387 = vmax.f32 %v4383, %v4386
        %s4388 = sadd.s32 %s4376, 31
        %s4389 = scalar_lea.vmem [#allocation6], %s4388
        %vm4390 = vcmask 253952
        %4391 = vst.msk [vmem:[%s4389] sm:$0x1] %vm4390, %v4387
      $region134: #{crepe_forward.1} parent=79 // loop_footer
        %s4380 = sadd.s32 1, %s4376
      $region135: #{crepe_forward.1} parent=79 // loop_footer_branch
        %4375 = sbr.rel target = $region131
      $region136: #{crepe_forward.1} parent=79 // loop_exit
        _
      loop: start=0, step=1, limit=64
      $region137: #{crepe_forward.1} parent=79 // loop_pre_header
        _
      $region138: #{crepe_forward.1} parent=79 // loop_header
        %s4393 = sphi 0, %s4397
        %p4394 = scmp.ge.s32.totalorder %s4393, 64
        %v4398 = vphi 0.0, %v4439
      $region139: #{crepe_forward.1} parent=79 // loop_header_branch
        %4396 = sbr.rel (%p4394) target = $region143
      $region140: #{crepe_forward.1} parent=79 // loop_body
        %s4399 = scalar_lea.vmem [#allocation6], %s4393
        %v4400 = vld [vmem:[%s4399] sm:$0xff]
        %v4401 = vpack.c.bf16 %v4400, %v4400
        %s4402 = smul.u32 %s4393, 32
        %s4403 = sshra.s32 %s4402, 3
        %s4404 = sand.u32 %s4402, 7
        %s4405 = smul.addr %s4403, 4
        %s4406 = scalar_lea.vmem %s11, %s4405
        %v4407 = vld [vmem:[%s4406] sm:$0xf]
        %v4408 = vld [vmem:[%s4406 + $0x4] sm:$0xf]
        %v4409 = vld [vmem:[%s4406 + $0x8] sm:$0xf]
        %v4410 = vld [vmem:[%s4406 + $0xc] sm:$0xf]
        %v4415 = vunpack.c.l.b16 %v4407
        %v4416 = vunpack.c.l.b16 %v4408
        %v4417 = vunpack.c.l.b16 %v4409
        %v4418 = vunpack.c.l.b16 %v4410
        %v4419 = vpack.c.b16 %v4416, %v4415
        %v4420 = vpack.c.b16 %v4418, %v4417
        %v4424 = vsel %vm557, %v4401, 0
        %4426 = vmatpush.bf16.msra.mxu0 0
        %4427 = vmatpush.bf16.msra.mxu0 0
        %4428 = vmatpush.bf16.msra.mxu0 0
        %4429 = vmatpush.bf16.msra.mxu0 0
        %4430 = vmatpush.bf16.msra.mxu0 0
        %4431 = vmatpush.bf16.msra.mxu0 0
        %4432 = vmatpush.bf16.msra.mxu0 %v4420
        %4433 = vmatpush.bf16.msra.mxu0 %v4419
        %4434 = vmatmul.bf16.gmra.mxu0 %v4424
        %v4435 = vpop.f32.mrf.mxu0
        %v4436 = vadd.f32 0.0, %v4435
        %v4437 = vpop.f32.mrf.mxu0
        %4438 = vdwg.mxu0
        %v4439 = vadd.f32 %v4398, %v4436
      $region141: #{crepe_forward.1} parent=79 // loop_footer
        %s4397 = sadd.s32 1, %s4393
      $region142: #{crepe_forward.1} parent=79 // loop_footer_branch
        %4392 = sbr.rel target = $region138
      $region143: #{crepe_forward.1} parent=79 // loop_exit
        _
      %v4440 = vld [vmem:[%s12] sm:$0x1]
      %v4441 = vld [vmem:[%s12 + $0x1] sm:$0x1]
      %v4442 = vld [vmem:[%s12 + $0x2] sm:$0x1]
      %v4443 = vperm.slane %v4440, 0
      %v4444 = vadd.f32 %v4398, %v4443
      %v4445 = vmax.f32 %v4444, 0.0
      %v4446 = vperm.slane %v4441, 0
      %v4447 = vmul.f32 %v4445, %v4446
      %v4448 = vperm.slane %v4442, 0
      %v4449 = vadd.f32 %v4447, %v4448
      %v4451 = vrot.slane %v4449, 1
      %v4453 = vmax.f32 %v4449, %v4451
      %v4455 = vrot.slane %v4453, 2
      %4456 = vrot.lane.b32.xlu0 %v4455, 64
      %v4457 = vpop.permute.xlu0 %4456
      %v4459 = vrot.slane %v4453, 4
      %v4461 = vrot.slane %v4453, 6
      %4462 = vrot.lane.b32.xlu0 %v4461, 64
      %v4463 = vpop.permute.xlu0 %4462
      %v4465 = vsel %vm2311, %v4453, %v4457
      %v4466 = vsel %vm2311, %v4459, %v4463
      %v4467 = vpack.c.bf16 %v4465, %v4465
      %v4468 = vpack.c.bf16 %v4466, %v4466
      %v4469 = vld [vmem:[%s13] sm:$0xff]
      %v4470 = vld [vmem:[%s13 + $0x8] sm:$0xf]
      %v4471 = vld [vmem:[%s13 + $0xc] sm:$0xff]
      %v4472 = vld [vmem:[%s13 + $0x14] sm:$0xf]
      %v4473 = vld [vmem:[%s13 + $0x18] sm:$0xff]
      %v4474 = vld [vmem:[%s13 + $0x20] sm:$0xf]
      %v4475 = vld [vmem:[%s13 + $0x24] sm:$0xff]
      %v4476 = vld [vmem:[%s13 + $0x2c] sm:$0xf]
      %v4477 = vld [vmem:[%s13 + $0x30] sm:$0xff]
      %v4478 = vld [vmem:[%s13 + $0x38] sm:$0xf]
      %v4479 = vld [vmem:[%s13 + $0x3c] sm:$0xff]
      %v4480 = vld [vmem:[%s13 + $0x44] sm:$0xf]
      %v4481 = vld [vmem:[%s13 + $0x48] sm:$0xff]
      %v4482 = vld [vmem:[%s13 + $0x50] sm:$0xf]
      %v4483 = vld [vmem:[%s13 + $0x54] sm:$0xff]
      %v4484 = vld [vmem:[%s13 + $0x5c] sm:$0xf]
      %v4485 = vld [vmem:[%s13 + $0x60] sm:$0xff]
      %v4486 = vld [vmem:[%s13 + $0x68] sm:$0xf]
      %v4487 = vld [vmem:[%s13 + $0x6c] sm:$0xff]
      %v4488 = vld [vmem:[%s13 + $0x74] sm:$0xf]
      %v4489 = vld [vmem:[%s13 + $0x78] sm:$0xff]
      %v4490 = vld [vmem:[%s13 + $0x80] sm:$0xf]
      %v4491 = vld [vmem:[%s13 + $0x84] sm:$0xff]
      %v4492 = vld [vmem:[%s13 + $0x8c] sm:$0xf]
      %v4493 = vld [vmem:[%s13 + $0x90] sm:$0xff]
      %v4494 = vld [vmem:[%s13 + $0x98] sm:$0xf]
      %v4495 = vld [vmem:[%s13 + $0x9c] sm:$0xff]
      %v4496 = vld [vmem:[%s13 + $0xa4] sm:$0xf]
      %v4497 = vld [vmem:[%s13 + $0xa8] sm:$0xff]
      %v4498 = vld [vmem:[%s13 + $0xb0] sm:$0xf]
      %v4499 = vld [vmem:[%s13 + $0xb4] sm:$0xff]
      %v4500 = vld [vmem:[%s13 + $0xbc] sm:$0xf]
      %v4501 = vld [vmem:[%s13 + $0xc0] sm:$0xff]
      %v4502 = vld [vmem:[%s13 + $0xc8] sm:$0xf]
      %v4503 = vld [vmem:[%s13 + $0xcc] sm:$0xff]
      %v4504 = vld [vmem:[%s13 + $0xd4] sm:$0xf]
      %v4505 = vld [vmem:[%s13 + $0xd8] sm:$0xff]
      %v4506 = vld [vmem:[%s13 + $0xe0] sm:$0xf]
      %v4507 = vld [vmem:[%s13 + $0xe4] sm:$0xff]
      %v4508 = vld [vmem:[%s13 + $0xec] sm:$0xf]
      %v4509 = vld [vmem:[%s13 + $0xf0] sm:$0xff]
      %v4510 = vld [vmem:[%s13 + $0xf8] sm:$0xf]
      %v4511 = vld [vmem:[%s13 + $0xfc] sm:$0xff]
      %v4512 = vld [vmem:[%s13 + $0x104] sm:$0xf]
      %v4513 = vld [vmem:[%s13 + $0x108] sm:$0xff]
      %v4514 = vld [vmem:[%s13 + $0x110] sm:$0xf]
      %v4515 = vld [vmem:[%s13 + $0x114] sm:$0xff]
      %v4516 = vld [vmem:[%s13 + $0x11c] sm:$0xf]
      %v4517 = vld [vmem:[%s13 + $0x120] sm:$0xff]
      %v4518 = vld [vmem:[%s13 + $0x128] sm:$0xf]
      %v4519 = vld [vmem:[%s13 + $0x12c] sm:$0xff]
      %v4520 = vld [vmem:[%s13 + $0x134] sm:$0xf]
      %v4521 = vld [vmem:[%s13 + $0x138] sm:$0xff]
      %v4522 = vld [vmem:[%s13 + $0x140] sm:$0xf]
      %v4523 = vld [vmem:[%s13 + $0x144] sm:$0xff]
      %v4524 = vld [vmem:[%s13 + $0x14c] sm:$0xf]
      %v4525 = vld [vmem:[%s13 + $0x150] sm:$0xff]
      %v4526 = vld [vmem:[%s13 + $0x158] sm:$0xf]
      %v4527 = vld [vmem:[%s13 + $0x15c] sm:$0xff]
      %v4528 = vld [vmem:[%s13 + $0x164] sm:$0xf]
      %v4529 = vld [vmem:[%s13 + $0x168] sm:$0xff]
      %v4530 = vld [vmem:[%s13 + $0x170] sm:$0xf]
      %v4531 = vld [vmem:[%s13 + $0x174] sm:$0xff]
      %v4532 = vld [vmem:[%s13 + $0x17c] sm:$0xf]
      %v4533 = vld [vmem:[%s14] sm:$0x7]
      %v4598 = vunpack.c.l.b16 %v4469
      %v4599 = vunpack.c.h.b16 %v4469
      %v4600 = vunpack.c.l.b16 %v4470
      %v4601 = vunpack.c.l.b16 %v4471
      %v4602 = vunpack.c.h.b16 %v4471
      %v4603 = vunpack.c.l.b16 %v4472
      %v4604 = vunpack.c.l.b16 %v4473
      %v4605 = vunpack.c.h.b16 %v4473
      %v4606 = vunpack.c.l.b16 %v4474
      %v4607 = vunpack.c.l.b16 %v4475
      %v4608 = vunpack.c.h.b16 %v4475
      %v4609 = vunpack.c.l.b16 %v4476
      %v4610 = vunpack.c.l.b16 %v4477
      %v4611 = vunpack.c.h.b16 %v4477
      %v4612 = vunpack.c.l.b16 %v4478
      %v4613 = vunpack.c.l.b16 %v4479
      %v4614 = vunpack.c.h.b16 %v4479
      %v4615 = vunpack.c.l.b16 %v4480
      %v4616 = vunpack.c.l.b16 %v4481
      %v4617 = vunpack.c.h.b16 %v4481
      %v4618 = vunpack.c.l.b16 %v4482
      %v4619 = vunpack.c.l.b16 %v4483
      %v4620 = vunpack.c.h.b16 %v4483
      %v4621 = vunpack.c.l.b16 %v4484
      %v4622 = vunpack.c.l.b16 %v4485
      %v4623 = vunpack.c.h.b16 %v4485
      %v4624 = vunpack.c.l.b16 %v4486
      %v4625 = vunpack.c.l.b16 %v4487
      %v4626 = vunpack.c.h.b16 %v4487
      %v4627 = vunpack.c.l.b16 %v4488
      %v4628 = vunpack.c.l.b16 %v4489
      %v4629 = vunpack.c.h.b16 %v4489
      %v4630 = vunpack.c.l.b16 %v4490
      %v4631 = vunpack.c.l.b16 %v4491
      %v4632 = vunpack.c.h.b16 %v4491
      %v4633 = vunpack.c.l.b16 %v4492
      %v4634 = vunpack.c.l.b16 %v4493
      %v4635 = vunpack.c.h.b16 %v4493
      %v4636 = vunpack.c.l.b16 %v4494
      %v4637 = vunpack.c.l.b16 %v4495
      %v4638 = vunpack.c.h.b16 %v4495
      %v4639 = vunpack.c.l.b16 %v4496
      %v4640 = vunpack.c.l.b16 %v4497
      %v4641 = vunpack.c.h.b16 %v4497
      %v4642 = vunpack.c.l.b16 %v4498
      %v4643 = vunpack.c.l.b16 %v4499
      %v4644 = vunpack.c.h.b16 %v4499
      %v4645 = vunpack.c.l.b16 %v4500
      %v4646 = vunpack.c.l.b16 %v4501
      %v4647 = vunpack.c.h.b16 %v4501
      %v4648 = vunpack.c.l.b16 %v4502
      %v4649 = vunpack.c.l.b16 %v4503
      %v4650 = vunpack.c.h.b16 %v4503
      %v4651 = vunpack.c.l.b16 %v4504
      %v4652 = vunpack.c.l.b16 %v4505
      %v4653 = vunpack.c.h.b16 %v4505
      %v4654 = vunpack.c.l.b16 %v4506
      %v4655 = vunpack.c.l.b16 %v4507
      %v4656 = vunpack.c.h.b16 %v4507
      %v4657 = vunpack.c.l.b16 %v4508
      %v4658 = vunpack.c.l.b16 %v4509
      %v4659 = vunpack.c.h.b16 %v4509
      %v4660 = vunpack.c.l.b16 %v4510
      %v4661 = vunpack.c.l.b16 %v4511
      %v4662 = vunpack.c.h.b16 %v4511
      %v4663 = vunpack.c.l.b16 %v4512
      %v4664 = vunpack.c.l.b16 %v4513
      %v4665 = vunpack.c.h.b16 %v4513
      %v4666 = vunpack.c.l.b16 %v4514
      %v4667 = vunpack.c.l.b16 %v4515
      %v4668 = vunpack.c.h.b16 %v4515
      %v4669 = vunpack.c.l.b16 %v4516
      %v4670 = vunpack.c.l.b16 %v4517
      %v4671 = vunpack.c.h.b16 %v4517
      %v4672 = vunpack.c.l.b16 %v4518
      %v4673 = vunpack.c.l.b16 %v4519
      %v4674 = vunpack.c.h.b16 %v4519
      %v4675 = vunpack.c.l.b16 %v4520
      %v4676 = vunpack.c.l.b16 %v4521
      %v4677 = vunpack.c.h.b16 %v4521
      %v4678 = vunpack.c.l.b16 %v4522
      %v4679 = vunpack.c.l.b16 %v4523
      %v4680 = vunpack.c.h.b16 %v4523
      %v4681 = vunpack.c.l.b16 %v4524
      %v4682 = vunpack.c.l.b16 %v4525
      %v4683 = vunpack.c.h.b16 %v4525
      %v4684 = vunpack.c.l.b16 %v4526
      %v4685 = vunpack.c.l.b16 %v4527
      %v4686 = vunpack.c.h.b16 %v4527
      %v4687 = vunpack.c.l.b16 %v4528
      %v4688 = vunpack.c.l.b16 %v4529
      %v4689 = vunpack.c.h.b16 %v4529
      %v4690 = vunpack.c.l.b16 %v4530
      %v4691 = vunpack.c.l.b16 %v4531
      %v4692 = vunpack.c.h.b16 %v4531
      %v4693 = vunpack.c.l.b16 %v4532
      %v4694 = vpack.c.b16 %v4601, %v4598
      %v4695 = vpack.c.b16 %v4602, %v4599
      %v4696 = vpack.c.b16 %v4603, %v4600
      %v4697 = vpack.c.b16 %v4607, %v4604
      %v4698 = vpack.c.b16 %v4608, %v4605
      %v4699 = vpack.c.b16 %v4609, %v4606
      %v4700 = vpack.c.b16 %v4613, %v4610
      %v4701 = vpack.c.b16 %v4614, %v4611
      %v4702 = vpack.c.b16 %v4615, %v4612
      %v4703 = vpack.c.b16 %v4619, %v4616
      %v4704 = vpack.c.b16 %v4620, %v4617
      %v4705 = vpack.c.b16 %v4621, %v4618
      %v4706 = vpack.c.b16 %v4625, %v4622
      %v4707 = vpack.c.b16 %v4626, %v4623
      %v4708 = vpack.c.b16 %v4627, %v4624
      %v4709 = vpack.c.b16 %v4631, %v4628
      %v4710 = vpack.c.b16 %v4632, %v4629
      %v4711 = vpack.c.b16 %v4633, %v4630
      %v4712 = vpack.c.b16 %v4637, %v4634
      %v4713 = vpack.c.b16 %v4638, %v4635
      %v4714 = vpack.c.b16 %v4639, %v4636
      %v4715 = vpack.c.b16 %v4643, %v4640
      %v4716 = vpack.c.b16 %v4644, %v4641
      %v4717 = vpack.c.b16 %v4645, %v4642
      %v4718 = vpack.c.b16 %v4649, %v4646
      %v4719 = vpack.c.b16 %v4650, %v4647
      %v4720 = vpack.c.b16 %v4651, %v4648
      %v4721 = vpack.c.b16 %v4655, %v4652
      %v4722 = vpack.c.b16 %v4656, %v4653
      %v4723 = vpack.c.b16 %v4657, %v4654
      %v4724 = vpack.c.b16 %v4661, %v4658
      %v4725 = vpack.c.b16 %v4662, %v4659
      %v4726 = vpack.c.b16 %v4663, %v4660
      %v4727 = vpack.c.b16 %v4667, %v4664
      %v4728 = vpack.c.b16 %v4668, %v4665
      %v4729 = vpack.c.b16 %v4669, %v4666
      %v4730 = vpack.c.b16 %v4673, %v4670
      %v4731 = vpack.c.b16 %v4674, %v4671
      %v4732 = vpack.c.b16 %v4675, %v4672
      %v4733 = vpack.c.b16 %v4679, %v4676
      %v4734 = vpack.c.b16 %v4680, %v4677
      %v4735 = vpack.c.b16 %v4681, %v4678
      %v4736 = vpack.c.b16 %v4685, %v4682
      %v4737 = vpack.c.b16 %v4686, %v4683
      %v4738 = vpack.c.b16 %v4687, %v4684
      %v4739 = vpack.c.b16 %v4691, %v4688
      %v4740 = vpack.c.b16 %v4692, %v4689
      %v4741 = vpack.c.b16 %v4693, %v4690
      %v4791 = vperm.slane %v4533, 0
      %v4792 = vperm.slane %v4533, 1
      %v4793 = vperm.slane %v4533, 2
      %4797 = vmatpush.bf16.msra.mxu0 %v4715
      %4798 = vmatpush.bf16.msra.mxu0 %v4712
      %4799 = vmatpush.bf16.msra.mxu0 %v4709
      %4800 = vmatpush.bf16.msra.mxu0 %v4706
      %4801 = vmatpush.bf16.msra.mxu0 %v4703
      %4802 = vmatpush.bf16.msra.mxu0 %v4700
      %4803 = vmatpush.bf16.msra.mxu0 %v4697
      %4804 = vmatpush.bf16.msra.mxu0 %v4694
      %4805 = vmatmul.bf16.gmra.mxu0 %v4467
      %v4806 = vpop.f32.mrf.mxu0
      %v4807 = vadd.f32 %v4791, %v4806
      %v4808 = vpop.f32.mrf.mxu0
      %4809 = vdwg.mxu0
      %4810 = vmatpush.bf16.msra.mxu0 %v4739
      %4811 = vmatpush.bf16.msra.mxu0 %v4736
      %4812 = vmatpush.bf16.msra.mxu0 %v4733
      %4813 = vmatpush.bf16.msra.mxu0 %v4730
      %4814 = vmatpush.bf16.msra.mxu0 %v4727
      %4815 = vmatpush.bf16.msra.mxu0 %v4724
      %4816 = vmatpush.bf16.msra.mxu0 %v4721
      %4817 = vmatpush.bf16.msra.mxu0 %v4718
      %4818 = vmatmul.bf16.gmra.mxu0 %v4468
      %v4819 = vpop.f32.mrf.mxu0
      %v4820 = vadd.f32 %v4807, %v4819
      %v4821 = vpop.f32.mrf.mxu0
      %4822 = vdwg.mxu0
      %4823 = vmatpush.bf16.msra.mxu0 %v4716
      %4824 = vmatpush.bf16.msra.mxu0 %v4713
      %4825 = vmatpush.bf16.msra.mxu0 %v4710
      %4826 = vmatpush.bf16.msra.mxu0 %v4707
      %4827 = vmatpush.bf16.msra.mxu0 %v4704
      %4828 = vmatpush.bf16.msra.mxu0 %v4701
      %4829 = vmatpush.bf16.msra.mxu0 %v4698
      %4830 = vmatpush.bf16.msra.mxu0 %v4695
      %4831 = vmatmul.bf16.gmra.mxu0 %v4467
      %v4832 = vpop.f32.mrf.mxu0
      %v4833 = vadd.f32 %v4792, %v4832
      %v4834 = vpop.f32.mrf.mxu0
      %4835 = vdwg.mxu0
      %4836 = vmatpush.bf16.msra.mxu0 %v4740
      %4837 = vmatpush.bf16.msra.mxu0 %v4737
      %4838 = vmatpush.bf16.msra.mxu0 %v4734
      %4839 = vmatpush.bf16.msra.mxu0 %v4731
      %4840 = vmatpush.bf16.msra.mxu0 %v4728
      %4841 = vmatpush.bf16.msra.mxu0 %v4725
      %4842 = vmatpush.bf16.msra.mxu0 %v4722
      %4843 = vmatpush.bf16.msra.mxu0 %v4719
      %4844 = vmatmul.bf16.gmra.mxu0 %v4468
      %v4845 = vpop.f32.mrf.mxu0
      %v4846 = vadd.f32 %v4833, %v4845
      %v4847 = vpop.f32.mrf.mxu0
      %4848 = vdwg.mxu0
      %4849 = vmatpush.bf16.msra.mxu0 %v4717
      %4850 = vmatpush.bf16.msra.mxu0 %v4714
      %4851 = vmatpush.bf16.msra.mxu0 %v4711
      %4852 = vmatpush.bf16.msra.mxu0 %v4708
      %4853 = vmatpush.bf16.msra.mxu0 %v4705
      %4854 = vmatpush.bf16.msra.mxu0 %v4702
      %4855 = vmatpush.bf16.msra.mxu0 %v4699
      %4856 = vmatpush.bf16.msra.mxu0 %v4696
      %4857 = vmatmul.bf16.gmra.mxu0 %v4467
      %v4858 = vpop.f32.mrf.mxu0
      %v4859 = vadd.f32 %v4793, %v4858
      %v4860 = vpop.f32.mrf.mxu0
      %4861 = vdwg.mxu0
      %4862 = vmatpush.bf16.msra.mxu0 %v4741
      %4863 = vmatpush.bf16.msra.mxu0 %v4738
      %4864 = vmatpush.bf16.msra.mxu0 %v4735
      %4865 = vmatpush.bf16.msra.mxu0 %v4732
      %4866 = vmatpush.bf16.msra.mxu0 %v4729
      %4867 = vmatpush.bf16.msra.mxu0 %v4726
      %4868 = vmatpush.bf16.msra.mxu0 %v4723
      %4869 = vmatpush.bf16.msra.mxu0 %v4720
      %4870 = vmatmul.bf16.gmra.mxu0 %v4468
      %v4871 = vpop.f32.mrf.mxu0
      %v4872 = vadd.f32 %v4859, %v4871
      %v4873 = vpop.f32.mrf.mxu0
      %4874 = vdwg.mxu0
      %v4875 = vand.u32 2147483647, %v4820
      %v4876 = vand.u32 2147483647, %v4846
      %v4877 = vand.u32 2147483647, %v4872
      %v4878 = vsub.f32 0.0, %v4875
      %v4879 = vsub.f32 0.0, %v4876
      %v4880 = vsub.f32 0.0, %v4877
      %v4881 = vmul.f32 %v4878, 1.442695
      %v4882 = vpow.pop %v4881
      %v4883 = vmul.f32 %v4879, 1.442695
      %v4884 = vpow.pop %v4883
      %v4885 = vmul.f32 %v4880, 1.442695
      %v4886 = vpow.pop %v4885
      %vm4887 = vcmp.ge.f32.partialorder %v4820, 0.0
      %vm4888 = vcmp.ge.f32.partialorder %v4846, 0.0
      %vm4889 = vcmp.ge.f32.partialorder %v4872, 0.0
      %v4890 = vadd.f32 %v4882, 1.0
      %v4891 = vadd.f32 %v4884, 1.0
      %v4892 = vadd.f32 %v4886, 1.0
      %v4893 = vrcp.pop %v4890
      %v4894 = vmul.f32 %v4890, %v4893
      %v4895 = vsub.f32 1.0, %v4894
      %v4896 = vmul.f32 %v4893, %v4895
      %v4897 = vadd.f32 %v4893, %v4896
      %vm4898 = vweird.f32 %v4890
      %vm4899 = vweird.f32 %v4893
      %vm4900 = vmor %vm4898, %vm4899
      %v4901 = vsel %vm4900, %v4893, %v4897
      %v4902 = vand.u32 2147483647, %v4890
      %vm4903 = vcmp.eq.f32.partialorder %v4902, 8.507059e+37
      %v4904 = vand.u32 %v4890, 2147483648
      %v4905 = vor.u32 1.1754944e-38, %v4904
      %v4906 = vsel %vm4903, %v4905, %v4901
      %v4907 = vmul.f32 1.0, %v4906
      %v4908 = vrcp.pop %v4891
      %v4909 = vmul.f32 %v4891, %v4908
      %v4910 = vsub.f32 1.0, %v4909
      %v4911 = vmul.f32 %v4908, %v4910
      %v4912 = vadd.f32 %v4908, %v4911
      %vm4913 = vweird.f32 %v4891
      %vm4914 = vweird.f32 %v4908
      %vm4915 = vmor %vm4913, %vm4914
      %v4916 = vsel %vm4915, %v4908, %v4912
      %v4917 = vand.u32 2147483647, %v4891
      %vm4918 = vcmp.eq.f32.partialorder %v4917, 8.507059e+37
      %v4919 = vand.u32 %v4891, 2147483648
      %v4920 = vor.u32 1.1754944e-38, %v4919
      %v4921 = vsel %vm4918, %v4920, %v4916
      %v4922 = vmul.f32 1.0, %v4921
      %v4923 = vrcp.pop %v4892
      %v4924 = vmul.f32 %v4892, %v4923
      %v4925 = vsub.f32 1.0, %v4924
      %v4926 = vmul.f32 %v4923, %v4925
      %v4927 = vadd.f32 %v4923, %v4926
      %vm4928 = vweird.f32 %v4892
      %vm4929 = vweird.f32 %v4923
      %vm4930 = vmor %vm4928, %vm4929
      %v4931 = vsel %vm4930, %v4923, %v4927
      %v4932 = vand.u32 2147483647, %v4892
      %vm4933 = vcmp.eq.f32.partialorder %v4932, 8.507059e+37
      %v4934 = vand.u32 %v4892, 2147483648
      %v4935 = vor.u32 1.1754944e-38, %v4934
      %v4936 = vsel %vm4933, %v4935, %v4931
      %v4937 = vmul.f32 1.0, %v4936
      %v4938 = vmul.f32 %v4882, %v4906
      %v4939 = vmul.f32 %v4884, %v4921
      %v4940 = vmul.f32 %v4886, %v4936
      %v4941 = vsel %vm4887, %v4907, %v4938
      %v4942 = vsel %vm4888, %v4922, %v4939
      %v4943 = vsel %vm4889, %v4937, %v4940
      %v4947 = vrot.slane %v4942, 7
      %v4948 = vrot.slane %v4943, 6
      %vm4949 = vcmask 1040384
      %v4950 = vsel %vm4949, %v4941, %v4947
      %vm4951 = vcmask 1041408
      %v4952 = vsel %vm4951, %v4950, %v4948
      %v4954 = vlaneseq
      %vm4955 = vcmp.ge.s32.totalorder %v4954, 0
      %vm4956 = vcmp.lt.s32.totalorder %v4954, 360
      %vm4957 = vmand %vm4955, %vm4956
      %4958 = vst.msk [vmem:[%s492] sm:$0x7] %vm4957, %v4952
      %p4959 = scmp.lt.s32.totalorder %s26, 1
      %s4960 = scalar_select %p4959, %s26, 1
      %s4961 = smul.addr %s4960, 3
      %s4962 = scalar_lea.vmem %s15, %s4961
      // Predicated region
      $region144: #{crepe_forward.1} parent=79 // pred_check
        %p4963 = pneg %p364
      $region145: #{crepe_forward.1} parent=79 // pred_check_branch
        %4965 = sbr.rel (%p4963) target = $region147
      $region146: #{crepe_forward.1} parent=79 // pred_region
        _
      $region147: #{crepe_forward.1} parent=79 // pred_fallthru
        _
    $region80: #{crepe_forward.1} parent=5 // pred_fallthru
      _
    %p4966 = scmp.le.s32.totalorder 2, %s21
    // Predicated region
    $region148: #{crepe_forward.1} parent=5 // pred_check
      %p4967 = pneg %p4966
    $region149: #{crepe_forward.1} parent=5 // pred_check_branch
      %4969 = sbr.rel (%p4967) target = $region151
    $region150: #{crepe_forward.1} parent=5 // pred_region
      %s4970 = ssub.s32 %s21, 2
      // Predicated region
      $region152: #{crepe_forward.1} parent=150 // pred_check
        %p4971 = pneg %p370
      $region153: #{crepe_forward.1} parent=150 // pred_check_branch
        %4973 = sbr.rel (%p4971) target = $region155
      $region154: #{crepe_forward.1} parent=150 // pred_region
        %p4974 = scmp.lt.s32.totalorder %s27, 1
        %s4975 = scalar_select %p4974, %s27, 1
        %s4976 = smul.addr %s4975, 3
        %s4977 = scalar_lea.vmem %s15, %s4976
      $region155: #{crepe_forward.1} parent=150 // pred_fallthru
        _
    $region151: #{crepe_forward.1} parent=5 // pred_fallthru
      _
  $region6: #{crepe_forward.1} parent=0 // loop_footer
    %s25 = sadd.s32 1, %s21
  $region7: #{crepe_forward.1} parent=0 // loop_footer_branch
    %20 = sbr.rel target = $region3
  $region8: #{crepe_forward.1} parent=0 // loop_exit
    _

</llo_original>
